<compile_context>
chip_gen: v7x
topology: tpu7x:2x2x1
jax: 0.10.0
libtpu: 0.0.40
codegen_flags: <defaults>
</compile_context>

<pallas_src>
import functools
import math

import jax
import jax.numpy as jnp
from jax.experimental import pallas as pl
from jax.experimental.pallas import tpu as pltpu

# ----------------------------- configuration --------------------------------
B = 2            # batch
L = 8            # trajectory length
NCAM = 2         # cameras
H = W = 8        # image spatial size (small synthetic)
EMB = 48         # embedding_dim (divisible by 6 for 3D sinusoid PE)
NH = 4           # attention heads
FFN = 96         # FFN hidden (== 2*EMB so it packs with the (D, 2D) weights)
T_DIFF = 100     # diffusion_timesteps
N_QUERY_XATTN_LAYERS = 4   # -> traj stack has N-2 = 2 layers
OUT_DIM = 9      # output_dim (7) + 2 for 6D rotation parametrization

assert FFN == 2 * EMB


# ====================== fused ParallelAttention stack ========================

def _stack_kernel(x0_ref, qpos_ref, ckin_ref, cv_ref, maskb_ref, ada_ref,
                  wdd_ref, wd2_ref, wf2_ref, pD_ref, p2_ref, o_ref):
    """One ParallelAttention layer per grid step; x stays resident in o_ref."""
    layer = pl.program_id(0)

    @pl.when(layer == 0)
    def _():
        o_ref[...] = x0_ref[...]

    Bb, Ll, Dd = x0_ref.shape
    BL = Bb * Ll
    dh = Dd // NH
    attn_scale = 1.0 / math.sqrt(dh)

    x = o_ref[...]                       # (B, L, D) f32 resident activations
    qpos = qpos_ref[...]                 # (B, L, D) f32
    maskb = maskb_ref[...]               # (B, L)    f32 additive key-pad bias
    ada = ada_ref[...]                   # (B, D)    f32, SiLU already applied

    # ---- per-layer packed parameters (weights bf16, biases / LN in f32) ----
    self_wv, self_wo = wdd_ref[0, 0], wdd_ref[0, 1]
    cr_wq, cr_wk = wdd_ref[0, 2], wdd_ref[0, 3]
    cr_wv, cr_wo = wdd_ref[0, 4], wdd_ref[0, 5]
    ada_w, self_wqk, ffn_w1 = wd2_ref[0, 0], wd2_ref[0, 1], wd2_ref[0, 2]
    ffn_w2 = wf2_ref[0]
    pD = pD_ref[0]                       # (16, D)  f32
    p2 = p2_ref[0]                       # (8, 2D)  f32
    ln1_g, ln1_b = pD[0:1], pD[1:2]
    ln2_g, ln2_b = pD[2:3], pD[3:4]
    ln3_g, ln3_b = pD[4:5], pD[5:6]
    self_bv, self_bo = pD[6:7], pD[7:8]
    cr_bq, cr_bk = pD[8:9], pD[9:10]
    cr_bv, cr_bo = pD[10:11], pD[11:12]
    ffn_b2 = pD[12:13]
    ada_b, self_bqk, ffn_b1 = p2[0:1], p2[1:2], p2[2:3]

    def mm(a, w):                        # bf16 MXU matmul, f32 accumulation
        return jnp.dot(a.astype(jnp.bfloat16), w,
                       preferred_element_type=jnp.float32)

    def ln_mod(v, g, beta):              # LayerNorm in f32
        mu = jnp.mean(v, axis=-1, keepdims=True)
        var = jnp.mean((v - mu) * (v - mu), axis=-1, keepdims=True)
        return (v - mu) * jax.lax.rsqrt(var + 1e-5) * g + beta

    # adaLN modulation from the denoising-timestep signal
    mod = mm(ada, ada_w) + ada_b                     # (B, 2D) f32
    scale_m = (1.0 + mod[:, :Dd])[:, None, :]        # (B, 1, D)
    shift_m = (mod[:, Dd:])[:, None, :]

    def attend(q_list, k_list, v_list, bias_list):
        rows = []
        for bb in range(Bb):
            qb, kb, vb = q_list[bb], k_list[bb], v_list[bb]
            heads = []
            for hd in range(NH):
                sl = slice(hd * dh, (hd + 1) * dh)
                qh = qb[:, sl].astype(jnp.bfloat16)
                kh = kb[:, sl].astype(jnp.bfloat16)
                vh = vb[:, sl].astype(jnp.bfloat16)
                s = jnp.einsum('qd,kd->qk', qh, kh,
                               preferred_element_type=jnp.float32) * attn_scale
                if bias_list is not None:            # f32 mask math (bf16-safe)
                    s = s + bias_list[bb]
                s = s - jnp.max(s, axis=-1, keepdims=True)
                pr = jnp.exp(s)
                pr = pr * pl.reciprocal(jnp.sum(pr, axis=-1, keepdims=True),
                                        approx=True)
                heads.append(jnp.dot(pr.astype(jnp.bfloat16), vh,
                                     preferred_element_type=jnp.float32))
            rows.append(jnp.concatenate(heads, axis=-1))     # (Lq, D)
        return jnp.concatenate(rows, axis=0)                  # (B*Lq, D)

    # ---- self-attention (fused Q/K projection, key-padding mask) ----
    hmod = ln_mod(x, ln1_g, ln1_b) * scale_m + shift_m
    qk = mm((hmod + qpos).reshape(BL, Dd), self_wqk) + self_bqk     # (BL, 2D)
    v2 = mm(hmod.reshape(BL, Dd), self_wv) + self_bv                # (BL, D)
    q_l = [qk[bb * Ll:(bb + 1) * Ll, :Dd] for bb in range(Bb)]
    k_l = [qk[bb * Ll:(bb + 1) * Ll, Dd:] for bb in range(Bb)]
    v_l = [v2[bb * Ll:(bb + 1) * Ll, :] for bb in range(Bb)]
    b_l = [maskb[bb:bb + 1, :] for bb in range(Bb)]
    att = attend(q_l, k_l, v_l, b_l)
    x = x + (mm(att, self_wo) + self_bo).reshape(Bb, Ll, Dd)

    # ---- cross-attention to visual / gripper context (no mask needed) ----
    hmod = ln_mod(x, ln2_g, ln2_b) * scale_m + shift_m
    q2 = mm((hmod + qpos).reshape(BL, Dd), cr_wq) + cr_bq
    q_l = [q2[bb * Ll:(bb + 1) * Ll, :] for bb in range(Bb)]
    k_l = [mm(ckin_ref[bb], cr_wk) + cr_bk for bb in range(Bb)]     # (Lc, D)
    v_l = [mm(cv_ref[bb], cr_wv) + cr_bv for bb in range(Bb)]
    att = attend(q_l, k_l, v_l, None)
    x = x + (mm(att, cr_wo) + cr_bo).reshape(Bb, Ll, Dd)

    # ---- FFN ----
    hmod = ln_mod(x, ln3_g, ln3_b) * scale_m + shift_m
    hid = jnp.maximum(mm(hmod.reshape(BL, Dd), ffn_w1) + ffn_b1, 0.0)
    x = x + (mm(hid, ffn_w2) + ffn_b2).reshape(Bb, Ll, Dd)

    o_ref[...] = x


def run_stack(sp, x0, qpos, ctx_kin, ctx_v, maskb, ada):
    """Run a stack of ParallelAttention layers in a single pallas_call."""
    NL = sp["wdd"].shape[0]
    Bb, Ll, Dd = x0.shape
    Lc = ctx_kin.shape[1]
    return pl.pallas_call(
        _stack_kernel,
        grid=(NL,),
        in_specs=[
            pl.BlockSpec((Bb, Ll, Dd), lambda l: (0, 0, 0)),          # x0
            pl.BlockSpec((Bb, Ll, Dd), lambda l: (0, 0, 0)),          # qpos
            pl.BlockSpec((Bb, Lc, Dd), lambda l: (0, 0, 0)),          # ctx (K in)
            pl.BlockSpec((Bb, Lc, Dd), lambda l: (0, 0, 0)),          # ctx (V in)
            pl.BlockSpec((Bb, Ll), lambda l: (0, 0)),                 # mask bias
            pl.BlockSpec((Bb, Dd), lambda l: (0, 0)),                 # ada (silu)
            pl.BlockSpec((1, 6, Dd, Dd), lambda l: (l, 0, 0, 0)),     # (D,D) ws
            pl.BlockSpec((1, 3, Dd, 2 * Dd), lambda l: (l, 0, 0, 0)), # (D,2D) ws
            pl.BlockSpec((1, 2 * Dd, Dd), lambda l: (l, 0, 0)),       # ffn_w2
            pl.BlockSpec((1, 16, Dd), lambda l: (l, 0, 0)),           # D-wide bias/LN
            pl.BlockSpec((1, 8, 2 * Dd), lambda l: (l, 0, 0)),        # 2D-wide bias
        ],
        out_specs=pl.BlockSpec((Bb, Ll, Dd), lambda l: (0, 0, 0)),
        out_shape=jax.ShapeDtypeStruct((Bb, Ll, Dd), jnp.float32),
        compiler_params=pltpu.CompilerParams(
            dimension_semantics=("arbitrary",)),
    )(x0, qpos, ctx_kin, ctx_v, maskb, ada,
      sp["wdd"], sp["wd2"], sp["wf2"], sp["pD"], sp["p2"])


# ============================ small fused kernels ============================

def _mlp2_kernel(x_ref, w1_ref, b1_ref, w2_ref, b2_ref, o_ref, *, act_out):
    h = jnp.dot(x_ref[...].astype(jnp.bfloat16), w1_ref[...],
                preferred_element_type=jnp.float32) + b1_ref[...]
    h = jnp.maximum(h, 0.0)
    y = jnp.dot(h.astype(jnp.bfloat16), w2_ref[...],
                preferred_element_type=jnp.float32) + b2_ref[...]
    if act_out == "silu":
        y = y / (1.0 + jnp.exp(-y))
    o_ref[...] = y


def mlp2(x, w1, b1, w2, b2, act_out="none"):
    """Fused Linear -> ReLU -> Linear (hidden never leaves VMEM)."""
    shp = x.shape
    x2 = x.reshape(-1, shp[-1])
    M, K = x2.shape
    Hd = w1.shape[1]
    N = w2.shape[1]
    y = pl.pallas_call(
        functools.partial(_mlp2_kernel, act_out=act_out),
        grid=(1,),
        in_specs=[pl.BlockSpec((M, K), lambda i: (0, 0)),
                  pl.BlockSpec((K, Hd), lambda i: (0, 0)),
                  pl.BlockSpec((1, Hd), lambda i: (0, 0)),
                  pl.BlockSpec((Hd, N), lambda i: (0, 0)),
                  pl.BlockSpec((1, N), lambda i: (0, 0))],
        out_specs=pl.BlockSpec((M, N), lambda i: (0, 0)),
        out_shape=jax.ShapeDtypeStruct((M, N), jnp.float32),
    )(x2, w1, b1.reshape(1, -1), w2, b2.reshape(1, -1))
    return y.reshape(shp[:-1] + (N,))


def _linear_kernel(x_ref, w_ref, b_ref, o_ref):
    o_ref[...] = jnp.dot(x_ref[...].astype(jnp.bfloat16), w_ref[...],
                         preferred_element_type=jnp.float32) + b_ref[...]


def linear_pallas(x, w, b, row_tiles=1):
    """Single linear; row_tiles>1 gives a 'parallel' grid (v7x 2-TC megacore)."""
    shp = x.shape
    x2 = x.reshape(-1, shp[-1])
    M, K = x2.shape
    N = w.shape[1]
    tm = M // row_tiles
    y = pl.pallas_call(
        _linear_kernel,
        grid=(row_tiles,),
        in_specs=[pl.BlockSpec((tm, K), lambda i: (i, 0)),
                  pl.BlockSpec((K, N), lambda i: (0, 0)),
                  pl.BlockSpec((1, N), lambda i: (0, 0))],
        out_specs=pl.BlockSpec((tm, N), lambda i: (i, 0)),
        out_shape=jax.ShapeDtypeStruct((M, N), jnp.float32),
        compiler_params=pltpu.CompilerParams(
            dimension_semantics=("parallel",)),
    )(x2, w, b.reshape(1, -1))
    return y.reshape(shp[:-1] + (N,))


def _regressor_kernel(px_ref, rx_ref, pw1_ref, pb1_ref, pw2_ref, pb2_ref,
                      rw1_ref, rb1_ref, rw2_ref, rb2_ref, o_ref):
    def mm(a, w):
        return jnp.dot(a.astype(jnp.bfloat16), w,
                       preferred_element_type=jnp.float32)
    hp = jnp.maximum(mm(px_ref[...], pw1_ref[...]) + pb1_ref[...], 0.0)
    pos = mm(hp, pw2_ref[...]) + pb2_ref[...]
    hr = jnp.maximum(mm(rx_ref[...], rw1_ref[...]) + rb1_ref[...], 0.0)
    rot = mm(hr, rw2_ref[...]) + rb2_ref[...]
    o_ref[...] = jnp.concatenate([pos, rot], axis=-1)


def regressor_pair(pos_x, rot_x, p):
    """Fused pos- and rot-regressor MLPs, one concatenated (B*L, 9) output."""
    Bb, Ll, Dd = pos_x.shape
    BL = Bb * Ll
    out = pl.pallas_call(
        _regressor_kernel,
        grid=(1,),
        in_specs=[pl.BlockSpec((BL, Dd), lambda i: (0, 0)),
                  pl.BlockSpec((BL, Dd), lambda i: (0, 0)),
                  pl.BlockSpec((Dd, Dd), lambda i: (0, 0)),
                  pl.BlockSpec((1, Dd), lambda i: (0, 0)),
                  pl.BlockSpec((Dd, 3), lambda i: (0, 0)),
                  pl.BlockSpec((1, 3), lambda i: (0, 0)),
                  pl.BlockSpec((Dd, Dd), lambda i: (0, 0)),
                  pl.BlockSpec((1, Dd), lambda i: (0, 0)),
                  pl.BlockSpec((Dd, 6), lambda i: (0, 0)),
                  pl.BlockSpec((1, 6), lambda i: (0, 0))],
        out_specs=pl.BlockSpec((BL, 9), lambda i: (0, 0)),
        out_shape=jax.ShapeDtypeStruct((BL, 9), jnp.float32),
    )(pos_x.reshape(BL, Dd), rot_x.reshape(BL, Dd),
      p["posr_w1"], p["posr_b1"].reshape(1, -1),
      p["posr_w2"], p["posr_b2"].reshape(1, -1),
      p["rotr_w1"], p["rotr_b1"].reshape(1, -1),
      p["rotr_w2"], p["rotr_b2"].reshape(1, -1))
    return out.reshape(Bb, Ll, 9)


# ============================ plain-JAX glue =================================
# (tiny element-wise ops left to XLA, per perf review)

def normalize_pos(pos, bounds):
    mn, mx = bounds[0], bounds[1]
    return (pos - mn) / (mx - mn) * 2.0 - 1.0


def sinusoid_pe_3d(pos, D):
    """(..., 3) -> (..., D) additive PE.  TODO(synk): real model uses rotary."""
    nfreq = D // 6
    freqs = jnp.exp(jnp.arange(nfreq, dtype=jnp.float32)
                    * (-math.log(100.0) / max(nfreq - 1, 1)))
    ang = pos[..., :, None] * freqs
    emb = jnp.concatenate([jnp.sin(ang), jnp.cos(ang)], axis=-1)
    return emb.reshape(pos.shape[:-1] + (D,))


def sinusoid_1d(t, D):
    half = D // 2
    freqs = jnp.exp(jnp.arange(half, dtype=jnp.float32)
                    * (-math.log(10000.0) / max(half - 1, 1)))
    ang = t[..., None] * freqs
    return jnp.concatenate([jnp.sin(ang), jnp.cos(ang)], axis=-1)


def normalise_quat(q):
    n = jnp.maximum(jnp.linalg.norm(q, axis=-1, keepdims=True), 1e-8)
    return q / n


def quaternion_to_matrix(q):
    r, i, j, k = q[..., 0], q[..., 1], q[..., 2], q[..., 3]
    two_s = 2.0 / jnp.sum(q * q, axis=-1)
    o = jnp.stack([
        1 - two_s * (j * j + k * k), two_s * (i * j - k * r), two_s * (i * k + j * r),
        two_s * (i * j + k * r), 1 - two_s * (i * i + k * k), two_s * (j * k - i * r),
        two_s * (i * k - j * r), two_s * (j * k + i * r), 1 - two_s * (i * i + j * j),
    ], axis=-1)
    return o.reshape(q.shape[:-1] + (3, 3))


def get_ortho6d_from_rotation_matrix(m):
    return jnp.concatenate([m[..., :, 0], m[..., :, 1]], axis=-1)


def convert_rot_6d(signal):
    quat = normalise_quat(signal[..., 3:7])
    res = signal[..., 7:]
    rot = quaternion_to_matrix(quat)
    r6 = get_ortho6d_from_rotation_matrix(rot.reshape(-1, 3, 3))
    r6 = r6.reshape(signal.shape[:-1] + (6,))
    out = jnp.concatenate([signal[..., :3], r6], axis=-1)
    if res.shape[-1] > 0:
        out = jnp.concatenate([out, res], axis=-1)
    return out


def ddpm_alphas_cumprod(schedule, T=T_DIFF, beta_start=1e-4, beta_end=0.02):
    if schedule == "scaled_linear":
        betas = jnp.linspace(beta_start ** 0.5, beta_end ** 0.5, T,
                             dtype=jnp.float32) ** 2
    else:  # squaredcos_cap_v2
        def alpha_bar(t):
            return math.cos((t + 0.008) / 1.008 * math.pi / 2) ** 2
        betas = jnp.array(
            [min(1 - alpha_bar((i + 1) / T) / alpha_bar(i / T), 0.999)
             for i in range(T)], dtype=jnp.float32)
    return jnp.cumprod(1.0 - betas)


def add_noise(sample, noise, timesteps, alphas_cumprod):
    a = jnp.sqrt(alphas_cumprod[timesteps])[:, None, None]
    s = jnp.sqrt(1.0 - alphas_cumprod[timesteps])[:, None, None]
    return a * sample + s * noise


# ============================ DiffusionHead ==================================

def head_forward(p, trajectory, trajectory_mask, timesteps,
                 visible_rgb, visible_pcd, curr_gripper):
    Bb, Ll, _ = trajectory.shape
    D = EMB

    # traj_encoder: fused Linear(9,D)+ReLU+Linear(D,D)   (Dropout: eval/identity)
    traj_feats = mlp2(trajectory, p["te_w1"], p["te_b1"], p["te_w2"], p["te_b2"])
    traj_pos = sinusoid_pe_3d(trajectory[..., :3], D)

    # denoising-timestep encoder; SiLU of the adaLN signal hoisted out of layers
    t_emb = sinusoid_1d(timesteps.astype(jnp.float32), D)
    ada_silu = mlp2(t_emb, p["time_w1"], p["time_b1"], p["time_w2"],
                    p["time_b2"], act_out="silu")                       # (B, D)

    # image encoder: per-pixel 1x1 conv as a row-parallel matmul
    # TODO(synk): real Encoder uses a CLIP/ResNet+FPN image backbone.
    rgb_pix = jnp.transpose(visible_rgb, (0, 1, 3, 4, 2)).reshape(-1, 3)
    pcd_cl = jnp.transpose(visible_pcd, (0, 1, 3, 4, 2)).reshape(Bb, -1, 3)
    context_feats = linear_pallas(rgb_pix, p["img_w"], p["img_b"],
                                  row_tiles=2).reshape(Bb, -1, D)
    context_pos = sinusoid_pe_3d(pcd_cl, D)

    # current gripper: encoder + embedding share the input -> pre-summed weights
    cg_feats = linear_pallas(curr_gripper, p["cgsum_w"], p["cgsum_b"])[:, None]
    cg_pos = sinusoid_pe_3d(curr_gripper[..., :3], D)[:, None]

    ctx = jnp.concatenate([context_feats, cg_feats], axis=1)            # (B,Lc,D)
    ctx_pos = jnp.concatenate([context_pos, cg_pos], axis=1)
    ctx_kin = (ctx + ctx_pos).astype(jnp.bfloat16)   # cross-attn K input
    ctx_v = ctx.astype(jnp.bfloat16)                 # cross-attn V input

    traj_time_pos = jnp.broadcast_to(
        sinusoid_1d(jnp.arange(Ll, dtype=jnp.float32), D)[None], (Bb, Ll, D))
    qpos = (traj_pos + traj_time_pos).astype(jnp.float32)
    maskb = jnp.where(trajectory_mask, -1e9, 0.0).astype(jnp.float32)   # (B, L)

    # fused attention stacks (layers iterated on an "arbitrary" grid axis)
    x = run_stack(p["traj_stack"], traj_feats, qpos, ctx_kin, ctx_v, maskb,
                  ada_silu)
    pos_x = run_stack(p["pos_stack"], x, qpos, ctx_kin, ctx_v, maskb, ada_silu)
    rot_x = run_stack(p["rot_stack"], x, qpos, ctx_kin, ctx_v, maskb, ada_silu)

    update = regressor_pair(pos_x, rot_x, p)                            # (B,L,9)
    new_traj = jnp.concatenate(
        [trajectory[..., :3] + update[..., :3], update[..., 3:]], axis=-1)
    return [new_traj]


# ============================ DiffusionPlanner ===============================

@jax.jit
def planner_forward(p, gt_trajectory, trajectory_mask, rgb_obs, pcd_obs,
                    instruction, curr_gripper, goal_gripper, noise_key):
    bounds = p["gripper_loc_bounds"]

    gt = gt_trajectory.at[..., :3].set(
        normalize_pos(gt_trajectory[..., :3], bounds))
    pcd = jnp.transpose(pcd_obs, (0, 1, 3, 4, 2))
    pcd = normalize_pos(pcd, bounds)
    pcd = jnp.transpose(pcd, (0, 1, 4, 2, 3))
    cg = curr_gripper.at[:, :3].set(normalize_pos(curr_gripper[:, :3], bounds))
    gg = goal_gripper.at[:, :3].set(normalize_pos(goal_gripper[:, :3], bounds))

    gt = convert_rot_6d(gt)      # (B, L, 9)
    cg = convert_rot_6d(cg)      # (B, 9)
    gg = convert_rot_6d(gg)      # (B, 9)   unused (use_goal=False, matches spec)
    del gg, instruction

    k_noise, k_t = jax.random.split(noise_key)
    noise = jax.random.normal(k_noise, gt.shape, jnp.float32)
    timesteps = jax.random.randint(k_t, (gt.shape[0],), 0, T_DIFF)

    pos = add_noise(gt[..., :3], noise[..., :3], timesteps, p["ac_pos"])
    rot = add_noise(gt[..., 3:9], noise[..., 3:9], timesteps, p["ac_rot"])
    noisy_trajectory = jnp.concatenate([pos, rot], axis=-1)
    # cond_mask is all-False during training, so noisy_trajectory is unchanged.

    preds = head_forward(p, noisy_trajectory, trajectory_mask, timesteps,
                         rgb_obs, pcd, cg)

    total_loss = jnp.float32(0.0)
    for layer_pred in preds:
        l_t = jnp.mean(jnp.abs(layer_pred[..., :3] - gt[..., :3]))
        l_r = jnp.mean(jnp.abs(layer_pred[..., 3:9] - gt[..., 3:9]))
        total_loss = total_loss + 100.0 * l_t + 10.0 * l_r
    return total_loss


# ============================== parameters ===================================

def init_stack(key, n_layers, D):
    """Stacked per-layer weights: bf16 weight slabs, f32 bias / LN slabs."""
    k1, k2, k3 = jax.random.split(key, 3)
    wdd = (jax.random.normal(k1, (n_layers, 6, D, D), jnp.float32) * 0.05
           ).astype(jnp.bfloat16)                     # self_wv, self_wo, cr_{q,k,v,o}
    wd2 = (jax.random.normal(k2, (n_layers, 3, D, 2 * D), jnp.float32) * 0.05
           ).astype(jnp.bfloat16)                     # ada_w, self_wqk, ffn_w1
    wf2 = (jax.random.normal(k3, (n_layers, 2 * D, D), jnp.float32) * 0.05
           ).astype(jnp.bfloat16)                     # ffn_w2
    pD = jnp.zeros((n_layers, 16, D), jnp.float32)    # LN params + D-wide biases
    pD = pD.at[:, 0].set(1.0).at[:, 2].set(1.0).at[:, 4].set(1.0)  # LN gains = 1
    p2 = jnp.zeros((n_layers, 8, 2 * D), jnp.float32)  # 2D-wide biases
    return {"wdd": wdd, "wd2": wd2, "wf2": wf2, "pD": pD, "p2": p2}


def init_params(key, D=EMB, out_dim=OUT_DIM):
    keys = iter(jax.random.split(key, 64))

    def w(shape):
        return (jax.random.normal(next(keys), shape, jnp.float32) * 0.05
                ).astype(jnp.bfloat16)

    def b(n):
        return jnp.zeros((n,), jnp.float32)

    p = {}
    p["te_w1"], p["te_b1"] = w((9, D)), b(D)
    p["te_w2"], p["te_b2"] = w((D, D)), b(D)
    p["time_w1"], p["time_b1"] = w((D, D)), b(D)
    p["time_w2"], p["time_b2"] = w((D, D)), b(D)
    p["img_w"], p["img_b"] = w((3, D)), b(D)
    # curr-gripper encoder + embedding apply to the same input -> pre-summed
    cg_w = jax.random.normal(next(keys), (out_dim, D), jnp.float32) * 0.05
    cge_w = jax.random.normal(next(keys), (out_dim, D), jnp.float32) * 0.05
    p["cgsum_w"], p["cgsum_b"] = (cg_w + cge_w).astype(jnp.bfloat16), b(D)
    p["traj_stack"] = init_stack(next(keys), N_QUERY_XATTN_LAYERS - 2, D)
    p["pos_stack"] = init_stack(next(keys), 2, D)
    p["rot_stack"] = init_stack(next(keys), 2, D)
    p["posr_w1"], p["posr_b1"] = w((D, D)), b(D)
    p["posr_w2"], p["posr_b2"] = w((D, 3)), b(3)
    p["rotr_w1"], p["rotr_b1"] = w((D, D)), b(D)
    p["rotr_w2"], p["rotr_b2"] = w((D, out_dim - 3)), b(out_dim - 3)
    p["gripper_loc_bounds"] = jnp.array([[-0.5, -0.5, -0.5],
                                         [0.5, 0.5, 0.5]], jnp.float32)
    p["ac_pos"] = ddpm_alphas_cumprod("scaled_linear")
    p["ac_rot"] = ddpm_alphas_cumprod("squaredcos_cap_v2")
    return p


# ================================= main ======================================

if __name__ == "__main__":
    key = jax.random.PRNGKey(0)
    (k_pos, k_quat, k_rgb, k_pcd, k_instr, k_cg, k_gg, k_noise) = \
        jax.random.split(key, 8)

    gt_pos = jax.random.uniform(k_pos, (B, L, 3), jnp.float32, -0.4, 0.4)
    gt_quat = jax.random.normal(k_quat, (B, L, 4), jnp.float32)
    gt_trajectory = jnp.concatenate([gt_pos, gt_quat], axis=-1)      # (B,L,7)

    trajectory_mask = jnp.zeros((B, L), bool).at[1, -2:].set(True)
    rgb_obs = jax.random.uniform(k_rgb, (B, NCAM, 3, H, W), jnp.float32)
    pcd_obs = jax.random.normal(k_pcd, (B, NCAM, 3, H, W), jnp.float32) * 0.3
    instruction = jax.random.normal(k_instr, (B, 8, 512), jnp.float32)
    curr_gripper = jnp.concatenate(
        [jax.random.uniform(k_cg, (B, 3), jnp.float32, -0.4, 0.4),
         jax.random.normal(k_cg, (B, 4), jnp.float32)], axis=-1)      # (B,7)
    goal_gripper = jnp.concatenate(
        [jax.random.uniform(k_gg, (B, 3), jnp.float32, -0.4, 0.4),
         jax.random.normal(k_gg, (B, 4), jnp.float32)], axis=-1)      # (B,7)

    params = init_params(jax.random.PRNGKey(1))

    loss = planner_forward(params, gt_trajectory, trajectory_mask, rgb_obs,
                           pcd_obs, instruction, curr_gripper, goal_gripper,
                           k_noise)
    loss = jax.block_until_ready(loss)
    assert jnp.isfinite(loss)
    print("KERNEL_OK")
</pallas_src>

<mosaic_0001>
module attributes {stable_mosaic.version = 11 : i64} {
  func.func @_linear_kernel(%arg0: i32, %arg1: memref<2x9xf32, #tpu.memory_space<vmem>>, %arg2: memref<9x48xbf16, #tpu.memory_space<vmem>>, %arg3: memref<1x48xf32, #tpu.memory_space<vmem>>, %arg4: memref<2x48xf32, #tpu.memory_space<vmem>>) attributes {dimension_semantics = [#tpu.dimension_semantics<parallel>], iteration_bounds = array<i64: 1>, scalar_prefetch = 0 : i64, scratch_operands = 0 : i64, tpu.core_type = #tpu.core_type<tc>, window_params = [{transform_indices = @transform_0, window_bounds = array<i64: 2, 9>}, {pipeline_mode = #tpu.pipeline_mode<synchronous>, transform_indices = @transform_1, window_bounds = array<i64: 9, 48>}, {pipeline_mode = #tpu.pipeline_mode<synchronous>, transform_indices = @transform_2, window_bounds = array<i64: 1, 48>}, {transform_indices = @transform_3, window_bounds = array<i64: 2, 48>}]} {
    %c0 = arith.constant 0 : index
    %c0_0 = arith.constant 0 : index
    %0 = vector.load %arg1[%c0, %c0_0] : memref<2x9xf32, #tpu.memory_space<vmem>>, vector<2x9xf32>
    %1 = arith.truncf %0 : vector<2x9xf32> to vector<2x9xbf16>
    %c0_1 = arith.constant 0 : index
    %c0_2 = arith.constant 0 : index
    %2 = vector.load %arg2[%c0_1, %c0_2] : memref<9x48xbf16, #tpu.memory_space<vmem>>, vector<9x48xbf16>
    %cst = arith.constant dense<0.000000e+00> : vector<2x48xf32>
    %3 = tpu.matmul %1, %2, %cst {dimension_numbers = #tpu.dot_dimension_numbers<[1], [0], [0], [1], [0, 0, 1, 1], [], []>} : vector<2x9xbf16>, vector<9x48xbf16>, vector<2x48xf32> -> vector<2x48xf32>
    %c0_3 = arith.constant 0 : index
    %c0_4 = arith.constant 0 : index
    %4 = vector.load %arg3[%c0_3, %c0_4] : memref<1x48xf32, #tpu.memory_space<vmem>>, vector<1x48xf32>
    %5 = vector.broadcast %4 : vector<1x48xf32> to vector<2x48xf32>
    %6 = arith.addf %3, %5 : vector<2x48xf32>
    %c0_5 = arith.constant 0 : index
    %c0_6 = arith.constant 0 : index
    %7 = vector.load %arg4[%c0_5, %c0_6] : memref<2x48xf32, #tpu.memory_space<vmem>>, vector<2x48xf32>
    tpu.vector_store %arg4[%c0_5, %c0_6], %6 {strides = array<i32>} : memref<2x48xf32, #tpu.memory_space<vmem>>, vector<2x48xf32>,
    return
  }
  func.func @transform_0(%arg0: i32) -> (i32, i32) {
    %c0_i32 = arith.constant 0 : i32
    %c0_i32_0 = arith.constant 0 : i32
    return %arg0, %c0_i32 : i32, i32
  }
  func.func @transform_1(%arg0: i32) -> (i32, i32) {
    %c0_i32 = arith.constant 0 : i32
    %c0_i32_0 = arith.constant 0 : i32
    %c0_i32_1 = arith.constant 0 : i32
    return %c0_i32, %c0_i32_0 : i32, i32
  }
  func.func @transform_2(%arg0: i32) -> (i32, i32) {
    %c0_i32 = arith.constant 0 : i32
    %c0_i32_0 = arith.constant 0 : i32
    %c0_i32_1 = arith.constant 0 : i32
    return %c0_i32, %c0_i32_0 : i32, i32
  }
  func.func @transform_3(%arg0: i32) -> (i32, i32) {
    %c0_i32 = arith.constant 0 : i32
    %c0_i32_0 = arith.constant 0 : i32
    return %arg0, %c0_i32 : i32, i32
  }
}

module attributes {stable_mosaic.version = 11 : i64} {
  func.func @_linear_kernel(%arg0: i32, %arg1: memref<128x3xf32, #tpu.memory_space<vmem>>, %arg2: memref<3x48xbf16, #tpu.memory_space<vmem>>, %arg3: memref<1x48xf32, #tpu.memory_space<vmem>>, %arg4: memref<128x48xf32, #tpu.memory_space<vmem>>) attributes {dimension_semantics = [#tpu.dimension_semantics<parallel>], iteration_bounds = array<i64: 2>, scalar_prefetch = 0 : i64, scratch_operands = 0 : i64, tpu.core_type = #tpu.core_type<tc>, window_params = [{transform_indices = @transform_0, window_bounds = array<i64: 128, 3>}, {pipeline_mode = #tpu.pipeline_mode<synchronous>, transform_indices = @transform_1, window_bounds = array<i64: 3, 48>}, {pipeline_mode = #tpu.pipeline_mode<synchronous>, transform_indices = @transform_2, window_bounds = array<i64: 1, 48>}, {transform_indices = @transform_3, window_bounds = array<i64: 128, 48>}]} {
    %c0 = arith.constant 0 : index
    %c0_0 = arith.constant 0 : index
    %0 = vector.load %arg1[%c0, %c0_0] : memref<128x3xf32, #tpu.memory_space<vmem>>, vector<128x3xf32>
    %1 = arith.truncf %0 : vector<128x3xf32> to vector<128x3xbf16>
    %c0_1 = arith.constant 0 : index
    %c0_2 = arith.constant 0 : index
    %2 = vector.load %arg2[%c0_1, %c0_2] : memref<3x48xbf16, #tpu.memory_space<vmem>>, vector<3x48xbf16>
    %cst = arith.constant dense<0.000000e+00> : vector<128x48xf32>
    %3 = tpu.matmul %1, %2, %cst {dimension_numbers = #tpu.dot_dimension_numbers<[1], [0], [0], [1], [0, 0, 1, 1], [], []>} : vector<128x3xbf16>, vector<3x48xbf16>, vector<128x48xf32> -> vector<128x48xf32>
    %c0_3 = arith.constant 0 : index
    %c0_4 = arith.constant 0 : index
    %4 = vector.load %arg3[%c0_3, %c0_4] : memref<1x48xf32, #tpu.memory_space<vmem>>, vector<1x48xf32>
    %5 = vector.broadcast %4 : vector<1x48xf32> to vector<128x48xf32>
    %6 = arith.addf %3, %5 : vector<128x48xf32>
    %c0_5 = arith.constant 0 : index
    %c0_6 = arith.constant 0 : index
    %7 = vector.load %arg4[%c0_5, %c0_6] : memref<128x48xf32, #tpu.memory_space<vmem>>, vector<128x48xf32>
    tpu.vector_store %arg4[%c0_5, %c0_6], %6 {strides = array<i32>} : memref<128x48xf32, #tpu.memory_space<vmem>>, vector<128x48xf32>,
    return
  }
  func.func @transform_0(%arg0: i32) -> (i32, i32) {
    %c0_i32 = arith.constant 0 : i32
    %c0_i32_0 = arith.constant 0 : i32
    return %arg0, %c0_i32 : i32, i32
  }
  func.func @transform_1(%arg0: i32) -> (i32, i32) {
    %c0_i32 = arith.constant 0 : i32
    %c0_i32_0 = arith.constant 0 : i32
    %c0_i32_1 = arith.constant 0 : i32
    return %c0_i32, %c0_i32_0 : i32, i32
  }
  func.func @transform_2(%arg0: i32) -> (i32, i32) {
    %c0_i32 = arith.constant 0 : i32
    %c0_i32_0 = arith.constant 0 : i32
    %c0_i32_1 = arith.constant 0 : i32
    return %c0_i32, %c0_i32_0 : i32, i32
  }
  func.func @transform_3(%arg0: i32) -> (i32, i32) {
    %c0_i32 = arith.constant 0 : i32
    %c0_i32_0 = arith.constant 0 : i32
    return %arg0, %c0_i32 : i32, i32
  }
}

module attributes {stable_mosaic.version = 11 : i64} {
  func.func @_mlp2_kernel(%arg0: i32, %arg1: memref<2x48xf32, #tpu.memory_space<vmem>>, %arg2: memref<48x48xbf16, #tpu.memory_space<vmem>>, %arg3: memref<1x48xf32, #tpu.memory_space<vmem>>, %arg4: memref<48x48xbf16, #tpu.memory_space<vmem>>, %arg5: memref<1x48xf32, #tpu.memory_space<vmem>>, %arg6: memref<2x48xf32, #tpu.memory_space<vmem>>) attributes {dimension_semantics = [#tpu.dimension_semantics<arbitrary>], iteration_bounds = array<i64: 1>, scalar_prefetch = 0 : i64, scratch_operands = 0 : i64, tpu.core_type = #tpu.core_type<tc>, window_params = [{pipeline_mode = #tpu.pipeline_mode<synchronous>, transform_indices = @transform_0, window_bounds = array<i64: 2, 48>}, {pipeline_mode = #tpu.pipeline_mode<synchronous>, transform_indices = @transform_1, window_bounds = array<i64: 48, 48>}, {pipeline_mode = #tpu.pipeline_mode<synchronous>, transform_indices = @transform_2, window_bounds = array<i64: 1, 48>}, {pipeline_mode = #tpu.pipeline_mode<synchronous>, transform_indices = @transform_3, window_bounds = array<i64: 48, 48>}, {pipeline_mode = #tpu.pipeline_mode<synchronous>, transform_indices = @transform_4, window_bounds = array<i64: 1, 48>}, {pipeline_mode = #tpu.pipeline_mode<synchronous>, transform_indices = @transform_5, window_bounds = array<i64: 2, 48>}]} {
    %c0 = arith.constant 0 : index
    %c0_0 = arith.constant 0 : index
    %0 = vector.load %arg1[%c0, %c0_0] : memref<2x48xf32, #tpu.memory_space<vmem>>, vector<2x48xf32>
    %1 = arith.truncf %0 : vector<2x48xf32> to vector<2x48xbf16>
    %c0_1 = arith.constant 0 : index
    %c0_2 = arith.constant 0 : index
    %2 = vector.load %arg2[%c0_1, %c0_2] : memref<48x48xbf16, #tpu.memory_space<vmem>>, vector<48x48xbf16>
    %cst = arith.constant dense<0.000000e+00> : vector<2x48xf32>
    %3 = tpu.matmul %1, %2, %cst {dimension_numbers = #tpu.dot_dimension_numbers<[1], [0], [0], [1], [0, 0, 1, 1], [], []>} : vector<2x48xbf16>, vector<48x48xbf16>, vector<2x48xf32> -> vector<2x48xf32>
    %c0_3 = arith.constant 0 : index
    %c0_4 = arith.constant 0 : index
    %4 = vector.load %arg3[%c0_3, %c0_4] : memref<1x48xf32, #tpu.memory_space<vmem>>, vector<1x48xf32>
    %5 = vector.broadcast %4 : vector<1x48xf32> to vector<2x48xf32>
    %6 = arith.addf %3, %5 : vector<2x48xf32>
    %cst_5 = arith.constant 0.000000e+00 : f32
    %7 = vector.broadcast %cst_5 : f32 to vector<2x48xf32>
    %8 = arith.maximumf %6, %7 : vector<2x48xf32>
    %9 = arith.truncf %8 : vector<2x48xf32> to vector<2x48xbf16>
    %c0_6 = arith.constant 0 : index
    %c0_7 = arith.constant 0 : index
    %10 = vector.load %arg4[%c0_6, %c0_7] : memref<48x48xbf16, #tpu.memory_space<vmem>>, vector<48x48xbf16>
    %cst_8 = arith.constant dense<0.000000e+00> : vector<2x48xf32>
    %11 = tpu.matmul %9, %10, %cst_8 {dimension_numbers = #tpu.dot_dimension_numbers<[1], [0], [0], [1], [0, 0, 1, 1], [], []>} : vector<2x48xbf16>, vector<48x48xbf16>, vector<2x48xf32> -> vector<2x48xf32>
    %c0_9 = arith.constant 0 : index
    %c0_10 = arith.constant 0 : index
    %12 = vector.load %arg5[%c0_9, %c0_10] : memref<1x48xf32, #tpu.memory_space<vmem>>, vector<1x48xf32>
    %13 = vector.broadcast %12 : vector<1x48xf32> to vector<2x48xf32>
    %14 = arith.addf %11, %13 : vector<2x48xf32>
    %cst_11 = arith.constant 0.000000e+00 : f32
    %15 = vector.broadcast %cst_11 : f32 to vector<2x48xf32>
    %16 = arith.subf %15, %14 : vector<2x48xf32>
    %17 = math.exp %16 : vector<2x48xf32>
    %cst_12 = arith.constant 1.000000e+00 : f32
    %18 = vector.broadcast %cst_12 : f32 to vector<2x48xf32>
    %19 = arith.addf %18, %17 : vector<2x48xf32>
    %20 = arith.divf %14, %19 : vector<2x48xf32>
    %c0_13 = arith.constant 0 : index
    %c0_14 = arith.constant 0 : index
    %21 = vector.load %arg6[%c0_13, %c0_14] : memref<2x48xf32, #tpu.memory_space<vmem>>, vector<2x48xf32>
    tpu.vector_store %arg6[%c0_13, %c0_14], %20 {strides = array<i32>} : memref<2x48xf32, #tpu.memory_space<vmem>>, vector<2x48xf32>,
    return
  }
  func.func @transform_0(%arg0: i32) -> (i32, i32) {
    %c0_i32 = arith.constant 0 : i32
    %c0_i32_0 = arith.constant 0 : i32
    %c0_i32_1 = arith.constant 0 : i32
    return %c0_i32, %c0_i32_0 : i32, i32
  }
  func.func @transform_1(%arg0: i32) -> (i32, i32) {
    %c0_i32 = arith.constant 0 : i32
    %c0_i32_0 = arith.constant 0 : i32
    %c0_i32_1 = arith.constant 0 : i32
    return %c0_i32, %c0_i32_0 : i32, i32
  }
  func.func @transform_2(%arg0: i32) -> (i32, i32) {
    %c0_i32 = arith.constant 0 : i32
    %c0_i32_0 = arith.constant 0 : i32
    %c0_i32_1 = arith.constant 0 : i32
    return %c0_i32, %c0_i32_0 : i32, i32
  }
  func.func @transform_3(%arg0: i32) -> (i32, i32) {
    %c0_i32 = arith.constant 0 : i32
    %c0_i32_0 = arith.constant 0 : i32
    %c0_i32_1 = arith.constant 0 : i32
    return %c0_i32, %c0_i32_0 : i32, i32
  }
  func.func @transform_4(%arg0: i32) -> (i32, i32) {
    %c0_i32 = arith.constant 0 : i32
    %c0_i32_0 = arith.constant 0 : i32
    %c0_i32_1 = arith.constant 0 : i32
    return %c0_i32, %c0_i32_0 : i32, i32
  }
  func.func @transform_5(%arg0: i32) -> (i32, i32) {
    %c0_i32 = arith.constant 0 : i32
    %c0_i32_0 = arith.constant 0 : i32
    %c0_i32_1 = arith.constant 0 : i32
    return %c0_i32, %c0_i32_0 : i32, i32
  }
}

module attributes {stable_mosaic.version = 11 : i64} {
  func.func @_mlp2_kernel(%arg0: i32, %arg1: memref<16x9xf32, #tpu.memory_space<vmem>>, %arg2: memref<9x48xbf16, #tpu.memory_space<vmem>>, %arg3: memref<1x48xf32, #tpu.memory_space<vmem>>, %arg4: memref<48x48xbf16, #tpu.memory_space<vmem>>, %arg5: memref<1x48xf32, #tpu.memory_space<vmem>>, %arg6: memref<16x48xf32, #tpu.memory_space<vmem>>) attributes {dimension_semantics = [#tpu.dimension_semantics<arbitrary>], iteration_bounds = array<i64: 1>, scalar_prefetch = 0 : i64, scratch_operands = 0 : i64, tpu.core_type = #tpu.core_type<tc>, window_params = [{pipeline_mode = #tpu.pipeline_mode<synchronous>, transform_indices = @transform_0, window_bounds = array<i64: 16, 9>}, {pipeline_mode = #tpu.pipeline_mode<synchronous>, transform_indices = @transform_1, window_bounds = array<i64: 9, 48>}, {pipeline_mode = #tpu.pipeline_mode<synchronous>, transform_indices = @transform_2, window_bounds = array<i64: 1, 48>}, {pipeline_mode = #tpu.pipeline_mode<synchronous>, transform_indices = @transform_3, window_bounds = array<i64: 48, 48>}, {pipeline_mode = #tpu.pipeline_mode<synchronous>, transform_indices = @transform_4, window_bounds = array<i64: 1, 48>}, {pipeline_mode = #tpu.pipeline_mode<synchronous>, transform_indices = @transform_5, window_bounds = array<i64: 16, 48>}]} {
    %c0 = arith.constant 0 : index
    %c0_0 = arith.constant 0 : index
    %0 = vector.load %arg1[%c0, %c0_0] : memref<16x9xf32, #tpu.memory_space<vmem>>, vector<16x9xf32>
    %1 = arith.truncf %0 : vector<16x9xf32> to vector<16x9xbf16>
    %c0_1 = arith.constant 0 : index
    %c0_2 = arith.constant 0 : index
    %2 = vector.load %arg2[%c0_1, %c0_2] : memref<9x48xbf16, #tpu.memory_space<vmem>>, vector<9x48xbf16>
    %cst = arith.constant dense<0.000000e+00> : vector<16x48xf32>
    %3 = tpu.matmul %1, %2, %cst {dimension_numbers = #tpu.dot_dimension_numbers<[1], [0], [0], [1], [0, 0, 1, 1], [], []>} : vector<16x9xbf16>, vector<9x48xbf16>, vector<16x48xf32> -> vector<16x48xf32>
    %c0_3 = arith.constant 0 : index
    %c0_4 = arith.constant 0 : index
    %4 = vector.load %arg3[%c0_3, %c0_4] : memref<1x48xf32, #tpu.memory_space<vmem>>, vector<1x48xf32>
    %5 = vector.broadcast %4 : vector<1x48xf32> to vector<16x48xf32>
    %6 = arith.addf %3, %5 : vector<16x48xf32>
    %cst_5 = arith.constant 0.000000e+00 : f32
    %7 = vector.broadcast %cst_5 : f32 to vector<16x48xf32>
    %8 = arith.maximumf %6, %7 : vector<16x48xf32>
    %9 = arith.truncf %8 : vector<16x48xf32> to vector<16x48xbf16>
    %c0_6 = arith.constant 0 : index
    %c0_7 = arith.constant 0 : index
    %10 = vector.load %arg4[%c0_6, %c0_7] : memref<48x48xbf16, #tpu.memory_space<vmem>>, vector<48x48xbf16>
    %cst_8 = arith.constant dense<0.000000e+00> : vector<16x48xf32>
    %11 = tpu.matmul %9, %10, %cst_8 {dimension_numbers = #tpu.dot_dimension_numbers<[1], [0], [0], [1], [0, 0, 1, 1], [], []>} : vector<16x48xbf16>, vector<48x48xbf16>, vector<16x48xf32> -> vector<16x48xf32>
    %c0_9 = arith.constant 0 : index
    %c0_10 = arith.constant 0 : index
    %12 = vector.load %arg5[%c0_9, %c0_10] : memref<1x48xf32, #tpu.memory_space<vmem>>, vector<1x48xf32>
    %13 = vector.broadcast %12 : vector<1x48xf32> to vector<16x48xf32>
    %14 = arith.addf %11, %13 : vector<16x48xf32>
    %c0_11 = arith.constant 0 : index
    %c0_12 = arith.constant 0 : index
    %15 = vector.load %arg6[%c0_11, %c0_12] : memref<16x48xf32, #tpu.memory_space<vmem>>, vector<16x48xf32>
    tpu.vector_store %arg6[%c0_11, %c0_12], %14 {strides = array<i32>} : memref<16x48xf32, #tpu.memory_space<vmem>>, vector<16x48xf32>,
    return
  }
  func.func @transform_0(%arg0: i32) -> (i32, i32) {
    %c0_i32 = arith.constant 0 : i32
    %c0_i32_0 = arith.constant 0 : i32
    %c0_i32_1 = arith.constant 0 : i32
    return %c0_i32, %c0_i32_0 : i32, i32
  }
  func.func @transform_1(%arg0: i32) -> (i32, i32) {
    %c0_i32 = arith.constant 0 : i32
    %c0_i32_0 = arith.constant 0 : i32
    %c0_i32_1 = arith.constant 0 : i32
    return %c0_i32, %c0_i32_0 : i32, i32
  }
  func.func @transform_2(%arg0: i32) -> (i32, i32) {
    %c0_i32 = arith.constant 0 : i32
    %c0_i32_0 = arith.constant 0 : i32
    %c0_i32_1 = arith.constant 0 : i32
    return %c0_i32, %c0_i32_0 : i32, i32
  }
  func.func @transform_3(%arg0: i32) -> (i32, i32) {
    %c0_i32 = arith.constant 0 : i32
    %c0_i32_0 = arith.constant 0 : i32
    %c0_i32_1 = arith.constant 0 : i32
    return %c0_i32, %c0_i32_0 : i32, i32
  }
  func.func @transform_4(%arg0: i32) -> (i32, i32) {
    %c0_i32 = arith.constant 0 : i32
    %c0_i32_0 = arith.constant 0 : i32
    %c0_i32_1 = arith.constant 0 : i32
    return %c0_i32, %c0_i32_0 : i32, i32
  }
  func.func @transform_5(%arg0: i32) -> (i32, i32) {
    %c0_i32 = arith.constant 0 : i32
    %c0_i32_0 = arith.constant 0 : i32
    %c0_i32_1 = arith.constant 0 : i32
    return %c0_i32, %c0_i32_0 : i32, i32
  }
}

module attributes {stable_mosaic.version = 11 : i64} {
  func.func @_regressor_kernel(%arg0: i32, %arg1: memref<16x48xf32, #tpu.memory_space<vmem>>, %arg2: memref<16x48xf32, #tpu.memory_space<vmem>>, %arg3: memref<48x48xbf16, #tpu.memory_space<vmem>>, %arg4: memref<1x48xf32, #tpu.memory_space<vmem>>, %arg5: memref<48x3xbf16, #tpu.memory_space<vmem>>, %arg6: memref<1x3xf32, #tpu.memory_space<vmem>>, %arg7: memref<48x48xbf16, #tpu.memory_space<vmem>>, %arg8: memref<1x48xf32, #tpu.memory_space<vmem>>, %arg9: memref<48x6xbf16, #tpu.memory_space<vmem>>, %arg10: memref<1x6xf32, #tpu.memory_space<vmem>>, %arg11: memref<16x9xf32, #tpu.memory_space<vmem>>) attributes {dimension_semantics = [#tpu.dimension_semantics<arbitrary>], iteration_bounds = array<i64: 1>, scalar_prefetch = 0 : i64, scratch_operands = 0 : i64, tpu.core_type = #tpu.core_type<tc>, window_params = [{pipeline_mode = #tpu.pipeline_mode<synchronous>, transform_indices = @transform_0, window_bounds = array<i64: 16, 48>}, {pipeline_mode = #tpu.pipeline_mode<synchronous>, transform_indices = @transform_1, window_bounds = array<i64: 16, 48>}, {pipeline_mode = #tpu.pipeline_mode<synchronous>, transform_indices = @transform_2, window_bounds = array<i64: 48, 48>}, {pipeline_mode = #tpu.pipeline_mode<synchronous>, transform_indices = @transform_3, window_bounds = array<i64: 1, 48>}, {pipeline_mode = #tpu.pipeline_mode<synchronous>, transform_indices = @transform_4, window_bounds = array<i64: 48, 3>}, {pipeline_mode = #tpu.pipeline_mode<synchronous>, transform_indices = @transform_5, window_bounds = array<i64: 1, 3>}, {pipeline_mode = #tpu.pipeline_mode<synchronous>, transform_indices = @transform_6, window_bounds = array<i64: 48, 48>}, {pipeline_mode = #tpu.pipeline_mode<synchronous>, transform_indices = @transform_7, window_bounds = array<i64: 1, 48>}, {pipeline_mode = #tpu.pipeline_mode<synchronous>, transform_indices = @transform_8, window_bounds = array<i64: 48, 6>}, {pipeline_mode = #tpu.pipeline_mode<synchronous>, transform_indices = @transform_9, window_bounds = array<i64: 1, 6>}, {pipeline_mode = #tpu.pipeline_mode<synchronous>, transform_indices = @transform_10, window_bounds = array<i64: 16, 9>}]} {
    %c0 = arith.constant 0 : index
    %c0_0 = arith.constant 0 : index
    %0 = vector.load %arg1[%c0, %c0_0] : memref<16x48xf32, #tpu.memory_space<vmem>>, vector<16x48xf32>
    %c0_1 = arith.constant 0 : index
    %c0_2 = arith.constant 0 : index
    %1 = vector.load %arg3[%c0_1, %c0_2] : memref<48x48xbf16, #tpu.memory_space<vmem>>, vector<48x48xbf16>
    %2 = arith.truncf %0 : vector<16x48xf32> to vector<16x48xbf16>
    %cst = arith.constant dense<0.000000e+00> : vector<16x48xf32>
    %3 = tpu.matmul %2, %1, %cst {dimension_numbers = #tpu.dot_dimension_numbers<[1], [0], [0], [1], [0, 0, 1, 1], [], []>} : vector<16x48xbf16>, vector<48x48xbf16>, vector<16x48xf32> -> vector<16x48xf32>
    %c0_3 = arith.constant 0 : index
    %c0_4 = arith.constant 0 : index
    %4 = vector.load %arg4[%c0_3, %c0_4] : memref<1x48xf32, #tpu.memory_space<vmem>>, vector<1x48xf32>
    %5 = vector.broadcast %4 : vector<1x48xf32> to vector<16x48xf32>
    %6 = arith.addf %3, %5 : vector<16x48xf32>
    %cst_5 = arith.constant 0.000000e+00 : f32
    %7 = vector.broadcast %cst_5 : f32 to vector<16x48xf32>
    %8 = arith.maximumf %6, %7 : vector<16x48xf32>
    %c0_6 = arith.constant 0 : index
    %c0_7 = arith.constant 0 : index
    %9 = vector.load %arg5[%c0_6, %c0_7] : memref<48x3xbf16, #tpu.memory_space<vmem>>, vector<48x3xbf16>
    %10 = arith.truncf %8 : vector<16x48xf32> to vector<16x48xbf16>
    %cst_8 = arith.constant dense<0.000000e+00> : vector<16x3xf32>
    %11 = tpu.matmul %10, %9, %cst_8 {dimension_numbers = #tpu.dot_dimension_numbers<[1], [0], [0], [1], [0, 0, 1, 1], [], []>} : vector<16x48xbf16>, vector<48x3xbf16>, vector<16x3xf32> -> vector<16x3xf32>
    %c0_9 = arith.constant 0 : index
    %c0_10 = arith.constant 0 : index
    %12 = vector.load %arg6[%c0_9, %c0_10] : memref<1x3xf32, #tpu.memory_space<vmem>>, vector<1x3xf32>
    %13 = vector.broadcast %12 : vector<1x3xf32> to vector<16x3xf32>
    %14 = arith.addf %11, %13 : vector<16x3xf32>
    %c0_11 = arith.constant 0 : index
    %c0_12 = arith.constant 0 : index
    %15 = vector.load %arg2[%c0_11, %c0_12] : memref<16x48xf32, #tpu.memory_space<vmem>>, vector<16x48xf32>
    %c0_13 = arith.constant 0 : index
    %c0_14 = arith.constant 0 : index
    %16 = vector.load %arg7[%c0_13, %c0_14] : memref<48x48xbf16, #tpu.memory_space<vmem>>, vector<48x48xbf16>
    %17 = arith.truncf %15 : vector<16x48xf32> to vector<16x48xbf16>
    %cst_15 = arith.constant dense<0.000000e+00> : vector<16x48xf32>
    %18 = tpu.matmul %17, %16, %cst_15 {dimension_numbers = #tpu.dot_dimension_numbers<[1], [0], [0], [1], [0, 0, 1, 1], [], []>} : vector<16x48xbf16>, vector<48x48xbf16>, vector<16x48xf32> -> vector<16x48xf32>
    %c0_16 = arith.constant 0 : index
    %c0_17 = arith.constant 0 : index
    %19 = vector.load %arg8[%c0_16, %c0_17] : memref<1x48xf32, #tpu.memory_space<vmem>>, vector<1x48xf32>
    %20 = vector.broadcast %19 : vector<1x48xf32> to vector<16x48xf32>
    %21 = arith.addf %18, %20 : vector<16x48xf32>
    %cst_18 = arith.constant 0.000000e+00 : f32
    %22 = vector.broadcast %cst_18 : f32 to vector<16x48xf32>
    %23 = arith.maximumf %21, %22 : vector<16x48xf32>
    %c0_19 = arith.constant 0 : index
    %c0_20 = arith.constant 0 : index
    %24 = vector.load %arg9[%c0_19, %c0_20] : memref<48x6xbf16, #tpu.memory_space<vmem>>, vector<48x6xbf16>
    %25 = arith.truncf %23 : vector<16x48xf32> to vector<16x48xbf16>
    %cst_21 = arith.constant dense<0.000000e+00> : vector<16x6xf32>
    %26 = tpu.matmul %25, %24, %cst_21 {dimension_numbers = #tpu.dot_dimension_numbers<[1], [0], [0], [1], [0, 0, 1, 1], [], []>} : vector<16x48xbf16>, vector<48x6xbf16>, vector<16x6xf32> -> vector<16x6xf32>
    %c0_22 = arith.constant 0 : index
    %c0_23 = arith.constant 0 : index
    %27 = vector.load %arg10[%c0_22, %c0_23] : memref<1x6xf32, #tpu.memory_space<vmem>>, vector<1x6xf32>
    %28 = vector.broadcast %27 : vector<1x6xf32> to vector<16x6xf32>
    %29 = arith.addf %26, %28 : vector<16x6xf32>
    %30 = tpu.concatenate %14, %29 in 1 : vector<16x3xf32>, vector<16x6xf32> -> vector<16x9xf32>
    %c0_24 = arith.constant 0 : index
    %c0_25 = arith.constant 0 : index
    %31 = vector.load %arg11[%c0_24, %c0_25] : memref<16x9xf32, #tpu.memory_space<vmem>>, vector<16x9xf32>
    tpu.vector_store %arg11[%c0_24, %c0_25], %30 {strides = array<i32>} : memref<16x9xf32, #tpu.memory_space<vmem>>, vector<16x9xf32>,
    return
  }
  func.func @transform_0(%arg0: i32) -> (i32, i32) {
    %c0_i32 = arith.constant 0 : i32
    %c0_i32_0 = arith.constant 0 : i32
    %c0_i32_1 = arith.constant 0 : i32
    return %c0_i32, %c0_i32_0 : i32, i32
  }
  func.func @transform_1(%arg0: i32) -> (i32, i32) {
    %c0_i32 = arith.constant 0 : i32
    %c0_i32_0 = arith.constant 0 : i32
    %c0_i32_1 = arith.constant 0 : i32
    return %c0_i32, %c0_i32_0 : i32, i32
  }
  func.func @transform_2(%arg0: i32) -> (i32, i32) {
    %c0_i32 = arith.constant 0 : i32
    %c0_i32_0 = arith.constant 0 : i32
    %c0_i32_1 = arith.constant 0 : i32
    return %c0_i32, %c0_i32_0 : i32, i32
  }
  func.func @transform_3(%arg0: i32) -> (i32, i32) {
    %c0_i32 = arith.constant 0 : i32
    %c0_i32_0 = arith.constant 0 : i32
    %c0_i32_1 = arith.constant 0 : i32
    return %c0_i32, %c0_i32_0 : i32, i32
  }
  func.func @transform_4(%arg0: i32) -> (i32, i32) {
    %c0_i32 = arith.constant 0 : i32
    %c0_i32_0 = arith.constant 0 : i32
    %c0_i32_1 = arith.constant 0 : i32
    return %c0_i32, %c0_i32_0 : i32, i32
  }
  func.func @transform_5(%arg0: i32) -> (i32, i32) {
    %c0_i32 = arith.constant 0 : i32
    %c0_i32_0 = arith.constant 0 : i32
    %c0_i32_1 = arith.constant 0 : i32
    return %c0_i32, %c0_i32_0 : i32, i32
  }
  func.func @transform_6(%arg0: i32) -> (i32, i32) {
    %c0_i32 = arith.constant 0 : i32
    %c0_i32_0 = arith.constant 0 : i32
    %c0_i32_1 = arith.constant 0 : i32
    return %c0_i32, %c0_i32_0 : i32, i32
  }
  func.func @transform_7(%arg0: i32) -> (i32, i32) {
    %c0_i32 = arith.constant 0 : i32
    %c0_i32_0 = arith.constant 0 : i32
    %c0_i32_1 = arith.constant 0 : i32
    return %c0_i32, %c0_i32_0 : i32, i32
  }
  func.func @transform_8(%arg0: i32) -> (i32, i32) {
    %c0_i32 = arith.constant 0 : i32
    %c0_i32_0 = arith.constant 0 : i32
    %c0_i32_1 = arith.constant 0 : i32
    return %c0_i32, %c0_i32_0 : i32, i32
  }
  func.func @transform_9(%arg0: i32) -> (i32, i32) {
    %c0_i32 = arith.constant 0 : i32
    %c0_i32_0 = arith.constant 0 : i32
    %c0_i32_1 = arith.constant 0 : i32
    return %c0_i32, %c0_i32_0 : i32, i32
  }
  func.func @transform_10(%arg0: i32) -> (i32, i32) {
    %c0_i32 = arith.constant 0 : i32
    %c0_i32_0 = arith.constant 0 : i32
    %c0_i32_1 = arith.constant 0 : i32
    return %c0_i32, %c0_i32_0 : i32, i32
  }
}

module attributes {stable_mosaic.version = 11 : i64} {
  func.func @_stack_kernel(%arg0: i32, %arg1: memref<2x8x48xf32, #tpu.memory_space<vmem>>, %arg2: memref<2x8x48xf32, #tpu.memory_space<vmem>>, %arg3: memref<2x129x48xbf16, #tpu.memory_space<vmem>>, %arg4: memref<2x129x48xbf16, #tpu.memory_space<vmem>>, %arg5: memref<2x8xf32, #tpu.memory_space<vmem>>, %arg6: memref<2x48xf32, #tpu.memory_space<vmem>>, %arg7: memref<1x6x48x48xbf16, #tpu.memory_space<vmem>>, %arg8: memref<1x3x48x96xbf16, #tpu.memory_space<vmem>>, %arg9: memref<1x96x48xbf16, #tpu.memory_space<vmem>>, %arg10: memref<1x16x48xf32, #tpu.memory_space<vmem>>, %arg11: memref<1x8x96xf32, #tpu.memory_space<vmem>>, %arg12: memref<2x8x48xf32, #tpu.memory_space<vmem>>) attributes {dimension_semantics = [#tpu.dimension_semantics<arbitrary>], iteration_bounds = array<i64: 2>, scalar_prefetch = 0 : i64, scratch_operands = 0 : i64, tpu.core_type = #tpu.core_type<tc>, window_params = [{pipeline_mode = #tpu.pipeline_mode<synchronous>, transform_indices = @transform_0, window_bounds = array<i64: 2, 8, 48>}, {pipeline_mode = #tpu.pipeline_mode<synchronous>, transform_indices = @transform_1, window_bounds = array<i64: 2, 8, 48>}, {pipeline_mode = #tpu.pipeline_mode<synchronous>, transform_indices = @transform_2, window_bounds = array<i64: 2, 129, 48>}, {pipeline_mode = #tpu.pipeline_mode<synchronous>, transform_indices = @transform_3, window_bounds = array<i64: 2, 129, 48>}, {pipeline_mode = #tpu.pipeline_mode<synchronous>, transform_indices = @transform_4, window_bounds = array<i64: 2, 8>}, {pipeline_mode = #tpu.pipeline_mode<synchronous>, transform_indices = @transform_5, window_bounds = array<i64: 2, 48>}, {transform_indices = @transform_6, window_bounds = array<i64: 1, 6, 48, 48>}, {transform_indices = @transform_7, window_bounds = array<i64: 1, 3, 48, 96>}, {transform_indices = @transform_8, window_bounds = array<i64: 1, 96, 48>}, {transform_indices = @transform_9, window_bounds = array<i64: 1, 16, 48>}, {transform_indices = @transform_10, window_bounds = array<i64: 1, 8, 96>}, {pipeline_mode = #tpu.pipeline_mode<synchronous>, transform_indices = @transform_11, window_bounds = array<i64: 2, 8, 48>}]} {
    %c0_i32 = arith.constant 0 : i32
    %0 = arith.cmpi eq, %arg0, %c0_i32 : i32
    %1 = arith.extui %0 : i1 to i32
    %c0_i32_0 = arith.constant 0 : i32
    %2 = arith.cmpi ne, %1, %c0_i32_0 : i32
    scf.if %2 {
      %c0_173 = arith.constant 0 : index
      %c0_174 = arith.constant 0 : index
      %c0_175 = arith.constant 0 : index
      %578 = vector.load %arg1[%c0_173, %c0_174, %c0_175] : memref<2x8x48xf32, #tpu.memory_space<vmem>>, vector<2x8x48xf32>
      %c0_176 = arith.constant 0 : index
      %c0_177 = arith.constant 0 : index
      %c0_178 = arith.constant 0 : index
      %579 = vector.load %arg12[%c0_176, %c0_177, %c0_178] : memref<2x8x48xf32, #tpu.memory_space<vmem>>, vector<2x8x48xf32>
      tpu.vector_store %arg12[%c0_176, %c0_177, %c0_178], %578 {strides = array<i32>} : memref<2x8x48xf32, #tpu.memory_space<vmem>>, vector<2x8x48xf32>,
    } else {
    }
    %c0 = arith.constant 0 : index
    %c0_1 = arith.constant 0 : index
    %c0_2 = arith.constant 0 : index
    %3 = vector.load %arg12[%c0, %c0_1, %c0_2] : memref<2x8x48xf32, #tpu.memory_space<vmem>>, vector<2x8x48xf32>
    %c0_3 = arith.constant 0 : index
    %c0_4 = arith.constant 0 : index
    %c0_5 = arith.constant 0 : index
    %4 = vector.load %arg2[%c0_3, %c0_4, %c0_5] : memref<2x8x48xf32, #tpu.memory_space<vmem>>, vector<2x8x48xf32>
    %c0_6 = arith.constant 0 : index
    %c0_7 = arith.constant 0 : index
    %5 = vector.load %arg5[%c0_6, %c0_7] : memref<2x8xf32, #tpu.memory_space<vmem>>, vector<2x8xf32>
    %c0_8 = arith.constant 0 : index
    %c0_9 = arith.constant 0 : index
    %6 = vector.load %arg6[%c0_8, %c0_9] : memref<2x48xf32, #tpu.memory_space<vmem>>, vector<2x48xf32>
    %c0_10 = arith.constant 0 : index
    %c0_11 = arith.constant 0 : index
    %c0_12 = arith.constant 0 : index
    %c0_13 = arith.constant 0 : index
    %7 = vector.load %arg7[%c0_10, %c0_11, %c0_12, %c0_13] : memref<1x6x48x48xbf16, #tpu.memory_space<vmem>>, vector<1x1x48x48xbf16>
    %8 = vector.shape_cast %7 : vector<1x1x48x48xbf16> to vector<48x48xbf16>
    %c0_14 = arith.constant 0 : index
    %c1 = arith.constant 1 : index
    %c0_15 = arith.constant 0 : index
    %c0_16 = arith.constant 0 : index
    %9 = vector.load %arg7[%c0_14, %c1, %c0_15, %c0_16] : memref<1x6x48x48xbf16, #tpu.memory_space<vmem>>, vector<1x1x48x48xbf16>
    %10 = vector.shape_cast %9 : vector<1x1x48x48xbf16> to vector<48x48xbf16>
    %c0_17 = arith.constant 0 : index
    %c2 = arith.constant 2 : index
    %c0_18 = arith.constant 0 : index
    %c0_19 = arith.constant 0 : index
    %11 = vector.load %arg7[%c0_17, %c2, %c0_18, %c0_19] : memref<1x6x48x48xbf16, #tpu.memory_space<vmem>>, vector<1x1x48x48xbf16>
    %12 = vector.shape_cast %11 : vector<1x1x48x48xbf16> to vector<48x48xbf16>
    %c0_20 = arith.constant 0 : index
    %c3 = arith.constant 3 : index
    %c0_21 = arith.constant 0 : index
    %c0_22 = arith.constant 0 : index
    %13 = vector.load %arg7[%c0_20, %c3, %c0_21, %c0_22] : memref<1x6x48x48xbf16, #tpu.memory_space<vmem>>, vector<1x1x48x48xbf16>
    %14 = vector.shape_cast %13 : vector<1x1x48x48xbf16> to vector<48x48xbf16>
    %c0_23 = arith.constant 0 : index
    %c4 = arith.constant 4 : index
    %c0_24 = arith.constant 0 : index
    %c0_25 = arith.constant 0 : index
    %15 = vector.load %arg7[%c0_23, %c4, %c0_24, %c0_25] : memref<1x6x48x48xbf16, #tpu.memory_space<vmem>>, vector<1x1x48x48xbf16>
    %16 = vector.shape_cast %15 : vector<1x1x48x48xbf16> to vector<48x48xbf16>
    %c0_26 = arith.constant 0 : index
    %c5 = arith.constant 5 : index
    %c0_27 = arith.constant 0 : index
    %c0_28 = arith.constant 0 : index
    %17 = vector.load %arg7[%c0_26, %c5, %c0_27, %c0_28] : memref<1x6x48x48xbf16, #tpu.memory_space<vmem>>, vector<1x1x48x48xbf16>
    %18 = vector.shape_cast %17 : vector<1x1x48x48xbf16> to vector<48x48xbf16>
    %c0_29 = arith.constant 0 : index
    %c0_30 = arith.constant 0 : index
    %c0_31 = arith.constant 0 : index
    %c0_32 = arith.constant 0 : index
    %19 = vector.load %arg8[%c0_29, %c0_30, %c0_31, %c0_32] : memref<1x3x48x96xbf16, #tpu.memory_space<vmem>>, vector<1x1x48x96xbf16>
    %20 = vector.shape_cast %19 : vector<1x1x48x96xbf16> to vector<48x96xbf16>
    %c0_33 = arith.constant 0 : index
    %c1_34 = arith.constant 1 : index
    %c0_35 = arith.constant 0 : index
    %c0_36 = arith.constant 0 : index
    %21 = vector.load %arg8[%c0_33, %c1_34, %c0_35, %c0_36] : memref<1x3x48x96xbf16, #tpu.memory_space<vmem>>, vector<1x1x48x96xbf16>
    %22 = vector.shape_cast %21 : vector<1x1x48x96xbf16> to vector<48x96xbf16>
    %c0_37 = arith.constant 0 : index
    %c2_38 = arith.constant 2 : index
    %c0_39 = arith.constant 0 : index
    %c0_40 = arith.constant 0 : index
    %23 = vector.load %arg8[%c0_37, %c2_38, %c0_39, %c0_40] : memref<1x3x48x96xbf16, #tpu.memory_space<vmem>>, vector<1x1x48x96xbf16>
    %24 = vector.shape_cast %23 : vector<1x1x48x96xbf16> to vector<48x96xbf16>
    %c0_41 = arith.constant 0 : index
    %c0_42 = arith.constant 0 : index
    %c0_43 = arith.constant 0 : index
    %25 = vector.load %arg9[%c0_41, %c0_42, %c0_43] : memref<1x96x48xbf16, #tpu.memory_space<vmem>>, vector<1x96x48xbf16>
    %26 = vector.shape_cast %25 : vector<1x96x48xbf16> to vector<96x48xbf16>
    %c0_44 = arith.constant 0 : index
    %c0_45 = arith.constant 0 : index
    %c0_46 = arith.constant 0 : index
    %27 = vector.load %arg10[%c0_44, %c0_45, %c0_46] : memref<1x16x48xf32, #tpu.memory_space<vmem>>, vector<1x16x48xf32>
    %28 = vector.shape_cast %27 : vector<1x16x48xf32> to vector<16x48xf32>
    %c0_47 = arith.constant 0 : index
    %c0_48 = arith.constant 0 : index
    %c0_49 = arith.constant 0 : index
    %29 = vector.load %arg11[%c0_47, %c0_48, %c0_49] : memref<1x8x96xf32, #tpu.memory_space<vmem>>, vector<1x8x96xf32>
    %30 = vector.shape_cast %29 : vector<1x8x96xf32> to vector<8x96xf32>
    %31 = vector.extract_strided_slice %28 {offsets = [0, 0], sizes = [1, 48], strides = [1, 1]} : vector<16x48xf32> to vector<1x48xf32>
    %32 = vector.extract_strided_slice %28 {offsets = [1, 0], sizes = [1, 48], strides = [1, 1]} : vector<16x48xf32> to vector<1x48xf32>
    %33 = vector.extract_strided_slice %28 {offsets = [2, 0], sizes = [1, 48], strides = [1, 1]} : vector<16x48xf32> to vector<1x48xf32>
    %34 = vector.extract_strided_slice %28 {offsets = [3, 0], sizes = [1, 48], strides = [1, 1]} : vector<16x48xf32> to vector<1x48xf32>
    %35 = vector.extract_strided_slice %28 {offsets = [4, 0], sizes = [1, 48], strides = [1, 1]} : vector<16x48xf32> to vector<1x48xf32>
    %36 = vector.extract_strided_slice %28 {offsets = [5, 0], sizes = [1, 48], strides = [1, 1]} : vector<16x48xf32> to vector<1x48xf32>
    %37 = vector.extract_strided_slice %28 {offsets = [6, 0], sizes = [1, 48], strides = [1, 1]} : vector<16x48xf32> to vector<1x48xf32>
    %38 = vector.extract_strided_slice %28 {offsets = [7, 0], sizes = [1, 48], strides = [1, 1]} : vector<16x48xf32> to vector<1x48xf32>
    %39 = vector.extract_strided_slice %28 {offsets = [8, 0], sizes = [1, 48], strides = [1, 1]} : vector<16x48xf32> to vector<1x48xf32>
    %40 = vector.extract_strided_slice %28 {offsets = [9, 0], sizes = [1, 48], strides = [1, 1]} : vector<16x48xf32> to vector<1x48xf32>
    %41 = vector.extract_strided_slice %28 {offsets = [10, 0], sizes = [1, 48], strides = [1, 1]} : vector<16x48xf32> to vector<1x48xf32>
    %42 = vector.extract_strided_slice %28 {offsets = [11, 0], sizes = [1, 48], strides = [1, 1]} : vector<16x48xf32> to vector<1x48xf32>
    %43 = vector.extract_strided_slice %28 {offsets = [12, 0], sizes = [1, 48], strides = [1, 1]} : vector<16x48xf32> to vector<1x48xf32>
    %44 = vector.extract_strided_slice %30 {offsets = [0, 0], sizes = [1, 96], strides = [1, 1]} : vector<8x96xf32> to vector<1x96xf32>
    %45 = vector.extract_strided_slice %30 {offsets = [1, 0], sizes = [1, 96], strides = [1, 1]} : vector<8x96xf32> to vector<1x96xf32>
    %46 = vector.extract_strided_slice %30 {offsets = [2, 0], sizes = [1, 96], strides = [1, 1]} : vector<8x96xf32> to vector<1x96xf32>
    %47 = arith.truncf %6 : vector<2x48xf32> to vector<2x48xbf16>
    %cst = arith.constant dense<0.000000e+00> : vector<2x96xf32>
    %48 = tpu.matmul %47, %20, %cst {dimension_numbers = #tpu.dot_dimension_numbers<[1], [0], [0], [1], [0, 0, 1, 1], [], []>} : vector<2x48xbf16>, vector<48x96xbf16>, vector<2x96xf32> -> vector<2x96xf32>
    %49 = vector.broadcast %44 : vector<1x96xf32> to vector<2x96xf32>
    %50 = arith.addf %48, %49 : vector<2x96xf32>
    %51 = vector.extract_strided_slice %50 {offsets = [0, 0], sizes = [2, 48], strides = [1, 1]} : vector<2x96xf32> to vector<2x48xf32>
    %cst_50 = arith.constant 1.000000e+00 : f32
    %52 = vector.broadcast %cst_50 : f32 to vector<2x48xf32>
    %53 = arith.addf %52, %51 : vector<2x48xf32>
    %54 = vector.shape_cast %53 : vector<2x48xf32> to vector<2x1x48xf32>
    %55 = vector.extract_strided_slice %50 {offsets = [0, 48], sizes = [2, 48], strides = [1, 1]} : vector<2x96xf32> to vector<2x48xf32>
    %56 = vector.shape_cast %55 : vector<2x48xf32> to vector<2x1x48xf32>
    %cst_51 = arith.constant dense<0.000000e+00> : vector<2x8xf32>
    %57 = vector.multi_reduction <add>, %3, %cst_51 [2] : vector<2x8x48xf32> to vector<2x8xf32>
    %58 = vector.shape_cast %57 : vector<2x8xf32> to vector<2x8x1xf32>
    %cst_52 = arith.constant 4.800000e+01 : f32
    %59 = vector.broadcast %cst_52 : f32 to vector<2x8x1xf32>
    %60 = arith.divf %58, %59 : vector<2x8x1xf32>
    %61 = vector.broadcast %60 : vector<2x8x1xf32> to vector<2x8x48xf32>
    %62 = arith.subf %3, %61 : vector<2x8x48xf32>
    %63 = vector.broadcast %60 : vector<2x8x1xf32> to vector<2x8x48xf32>
    %64 = arith.subf %3, %63 : vector<2x8x48xf32>
    %65 = arith.mulf %62, %64 : vector<2x8x48xf32>
    %cst_53 = arith.constant dense<0.000000e+00> : vector<2x8xf32>
    %66 = vector.multi_reduction <add>, %65, %cst_53 [2] : vector<2x8x48xf32> to vector<2x8xf32>
    %67 = vector.shape_cast %66 : vector<2x8xf32> to vector<2x8x1xf32>
    %cst_54 = arith.constant 4.800000e+01 : f32
    %68 = vector.broadcast %cst_54 : f32 to vector<2x8x1xf32>
    %69 = arith.divf %67, %68 : vector<2x8x1xf32>
    %70 = vector.broadcast %60 : vector<2x8x1xf32> to vector<2x8x48xf32>
    %71 = arith.subf %3, %70 : vector<2x8x48xf32>
    %cst_55 = arith.constant 9.99999974E-6 : f32
    %72 = vector.broadcast %cst_55 : f32 to vector<2x8x1xf32>
    %73 = arith.addf %69, %72 : vector<2x8x1xf32>
    %74 = math.rsqrt %73 : vector<2x8x1xf32>
    %75 = vector.broadcast %74 : vector<2x8x1xf32> to vector<2x8x48xf32>
    %76 = arith.mulf %71, %75 : vector<2x8x48xf32>
    %77 = vector.shape_cast %31 : vector<1x48xf32> to vector<1x1x48xf32>
    %78 = vector.broadcast %77 : vector<1x1x48xf32> to vector<2x8x48xf32>
    %79 = arith.mulf %76, %78 : vector<2x8x48xf32>
    %80 = vector.shape_cast %32 : vector<1x48xf32> to vector<1x1x48xf32>
    %81 = vector.broadcast %80 : vector<1x1x48xf32> to vector<2x8x48xf32>
    %82 = arith.addf %79, %81 : vector<2x8x48xf32>
    %83 = vector.broadcast %54 : vector<2x1x48xf32> to vector<2x8x48xf32>
    %84 = arith.mulf %82, %83 : vector<2x8x48xf32>
    %85 = vector.broadcast %56 : vector<2x1x48xf32> to vector<2x8x48xf32>
    %86 = arith.addf %84, %85 : vector<2x8x48xf32>
    %87 = arith.addf %86, %4 : vector<2x8x48xf32>
    %88 = vector.shape_cast %87 : vector<2x8x48xf32> to vector<16x48xf32>
    %89 = arith.truncf %88 : vector<16x48xf32> to vector<16x48xbf16>
    %cst_56 = arith.constant dense<0.000000e+00> : vector<16x96xf32>
    %90 = tpu.matmul %89, %22, %cst_56 {dimension_numbers = #tpu.dot_dimension_numbers<[1], [0], [0], [1], [0, 0, 1, 1], [], []>} : vector<16x48xbf16>, vector<48x96xbf16>, vector<16x96xf32> -> vector<16x96xf32>
    %91 = vector.broadcast %45 : vector<1x96xf32> to vector<16x96xf32>
    %92 = arith.addf %90, %91 : vector<16x96xf32>
    %93 = vector.shape_cast %86 : vector<2x8x48xf32> to vector<16x48xf32>
    %94 = arith.truncf %93 : vector<16x48xf32> to vector<16x48xbf16>
    %cst_57 = arith.constant dense<0.000000e+00> : vector<16x48xf32>
    %95 = tpu.matmul %94, %8, %cst_57 {dimension_numbers = #tpu.dot_dimension_numbers<[1], [0], [0], [1], [0, 0, 1, 1], [], []>} : vector<16x48xbf16>, vector<48x48xbf16>, vector<16x48xf32> -> vector<16x48xf32>
    %96 = vector.broadcast %37 : vector<1x48xf32> to vector<16x48xf32>
    %97 = arith.addf %95, %96 : vector<16x48xf32>
    %98 = vector.extract_strided_slice %92 {offsets = [0, 0], sizes = [8, 48], strides = [1, 1]} : vector<16x96xf32> to vector<8x48xf32>
    %99 = vector.extract_strided_slice %92 {offsets = [8, 0], sizes = [8, 48], strides = [1, 1]} : vector<16x96xf32> to vector<8x48xf32>
    %100 = vector.extract_strided_slice %92 {offsets = [0, 48], sizes = [8, 48], strides = [1, 1]} : vector<16x96xf32> to vector<8x48xf32>
    %101 = vector.extract_strided_slice %92 {offsets = [8, 48], sizes = [8, 48], strides = [1, 1]} : vector<16x96xf32> to vector<8x48xf32>
    %102 = vector.extract_strided_slice %97 {offsets = [0, 0], sizes = [8, 48], strides = [1, 1]} : vector<16x48xf32> to vector<8x48xf32>
    %103 = vector.extract_strided_slice %97 {offsets = [8, 0], sizes = [8, 48], strides = [1, 1]} : vector<16x48xf32> to vector<8x48xf32>
    %104 = vector.extract_strided_slice %5 {offsets = [0, 0], sizes = [1, 8], strides = [1, 1]} : vector<2x8xf32> to vector<1x8xf32>
    %105 = vector.extract_strided_slice %5 {offsets = [1, 0], sizes = [1, 8], strides = [1, 1]} : vector<2x8xf32> to vector<1x8xf32>
    %106 = vector.extract_strided_slice %98 {offsets = [0, 0], sizes = [8, 12], strides = [1, 1]} : vector<8x48xf32> to vector<8x12xf32>
    %107 = arith.truncf %106 : vector<8x12xf32> to vector<8x12xbf16>
    %108 = vector.extract_strided_slice %100 {offsets = [0, 0], sizes = [8, 12], strides = [1, 1]} : vector<8x48xf32> to vector<8x12xf32>
    %109 = arith.truncf %108 : vector<8x12xf32> to vector<8x12xbf16>
    %110 = vector.extract_strided_slice %102 {offsets = [0, 0], sizes = [8, 12], strides = [1, 1]} : vector<8x48xf32> to vector<8x12xf32>
    %111 = arith.truncf %110 : vector<8x12xf32> to vector<8x12xbf16>
    "tpu.trace_start"() <{level = 10 : i32, message = "qd,kd->qk"}> : () -> ()
    %cst_58 = arith.constant dense<0.000000e+00> : vector<8x8xf32>
    %112 = tpu.matmul %107, %109, %cst_58 {dimension_numbers = #tpu.dot_dimension_numbers<[1], [1], [0], [0], [0, 0, 1, 0], [], []>} : vector<8x12xbf16>, vector<8x12xbf16>, vector<8x8xf32> -> vector<8x8xf32>
    "tpu.trace_stop"() : () -> ()
    %cst_59 = arith.constant 0.288675129 : f32
    %113 = vector.broadcast %cst_59 : f32 to vector<8x8xf32>
    %114 = arith.mulf %112, %113 : vector<8x8xf32>
    %115 = vector.broadcast %104 : vector<1x8xf32> to vector<8x8xf32>
    %116 = arith.addf %114, %115 : vector<8x8xf32>
    %cst_60 = arith.constant dense<0xFF800000> : vector<8xf32>
    %117 = vector.multi_reduction <maximumf>, %116, %cst_60 [1] : vector<8x8xf32> to vector<8xf32>
    %118 = vector.shape_cast %117 : vector<8xf32> to vector<8x1xf32>
    %119 = vector.broadcast %118 : vector<8x1xf32> to vector<8x8xf32>
    %120 = arith.subf %116, %119 : vector<8x8xf32>
    %121 = math.exp %120 : vector<8x8xf32>
    %cst_61 = arith.constant dense<0.000000e+00> : vector<8xf32>
    %122 = vector.multi_reduction <add>, %121, %cst_61 [1] : vector<8x8xf32> to vector<8xf32>
    %123 = vector.shape_cast %122 : vector<8xf32> to vector<8x1xf32>
    %124 = tpu.reciprocal %123 {approx = true} : vector<8x1xf32> -> vector<8x1xf32>
    %125 = vector.broadcast %124 : vector<8x1xf32> to vector<8x8xf32>
    %126 = arith.mulf %121, %125 : vector<8x8xf32>
    %127 = arith.truncf %126 : vector<8x8xf32> to vector<8x8xbf16>
    %cst_62 = arith.constant dense<0.000000e+00> : vector<8x12xf32>
    %128 = tpu.matmul %127, %111, %cst_62 {dimension_numbers = #tpu.dot_dimension_numbers<[1], [0], [0], [1], [0, 0, 1, 1], [], []>} : vector<8x8xbf16>, vector<8x12xbf16>, vector<8x12xf32> -> vector<8x12xf32>
    %129 = vector.extract_strided_slice %98 {offsets = [0, 12], sizes = [8, 12], strides = [1, 1]} : vector<8x48xf32> to vector<8x12xf32>
    %130 = arith.truncf %129 : vector<8x12xf32> to vector<8x12xbf16>
    %131 = vector.extract_strided_slice %100 {offsets = [0, 12], sizes = [8, 12], strides = [1, 1]} : vector<8x48xf32> to vector<8x12xf32>
    %132 = arith.truncf %131 : vector<8x12xf32> to vector<8x12xbf16>
    %133 = vector.extract_strided_slice %102 {offsets = [0, 12], sizes = [8, 12], strides = [1, 1]} : vector<8x48xf32> to vector<8x12xf32>
    %134 = arith.truncf %133 : vector<8x12xf32> to vector<8x12xbf16>
    "tpu.trace_start"() <{level = 10 : i32, message = "qd,kd->qk"}> : () -> ()
    %cst_63 = arith.constant dense<0.000000e+00> : vector<8x8xf32>
    %135 = tpu.matmul %130, %132, %cst_63 {dimension_numbers = #tpu.dot_dimension_numbers<[1], [1], [0], [0], [0, 0, 1, 0], [], []>} : vector<8x12xbf16>, vector<8x12xbf16>, vector<8x8xf32> -> vector<8x8xf32>
    "tpu.trace_stop"() : () -> ()
    %cst_64 = arith.constant 0.288675129 : f32
    %136 = vector.broadcast %cst_64 : f32 to vector<8x8xf32>
    %137 = arith.mulf %135, %136 : vector<8x8xf32>
    %138 = vector.broadcast %104 : vector<1x8xf32> to vector<8x8xf32>
    %139 = arith.addf %137, %138 : vector<8x8xf32>
    %cst_65 = arith.constant dense<0xFF800000> : vector<8xf32>
    %140 = vector.multi_reduction <maximumf>, %139, %cst_65 [1] : vector<8x8xf32> to vector<8xf32>
    %141 = vector.shape_cast %140 : vector<8xf32> to vector<8x1xf32>
    %142 = vector.broadcast %141 : vector<8x1xf32> to vector<8x8xf32>
    %143 = arith.subf %139, %142 : vector<8x8xf32>
    %144 = math.exp %143 : vector<8x8xf32>
    %cst_66 = arith.constant dense<0.000000e+00> : vector<8xf32>
    %145 = vector.multi_reduction <add>, %144, %cst_66 [1] : vector<8x8xf32> to vector<8xf32>
    %146 = vector.shape_cast %145 : vector<8xf32> to vector<8x1xf32>
    %147 = tpu.reciprocal %146 {approx = true} : vector<8x1xf32> -> vector<8x1xf32>
    %148 = vector.broadcast %147 : vector<8x1xf32> to vector<8x8xf32>
    %149 = arith.mulf %144, %148 : vector<8x8xf32>
    %150 = arith.truncf %149 : vector<8x8xf32> to vector<8x8xbf16>
    %cst_67 = arith.constant dense<0.000000e+00> : vector<8x12xf32>
    %151 = tpu.matmul %150, %134, %cst_67 {dimension_numbers = #tpu.dot_dimension_numbers<[1], [0], [0], [1], [0, 0, 1, 1], [], []>} : vector<8x8xbf16>, vector<8x12xbf16>, vector<8x12xf32> -> vector<8x12xf32>
    %152 = vector.extract_strided_slice %98 {offsets = [0, 24], sizes = [8, 12], strides = [1, 1]} : vector<8x48xf32> to vector<8x12xf32>
    %153 = arith.truncf %152 : vector<8x12xf32> to vector<8x12xbf16>
    %154 = vector.extract_strided_slice %100 {offsets = [0, 24], sizes = [8, 12], strides = [1, 1]} : vector<8x48xf32> to vector<8x12xf32>
    %155 = arith.truncf %154 : vector<8x12xf32> to vector<8x12xbf16>
    %156 = vector.extract_strided_slice %102 {offsets = [0, 24], sizes = [8, 12], strides = [1, 1]} : vector<8x48xf32> to vector<8x12xf32>
    %157 = arith.truncf %156 : vector<8x12xf32> to vector<8x12xbf16>
    "tpu.trace_start"() <{level = 10 : i32, message = "qd,kd->qk"}> : () -> ()
    %cst_68 = arith.constant dense<0.000000e+00> : vector<8x8xf32>
    %158 = tpu.matmul %153, %155, %cst_68 {dimension_numbers = #tpu.dot_dimension_numbers<[1], [1], [0], [0], [0, 0, 1, 0], [], []>} : vector<8x12xbf16>, vector<8x12xbf16>, vector<8x8xf32> -> vector<8x8xf32>
    "tpu.trace_stop"() : () -> ()
    %cst_69 = arith.constant 0.288675129 : f32
    %159 = vector.broadcast %cst_69 : f32 to vector<8x8xf32>
    %160 = arith.mulf %158, %159 : vector<8x8xf32>
    %161 = vector.broadcast %104 : vector<1x8xf32> to vector<8x8xf32>
    %162 = arith.addf %160, %161 : vector<8x8xf32>
    %cst_70 = arith.constant dense<0xFF800000> : vector<8xf32>
    %163 = vector.multi_reduction <maximumf>, %162, %cst_70 [1] : vector<8x8xf32> to vector<8xf32>
    %164 = vector.shape_cast %163 : vector<8xf32> to vector<8x1xf32>
    %165 = vector.broadcast %164 : vector<8x1xf32> to vector<8x8xf32>
    %166 = arith.subf %162, %165 : vector<8x8xf32>
    %167 = math.exp %166 : vector<8x8xf32>
    %cst_71 = arith.constant dense<0.000000e+00> : vector<8xf32>
    %168 = vector.multi_reduction <add>, %167, %cst_71 [1] : vector<8x8xf32> to vector<8xf32>
    %169 = vector.shape_cast %168 : vector<8xf32> to vector<8x1xf32>
    %170 = tpu.reciprocal %169 {approx = true} : vector<8x1xf32> -> vector<8x1xf32>
    %171 = vector.broadcast %170 : vector<8x1xf32> to vector<8x8xf32>
    %172 = arith.mulf %167, %171 : vector<8x8xf32>
    %173 = arith.truncf %172 : vector<8x8xf32> to vector<8x8xbf16>
    %cst_72 = arith.constant dense<0.000000e+00> : vector<8x12xf32>
    %174 = tpu.matmul %173, %157, %cst_72 {dimension_numbers = #tpu.dot_dimension_numbers<[1], [0], [0], [1], [0, 0, 1, 1], [], []>} : vector<8x8xbf16>, vector<8x12xbf16>, vector<8x12xf32> -> vector<8x12xf32>
    %175 = vector.extract_strided_slice %98 {offsets = [0, 36], sizes = [8, 12], strides = [1, 1]} : vector<8x48xf32> to vector<8x12xf32>
    %176 = arith.truncf %175 : vector<8x12xf32> to vector<8x12xbf16>
    %177 = vector.extract_strided_slice %100 {offsets = [0, 36], sizes = [8, 12], strides = [1, 1]} : vector<8x48xf32> to vector<8x12xf32>
    %178 = arith.truncf %177 : vector<8x12xf32> to vector<8x12xbf16>
    %179 = vector.extract_strided_slice %102 {offsets = [0, 36], sizes = [8, 12], strides = [1, 1]} : vector<8x48xf32> to vector<8x12xf32>
    %180 = arith.truncf %179 : vector<8x12xf32> to vector<8x12xbf16>
    "tpu.trace_start"() <{level = 10 : i32, message = "qd,kd->qk"}> : () -> ()
    %cst_73 = arith.constant dense<0.000000e+00> : vector<8x8xf32>
    %181 = tpu.matmul %176, %178, %cst_73 {dimension_numbers = #tpu.dot_dimension_numbers<[1], [1], [0], [0], [0, 0, 1, 0], [], []>} : vector<8x12xbf16>, vector<8x12xbf16>, vector<8x8xf32> -> vector<8x8xf32>
    "tpu.trace_stop"() : () -> ()
    %cst_74 = arith.constant 0.288675129 : f32
    %182 = vector.broadcast %cst_74 : f32 to vector<8x8xf32>
    %183 = arith.mulf %181, %182 : vector<8x8xf32>
    %184 = vector.broadcast %104 : vector<1x8xf32> to vector<8x8xf32>
    %185 = arith.addf %183, %184 : vector<8x8xf32>
    %cst_75 = arith.constant dense<0xFF800000> : vector<8xf32>
    %186 = vector.multi_reduction <maximumf>, %185, %cst_75 [1] : vector<8x8xf32> to vector<8xf32>
    %187 = vector.shape_cast %186 : vector<8xf32> to vector<8x1xf32>
    %188 = vector.broadcast %187 : vector<8x1xf32> to vector<8x8xf32>
    %189 = arith.subf %185, %188 : vector<8x8xf32>
    %190 = math.exp %189 : vector<8x8xf32>
    %cst_76 = arith.constant dense<0.000000e+00> : vector<8xf32>
    %191 = vector.multi_reduction <add>, %190, %cst_76 [1] : vector<8x8xf32> to vector<8xf32>
    %192 = vector.shape_cast %191 : vector<8xf32> to vector<8x1xf32>
    %193 = tpu.reciprocal %192 {approx = true} : vector<8x1xf32> -> vector<8x1xf32>
    %194 = vector.broadcast %193 : vector<8x1xf32> to vector<8x8xf32>
    %195 = arith.mulf %190, %194 : vector<8x8xf32>
    %196 = arith.truncf %195 : vector<8x8xf32> to vector<8x8xbf16>
    %cst_77 = arith.constant dense<0.000000e+00> : vector<8x12xf32>
    %197 = tpu.matmul %196, %180, %cst_77 {dimension_numbers = #tpu.dot_dimension_numbers<[1], [0], [0], [1], [0, 0, 1, 1], [], []>} : vector<8x8xbf16>, vector<8x12xbf16>, vector<8x12xf32> -> vector<8x12xf32>
    %198 = tpu.concatenate %128, %151, %174, %197 in 1 : vector<8x12xf32>, vector<8x12xf32>, vector<8x12xf32>, vector<8x12xf32> -> vector<8x48xf32>
    %199 = vector.extract_strided_slice %99 {offsets = [0, 0], sizes = [8, 12], strides = [1, 1]} : vector<8x48xf32> to vector<8x12xf32>
    %200 = arith.truncf %199 : vector<8x12xf32> to vector<8x12xbf16>
    %201 = vector.extract_strided_slice %101 {offsets = [0, 0], sizes = [8, 12], strides = [1, 1]} : vector<8x48xf32> to vector<8x12xf32>
    %202 = arith.truncf %201 : vector<8x12xf32> to vector<8x12xbf16>
    %203 = vector.extract_strided_slice %103 {offsets = [0, 0], sizes = [8, 12], strides = [1, 1]} : vector<8x48xf32> to vector<8x12xf32>
    %204 = arith.truncf %203 : vector<8x12xf32> to vector<8x12xbf16>
    "tpu.trace_start"() <{level = 10 : i32, message = "qd,kd->qk"}> : () -> ()
    %cst_78 = arith.constant dense<0.000000e+00> : vector<8x8xf32>
    %205 = tpu.matmul %200, %202, %cst_78 {dimension_numbers = #tpu.dot_dimension_numbers<[1], [1], [0], [0], [0, 0, 1, 0], [], []>} : vector<8x12xbf16>, vector<8x12xbf16>, vector<8x8xf32> -> vector<8x8xf32>
    "tpu.trace_stop"() : () -> ()
    %cst_79 = arith.constant 0.288675129 : f32
    %206 = vector.broadcast %cst_79 : f32 to vector<8x8xf32>
    %207 = arith.mulf %205, %206 : vector<8x8xf32>
    %208 = vector.broadcast %105 : vector<1x8xf32> to vector<8x8xf32>
    %209 = arith.addf %207, %208 : vector<8x8xf32>
    %cst_80 = arith.constant dense<0xFF800000> : vector<8xf32>
    %210 = vector.multi_reduction <maximumf>, %209, %cst_80 [1] : vector<8x8xf32> to vector<8xf32>
    %211 = vector.shape_cast %210 : vector<8xf32> to vector<8x1xf32>
    %212 = vector.broadcast %211 : vector<8x1xf32> to vector<8x8xf32>
    %213 = arith.subf %209, %212 : vector<8x8xf32>
    %214 = math.exp %213 : vector<8x8xf32>
    %cst_81 = arith.constant dense<0.000000e+00> : vector<8xf32>
    %215 = vector.multi_reduction <add>, %214, %cst_81 [1] : vector<8x8xf32> to vector<8xf32>
    %216 = vector.shape_cast %215 : vector<8xf32> to vector<8x1xf32>
    %217 = tpu.reciprocal %216 {approx = true} : vector<8x1xf32> -> vector<8x1xf32>
    %218 = vector.broadcast %217 : vector<8x1xf32> to vector<8x8xf32>
    %219 = arith.mulf %214, %218 : vector<8x8xf32>
    %220 = arith.truncf %219 : vector<8x8xf32> to vector<8x8xbf16>
    %cst_82 = arith.constant dense<0.000000e+00> : vector<8x12xf32>
    %221 = tpu.matmul %220, %204, %cst_82 {dimension_numbers = #tpu.dot_dimension_numbers<[1], [0], [0], [1], [0, 0, 1, 1], [], []>} : vector<8x8xbf16>, vector<8x12xbf16>, vector<8x12xf32> -> vector<8x12xf32>
    %222 = vector.extract_strided_slice %99 {offsets = [0, 12], sizes = [8, 12], strides = [1, 1]} : vector<8x48xf32> to vector<8x12xf32>
    %223 = arith.truncf %222 : vector<8x12xf32> to vector<8x12xbf16>
    %224 = vector.extract_strided_slice %101 {offsets = [0, 12], sizes = [8, 12], strides = [1, 1]} : vector<8x48xf32> to vector<8x12xf32>
    %225 = arith.truncf %224 : vector<8x12xf32> to vector<8x12xbf16>
    %226 = vector.extract_strided_slice %103 {offsets = [0, 12], sizes = [8, 12], strides = [1, 1]} : vector<8x48xf32> to vector<8x12xf32>
    %227 = arith.truncf %226 : vector<8x12xf32> to vector<8x12xbf16>
    "tpu.trace_start"() <{level = 10 : i32, message = "qd,kd->qk"}> : () -> ()
    %cst_83 = arith.constant dense<0.000000e+00> : vector<8x8xf32>
    %228 = tpu.matmul %223, %225, %cst_83 {dimension_numbers = #tpu.dot_dimension_numbers<[1], [1], [0], [0], [0, 0, 1, 0], [], []>} : vector<8x12xbf16>, vector<8x12xbf16>, vector<8x8xf32> -> vector<8x8xf32>
    "tpu.trace_stop"() : () -> ()
    %cst_84 = arith.constant 0.288675129 : f32
    %229 = vector.broadcast %cst_84 : f32 to vector<8x8xf32>
    %230 = arith.mulf %228, %229 : vector<8x8xf32>
    %231 = vector.broadcast %105 : vector<1x8xf32> to vector<8x8xf32>
    %232 = arith.addf %230, %231 : vector<8x8xf32>
    %cst_85 = arith.constant dense<0xFF800000> : vector<8xf32>
    %233 = vector.multi_reduction <maximumf>, %232, %cst_85 [1] : vector<8x8xf32> to vector<8xf32>
    %234 = vector.shape_cast %233 : vector<8xf32> to vector<8x1xf32>
    %235 = vector.broadcast %234 : vector<8x1xf32> to vector<8x8xf32>
    %236 = arith.subf %232, %235 : vector<8x8xf32>
    %237 = math.exp %236 : vector<8x8xf32>
    %cst_86 = arith.constant dense<0.000000e+00> : vector<8xf32>
    %238 = vector.multi_reduction <add>, %237, %cst_86 [1] : vector<8x8xf32> to vector<8xf32>
    %239 = vector.shape_cast %238 : vector<8xf32> to vector<8x1xf32>
    %240 = tpu.reciprocal %239 {approx = true} : vector<8x1xf32> -> vector<8x1xf32>
    %241 = vector.broadcast %240 : vector<8x1xf32> to vector<8x8xf32>
    %242 = arith.mulf %237, %241 : vector<8x8xf32>
    %243 = arith.truncf %242 : vector<8x8xf32> to vector<8x8xbf16>
    %cst_87 = arith.constant dense<0.000000e+00> : vector<8x12xf32>
    %244 = tpu.matmul %243, %227, %cst_87 {dimension_numbers = #tpu.dot_dimension_numbers<[1], [0], [0], [1], [0, 0, 1, 1], [], []>} : vector<8x8xbf16>, vector<8x12xbf16>, vector<8x12xf32> -> vector<8x12xf32>
    %245 = vector.extract_strided_slice %99 {offsets = [0, 24], sizes = [8, 12], strides = [1, 1]} : vector<8x48xf32> to vector<8x12xf32>
    %246 = arith.truncf %245 : vector<8x12xf32> to vector<8x12xbf16>
    %247 = vector.extract_strided_slice %101 {offsets = [0, 24], sizes = [8, 12], strides = [1, 1]} : vector<8x48xf32> to vector<8x12xf32>
    %248 = arith.truncf %247 : vector<8x12xf32> to vector<8x12xbf16>
    %249 = vector.extract_strided_slice %103 {offsets = [0, 24], sizes = [8, 12], strides = [1, 1]} : vector<8x48xf32> to vector<8x12xf32>
    %250 = arith.truncf %249 : vector<8x12xf32> to vector<8x12xbf16>
    "tpu.trace_start"() <{level = 10 : i32, message = "qd,kd->qk"}> : () -> ()
    %cst_88 = arith.constant dense<0.000000e+00> : vector<8x8xf32>
    %251 = tpu.matmul %246, %248, %cst_88 {dimension_numbers = #tpu.dot_dimension_numbers<[1], [1], [0], [0], [0, 0, 1, 0], [], []>} : vector<8x12xbf16>, vector<8x12xbf16>, vector<8x8xf32> -> vector<8x8xf32>
    "tpu.trace_stop"() : () -> ()
    %cst_89 = arith.constant 0.288675129 : f32
    %252 = vector.broadcast %cst_89 : f32 to vector<8x8xf32>
    %253 = arith.mulf %251, %252 : vector<8x8xf32>
    %254 = vector.broadcast %105 : vector<1x8xf32> to vector<8x8xf32>
    %255 = arith.addf %253, %254 : vector<8x8xf32>
    %cst_90 = arith.constant dense<0xFF800000> : vector<8xf32>
    %256 = vector.multi_reduction <maximumf>, %255, %cst_90 [1] : vector<8x8xf32> to vector<8xf32>
    %257 = vector.shape_cast %256 : vector<8xf32> to vector<8x1xf32>
    %258 = vector.broadcast %257 : vector<8x1xf32> to vector<8x8xf32>
    %259 = arith.subf %255, %258 : vector<8x8xf32>
    %260 = math.exp %259 : vector<8x8xf32>
    %cst_91 = arith.constant dense<0.000000e+00> : vector<8xf32>
    %261 = vector.multi_reduction <add>, %260, %cst_91 [1] : vector<8x8xf32> to vector<8xf32>
    %262 = vector.shape_cast %261 : vector<8xf32> to vector<8x1xf32>
    %263 = tpu.reciprocal %262 {approx = true} : vector<8x1xf32> -> vector<8x1xf32>
    %264 = vector.broadcast %263 : vector<8x1xf32> to vector<8x8xf32>
    %265 = arith.mulf %260, %264 : vector<8x8xf32>
    %266 = arith.truncf %265 : vector<8x8xf32> to vector<8x8xbf16>
    %cst_92 = arith.constant dense<0.000000e+00> : vector<8x12xf32>
    %267 = tpu.matmul %266, %250, %cst_92 {dimension_numbers = #tpu.dot_dimension_numbers<[1], [0], [0], [1], [0, 0, 1, 1], [], []>} : vector<8x8xbf16>, vector<8x12xbf16>, vector<8x12xf32> -> vector<8x12xf32>
    %268 = vector.extract_strided_slice %99 {offsets = [0, 36], sizes = [8, 12], strides = [1, 1]} : vector<8x48xf32> to vector<8x12xf32>
    %269 = arith.truncf %268 : vector<8x12xf32> to vector<8x12xbf16>
    %270 = vector.extract_strided_slice %101 {offsets = [0, 36], sizes = [8, 12], strides = [1, 1]} : vector<8x48xf32> to vector<8x12xf32>
    %271 = arith.truncf %270 : vector<8x12xf32> to vector<8x12xbf16>
    %272 = vector.extract_strided_slice %103 {offsets = [0, 36], sizes = [8, 12], strides = [1, 1]} : vector<8x48xf32> to vector<8x12xf32>
    %273 = arith.truncf %272 : vector<8x12xf32> to vector<8x12xbf16>
    "tpu.trace_start"() <{level = 10 : i32, message = "qd,kd->qk"}> : () -> ()
    %cst_93 = arith.constant dense<0.000000e+00> : vector<8x8xf32>
    %274 = tpu.matmul %269, %271, %cst_93 {dimension_numbers = #tpu.dot_dimension_numbers<[1], [1], [0], [0], [0, 0, 1, 0], [], []>} : vector<8x12xbf16>, vector<8x12xbf16>, vector<8x8xf32> -> vector<8x8xf32>
    "tpu.trace_stop"() : () -> ()
    %cst_94 = arith.constant 0.288675129 : f32
    %275 = vector.broadcast %cst_94 : f32 to vector<8x8xf32>
    %276 = arith.mulf %274, %275 : vector<8x8xf32>
    %277 = vector.broadcast %105 : vector<1x8xf32> to vector<8x8xf32>
    %278 = arith.addf %276, %277 : vector<8x8xf32>
    %cst_95 = arith.constant dense<0xFF800000> : vector<8xf32>
    %279 = vector.multi_reduction <maximumf>, %278, %cst_95 [1] : vector<8x8xf32> to vector<8xf32>
    %280 = vector.shape_cast %279 : vector<8xf32> to vector<8x1xf32>
    %281 = vector.broadcast %280 : vector<8x1xf32> to vector<8x8xf32>
    %282 = arith.subf %278, %281 : vector<8x8xf32>
    %283 = math.exp %282 : vector<8x8xf32>
    %cst_96 = arith.constant dense<0.000000e+00> : vector<8xf32>
    %284 = vector.multi_reduction <add>, %283, %cst_96 [1] : vector<8x8xf32> to vector<8xf32>
    %285 = vector.shape_cast %284 : vector<8xf32> to vector<8x1xf32>
    %286 = tpu.reciprocal %285 {approx = true} : vector<8x1xf32> -> vector<8x1xf32>
    %287 = vector.broadcast %286 : vector<8x1xf32> to vector<8x8xf32>
    %288 = arith.mulf %283, %287 : vector<8x8xf32>
    %289 = arith.truncf %288 : vector<8x8xf32> to vector<8x8xbf16>
    %cst_97 = arith.constant dense<0.000000e+00> : vector<8x12xf32>
    %290 = tpu.matmul %289, %273, %cst_97 {dimension_numbers = #tpu.dot_dimension_numbers<[1], [0], [0], [1], [0, 0, 1, 1], [], []>} : vector<8x8xbf16>, vector<8x12xbf16>, vector<8x12xf32> -> vector<8x12xf32>
    %291 = tpu.concatenate %221, %244, %267, %290 in 1 : vector<8x12xf32>, vector<8x12xf32>, vector<8x12xf32>, vector<8x12xf32> -> vector<8x48xf32>
    %292 = tpu.concatenate %198, %291 in 0 : vector<8x48xf32>, vector<8x48xf32> -> vector<16x48xf32>
    %293 = arith.truncf %292 : vector<16x48xf32> to vector<16x48xbf16>
    %cst_98 = arith.constant dense<0.000000e+00> : vector<16x48xf32>
    %294 = tpu.matmul %293, %10, %cst_98 {dimension_numbers = #tpu.dot_dimension_numbers<[1], [0], [0], [1], [0, 0, 1, 1], [], []>} : vector<16x48xbf16>, vector<48x48xbf16>, vector<16x48xf32> -> vector<16x48xf32>
    %295 = vector.broadcast %38 : vector<1x48xf32> to vector<16x48xf32>
    %296 = arith.addf %294, %295 : vector<16x48xf32>
    %297 = vector.shape_cast %296 : vector<16x48xf32> to vector<2x8x48xf32>
    %298 = arith.addf %3, %297 : vector<2x8x48xf32>
    %cst_99 = arith.constant dense<0.000000e+00> : vector<2x8xf32>
    %299 = vector.multi_reduction <add>, %298, %cst_99 [2] : vector<2x8x48xf32> to vector<2x8xf32>
    %300 = vector.shape_cast %299 : vector<2x8xf32> to vector<2x8x1xf32>
    %cst_100 = arith.constant 4.800000e+01 : f32
    %301 = vector.broadcast %cst_100 : f32 to vector<2x8x1xf32>
    %302 = arith.divf %300, %301 : vector<2x8x1xf32>
    %303 = vector.broadcast %302 : vector<2x8x1xf32> to vector<2x8x48xf32>
    %304 = arith.subf %298, %303 : vector<2x8x48xf32>
    %305 = vector.broadcast %302 : vector<2x8x1xf32> to vector<2x8x48xf32>
    %306 = arith.subf %298, %305 : vector<2x8x48xf32>
    %307 = arith.mulf %304, %306 : vector<2x8x48xf32>
    %cst_101 = arith.constant dense<0.000000e+00> : vector<2x8xf32>
    %308 = vector.multi_reduction <add>, %307, %cst_101 [2] : vector<2x8x48xf32> to vector<2x8xf32>
    %309 = vector.shape_cast %308 : vector<2x8xf32> to vector<2x8x1xf32>
    %cst_102 = arith.constant 4.800000e+01 : f32
    %310 = vector.broadcast %cst_102 : f32 to vector<2x8x1xf32>
    %311 = arith.divf %309, %310 : vector<2x8x1xf32>
    %312 = vector.broadcast %302 : vector<2x8x1xf32> to vector<2x8x48xf32>
    %313 = arith.subf %298, %312 : vector<2x8x48xf32>
    %cst_103 = arith.constant 9.99999974E-6 : f32
    %314 = vector.broadcast %cst_103 : f32 to vector<2x8x1xf32>
    %315 = arith.addf %311, %314 : vector<2x8x1xf32>
    %316 = math.rsqrt %315 : vector<2x8x1xf32>
    %317 = vector.broadcast %316 : vector<2x8x1xf32> to vector<2x8x48xf32>
    %318 = arith.mulf %313, %317 : vector<2x8x48xf32>
    %319 = vector.shape_cast %33 : vector<1x48xf32> to vector<1x1x48xf32>
    %320 = vector.broadcast %319 : vector<1x1x48xf32> to vector<2x8x48xf32>
    %321 = arith.mulf %318, %320 : vector<2x8x48xf32>
    %322 = vector.shape_cast %34 : vector<1x48xf32> to vector<1x1x48xf32>
    %323 = vector.broadcast %322 : vector<1x1x48xf32> to vector<2x8x48xf32>
    %324 = arith.addf %321, %323 : vector<2x8x48xf32>
    %325 = vector.broadcast %54 : vector<2x1x48xf32> to vector<2x8x48xf32>
    %326 = arith.mulf %324, %325 : vector<2x8x48xf32>
    %327 = vector.broadcast %56 : vector<2x1x48xf32> to vector<2x8x48xf32>
    %328 = arith.addf %326, %327 : vector<2x8x48xf32>
    %329 = arith.addf %328, %4 : vector<2x8x48xf32>
    %330 = vector.shape_cast %329 : vector<2x8x48xf32> to vector<16x48xf32>
    %331 = arith.truncf %330 : vector<16x48xf32> to vector<16x48xbf16>
    %cst_104 = arith.constant dense<0.000000e+00> : vector<16x48xf32>
    %332 = tpu.matmul %331, %12, %cst_104 {dimension_numbers = #tpu.dot_dimension_numbers<[1], [0], [0], [1], [0, 0, 1, 1], [], []>} : vector<16x48xbf16>, vector<48x48xbf16>, vector<16x48xf32> -> vector<16x48xf32>
    %333 = vector.broadcast %39 : vector<1x48xf32> to vector<16x48xf32>
    %334 = arith.addf %332, %333 : vector<16x48xf32>
    %335 = vector.extract_strided_slice %334 {offsets = [0, 0], sizes = [8, 48], strides = [1, 1]} : vector<16x48xf32> to vector<8x48xf32>
    %336 = vector.extract_strided_slice %334 {offsets = [8, 0], sizes = [8, 48], strides = [1, 1]} : vector<16x48xf32> to vector<8x48xf32>
    %c0_105 = arith.constant 0 : index
    %c0_106 = arith.constant 0 : index
    %c0_107 = arith.constant 0 : index
    %337 = vector.load %arg3[%c0_105, %c0_106, %c0_107] : memref<2x129x48xbf16, #tpu.memory_space<vmem>>, vector<1x129x48xbf16>
    %338 = vector.shape_cast %337 : vector<1x129x48xbf16> to vector<129x48xbf16>
    %cst_108 = arith.constant dense<0.000000e+00> : vector<129x48xf32>
    %339 = tpu.matmul %338, %14, %cst_108 {dimension_numbers = #tpu.dot_dimension_numbers<[1], [0], [0], [1], [0, 0, 1, 1], [], []>} : vector<129x48xbf16>, vector<48x48xbf16>, vector<129x48xf32> -> vector<129x48xf32>
    %340 = vector.broadcast %40 : vector<1x48xf32> to vector<129x48xf32>
    %341 = arith.addf %339, %340 : vector<129x48xf32>
    %c1_109 = arith.constant 1 : index
    %c0_110 = arith.constant 0 : index
    %c0_111 = arith.constant 0 : index
    %342 = vector.load %arg3[%c1_109, %c0_110, %c0_111] : memref<2x129x48xbf16, #tpu.memory_space<vmem>>, vector<1x129x48xbf16>
    %343 = vector.shape_cast %342 : vector<1x129x48xbf16> to vector<129x48xbf16>
    %cst_112 = arith.constant dense<0.000000e+00> : vector<129x48xf32>
    %344 = tpu.matmul %343, %14, %cst_112 {dimension_numbers = #tpu.dot_dimension_numbers<[1], [0], [0], [1], [0, 0, 1, 1], [], []>} : vector<129x48xbf16>, vector<48x48xbf16>, vector<129x48xf32> -> vector<129x48xf32>
    %345 = vector.broadcast %40 : vector<1x48xf32> to vector<129x48xf32>
    %346 = arith.addf %344, %345 : vector<129x48xf32>
    %c0_113 = arith.constant 0 : index
    %c0_114 = arith.constant 0 : index
    %c0_115 = arith.constant 0 : index
    %347 = vector.load %arg4[%c0_113, %c0_114, %c0_115] : memref<2x129x48xbf16, #tpu.memory_space<vmem>>, vector<1x129x48xbf16>
    %348 = vector.shape_cast %347 : vector<1x129x48xbf16> to vector<129x48xbf16>
    %cst_116 = arith.constant dense<0.000000e+00> : vector<129x48xf32>
    %349 = tpu.matmul %348, %16, %cst_116 {dimension_numbers = #tpu.dot_dimension_numbers<[1], [0], [0], [1], [0, 0, 1, 1], [], []>} : vector<129x48xbf16>, vector<48x48xbf16>, vector<129x48xf32> -> vector<129x48xf32>
    %350 = vector.broadcast %41 : vector<1x48xf32> to vector<129x48xf32>
    %351 = arith.addf %349, %350 : vector<129x48xf32>
    %c1_117 = arith.constant 1 : index
    %c0_118 = arith.constant 0 : index
    %c0_119 = arith.constant 0 : index
    %352 = vector.load %arg4[%c1_117, %c0_118, %c0_119] : memref<2x129x48xbf16, #tpu.memory_space<vmem>>, vector<1x129x48xbf16>
    %353 = vector.shape_cast %352 : vector<1x129x48xbf16> to vector<129x48xbf16>
    %cst_120 = arith.constant dense<0.000000e+00> : vector<129x48xf32>
    %354 = tpu.matmul %353, %16, %cst_120 {dimension_numbers = #tpu.dot_dimension_numbers<[1], [0], [0], [1], [0, 0, 1, 1], [], []>} : vector<129x48xbf16>, vector<48x48xbf16>, vector<129x48xf32> -> vector<129x48xf32>
    %355 = vector.broadcast %41 : vector<1x48xf32> to vector<129x48xf32>
    %356 = arith.addf %354, %355 : vector<129x48xf32>
    %357 = vector.extract_strided_slice %335 {offsets = [0, 0], sizes = [8, 12], strides = [1, 1]} : vector<8x48xf32> to vector<8x12xf32>
    %358 = arith.truncf %357 : vector<8x12xf32> to vector<8x12xbf16>
    %359 = vector.extract_strided_slice %341 {offsets = [0, 0], sizes = [129, 12], strides = [1, 1]} : vector<129x48xf32> to vector<129x12xf32>
    %360 = arith.truncf %359 : vector<129x12xf32> to vector<129x12xbf16>
    %361 = vector.extract_strided_slice %351 {offsets = [0, 0], sizes = [129, 12], strides = [1, 1]} : vector<129x48xf32> to vector<129x12xf32>
    %362 = arith.truncf %361 : vector<129x12xf32> to vector<129x12xbf16>
    "tpu.trace_start"() <{level = 10 : i32, message = "qd,kd->qk"}> : () -> ()
    %cst_121 = arith.constant dense<0.000000e+00> : vector<8x129xf32>
    %363 = tpu.matmul %358, %360, %cst_121 {dimension_numbers = #tpu.dot_dimension_numbers<[1], [1], [0], [0], [0, 0, 1, 0], [], []>} : vector<8x12xbf16>, vector<129x12xbf16>, vector<8x129xf32> -> vector<8x129xf32>
    "tpu.trace_stop"() : () -> ()
    %cst_122 = arith.constant 0.288675129 : f32
    %364 = vector.broadcast %cst_122 : f32 to vector<8x129xf32>
    %365 = arith.mulf %363, %364 : vector<8x129xf32>
    %cst_123 = arith.constant dense<0xFF800000> : vector<8xf32>
    %366 = vector.multi_reduction <maximumf>, %365, %cst_123 [1] : vector<8x129xf32> to vector<8xf32>
    %367 = vector.shape_cast %366 : vector<8xf32> to vector<8x1xf32>
    %368 = vector.broadcast %367 : vector<8x1xf32> to vector<8x129xf32>
    %369 = arith.subf %365, %368 : vector<8x129xf32>
    %370 = math.exp %369 : vector<8x129xf32>
    %cst_124 = arith.constant dense<0.000000e+00> : vector<8xf32>
    %371 = vector.multi_reduction <add>, %370, %cst_124 [1] : vector<8x129xf32> to vector<8xf32>
    %372 = vector.shape_cast %371 : vector<8xf32> to vector<8x1xf32>
    %373 = tpu.reciprocal %372 {approx = true} : vector<8x1xf32> -> vector<8x1xf32>
    %374 = vector.broadcast %373 : vector<8x1xf32> to vector<8x129xf32>
    %375 = arith.mulf %370, %374 : vector<8x129xf32>
    %376 = arith.truncf %375 : vector<8x129xf32> to vector<8x129xbf16>
    %cst_125 = arith.constant dense<0.000000e+00> : vector<8x12xf32>
    %377 = tpu.matmul %376, %362, %cst_125 {dimension_numbers = #tpu.dot_dimension_numbers<[1], [0], [0], [1], [0, 0, 1, 1], [], []>} : vector<8x129xbf16>, vector<129x12xbf16>, vector<8x12xf32> -> vector<8x12xf32>
    %378 = vector.extract_strided_slice %335 {offsets = [0, 12], sizes = [8, 12], strides = [1, 1]} : vector<8x48xf32> to vector<8x12xf32>
    %379 = arith.truncf %378 : vector<8x12xf32> to vector<8x12xbf16>
    %380 = vector.extract_strided_slice %341 {offsets = [0, 12], sizes = [129, 12], strides = [1, 1]} : vector<129x48xf32> to vector<129x12xf32>
    %381 = arith.truncf %380 : vector<129x12xf32> to vector<129x12xbf16>
    %382 = vector.extract_strided_slice %351 {offsets = [0, 12], sizes = [129, 12], strides = [1, 1]} : vector<129x48xf32> to vector<129x12xf32>
    %383 = arith.truncf %382 : vector<129x12xf32> to vector<129x12xbf16>
    "tpu.trace_start"() <{level = 10 : i32, message = "qd,kd->qk"}> : () -> ()
    %cst_126 = arith.constant dense<0.000000e+00> : vector<8x129xf32>
    %384 = tpu.matmul %379, %381, %cst_126 {dimension_numbers = #tpu.dot_dimension_numbers<[1], [1], [0], [0], [0, 0, 1, 0], [], []>} : vector<8x12xbf16>, vector<129x12xbf16>, vector<8x129xf32> -> vector<8x129xf32>
    "tpu.trace_stop"() : () -> ()
    %cst_127 = arith.constant 0.288675129 : f32
    %385 = vector.broadcast %cst_127 : f32 to vector<8x129xf32>
    %386 = arith.mulf %384, %385 : vector<8x129xf32>
    %cst_128 = arith.constant dense<0xFF800000> : vector<8xf32>
    %387 = vector.multi_reduction <maximumf>, %386, %cst_128 [1] : vector<8x129xf32> to vector<8xf32>
    %388 = vector.shape_cast %387 : vector<8xf32> to vector<8x1xf32>
    %389 = vector.broadcast %388 : vector<8x1xf32> to vector<8x129xf32>
    %390 = arith.subf %386, %389 : vector<8x129xf32>
    %391 = math.exp %390 : vector<8x129xf32>
    %cst_129 = arith.constant dense<0.000000e+00> : vector<8xf32>
    %392 = vector.multi_reduction <add>, %391, %cst_129 [1] : vector<8x129xf32> to vector<8xf32>
    %393 = vector.shape_cast %392 : vector<8xf32> to vector<8x1xf32>
    %394 = tpu.reciprocal %393 {approx = true} : vector<8x1xf32> -> vector<8x1xf32>
    %395 = vector.broadcast %394 : vector<8x1xf32> to vector<8x129xf32>
    %396 = arith.mulf %391, %395 : vector<8x129xf32>
    %397 = arith.truncf %396 : vector<8x129xf32> to vector<8x129xbf16>
    %cst_130 = arith.constant dense<0.000000e+00> : vector<8x12xf32>
    %398 = tpu.matmul %397, %383, %cst_130 {dimension_numbers = #tpu.dot_dimension_numbers<[1], [0], [0], [1], [0, 0, 1, 1], [], []>} : vector<8x129xbf16>, vector<129x12xbf16>, vector<8x12xf32> -> vector<8x12xf32>
    %399 = vector.extract_strided_slice %335 {offsets = [0, 24], sizes = [8, 12], strides = [1, 1]} : vector<8x48xf32> to vector<8x12xf32>
    %400 = arith.truncf %399 : vector<8x12xf32> to vector<8x12xbf16>
    %401 = vector.extract_strided_slice %341 {offsets = [0, 24], sizes = [129, 12], strides = [1, 1]} : vector<129x48xf32> to vector<129x12xf32>
    %402 = arith.truncf %401 : vector<129x12xf32> to vector<129x12xbf16>
    %403 = vector.extract_strided_slice %351 {offsets = [0, 24], sizes = [129, 12], strides = [1, 1]} : vector<129x48xf32> to vector<129x12xf32>
    %404 = arith.truncf %403 : vector<129x12xf32> to vector<129x12xbf16>
    "tpu.trace_start"() <{level = 10 : i32, message = "qd,kd->qk"}> : () -> ()
    %cst_131 = arith.constant dense<0.000000e+00> : vector<8x129xf32>
    %405 = tpu.matmul %400, %402, %cst_131 {dimension_numbers = #tpu.dot_dimension_numbers<[1], [1], [0], [0], [0, 0, 1, 0], [], []>} : vector<8x12xbf16>, vector<129x12xbf16>, vector<8x129xf32> -> vector<8x129xf32>
    "tpu.trace_stop"() : () -> ()
    %cst_132 = arith.constant 0.288675129 : f32
    %406 = vector.broadcast %cst_132 : f32 to vector<8x129xf32>
    %407 = arith.mulf %405, %406 : vector<8x129xf32>
    %cst_133 = arith.constant dense<0xFF800000> : vector<8xf32>
    %408 = vector.multi_reduction <maximumf>, %407, %cst_133 [1] : vector<8x129xf32> to vector<8xf32>
    %409 = vector.shape_cast %408 : vector<8xf32> to vector<8x1xf32>
    %410 = vector.broadcast %409 : vector<8x1xf32> to vector<8x129xf32>
    %411 = arith.subf %407, %410 : vector<8x129xf32>
    %412 = math.exp %411 : vector<8x129xf32>
    %cst_134 = arith.constant dense<0.000000e+00> : vector<8xf32>
    %413 = vector.multi_reduction <add>, %412, %cst_134 [1] : vector<8x129xf32> to vector<8xf32>
    %414 = vector.shape_cast %413 : vector<8xf32> to vector<8x1xf32>
    %415 = tpu.reciprocal %414 {approx = true} : vector<8x1xf32> -> vector<8x1xf32>
    %416 = vector.broadcast %415 : vector<8x1xf32> to vector<8x129xf32>
    %417 = arith.mulf %412, %416 : vector<8x129xf32>
    %418 = arith.truncf %417 : vector<8x129xf32> to vector<8x129xbf16>
    %cst_135 = arith.constant dense<0.000000e+00> : vector<8x12xf32>
    %419 = tpu.matmul %418, %404, %cst_135 {dimension_numbers = #tpu.dot_dimension_numbers<[1], [0], [0], [1], [0, 0, 1, 1], [], []>} : vector<8x129xbf16>, vector<129x12xbf16>, vector<8x12xf32> -> vector<8x12xf32>
    %420 = vector.extract_strided_slice %335 {offsets = [0, 36], sizes = [8, 12], strides = [1, 1]} : vector<8x48xf32> to vector<8x12xf32>
    %421 = arith.truncf %420 : vector<8x12xf32> to vector<8x12xbf16>
    %422 = vector.extract_strided_slice %341 {offsets = [0, 36], sizes = [129, 12], strides = [1, 1]} : vector<129x48xf32> to vector<129x12xf32>
    %423 = arith.truncf %422 : vector<129x12xf32> to vector<129x12xbf16>
    %424 = vector.extract_strided_slice %351 {offsets = [0, 36], sizes = [129, 12], strides = [1, 1]} : vector<129x48xf32> to vector<129x12xf32>
    %425 = arith.truncf %424 : vector<129x12xf32> to vector<129x12xbf16>
    "tpu.trace_start"() <{level = 10 : i32, message = "qd,kd->qk"}> : () -> ()
    %cst_136 = arith.constant dense<0.000000e+00> : vector<8x129xf32>
    %426 = tpu.matmul %421, %423, %cst_136 {dimension_numbers = #tpu.dot_dimension_numbers<[1], [1], [0], [0], [0, 0, 1, 0], [], []>} : vector<8x12xbf16>, vector<129x12xbf16>, vector<8x129xf32> -> vector<8x129xf32>
    "tpu.trace_stop"() : () -> ()
    %cst_137 = arith.constant 0.288675129 : f32
    %427 = vector.broadcast %cst_137 : f32 to vector<8x129xf32>
    %428 = arith.mulf %426, %427 : vector<8x129xf32>
    %cst_138 = arith.constant dense<0xFF800000> : vector<8xf32>
    %429 = vector.multi_reduction <maximumf>, %428, %cst_138 [1] : vector<8x129xf32> to vector<8xf32>
    %430 = vector.shape_cast %429 : vector<8xf32> to vector<8x1xf32>
    %431 = vector.broadcast %430 : vector<8x1xf32> to vector<8x129xf32>
    %432 = arith.subf %428, %431 : vector<8x129xf32>
    %433 = math.exp %432 : vector<8x129xf32>
    %cst_139 = arith.constant dense<0.000000e+00> : vector<8xf32>
    %434 = vector.multi_reduction <add>, %433, %cst_139 [1] : vector<8x129xf32> to vector<8xf32>
    %435 = vector.shape_cast %434 : vector<8xf32> to vector<8x1xf32>
    %436 = tpu.reciprocal %435 {approx = true} : vector<8x1xf32> -> vector<8x1xf32>
    %437 = vector.broadcast %436 : vector<8x1xf32> to vector<8x129xf32>
    %438 = arith.mulf %433, %437 : vector<8x129xf32>
    %439 = arith.truncf %438 : vector<8x129xf32> to vector<8x129xbf16>
    %cst_140 = arith.constant dense<0.000000e+00> : vector<8x12xf32>
    %440 = tpu.matmul %439, %425, %cst_140 {dimension_numbers = #tpu.dot_dimension_numbers<[1], [0], [0], [1], [0, 0, 1, 1], [], []>} : vector<8x129xbf16>, vector<129x12xbf16>, vector<8x12xf32> -> vector<8x12xf32>
    %441 = tpu.concatenate %377, %398, %419, %440 in 1 : vector<8x12xf32>, vector<8x12xf32>, vector<8x12xf32>, vector<8x12xf32> -> vector<8x48xf32>
    %442 = vector.extract_strided_slice %336 {offsets = [0, 0], sizes = [8, 12], strides = [1, 1]} : vector<8x48xf32> to vector<8x12xf32>
    %443 = arith.truncf %442 : vector<8x12xf32> to vector<8x12xbf16>
    %444 = vector.extract_strided_slice %346 {offsets = [0, 0], sizes = [129, 12], strides = [1, 1]} : vector<129x48xf32> to vector<129x12xf32>
    %445 = arith.truncf %444 : vector<129x12xf32> to vector<129x12xbf16>
    %446 = vector.extract_strided_slice %356 {offsets = [0, 0], sizes = [129, 12], strides = [1, 1]} : vector<129x48xf32> to vector<129x12xf32>
    %447 = arith.truncf %446 : vector<129x12xf32> to vector<129x12xbf16>
    "tpu.trace_start"() <{level = 10 : i32, message = "qd,kd->qk"}> : () -> ()
    %cst_141 = arith.constant dense<0.000000e+00> : vector<8x129xf32>
    %448 = tpu.matmul %443, %445, %cst_141 {dimension_numbers = #tpu.dot_dimension_numbers<[1], [1], [0], [0], [0, 0, 1, 0], [], []>} : vector<8x12xbf16>, vector<129x12xbf16>, vector<8x129xf32> -> vector<8x129xf32>
    "tpu.trace_stop"() : () -> ()
    %cst_142 = arith.constant 0.288675129 : f32
    %449 = vector.broadcast %cst_142 : f32 to vector<8x129xf32>
    %450 = arith.mulf %448, %449 : vector<8x129xf32>
    %cst_143 = arith.constant dense<0xFF800000> : vector<8xf32>
    %451 = vector.multi_reduction <maximumf>, %450, %cst_143 [1] : vector<8x129xf32> to vector<8xf32>
    %452 = vector.shape_cast %451 : vector<8xf32> to vector<8x1xf32>
    %453 = vector.broadcast %452 : vector<8x1xf32> to vector<8x129xf32>
    %454 = arith.subf %450, %453 : vector<8x129xf32>
    %455 = math.exp %454 : vector<8x129xf32>
    %cst_144 = arith.constant dense<0.000000e+00> : vector<8xf32>
    %456 = vector.multi_reduction <add>, %455, %cst_144 [1] : vector<8x129xf32> to vector<8xf32>
    %457 = vector.shape_cast %456 : vector<8xf32> to vector<8x1xf32>
    %458 = tpu.reciprocal %457 {approx = true} : vector<8x1xf32> -> vector<8x1xf32>
    %459 = vector.broadcast %458 : vector<8x1xf32> to vector<8x129xf32>
    %460 = arith.mulf %455, %459 : vector<8x129xf32>
    %461 = arith.truncf %460 : vector<8x129xf32> to vector<8x129xbf16>
    %cst_145 = arith.constant dense<0.000000e+00> : vector<8x12xf32>
    %462 = tpu.matmul %461, %447, %cst_145 {dimension_numbers = #tpu.dot_dimension_numbers<[1], [0], [0], [1], [0, 0, 1, 1], [], []>} : vector<8x129xbf16>, vector<129x12xbf16>, vector<8x12xf32> -> vector<8x12xf32>
    %463 = vector.extract_strided_slice %336 {offsets = [0, 12], sizes = [8, 12], strides = [1, 1]} : vector<8x48xf32> to vector<8x12xf32>
    %464 = arith.truncf %463 : vector<8x12xf32> to vector<8x12xbf16>
    %465 = vector.extract_strided_slice %346 {offsets = [0, 12], sizes = [129, 12], strides = [1, 1]} : vector<129x48xf32> to vector<129x12xf32>
    %466 = arith.truncf %465 : vector<129x12xf32> to vector<129x12xbf16>
    %467 = vector.extract_strided_slice %356 {offsets = [0, 12], sizes = [129, 12], strides = [1, 1]} : vector<129x48xf32> to vector<129x12xf32>
    %468 = arith.truncf %467 : vector<129x12xf32> to vector<129x12xbf16>
    "tpu.trace_start"() <{level = 10 : i32, message = "qd,kd->qk"}> : () -> ()
    %cst_146 = arith.constant dense<0.000000e+00> : vector<8x129xf32>
    %469 = tpu.matmul %464, %466, %cst_146 {dimension_numbers = #tpu.dot_dimension_numbers<[1], [1], [0], [0], [0, 0, 1, 0], [], []>} : vector<8x12xbf16>, vector<129x12xbf16>, vector<8x129xf32> -> vector<8x129xf32>
    "tpu.trace_stop"() : () -> ()
    %cst_147 = arith.constant 0.288675129 : f32
    %470 = vector.broadcast %cst_147 : f32 to vector<8x129xf32>
    %471 = arith.mulf %469, %470 : vector<8x129xf32>
    %cst_148 = arith.constant dense<0xFF800000> : vector<8xf32>
    %472 = vector.multi_reduction <maximumf>, %471, %cst_148 [1] : vector<8x129xf32> to vector<8xf32>
    %473 = vector.shape_cast %472 : vector<8xf32> to vector<8x1xf32>
    %474 = vector.broadcast %473 : vector<8x1xf32> to vector<8x129xf32>
    %475 = arith.subf %471, %474 : vector<8x129xf32>
    %476 = math.exp %475 : vector<8x129xf32>
    %cst_149 = arith.constant dense<0.000000e+00> : vector<8xf32>
    %477 = vector.multi_reduction <add>, %476, %cst_149 [1] : vector<8x129xf32> to vector<8xf32>
    %478 = vector.shape_cast %477 : vector<8xf32> to vector<8x1xf32>
    %479 = tpu.reciprocal %478 {approx = true} : vector<8x1xf32> -> vector<8x1xf32>
    %480 = vector.broadcast %479 : vector<8x1xf32> to vector<8x129xf32>
    %481 = arith.mulf %476, %480 : vector<8x129xf32>
    %482 = arith.truncf %481 : vector<8x129xf32> to vector<8x129xbf16>
    %cst_150 = arith.constant dense<0.000000e+00> : vector<8x12xf32>
    %483 = tpu.matmul %482, %468, %cst_150 {dimension_numbers = #tpu.dot_dimension_numbers<[1], [0], [0], [1], [0, 0, 1, 1], [], []>} : vector<8x129xbf16>, vector<129x12xbf16>, vector<8x12xf32> -> vector<8x12xf32>
    %484 = vector.extract_strided_slice %336 {offsets = [0, 24], sizes = [8, 12], strides = [1, 1]} : vector<8x48xf32> to vector<8x12xf32>
    %485 = arith.truncf %484 : vector<8x12xf32> to vector<8x12xbf16>
    %486 = vector.extract_strided_slice %346 {offsets = [0, 24], sizes = [129, 12], strides = [1, 1]} : vector<129x48xf32> to vector<129x12xf32>
    %487 = arith.truncf %486 : vector<129x12xf32> to vector<129x12xbf16>
    %488 = vector.extract_strided_slice %356 {offsets = [0, 24], sizes = [129, 12], strides = [1, 1]} : vector<129x48xf32> to vector<129x12xf32>
    %489 = arith.truncf %488 : vector<129x12xf32> to vector<129x12xbf16>
    "tpu.trace_start"() <{level = 10 : i32, message = "qd,kd->qk"}> : () -> ()
    %cst_151 = arith.constant dense<0.000000e+00> : vector<8x129xf32>
    %490 = tpu.matmul %485, %487, %cst_151 {dimension_numbers = #tpu.dot_dimension_numbers<[1], [1], [0], [0], [0, 0, 1, 0], [], []>} : vector<8x12xbf16>, vector<129x12xbf16>, vector<8x129xf32> -> vector<8x129xf32>
    "tpu.trace_stop"() : () -> ()
    %cst_152 = arith.constant 0.288675129 : f32
    %491 = vector.broadcast %cst_152 : f32 to vector<8x129xf32>
    %492 = arith.mulf %490, %491 : vector<8x129xf32>
    %cst_153 = arith.constant dense<0xFF800000> : vector<8xf32>
    %493 = vector.multi_reduction <maximumf>, %492, %cst_153 [1] : vector<8x129xf32> to vector<8xf32>
    %494 = vector.shape_cast %493 : vector<8xf32> to vector<8x1xf32>
    %495 = vector.broadcast %494 : vector<8x1xf32> to vector<8x129xf32>
    %496 = arith.subf %492, %495 : vector<8x129xf32>
    %497 = math.exp %496 : vector<8x129xf32>
    %cst_154 = arith.constant dense<0.000000e+00> : vector<8xf32>
    %498 = vector.multi_reduction <add>, %497, %cst_154 [1] : vector<8x129xf32> to vector<8xf32>
    %499 = vector.shape_cast %498 : vector<8xf32> to vector<8x1xf32>
    %500 = tpu.reciprocal %499 {approx = true} : vector<8x1xf32> -> vector<8x1xf32>
    %501 = vector.broadcast %500 : vector<8x1xf32> to vector<8x129xf32>
    %502 = arith.mulf %497, %501 : vector<8x129xf32>
    %503 = arith.truncf %502 : vector<8x129xf32> to vector<8x129xbf16>
    %cst_155 = arith.constant dense<0.000000e+00> : vector<8x12xf32>
    %504 = tpu.matmul %503, %489, %cst_155 {dimension_numbers = #tpu.dot_dimension_numbers<[1], [0], [0], [1], [0, 0, 1, 1], [], []>} : vector<8x129xbf16>, vector<129x12xbf16>, vector<8x12xf32> -> vector<8x12xf32>
    %505 = vector.extract_strided_slice %336 {offsets = [0, 36], sizes = [8, 12], strides = [1, 1]} : vector<8x48xf32> to vector<8x12xf32>
    %506 = arith.truncf %505 : vector<8x12xf32> to vector<8x12xbf16>
    %507 = vector.extract_strided_slice %346 {offsets = [0, 36], sizes = [129, 12], strides = [1, 1]} : vector<129x48xf32> to vector<129x12xf32>
    %508 = arith.truncf %507 : vector<129x12xf32> to vector<129x12xbf16>
    %509 = vector.extract_strided_slice %356 {offsets = [0, 36], sizes = [129, 12], strides = [1, 1]} : vector<129x48xf32> to vector<129x12xf32>
    %510 = arith.truncf %509 : vector<129x12xf32> to vector<129x12xbf16>
    "tpu.trace_start"() <{level = 10 : i32, message = "qd,kd->qk"}> : () -> ()
    %cst_156 = arith.constant dense<0.000000e+00> : vector<8x129xf32>
    %511 = tpu.matmul %506, %508, %cst_156 {dimension_numbers = #tpu.dot_dimension_numbers<[1], [1], [0], [0], [0, 0, 1, 0], [], []>} : vector<8x12xbf16>, vector<129x12xbf16>, vector<8x129xf32> -> vector<8x129xf32>
    "tpu.trace_stop"() : () -> ()
    %cst_157 = arith.constant 0.288675129 : f32
    %512 = vector.broadcast %cst_157 : f32 to vector<8x129xf32>
    %513 = arith.mulf %511, %512 : vector<8x129xf32>
    %cst_158 = arith.constant dense<0xFF800000> : vector<8xf32>
    %514 = vector.multi_reduction <maximumf>, %513, %cst_158 [1] : vector<8x129xf32> to vector<8xf32>
    %515 = vector.shape_cast %514 : vector<8xf32> to vector<8x1xf32>
    %516 = vector.broadcast %515 : vector<8x1xf32> to vector<8x129xf32>
    %517 = arith.subf %513, %516 : vector<8x129xf32>
    %518 = math.exp %517 : vector<8x129xf32>
    %cst_159 = arith.constant dense<0.000000e+00> : vector<8xf32>
    %519 = vector.multi_reduction <add>, %518, %cst_159 [1] : vector<8x129xf32> to vector<8xf32>
    %520 = vector.shape_cast %519 : vector<8xf32> to vector<8x1xf32>
    %521 = tpu.reciprocal %520 {approx = true} : vector<8x1xf32> -> vector<8x1xf32>
    %522 = vector.broadcast %521 : vector<8x1xf32> to vector<8x129xf32>
    %523 = arith.mulf %518, %522 : vector<8x129xf32>
    %524 = arith.truncf %523 : vector<8x129xf32> to vector<8x129xbf16>
    %cst_160 = arith.constant dense<0.000000e+00> : vector<8x12xf32>
    %525 = tpu.matmul %524, %510, %cst_160 {dimension_numbers = #tpu.dot_dimension_numbers<[1], [0], [0], [1], [0, 0, 1, 1], [], []>} : vector<8x129xbf16>, vector<129x12xbf16>, vector<8x12xf32> -> vector<8x12xf32>
    %526 = tpu.concatenate %462, %483, %504, %525 in 1 : vector<8x12xf32>, vector<8x12xf32>, vector<8x12xf32>, vector<8x12xf32> -> vector<8x48xf32>
    %527 = tpu.concatenate %441, %526 in 0 : vector<8x48xf32>, vector<8x48xf32> -> vector<16x48xf32>
    %528 = arith.truncf %527 : vector<16x48xf32> to vector<16x48xbf16>
    %cst_161 = arith.constant dense<0.000000e+00> : vector<16x48xf32>
    %529 = tpu.matmul %528, %18, %cst_161 {dimension_numbers = #tpu.dot_dimension_numbers<[1], [0], [0], [1], [0, 0, 1, 1], [], []>} : vector<16x48xbf16>, vector<48x48xbf16>, vector<16x48xf32> -> vector<16x48xf32>
    %530 = vector.broadcast %42 : vector<1x48xf32> to vector<16x48xf32>
    %531 = arith.addf %529, %530 : vector<16x48xf32>
    %532 = vector.shape_cast %531 : vector<16x48xf32> to vector<2x8x48xf32>
    %533 = arith.addf %298, %532 : vector<2x8x48xf32>
    %cst_162 = arith.constant dense<0.000000e+00> : vector<2x8xf32>
    %534 = vector.multi_reduction <add>, %533, %cst_162 [2] : vector<2x8x48xf32> to vector<2x8xf32>
    %535 = vector.shape_cast %534 : vector<2x8xf32> to vector<2x8x1xf32>
    %cst_163 = arith.constant 4.800000e+01 : f32
    %536 = vector.broadcast %cst_163 : f32 to vector<2x8x1xf32>
    %537 = arith.divf %535, %536 : vector<2x8x1xf32>
    %538 = vector.broadcast %537 : vector<2x8x1xf32> to vector<2x8x48xf32>
    %539 = arith.subf %533, %538 : vector<2x8x48xf32>
    %540 = vector.broadcast %537 : vector<2x8x1xf32> to vector<2x8x48xf32>
    %541 = arith.subf %533, %540 : vector<2x8x48xf32>
    %542 = arith.mulf %539, %541 : vector<2x8x48xf32>
    %cst_164 = arith.constant dense<0.000000e+00> : vector<2x8xf32>
    %543 = vector.multi_reduction <add>, %542, %cst_164 [2] : vector<2x8x48xf32> to vector<2x8xf32>
    %544 = vector.shape_cast %543 : vector<2x8xf32> to vector<2x8x1xf32>
    %cst_165 = arith.constant 4.800000e+01 : f32
    %545 = vector.broadcast %cst_165 : f32 to vector<2x8x1xf32>
    %546 = arith.divf %544, %545 : vector<2x8x1xf32>
    %547 = vector.broadcast %537 : vector<2x8x1xf32> to vector<2x8x48xf32>
    %548 = arith.subf %533, %547 : vector<2x8x48xf32>
    %cst_166 = arith.constant 9.99999974E-6 : f32
    %549 = vector.broadcast %cst_166 : f32 to vector<2x8x1xf32>
    %550 = arith.addf %546, %549 : vector<2x8x1xf32>
    %551 = math.rsqrt %550 : vector<2x8x1xf32>
    %552 = vector.broadcast %551 : vector<2x8x1xf32> to vector<2x8x48xf32>
    %553 = arith.mulf %548, %552 : vector<2x8x48xf32>
    %554 = vector.shape_cast %35 : vector<1x48xf32> to vector<1x1x48xf32>
    %555 = vector.broadcast %554 : vector<1x1x48xf32> to vector<2x8x48xf32>
    %556 = arith.mulf %553, %555 : vector<2x8x48xf32>
    %557 = vector.shape_cast %36 : vector<1x48xf32> to vector<1x1x48xf32>
    %558 = vector.broadcast %557 : vector<1x1x48xf32> to vector<2x8x48xf32>
    %559 = arith.addf %556, %558 : vector<2x8x48xf32>
    %560 = vector.broadcast %54 : vector<2x1x48xf32> to vector<2x8x48xf32>
    %561 = arith.mulf %559, %560 : vector<2x8x48xf32>
    %562 = vector.broadcast %56 : vector<2x1x48xf32> to vector<2x8x48xf32>
    %563 = arith.addf %561, %562 : vector<2x8x48xf32>
    %564 = vector.shape_cast %563 : vector<2x8x48xf32> to vector<16x48xf32>
    %565 = arith.truncf %564 : vector<16x48xf32> to vector<16x48xbf16>
    %cst_167 = arith.constant dense<0.000000e+00> : vector<16x96xf32>
    %566 = tpu.matmul %565, %24, %cst_167 {dimension_numbers = #tpu.dot_dimension_numbers<[1], [0], [0], [1], [0, 0, 1, 1], [], []>} : vector<16x48xbf16>, vector<48x96xbf16>, vector<16x96xf32> -> vector<16x96xf32>
    %567 = vector.broadcast %46 : vector<1x96xf32> to vector<16x96xf32>
    %568 = arith.addf %566, %567 : vector<16x96xf32>
    %cst_168 = arith.constant 0.000000e+00 : f32
    %569 = vector.broadcast %cst_168 : f32 to vector<16x96xf32>
    %570 = arith.maximumf %568, %569 : vector<16x96xf32>
    %571 = arith.truncf %570 : vector<16x96xf32> to vector<16x96xbf16>
    %cst_169 = arith.constant dense<0.000000e+00> : vector<16x48xf32>
    %572 = tpu.matmul %571, %26, %cst_169 {dimension_numbers = #tpu.dot_dimension_numbers<[1], [0], [0], [1], [0, 0, 1, 1], [], []>} : vector<16x96xbf16>, vector<96x48xbf16>, vector<16x48xf32> -> vector<16x48xf32>
    %573 = vector.broadcast %43 : vector<1x48xf32> to vector<16x48xf32>
    %574 = arith.addf %572, %573 : vector<16x48xf32>
    %575 = vector.shape_cast %574 : vector<16x48xf32> to vector<2x8x48xf32>
    %576 = arith.addf %533, %575 : vector<2x8x48xf32>
    %c0_170 = arith.constant 0 : index
    %c0_171 = arith.constant 0 : index
    %c0_172 = arith.constant 0 : index
    %577 = vector.load %arg12[%c0_170, %c0_171, %c0_172] : memref<2x8x48xf32, #tpu.memory_space<vmem>>, vector<2x8x48xf32>
    tpu.vector_store %arg12[%c0_170, %c0_171, %c0_172], %576 {strides = array<i32>} : memref<2x8x48xf32, #tpu.memory_space<vmem>>, vector<2x8x48xf32>,
    return
  }
  func.func @transform_0(%arg0: i32) -> (i32, i32, i32) {
    %c0_i32 = arith.constant 0 : i32
    %c0_i32_0 = arith.constant 0 : i32
    %c0_i32_1 = arith.constant 0 : i32
    %c0_i32_2 = arith.constant 0 : i32
    return %c0_i32, %c0_i32_0, %c0_i32_1 : i32, i32, i32
  }
  func.func @transform_1(%arg0: i32) -> (i32, i32, i32) {
    %c0_i32 = arith.constant 0 : i32
    %c0_i32_0 = arith.constant 0 : i32
    %c0_i32_1 = arith.constant 0 : i32
    %c0_i32_2 = arith.constant 0 : i32
    return %c0_i32, %c0_i32_0, %c0_i32_1 : i32, i32, i32
  }
  func.func @transform_2(%arg0: i32) -> (i32, i32, i32) {
    %c0_i32 = arith.constant 0 : i32
    %c0_i32_0 = arith.constant 0 : i32
    %c0_i32_1 = arith.constant 0 : i32
    %c0_i32_2 = arith.constant 0 : i32
    return %c0_i32, %c0_i32_0, %c0_i32_1 : i32, i32, i32
  }
  func.func @transform_3(%arg0: i32) -> (i32, i32, i32) {
    %c0_i32 = arith.constant 0 : i32
    %c0_i32_0 = arith.constant 0 : i32
    %c0_i32_1 = arith.constant 0 : i32
    %c0_i32_2 = arith.constant 0 : i32
    return %c0_i32, %c0_i32_0, %c0_i32_1 : i32, i32, i32
  }
  func.func @transform_4(%arg0: i32) -> (i32, i32) {
    %c0_i32 = arith.constant 0 : i32
    %c0_i32_0 = arith.constant 0 : i32
    %c0_i32_1 = arith.constant 0 : i32
    return %c0_i32, %c0_i32_0 : i32, i32
  }
  func.func @transform_5(%arg0: i32) -> (i32, i32) {
    %c0_i32 = arith.constant 0 : i32
    %c0_i32_0 = arith.constant 0 : i32
    %c0_i32_1 = arith.constant 0 : i32
    return %c0_i32, %c0_i32_0 : i32, i32
  }
  func.func @transform_6(%arg0: i32) -> (i32, i32, i32, i32) {
    %c0_i32 = arith.constant 0 : i32
    %c0_i32_0 = arith.constant 0 : i32
    %c0_i32_1 = arith.constant 0 : i32
    %c0_i32_2 = arith.constant 0 : i32
    return %arg0, %c0_i32, %c0_i32_0, %c0_i32_1 : i32, i32, i32, i32
  }
  func.func @transform_7(%arg0: i32) -> (i32, i32, i32, i32) {
    %c0_i32 = arith.constant 0 : i32
    %c0_i32_0 = arith.constant 0 : i32
    %c0_i32_1 = arith.constant 0 : i32
    %c0_i32_2 = arith.constant 0 : i32
    return %arg0, %c0_i32, %c0_i32_0, %c0_i32_1 : i32, i32, i32, i32
  }
  func.func @transform_8(%arg0: i32) -> (i32, i32, i32) {
    %c0_i32 = arith.constant 0 : i32
    %c0_i32_0 = arith.constant 0 : i32
    %c0_i32_1 = arith.constant 0 : i32
    return %arg0, %c0_i32, %c0_i32_0 : i32, i32, i32
  }
  func.func @transform_9(%arg0: i32) -> (i32, i32, i32) {
    %c0_i32 = arith.constant 0 : i32
    %c0_i32_0 = arith.constant 0 : i32
    %c0_i32_1 = arith.constant 0 : i32
    return %arg0, %c0_i32, %c0_i32_0 : i32, i32, i32
  }
  func.func @transform_10(%arg0: i32) -> (i32, i32, i32) {
    %c0_i32 = arith.constant 0 : i32
    %c0_i32_0 = arith.constant 0 : i32
    %c0_i32_1 = arith.constant 0 : i32
    return %arg0, %c0_i32, %c0_i32_0 : i32, i32, i32
  }
  func.func @transform_11(%arg0: i32) -> (i32, i32, i32) {
    %c0_i32 = arith.constant 0 : i32
    %c0_i32_0 = arith.constant 0 : i32
    %c0_i32_1 = arith.constant 0 : i32
    %c0_i32_2 = arith.constant 0 : i32
    return %c0_i32, %c0_i32_0, %c0_i32_1 : i32, i32, i32
  }
}

</mosaic_0001>

<llo_original>
// kernel: planner_forward.30
$region0: #{planner_forward.30}
  #allocation0 [shape = 'u32[]', space=smem, size = 0x4, offset = 0x4, fixed_abs, tag = 'smem constant byte address 0x4 - core index']
  #allocation1 [shape = 'u32[144,128]{1,0:T(1,128)}', space=vmem, size = 0x12000, scoped, tag = 'internal scratch']
  %s0 = inlined_call_operand.vmem [shape: f32[2,9], index: 0, kind: input, shape index: {}]
  %s1 = inlined_call_operand.vmem [shape: bf16[9,48], index: 1, kind: input, shape index: {}]
  %s2 = inlined_call_operand.vmem [shape: f32[1,48], index: 2, kind: input, shape index: {}]
  %s3 = inlined_call_operand.vmem [shape: f32[2,48], index: 3, kind: output, shape index: {}]
  %s4 = sld [smem:[#allocation0]]
  $region22: #{planner_forward.30} parent=0
    _
  %s6 = ssub.s32 1, %s4
  %s7 = scalar_select 0, %s6, %s4
  // Predicated region
  $region2: #{planner_forward.30} parent=0 // pred_check
    _
  $region3: #{planner_forward.30} parent=0 // pred_check_branch
    %9 = sbr.rel (0) target = $region5
  $region4: #{planner_forward.30} parent=0 // pred_region
    _
  $region5: #{planner_forward.30} parent=0 // pred_fallthru
    _
  // Predicated region
  $region6: #{planner_forward.30} parent=0 // pred_check
    _
  $region7: #{planner_forward.30} parent=0 // pred_check_branch
    %11 = sbr.rel (0) target = $region9
  $region8: #{planner_forward.30} parent=0 // pred_region
    _
  $region9: #{planner_forward.30} parent=0 // pred_fallthru
    _
  // Predicated region
  $region10: #{planner_forward.30} parent=0 // pred_check
    _
  $region11: #{planner_forward.30} parent=0 // pred_check_branch
    %13 = sbr.rel (0) target = $region13
  $region12: #{planner_forward.30} parent=0 // pred_region
    _
  $region13: #{planner_forward.30} parent=0 // pred_fallthru
    _
  %v15 = vld [vmem:[%s0] sm:$0x3]
  %v16 = vpack.c.bf16 %v15, %v15
  %v17 = vld [vmem:[%s1] sm:$0xf]
  %v18 = vld [vmem:[%s1 + $0x4] sm:$0x1]
  %v19 = vld [vmem:[%s2] sm:$0x1]
  %v21 = vlaneseq
  %v22 = vshrl.u32 %v21, 7
  %v23 = vsub.s32 0, %v22
  %v24 = vrot.slane %v19, %v23
  %v28 = vunpack.c.l.b16 %v17
  %v29 = vunpack.c.l.b16 %v18
  %v30 = vpack.c.b16 %v29, %v28
  %vm31 = vcmask 72704
  %v33 = vsel %vm31, %v16, 0
  %vm35 = vcmask 1043456
  %vm36 = vcmask 1044480
  %v37 = vsel %vm35, 4294967295, 65535
  %v38 = vsel %vm36, %v37, 0
  %v40 = vand.u32 %v30, %v38
  %42 = vmatprep.subr.bf16.mxu0 0
  %43 = vmatpush1.bf16.msra.mxu0 %v40
  %44 = vmatprep.subr.bf16.mxu0 0
  %45 = vmatpush1.bf16.msra.mxu0 0
  %46 = vmatprep.subr.bf16.mxu0 0
  %47 = vmatpush1.bf16.msra.mxu0 0
  %48 = vmatprep.subr.bf16.mxu0 0
  %49 = vmatpush1.bf16.msra.mxu0 0
  %50 = vmatprep.subr.bf16.mxu0 0
  %51 = vmatpush1.bf16.msra.mxu0 0
  %52 = vmatprep.subr.bf16.mxu0 0
  %53 = vmatpush1.bf16.msra.mxu0 0
  %54 = vmatprep.subr.bf16.mxu0 0
  %55 = vmatpush1.bf16.msra.mxu0 0
  %56 = vmatprep.subr.bf16.mxu0 0
  %57 = vmatpush1.bf16.msra.mxu0 0
  %58 = vmatprep.subr.bf16.mxu0 0
  %59 = vmatpush1.bf16.msra.mxu0 0
  %60 = vmatprep.subr.bf16.mxu0 0
  %61 = vmatpush1.bf16.msra.mxu0 0
  %62 = vmatprep.subr.bf16.mxu0 0
  %63 = vmatpush1.bf16.msra.mxu0 0
  %64 = vmatprep.subr.bf16.mxu0 0
  %65 = vmatpush1.bf16.msra.mxu0 0
  %66 = vmatprep.subr.bf16.mxu0 0
  %67 = vmatpush1.bf16.msra.mxu0 0
  %68 = vmatprep.subr.bf16.mxu0 0
  %69 = vmatpush1.bf16.msra.mxu0 0
  %70 = vmatprep.subr.bf16.mxu0 0
  %71 = vmatpush1.bf16.msra.mxu0 0
  %72 = vmatprep.subr.bf16.mxu0 0
  %73 = vmatpush1.bf16.msra.mxu0 0
  %74 = vmatprep.mubr.bf16.mxu0 0
  %75 = vmatmul.mubr.bf16.gmra.mrb[0].mxu0 %v33
  %v76 = vpop.f32.mrb[0].mxu0
  %v77 = vadd.f32 %v24, %v76
  %v78 = vpop.f32.mrb[0].mxu0
  %v79 = vpop.f32.mrb[0].mxu0
  %v80 = vpop.f32.mrb[0].mxu0
  %81 = vdwg.mxu0
  %vm82 = vcmask 386048
  %83 = vst.msk [vmem:[%s3] sm:$0x3] %vm82, %v77
  // Predicated region
  $region14: #{planner_forward.30} parent=0 // pred_check
    _
  $region15: #{planner_forward.30} parent=0 // pred_check_branch
    %85 = sbr.rel (0) target = $region17
  $region16: #{planner_forward.30} parent=0 // pred_region
    _
  $region17: #{planner_forward.30} parent=0 // pred_fallthru
    _
  // Predicated region
  $region18: #{planner_forward.30} parent=0 // pred_check
    _
  $region19: #{planner_forward.30} parent=0 // pred_check_branch
    %87 = sbr.rel (0) target = $region21
  $region20: #{planner_forward.30} parent=0 // pred_region
    _
  $region21: #{planner_forward.30} parent=0 // pred_fallthru
    _

// kernel: planner_forward.29
$region0: #{planner_forward.29}
  #allocation0 [shape = 'u32[]', space=smem, size = 0x4, offset = 0x4, fixed_abs, tag = 'smem constant byte address 0x4 - core index']
  #allocation1 [shape = 'u32[144,128]{1,0:T(1,128)}', space=vmem, size = 0x12000, scoped, tag = 'internal scratch']
  %s0 = inlined_call_operand.vmem [shape: f32[256,3], index: 0, kind: input, shape index: {}]
  %s1 = inlined_call_operand.vmem [shape: bf16[3,48], index: 1, kind: input, shape index: {}]
  %s2 = inlined_call_operand.vmem [shape: f32[1,48], index: 2, kind: input, shape index: {}]
  %s3 = inlined_call_operand.vmem [shape: f32[256,48], index: 3, kind: output, shape index: {}]
  %s4 = sld [smem:[#allocation0]]
  $region45: #{planner_forward.29} parent=0
    _
  %s6 = ssub.s32 1, %s4
  %s7 = scalar_select 0, %s6, %s4
  loop: start=0, step=1, limit=4
  $region2: #{planner_forward.29} parent=0 // loop_pre_header
    _
  $region3: #{planner_forward.29} parent=0 // loop_header
    %s9 = sphi 0, %s13
    %p10 = scmp.ge.s32.totalorder %s9, 4
    %s19 = sphi 0, %s21
    %s22 = sphi 0, %s19
    %s23 = sphi 0, %s22
    %s39 = sphi 0, %s23
    %s43 = sphi 0, %s43
    %s45 = sphi 0, %s43
    %s46 = sphi 0, %s45
    %s60 = sphi 0, %s46
    %s64 = sphi 0, %s64
    %s66 = sphi 0, %s64
    %s67 = sphi 0, %s66
    %s81 = sphi 0, %s67
    %s87 = sphi 0, %s89
    %s90 = sphi 0, %s87
    %s91 = sphi 0, %s90
    %s107 = sphi 0, %s91
  $region4: #{planner_forward.29} parent=0 // loop_header_branch
    %12 = sbr.rel (%p10) target = $region8
  $region5: #{planner_forward.29} parent=0 // loop_body
    %s14 = ssub.s32 %s9, 1
    %s15 = ssub.s32 %s9, 2
    %s16 = sadd.s32 %s9, 1
    %s17 = ssub.s32 %s9, %s16
    %p18 = scmp.eq.s32.totalorder %s17, 0
    %s20 = sadd.s32 %s19, 1
    %s21 = scalar_select %p18, %s19, %s20
    %p24 = pneg %p18
    %p25 = scmp.eq.s32.totalorder %s9, 1
    %p26 = por %p24, %p25
    %p27 = scmp.ne.s32.totalorder %s19, %s22
    %p28 = scmp.eq.s32.totalorder %s9, 0
    %p29 = por %p27, %p28
    %p30 = scmp.ne.s32.totalorder %s19, %s22
    %p31 = scmp.eq.s32.totalorder %s14, 1
    %p32 = por %p30, %p31
    %p33 = scmp.ne.s32.totalorder %s22, %s23
    %p34 = scmp.eq.s32.totalorder %s14, 0
    %p35 = por %p33, %p34
    %p36 = scmp.ne.s32.totalorder %s22, %s23
    %p37 = scmp.eq.s32.totalorder %s15, 1
    %p38 = por %p36, %p37
    %p40 = scmp.ne.s32.totalorder %s23, %s39
    %p41 = scmp.eq.s32.totalorder %s15, 0
    %p42 = por %p40, %p41
    %s44 = sadd.s32 %s43, 1
    %p47 = scmp.eq.s32.totalorder %s9, 1
    %p48 = scmp.ne.s32.totalorder %s43, %s45
    %p49 = scmp.eq.s32.totalorder %s9, 0
    %p50 = por %p48, %p49
    %p51 = scmp.ne.s32.totalorder %s43, %s45
    %p52 = scmp.eq.s32.totalorder %s14, 1
    %p53 = por %p51, %p52
    %p54 = scmp.ne.s32.totalorder %s45, %s46
    %p55 = scmp.eq.s32.totalorder %s14, 0
    %p56 = por %p54, %p55
    %p57 = scmp.ne.s32.totalorder %s45, %s46
    %p58 = scmp.eq.s32.totalorder %s15, 1
    %p59 = por %p57, %p58
    %p61 = scmp.ne.s32.totalorder %s46, %s60
    %p62 = scmp.eq.s32.totalorder %s15, 0
    %p63 = por %p61, %p62
    %s65 = sadd.s32 %s64, 1
    %p68 = scmp.eq.s32.totalorder %s9, 1
    %p69 = scmp.ne.s32.totalorder %s64, %s66
    %p70 = scmp.eq.s32.totalorder %s9, 0
    %p71 = por %p69, %p70
    %p72 = scmp.ne.s32.totalorder %s64, %s66
    %p73 = scmp.eq.s32.totalorder %s14, 1
    %p74 = por %p72, %p73
    %p75 = scmp.ne.s32.totalorder %s66, %s67
    %p76 = scmp.eq.s32.totalorder %s14, 0
    %p77 = por %p75, %p76
    %p78 = scmp.ne.s32.totalorder %s66, %s67
    %p79 = scmp.eq.s32.totalorder %s15, 1
    %p80 = por %p78, %p79
    %p82 = scmp.ne.s32.totalorder %s67, %s81
    %p83 = scmp.eq.s32.totalorder %s15, 0
    %p84 = por %p82, %p83
    %s85 = ssub.s32 %s9, %s16
    %p86 = scmp.eq.s32.totalorder %s85, 0
    %s88 = sadd.s32 %s87, 1
    %s89 = scalar_select %p86, %s87, %s88
    %p92 = pneg %p86
    %p93 = scmp.eq.s32.totalorder %s9, 1
    %p94 = por %p92, %p93
    %p95 = scmp.ne.s32.totalorder %s87, %s90
    %p96 = scmp.eq.s32.totalorder %s9, 0
    %p97 = por %p95, %p96
    %p98 = scmp.ne.s32.totalorder %s87, %s90
    %p99 = scmp.eq.s32.totalorder %s14, 1
    %p100 = por %p98, %p99
    %p101 = scmp.ne.s32.totalorder %s90, %s91
    %p102 = scmp.eq.s32.totalorder %s14, 0
    %p103 = por %p101, %p102
    %p104 = scmp.ne.s32.totalorder %s90, %s91
    %p105 = scmp.eq.s32.totalorder %s15, 1
    %p106 = por %p104, %p105
    %p108 = scmp.ne.s32.totalorder %s91, %s107
    %p109 = scmp.eq.s32.totalorder %s15, 0
    %p110 = por %p108, %p109
    %p111 = scmp.le.s32.totalorder 1, %s9
    %p112 = scmp.lt.s32.totalorder %s9, 3
    %p113 = pnand %p111, %p112
    %p114 = pneg %p113
    // Predicated region
    $region9: #{planner_forward.29} parent=5 // pred_check
      _
    $region10: #{planner_forward.29} parent=5 // pred_check_branch
      %116 = sbr.rel (%p113) target = $region12
    $region11: #{planner_forward.29} parent=5 // pred_region
      %s117 = ssub.s32 %s9, 1
      // Predicated region
      $region13: #{planner_forward.29} parent=11 // pred_check
        %p118 = pneg %p56
      $region14: #{planner_forward.29} parent=11 // pred_check_branch
        %120 = sbr.rel (%p118) target = $region16
      $region15: #{planner_forward.29} parent=11 // pred_region
        _
      $region16: #{planner_forward.29} parent=11 // pred_fallthru
        _
      // Predicated region
      $region17: #{planner_forward.29} parent=11 // pred_check
        %p121 = pneg %p77
      $region18: #{planner_forward.29} parent=11 // pred_check_branch
        %123 = sbr.rel (%p121) target = $region20
      $region19: #{planner_forward.29} parent=11 // pred_region
        _
      $region20: #{planner_forward.29} parent=11 // pred_fallthru
        _
    $region12: #{planner_forward.29} parent=5 // pred_fallthru
      _
    %p124 = scmp.lt.s32.totalorder %s9, 2
    // Predicated region
    $region21: #{planner_forward.29} parent=5 // pred_check
      %p125 = pneg %p124
    $region22: #{planner_forward.29} parent=5 // pred_check_branch
      %127 = sbr.rel (%p125) target = $region24
    $region23: #{planner_forward.29} parent=5 // pred_region
      // Predicated region
      $region25: #{planner_forward.29} parent=23 // pred_check
        %p128 = pneg %p29
      $region26: #{planner_forward.29} parent=23 // pred_check_branch
        %130 = sbr.rel (%p128) target = $region28
      $region27: #{planner_forward.29} parent=23 // pred_region
        %s131 = smul.u32 16, %s9
        %p132 = scmp.lt.s32.totalorder %s131, 31
        %s133 = scalar_select %p132, %s131, 31
        %s134 = smul.addr %s133, 8
        %s135 = scalar_lea.vmem %s0, %s134
        %s136 = smul.u32 16, %s9
      $region28: #{planner_forward.29} parent=23 // pred_fallthru
        _
    $region24: #{planner_forward.29} parent=5 // pred_fallthru
      _
    %p137 = scmp.le.s32.totalorder 1, %s9
    %p138 = scmp.lt.s32.totalorder %s9, 3
    %p139 = pnand %p137, %p138
    %p140 = pneg %p139
    // Predicated region
    $region29: #{planner_forward.29} parent=5 // pred_check
      _
    $region30: #{planner_forward.29} parent=5 // pred_check_branch
      %142 = sbr.rel (%p139) target = $region32
    $region31: #{planner_forward.29} parent=5 // pred_region
      %s143 = ssub.s32 %s9, 1
      %s144 = smul.u32 16, %s14
      %p145 = scmp.lt.s32.totalorder %s144, 31
      %s146 = scalar_select %p145, %s144, 31
      %s147 = smul.addr %s146, 8
      %s148 = scalar_lea.vmem %s0, %s147
      %p149 = pneg %p35
      %p150 = pneg %p32
      %p151 = pneg %p56
      %p152 = pneg %p53
      %p153 = pneg %p77
      %p154 = pneg %p74
      %p155 = pneg %p103
      %p156 = pneg %p100
      %s157 = smul.u32 16, %s14
      %p158 = scmp.lt.s32.totalorder %s157, 31
      %s159 = scalar_select %p158, %s157, 31
      %s160 = smul.addr %s159, 8
      %s161 = scalar_lea.vmem %s3, %s160
      %s162 = smul.u32 16, %s14
      %p163 = scmp.lt.s32.totalorder %s162, 31
      %s164 = scalar_select %p163, %s162, 31
      %s165 = smul.addr %s164, 8
      %s166 = scalar_lea.vmem %s0, %s165
      %s167 = smul.u32 16, %s14
      %s168 = smul.u32 16, %s14
      %p169 = scmp.lt.s32.totalorder %s168, 31
      %s170 = scalar_select %p169, %s168, 31
      %s171 = smul.addr %s170, 8
      %s172 = scalar_lea.vmem %s3, %s171
      %s173 = smul.u32 16, %s14
      %v175 = vld [vmem:[%s166] sm:$0xff]
      %v176 = vld [vmem:[%s166 + $0x8] sm:$0xff]
      %v177 = vld [vmem:[%s166 + $0x10] sm:$0xff]
      %v178 = vld [vmem:[%s166 + $0x18] sm:$0xff]
      %v179 = vld [vmem:[%s166 + $0x20] sm:$0xff]
      %v180 = vld [vmem:[%s166 + $0x28] sm:$0xff]
      %v181 = vld [vmem:[%s166 + $0x30] sm:$0xff]
      %v182 = vld [vmem:[%s166 + $0x38] sm:$0xff]
      %v183 = vld [vmem:[%s166 + $0x40] sm:$0xff]
      %v184 = vld [vmem:[%s166 + $0x48] sm:$0xff]
      %v185 = vld [vmem:[%s166 + $0x50] sm:$0xff]
      %v186 = vld [vmem:[%s166 + $0x58] sm:$0xff]
      %v187 = vld [vmem:[%s166 + $0x60] sm:$0xff]
      %v188 = vld [vmem:[%s166 + $0x68] sm:$0xff]
      %v189 = vld [vmem:[%s166 + $0x70] sm:$0xff]
      %v190 = vld [vmem:[%s166 + $0x78] sm:$0xff]
      %v191 = vpack.c.bf16 %v176, %v175
      %v192 = vpack.c.bf16 %v178, %v177
      %v193 = vpack.c.bf16 %v180, %v179
      %v194 = vpack.c.bf16 %v182, %v181
      %v195 = vpack.c.bf16 %v184, %v183
      %v196 = vpack.c.bf16 %v186, %v185
      %v197 = vpack.c.bf16 %v188, %v187
      %v198 = vpack.c.bf16 %v190, %v189
      %v199 = vld [vmem:[%s1] sm:$0x3]
      %v200 = vld [vmem:[%s2] sm:$0x1]
      %v202 = vlaneseq
      %v203 = vshrl.u32 %v202, 7
      %v204 = vsub.s32 0, %v203
      %v205 = vrot.slane %v200, %v204
      %vm207 = vcmask 23552
      %v209 = vsel %vm207, %v191, 0
      %v212 = vsel %vm207, %v192, 0
      %v215 = vsel %vm207, %v193, 0
      %v218 = vsel %vm207, %v194, 0
      %v221 = vsel %vm207, %v195, 0
      %v224 = vsel %vm207, %v196, 0
      %v227 = vsel %vm207, %v197, 0
      %v230 = vsel %vm207, %v198, 0
      %vm232 = vcmask 1040384
      %vm233 = vcmask 1041408
      %v234 = vsel %vm232, 4294967295, 65535
      %v235 = vsel %vm233, %v234, 0
      %v237 = vand.u32 %v199, %v235
      %239 = vmatprep.subr.bf16.mxu0 0
      %240 = vmatpush1.bf16.msra.mxu0 %v237
      %241 = vmatprep.subr.bf16.mxu0 0
      %242 = vmatpush1.bf16.msra.mxu0 0
      %243 = vmatprep.subr.bf16.mxu0 0
      %244 = vmatpush1.bf16.msra.mxu0 0
      %245 = vmatprep.subr.bf16.mxu0 0
      %246 = vmatpush1.bf16.msra.mxu0 0
      %247 = vmatprep.subr.bf16.mxu0 0
      %248 = vmatpush1.bf16.msra.mxu0 0
      %249 = vmatprep.subr.bf16.mxu0 0
      %250 = vmatpush1.bf16.msra.mxu0 0
      %251 = vmatprep.subr.bf16.mxu0 0
      %252 = vmatpush1.bf16.msra.mxu0 0
      %253 = vmatprep.subr.bf16.mxu0 0
      %254 = vmatpush1.bf16.msra.mxu0 0
      %255 = vmatprep.subr.bf16.mxu0 0
      %256 = vmatpush1.bf16.msra.mxu0 0
      %257 = vmatprep.subr.bf16.mxu0 0
      %258 = vmatpush1.bf16.msra.mxu0 0
      %259 = vmatprep.subr.bf16.mxu0 0
      %260 = vmatpush1.bf16.msra.mxu0 0
      %261 = vmatprep.subr.bf16.mxu0 0
      %262 = vmatpush1.bf16.msra.mxu0 0
      %263 = vmatprep.subr.bf16.mxu0 0
      %264 = vmatpush1.bf16.msra.mxu0 0
      %265 = vmatprep.subr.bf16.mxu0 0
      %266 = vmatpush1.bf16.msra.mxu0 0
      %267 = vmatprep.subr.bf16.mxu0 0
      %268 = vmatpush1.bf16.msra.mxu0 0
      %269 = vmatprep.subr.bf16.mxu0 0
      %270 = vmatpush1.bf16.msra.mxu0 0
      %271 = vmatprep.mubr.bf16.mxu0 0
      %272 = vmatmul.mubr.bf16.gmra.mrb[0].mxu0 %v209
      %v273 = vpop.f32.mrb[0].mxu0
      %v274 = vadd.f32 %v205, %v273
      %v275 = vpop.f32.mrb[0].mxu0
      %v276 = vpop.f32.mrb[0].mxu0
      %v277 = vadd.f32 %v205, %v276
      %v278 = vpop.f32.mrb[0].mxu0
      %279 = vmatprep.mubr.bf16.mxu0 0
      %280 = vmatmul.mubr.bf16.gmra.mrb[0].mxu0 %v212
      %v281 = vpop.f32.mrb[0].mxu0
      %v282 = vadd.f32 %v205, %v281
      %v283 = vpop.f32.mrb[0].mxu0
      %v284 = vpop.f32.mrb[0].mxu0
      %v285 = vadd.f32 %v205, %v284
      %v286 = vpop.f32.mrb[0].mxu0
      %287 = vmatprep.mubr.bf16.mxu0 0
      %288 = vmatmul.mubr.bf16.gmra.mrb[0].mxu0 %v215
      %v289 = vpop.f32.mrb[0].mxu0
      %v290 = vadd.f32 %v205, %v289
      %v291 = vpop.f32.mrb[0].mxu0
      %v292 = vpop.f32.mrb[0].mxu0
      %v293 = vadd.f32 %v205, %v292
      %v294 = vpop.f32.mrb[0].mxu0
      %295 = vmatprep.mubr.bf16.mxu0 0
      %296 = vmatmul.mubr.bf16.gmra.mrb[0].mxu0 %v218
      %v297 = vpop.f32.mrb[0].mxu0
      %v298 = vadd.f32 %v205, %v297
      %v299 = vpop.f32.mrb[0].mxu0
      %v300 = vpop.f32.mrb[0].mxu0
      %v301 = vadd.f32 %v205, %v300
      %v302 = vpop.f32.mrb[0].mxu0
      %303 = vmatprep.mubr.bf16.mxu0 0
      %304 = vmatmul.mubr.bf16.gmra.mrb[0].mxu0 %v221
      %v305 = vpop.f32.mrb[0].mxu0
      %v306 = vadd.f32 %v205, %v305
      %v307 = vpop.f32.mrb[0].mxu0
      %v308 = vpop.f32.mrb[0].mxu0
      %v309 = vadd.f32 %v205, %v308
      %v310 = vpop.f32.mrb[0].mxu0
      %311 = vmatprep.mubr.bf16.mxu0 0
      %312 = vmatmul.mubr.bf16.gmra.mrb[0].mxu0 %v224
      %v313 = vpop.f32.mrb[0].mxu0
      %v314 = vadd.f32 %v205, %v313
      %v315 = vpop.f32.mrb[0].mxu0
      %v316 = vpop.f32.mrb[0].mxu0
      %v317 = vadd.f32 %v205, %v316
      %v318 = vpop.f32.mrb[0].mxu0
      %319 = vmatprep.mubr.bf16.mxu0 0
      %320 = vmatmul.mubr.bf16.gmra.mrb[0].mxu0 %v227
      %v321 = vpop.f32.mrb[0].mxu0
      %v322 = vadd.f32 %v205, %v321
      %v323 = vpop.f32.mrb[0].mxu0
      %v324 = vpop.f32.mrb[0].mxu0
      %v325 = vadd.f32 %v205, %v324
      %v326 = vpop.f32.mrb[0].mxu0
      %327 = vmatprep.mubr.bf16.mxu0 0
      %328 = vmatmul.mubr.bf16.gmra.mrb[0].mxu0 %v230
      %v329 = vpop.f32.mrb[0].mxu0
      %v330 = vadd.f32 %v205, %v329
      %v331 = vpop.f32.mrb[0].mxu0
      %v332 = vpop.f32.mrb[0].mxu0
      %v333 = vadd.f32 %v205, %v332
      %v334 = vpop.f32.mrb[0].mxu0
      %335 = vdwg.mxu0
      %vm336 = vcmask 392192
      %337 = vst.msk [vmem:[%s172] sm:$0xff] %vm336, %v274
      %338 = vst.msk [vmem:[%s172 + $0x8] sm:$0xff] %vm336, %v277
      %339 = vst.msk [vmem:[%s172 + $0x10] sm:$0xff] %vm336, %v282
      %340 = vst.msk [vmem:[%s172 + $0x18] sm:$0xff] %vm336, %v285
      %341 = vst.msk [vmem:[%s172 + $0x20] sm:$0xff] %vm336, %v290
      %342 = vst.msk [vmem:[%s172 + $0x28] sm:$0xff] %vm336, %v293
      %343 = vst.msk [vmem:[%s172 + $0x30] sm:$0xff] %vm336, %v298
      %344 = vst.msk [vmem:[%s172 + $0x38] sm:$0xff] %vm336, %v301
      %345 = vst.msk [vmem:[%s172 + $0x40] sm:$0xff] %vm336, %v306
      %346 = vst.msk [vmem:[%s172 + $0x48] sm:$0xff] %vm336, %v309
      %347 = vst.msk [vmem:[%s172 + $0x50] sm:$0xff] %vm336, %v314
      %348 = vst.msk [vmem:[%s172 + $0x58] sm:$0xff] %vm336, %v317
      %349 = vst.msk [vmem:[%s172 + $0x60] sm:$0xff] %vm336, %v322
      %350 = vst.msk [vmem:[%s172 + $0x68] sm:$0xff] %vm336, %v325
      %351 = vst.msk [vmem:[%s172 + $0x70] sm:$0xff] %vm336, %v330
      %352 = vst.msk [vmem:[%s172 + $0x78] sm:$0xff] %vm336, %v333
      %s353 = smul.u32 16, %s14
      %p354 = scmp.lt.s32.totalorder %s353, 31
      %s355 = scalar_select %p354, %s353, 31
      %s356 = smul.addr %s355, 8
      %s357 = scalar_lea.vmem %s3, %s356
      // Predicated region
      $region33: #{planner_forward.29} parent=31 // pred_check
        %p358 = pneg %p100
      $region34: #{planner_forward.29} parent=31 // pred_check_branch
        %360 = sbr.rel (%p358) target = $region36
      $region35: #{planner_forward.29} parent=31 // pred_region
        %s361 = smul.u32 16, %s14
      $region36: #{planner_forward.29} parent=31 // pred_fallthru
        _
    $region32: #{planner_forward.29} parent=5 // pred_fallthru
      _
    %p362 = scmp.le.s32.totalorder 2, %s9
    // Predicated region
    $region37: #{planner_forward.29} parent=5 // pred_check
      %p363 = pneg %p362
    $region38: #{planner_forward.29} parent=5 // pred_check_branch
      %365 = sbr.rel (%p363) target = $region40
    $region39: #{planner_forward.29} parent=5 // pred_region
      %s366 = ssub.s32 %s9, 2
      // Predicated region
      $region41: #{planner_forward.29} parent=39 // pred_check
        %p367 = pneg %p106
      $region42: #{planner_forward.29} parent=39 // pred_check_branch
        %369 = sbr.rel (%p367) target = $region44
      $region43: #{planner_forward.29} parent=39 // pred_region
        %s370 = smul.u32 16, %s15
        %p371 = scmp.lt.s32.totalorder %s370, 31
        %s372 = scalar_select %p371, %s370, 31
        %s373 = smul.addr %s372, 8
        %s374 = scalar_lea.vmem %s3, %s373
      $region44: #{planner_forward.29} parent=39 // pred_fallthru
        _
    $region40: #{planner_forward.29} parent=5 // pred_fallthru
      _
  $region6: #{planner_forward.29} parent=0 // loop_footer
    %s13 = sadd.s32 1, %s9
  $region7: #{planner_forward.29} parent=0 // loop_footer_branch
    %8 = sbr.rel target = $region3
  $region8: #{planner_forward.29} parent=0 // loop_exit
    _

// kernel: planner_forward.31
$region0: #{planner_forward.31}
  #allocation0 [shape = 'u32[]', space=smem, size = 0x4, offset = 0x4, fixed_abs, tag = 'smem constant byte address 0x4 - core index']
  #allocation1 [shape = 'u32[144,128]{1,0:T(1,128)}', space=vmem, size = 0x12000, scoped, tag = 'internal scratch']
  %s0 = inlined_call_operand.vmem [shape: f32[2,48], index: 0, kind: input, shape index: {}]
  %s1 = inlined_call_operand.vmem [shape: bf16[48,48], index: 1, kind: input, shape index: {}]
  %s2 = inlined_call_operand.vmem [shape: f32[1,48], index: 2, kind: input, shape index: {}]
  %s3 = inlined_call_operand.vmem [shape: bf16[48,48], index: 3, kind: input, shape index: {}]
  %s4 = inlined_call_operand.vmem [shape: f32[1,48], index: 4, kind: input, shape index: {}]
  %s5 = inlined_call_operand.vmem [shape: f32[2,48], index: 5, kind: output, shape index: {}]
  %s6 = sld [smem:[#allocation0]]
  $region30: #{planner_forward.31} parent=0
    _
  %s8 = ssub.s32 1, %s6
  %s9 = scalar_select 0, %s8, %s6
  // Predicated region
  $region2: #{planner_forward.31} parent=0 // pred_check
    _
  $region3: #{planner_forward.31} parent=0 // pred_check_branch
    %11 = sbr.rel (0) target = $region5
  $region4: #{planner_forward.31} parent=0 // pred_region
    _
  $region5: #{planner_forward.31} parent=0 // pred_fallthru
    _
  // Predicated region
  $region6: #{planner_forward.31} parent=0 // pred_check
    _
  $region7: #{planner_forward.31} parent=0 // pred_check_branch
    %13 = sbr.rel (0) target = $region9
  $region8: #{planner_forward.31} parent=0 // pred_region
    _
  $region9: #{planner_forward.31} parent=0 // pred_fallthru
    _
  // Predicated region
  $region10: #{planner_forward.31} parent=0 // pred_check
    _
  $region11: #{planner_forward.31} parent=0 // pred_check_branch
    %15 = sbr.rel (0) target = $region13
  $region12: #{planner_forward.31} parent=0 // pred_region
    _
  $region13: #{planner_forward.31} parent=0 // pred_fallthru
    _
  // Predicated region
  $region14: #{planner_forward.31} parent=0 // pred_check
    _
  $region15: #{planner_forward.31} parent=0 // pred_check_branch
    %17 = sbr.rel (0) target = $region17
  $region16: #{planner_forward.31} parent=0 // pred_region
    _
  $region17: #{planner_forward.31} parent=0 // pred_fallthru
    _
  // Predicated region
  $region18: #{planner_forward.31} parent=0 // pred_check
    _
  $region19: #{planner_forward.31} parent=0 // pred_check_branch
    %19 = sbr.rel (0) target = $region21
  $region20: #{planner_forward.31} parent=0 // pred_region
    _
  $region21: #{planner_forward.31} parent=0 // pred_fallthru
    _
  %v21 = vld [vmem:[%s0] sm:$0x3]
  %v22 = vpack.c.bf16 %v21, %v21
  %v23 = vld [vmem:[%s1] sm:$0xf]
  %v24 = vld [vmem:[%s1 + $0x4] sm:$0xf]
  %v25 = vld [vmem:[%s1 + $0x8] sm:$0xf]
  %v26 = vld [vmem:[%s1 + $0xc] sm:$0xf]
  %v27 = vld [vmem:[%s1 + $0x10] sm:$0xf]
  %v28 = vld [vmem:[%s1 + $0x14] sm:$0xf]
  %v29 = vld [vmem:[%s2] sm:$0x1]
  %v31 = vlaneseq
  %v32 = vshrl.u32 %v31, 7
  %v33 = vsub.s32 0, %v32
  %v34 = vrot.slane %v29, %v33
  %v42 = vunpack.c.l.b16 %v23
  %v43 = vunpack.c.l.b16 %v24
  %v44 = vunpack.c.l.b16 %v25
  %v45 = vunpack.c.l.b16 %v26
  %v46 = vunpack.c.l.b16 %v27
  %v47 = vunpack.c.l.b16 %v28
  %v48 = vpack.c.b16 %v43, %v42
  %v49 = vpack.c.b16 %v45, %v44
  %v50 = vpack.c.b16 %v47, %v46
  %vm54 = vcmask 392192
  %v56 = vsel %vm54, %v22, 0
  %58 = vmatprep.subr.bf16.mxu0 0
  %59 = vmatpush1.bf16.msra.mxu0 %v48
  %60 = vmatprep.subr.bf16.mxu0 0
  %61 = vmatpush1.bf16.msra.mxu0 %v49
  %62 = vmatprep.subr.bf16.mxu0 0
  %63 = vmatpush1.bf16.msra.mxu0 %v50
  %64 = vmatprep.subr.bf16.mxu0 0
  %65 = vmatpush1.bf16.msra.mxu0 0
  %66 = vmatprep.subr.bf16.mxu0 0
  %67 = vmatpush1.bf16.msra.mxu0 0
  %68 = vmatprep.subr.bf16.mxu0 0
  %69 = vmatpush1.bf16.msra.mxu0 0
  %70 = vmatprep.subr.bf16.mxu0 0
  %71 = vmatpush1.bf16.msra.mxu0 0
  %72 = vmatprep.subr.bf16.mxu0 0
  %73 = vmatpush1.bf16.msra.mxu0 0
  %74 = vmatprep.subr.bf16.mxu0 0
  %75 = vmatpush1.bf16.msra.mxu0 0
  %76 = vmatprep.subr.bf16.mxu0 0
  %77 = vmatpush1.bf16.msra.mxu0 0
  %78 = vmatprep.subr.bf16.mxu0 0
  %79 = vmatpush1.bf16.msra.mxu0 0
  %80 = vmatprep.subr.bf16.mxu0 0
  %81 = vmatpush1.bf16.msra.mxu0 0
  %82 = vmatprep.subr.bf16.mxu0 0
  %83 = vmatpush1.bf16.msra.mxu0 0
  %84 = vmatprep.subr.bf16.mxu0 0
  %85 = vmatpush1.bf16.msra.mxu0 0
  %86 = vmatprep.subr.bf16.mxu0 0
  %87 = vmatpush1.bf16.msra.mxu0 0
  %88 = vmatprep.subr.bf16.mxu0 0
  %89 = vmatpush1.bf16.msra.mxu0 0
  %90 = vmatprep.mubr.bf16.mxu0 0
  %91 = vmatmul.mubr.bf16.gmra.mrb[0].mxu0 %v56
  %v92 = vpop.f32.mrb[0].mxu0
  %v93 = vadd.f32 %v34, %v92
  %v94 = vpop.f32.mrb[0].mxu0
  %v95 = vpop.f32.mrb[0].mxu0
  %v96 = vpop.f32.mrb[0].mxu0
  %97 = vdwg.mxu0
  %v98 = vmax.f32 %v93, 0.0
  %v99 = vpack.c.bf16 %v98, %v98
  %v100 = vld [vmem:[%s3] sm:$0xf]
  %v101 = vld [vmem:[%s3 + $0x4] sm:$0xf]
  %v102 = vld [vmem:[%s3 + $0x8] sm:$0xf]
  %v103 = vld [vmem:[%s3 + $0xc] sm:$0xf]
  %v104 = vld [vmem:[%s3 + $0x10] sm:$0xf]
  %v105 = vld [vmem:[%s3 + $0x14] sm:$0xf]
  %v106 = vld [vmem:[%s4] sm:$0x1]
  %v108 = vlaneseq
  %v109 = vshrl.u32 %v108, 7
  %v110 = vsub.s32 0, %v109
  %v111 = vrot.slane %v106, %v110
  %v119 = vunpack.c.l.b16 %v100
  %v120 = vunpack.c.l.b16 %v101
  %v121 = vunpack.c.l.b16 %v102
  %v122 = vunpack.c.l.b16 %v103
  %v123 = vunpack.c.l.b16 %v104
  %v124 = vunpack.c.l.b16 %v105
  %v125 = vpack.c.b16 %v120, %v119
  %v126 = vpack.c.b16 %v122, %v121
  %v127 = vpack.c.b16 %v124, %v123
  %v132 = vsel %vm54, %v99, 0
  %134 = vmatprep.subr.bf16.mxu0 0
  %135 = vmatpush1.bf16.msra.mxu0 %v125
  %136 = vmatprep.subr.bf16.mxu0 0
  %137 = vmatpush1.bf16.msra.mxu0 %v126
  %138 = vmatprep.subr.bf16.mxu0 0
  %139 = vmatpush1.bf16.msra.mxu0 %v127
  %140 = vmatprep.subr.bf16.mxu0 0
  %141 = vmatpush1.bf16.msra.mxu0 0
  %142 = vmatprep.subr.bf16.mxu0 0
  %143 = vmatpush1.bf16.msra.mxu0 0
  %144 = vmatprep.subr.bf16.mxu0 0
  %145 = vmatpush1.bf16.msra.mxu0 0
  %146 = vmatprep.subr.bf16.mxu0 0
  %147 = vmatpush1.bf16.msra.mxu0 0
  %148 = vmatprep.subr.bf16.mxu0 0
  %149 = vmatpush1.bf16.msra.mxu0 0
  %150 = vmatprep.subr.bf16.mxu0 0
  %151 = vmatpush1.bf16.msra.mxu0 0
  %152 = vmatprep.subr.bf16.mxu0 0
  %153 = vmatpush1.bf16.msra.mxu0 0
  %154 = vmatprep.subr.bf16.mxu0 0
  %155 = vmatpush1.bf16.msra.mxu0 0
  %156 = vmatprep.subr.bf16.mxu0 0
  %157 = vmatpush1.bf16.msra.mxu0 0
  %158 = vmatprep.subr.bf16.mxu0 0
  %159 = vmatpush1.bf16.msra.mxu0 0
  %160 = vmatprep.subr.bf16.mxu0 0
  %161 = vmatpush1.bf16.msra.mxu0 0
  %162 = vmatprep.subr.bf16.mxu0 0
  %163 = vmatpush1.bf16.msra.mxu0 0
  %164 = vmatprep.subr.bf16.mxu0 0
  %165 = vmatpush1.bf16.msra.mxu0 0
  %166 = vmatprep.mubr.bf16.mxu0 0
  %167 = vmatmul.mubr.bf16.gmra.mrb[0].mxu0 %v132
  %v168 = vpop.f32.mrb[0].mxu0
  %v169 = vadd.f32 %v111, %v168
  %v170 = vpop.f32.mrb[0].mxu0
  %v171 = vpop.f32.mrb[0].mxu0
  %v172 = vpop.f32.mrb[0].mxu0
  %173 = vdwg.mxu0
  %v174 = vsub.f32 0.0, %v169
  %v175 = vmul.f32 %v174, 1.442695
  %v176 = vpow.pop %v175
  %v177 = vadd.f32 %v176, 1.0
  %v178 = vrcp.pop %v177
  %v179 = vmul.f32 %v169, %v178
  %vm180 = vcmask 386048
  %181 = vst.msk [vmem:[%s5] sm:$0x3] %vm180, %v179
  // Predicated region
  $region22: #{planner_forward.31} parent=0 // pred_check
    _
  $region23: #{planner_forward.31} parent=0 // pred_check_branch
    %183 = sbr.rel (0) target = $region25
  $region24: #{planner_forward.31} parent=0 // pred_region
    _
  $region25: #{planner_forward.31} parent=0 // pred_fallthru
    _
  // Predicated region
  $region26: #{planner_forward.31} parent=0 // pred_check
    _
  $region27: #{planner_forward.31} parent=0 // pred_check_branch
    %185 = sbr.rel (0) target = $region29
  $region28: #{planner_forward.31} parent=0 // pred_region
    _
  $region29: #{planner_forward.31} parent=0 // pred_fallthru
    _

// kernel: planner_forward.28
$region0: #{planner_forward.28}
  #allocation0 [shape = 'u32[]', space=smem, size = 0x4, offset = 0x4, fixed_abs, tag = 'smem constant byte address 0x4 - core index']
  #allocation1 [shape = 'u32[144,128]{1,0:T(1,128)}', space=vmem, size = 0x12000, scoped, tag = 'internal scratch']
  %s0 = inlined_call_operand.vmem [shape: f32[16,9], index: 0, kind: input, shape index: {}]
  %s1 = inlined_call_operand.vmem [shape: bf16[9,48], index: 1, kind: input, shape index: {}]
  %s2 = inlined_call_operand.vmem [shape: f32[1,48], index: 2, kind: input, shape index: {}]
  %s3 = inlined_call_operand.vmem [shape: bf16[48,48], index: 3, kind: input, shape index: {}]
  %s4 = inlined_call_operand.vmem [shape: f32[1,48], index: 4, kind: input, shape index: {}]
  %s5 = inlined_call_operand.vmem [shape: f32[16,48], index: 5, kind: output, shape index: {}]
  %s6 = sld [smem:[#allocation0]]
  $region30: #{planner_forward.28} parent=0
    _
  %s8 = ssub.s32 1, %s6
  %s9 = scalar_select 0, %s8, %s6
  // Predicated region
  $region2: #{planner_forward.28} parent=0 // pred_check
    _
  $region3: #{planner_forward.28} parent=0 // pred_check_branch
    %11 = sbr.rel (0) target = $region5
  $region4: #{planner_forward.28} parent=0 // pred_region
    _
  $region5: #{planner_forward.28} parent=0 // pred_fallthru
    _
  // Predicated region
  $region6: #{planner_forward.28} parent=0 // pred_check
    _
  $region7: #{planner_forward.28} parent=0 // pred_check_branch
    %13 = sbr.rel (0) target = $region9
  $region8: #{planner_forward.28} parent=0 // pred_region
    _
  $region9: #{planner_forward.28} parent=0 // pred_fallthru
    _
  // Predicated region
  $region10: #{planner_forward.28} parent=0 // pred_check
    _
  $region11: #{planner_forward.28} parent=0 // pred_check_branch
    %15 = sbr.rel (0) target = $region13
  $region12: #{planner_forward.28} parent=0 // pred_region
    _
  $region13: #{planner_forward.28} parent=0 // pred_fallthru
    _
  // Predicated region
  $region14: #{planner_forward.28} parent=0 // pred_check
    _
  $region15: #{planner_forward.28} parent=0 // pred_check_branch
    %17 = sbr.rel (0) target = $region17
  $region16: #{planner_forward.28} parent=0 // pred_region
    _
  $region17: #{planner_forward.28} parent=0 // pred_fallthru
    _
  // Predicated region
  $region18: #{planner_forward.28} parent=0 // pred_check
    _
  $region19: #{planner_forward.28} parent=0 // pred_check_branch
    %19 = sbr.rel (0) target = $region21
  $region20: #{planner_forward.28} parent=0 // pred_region
    _
  $region21: #{planner_forward.28} parent=0 // pred_fallthru
    _
  %v21 = vld [vmem:[%s0] sm:$0xff]
  %v22 = vld [vmem:[%s0 + $0x8] sm:$0xff]
  %v23 = vpack.c.bf16 %v22, %v21
  %v24 = vld [vmem:[%s1] sm:$0xf]
  %v25 = vld [vmem:[%s1 + $0x4] sm:$0x1]
  %v26 = vld [vmem:[%s2] sm:$0x1]
  %v28 = vlaneseq
  %v29 = vshrl.u32 %v28, 7
  %v30 = vsub.s32 0, %v29
  %v31 = vrot.slane %v26, %v30
  %v35 = vunpack.c.l.b16 %v24
  %v36 = vunpack.c.l.b16 %v25
  %v37 = vpack.c.b16 %v36, %v35
  %vm38 = vcmask 72704
  %v40 = vsel %vm38, %v23, 0
  %vm42 = vcmask 1043456
  %vm43 = vcmask 1044480
  %v44 = vsel %vm42, 4294967295, 65535
  %v45 = vsel %vm43, %v44, 0
  %v47 = vand.u32 %v37, %v45
  %49 = vmatprep.subr.bf16.mxu0 0
  %50 = vmatpush1.bf16.msra.mxu0 %v47
  %51 = vmatprep.subr.bf16.mxu0 0
  %52 = vmatpush1.bf16.msra.mxu0 0
  %53 = vmatprep.subr.bf16.mxu0 0
  %54 = vmatpush1.bf16.msra.mxu0 0
  %55 = vmatprep.subr.bf16.mxu0 0
  %56 = vmatpush1.bf16.msra.mxu0 0
  %57 = vmatprep.subr.bf16.mxu0 0
  %58 = vmatpush1.bf16.msra.mxu0 0
  %59 = vmatprep.subr.bf16.mxu0 0
  %60 = vmatpush1.bf16.msra.mxu0 0
  %61 = vmatprep.subr.bf16.mxu0 0
  %62 = vmatpush1.bf16.msra.mxu0 0
  %63 = vmatprep.subr.bf16.mxu0 0
  %64 = vmatpush1.bf16.msra.mxu0 0
  %65 = vmatprep.subr.bf16.mxu0 0
  %66 = vmatpush1.bf16.msra.mxu0 0
  %67 = vmatprep.subr.bf16.mxu0 0
  %68 = vmatpush1.bf16.msra.mxu0 0
  %69 = vmatprep.subr.bf16.mxu0 0
  %70 = vmatpush1.bf16.msra.mxu0 0
  %71 = vmatprep.subr.bf16.mxu0 0
  %72 = vmatpush1.bf16.msra.mxu0 0
  %73 = vmatprep.subr.bf16.mxu0 0
  %74 = vmatpush1.bf16.msra.mxu0 0
  %75 = vmatprep.subr.bf16.mxu0 0
  %76 = vmatpush1.bf16.msra.mxu0 0
  %77 = vmatprep.subr.bf16.mxu0 0
  %78 = vmatpush1.bf16.msra.mxu0 0
  %79 = vmatprep.subr.bf16.mxu0 0
  %80 = vmatpush1.bf16.msra.mxu0 0
  %81 = vmatprep.mubr.bf16.mxu0 0
  %82 = vmatmul.mubr.bf16.gmra.mrb[0].mxu0 %v40
  %v83 = vpop.f32.mrb[0].mxu0
  %v84 = vadd.f32 %v31, %v83
  %v85 = vpop.f32.mrb[0].mxu0
  %v86 = vpop.f32.mrb[0].mxu0
  %v87 = vadd.f32 %v31, %v86
  %v88 = vpop.f32.mrb[0].mxu0
  %89 = vdwg.mxu0
  %v90 = vmax.f32 %v84, 0.0
  %v91 = vmax.f32 %v87, 0.0
  %v92 = vpack.c.bf16 %v91, %v90
  %v93 = vld [vmem:[%s3] sm:$0xf]
  %v94 = vld [vmem:[%s3 + $0x4] sm:$0xf]
  %v95 = vld [vmem:[%s3 + $0x8] sm:$0xf]
  %v96 = vld [vmem:[%s3 + $0xc] sm:$0xf]
  %v97 = vld [vmem:[%s3 + $0x10] sm:$0xf]
  %v98 = vld [vmem:[%s3 + $0x14] sm:$0xf]
  %v99 = vld [vmem:[%s4] sm:$0x1]
  %v101 = vlaneseq
  %v102 = vshrl.u32 %v101, 7
  %v103 = vsub.s32 0, %v102
  %v104 = vrot.slane %v99, %v103
  %v112 = vunpack.c.l.b16 %v93
  %v113 = vunpack.c.l.b16 %v94
  %v114 = vunpack.c.l.b16 %v95
  %v115 = vunpack.c.l.b16 %v96
  %v116 = vunpack.c.l.b16 %v97
  %v117 = vunpack.c.l.b16 %v98
  %v118 = vpack.c.b16 %v113, %v112
  %v119 = vpack.c.b16 %v115, %v114
  %v120 = vpack.c.b16 %v117, %v116
  %vm124 = vcmask 392192
  %v126 = vsel %vm124, %v92, 0
  %128 = vmatprep.subr.bf16.mxu0 0
  %129 = vmatpush1.bf16.msra.mxu0 %v118
  %130 = vmatprep.subr.bf16.mxu0 0
  %131 = vmatpush1.bf16.msra.mxu0 %v119
  %132 = vmatprep.subr.bf16.mxu0 0
  %133 = vmatpush1.bf16.msra.mxu0 %v120
  %134 = vmatprep.subr.bf16.mxu0 0
  %135 = vmatpush1.bf16.msra.mxu0 0
  %136 = vmatprep.subr.bf16.mxu0 0
  %137 = vmatpush1.bf16.msra.mxu0 0
  %138 = vmatprep.subr.bf16.mxu0 0
  %139 = vmatpush1.bf16.msra.mxu0 0
  %140 = vmatprep.subr.bf16.mxu0 0
  %141 = vmatpush1.bf16.msra.mxu0 0
  %142 = vmatprep.subr.bf16.mxu0 0
  %143 = vmatpush1.bf16.msra.mxu0 0
  %144 = vmatprep.subr.bf16.mxu0 0
  %145 = vmatpush1.bf16.msra.mxu0 0
  %146 = vmatprep.subr.bf16.mxu0 0
  %147 = vmatpush1.bf16.msra.mxu0 0
  %148 = vmatprep.subr.bf16.mxu0 0
  %149 = vmatpush1.bf16.msra.mxu0 0
  %150 = vmatprep.subr.bf16.mxu0 0
  %151 = vmatpush1.bf16.msra.mxu0 0
  %152 = vmatprep.subr.bf16.mxu0 0
  %153 = vmatpush1.bf16.msra.mxu0 0
  %154 = vmatprep.subr.bf16.mxu0 0
  %155 = vmatpush1.bf16.msra.mxu0 0
  %156 = vmatprep.subr.bf16.mxu0 0
  %157 = vmatpush1.bf16.msra.mxu0 0
  %158 = vmatprep.subr.bf16.mxu0 0
  %159 = vmatpush1.bf16.msra.mxu0 0
  %160 = vmatprep.mubr.bf16.mxu0 0
  %161 = vmatmul.mubr.bf16.gmra.mrb[0].mxu0 %v126
  %v162 = vpop.f32.mrb[0].mxu0
  %v163 = vadd.f32 %v104, %v162
  %v164 = vpop.f32.mrb[0].mxu0
  %v165 = vpop.f32.mrb[0].mxu0
  %v166 = vadd.f32 %v104, %v165
  %v167 = vpop.f32.mrb[0].mxu0
  %168 = vdwg.mxu0
  %169 = vst.msk [vmem:[%s5] sm:$0xff] %vm124, %v163
  %170 = vst.msk [vmem:[%s5 + $0x8] sm:$0xff] %vm124, %v166
  // Predicated region
  $region22: #{planner_forward.28} parent=0 // pred_check
    _
  $region23: #{planner_forward.28} parent=0 // pred_check_branch
    %172 = sbr.rel (0) target = $region25
  $region24: #{planner_forward.28} parent=0 // pred_region
    _
  $region25: #{planner_forward.28} parent=0 // pred_fallthru
    _
  // Predicated region
  $region26: #{planner_forward.28} parent=0 // pred_check
    _
  $region27: #{planner_forward.28} parent=0 // pred_check_branch
    %174 = sbr.rel (0) target = $region29
  $region28: #{planner_forward.28} parent=0 // pred_region
    _
  $region29: #{planner_forward.28} parent=0 // pred_fallthru
    _

// kernel: planner_forward.35
$region0: #{planner_forward.35}
  #allocation0 [shape = 'u32[]', space=smem, size = 0x4, offset = 0x4, fixed_abs, tag = 'smem constant byte address 0x4 - core index']
  #allocation1 [shape = 'u32[144,128]{1,0:T(1,128)}', space=vmem, size = 0x12000, scoped, tag = 'internal scratch']
  %s0 = inlined_call_operand.vmem [shape: f32[16,48], index: 0, kind: input, shape index: {}]
  %s1 = inlined_call_operand.vmem [shape: f32[16,48], index: 1, kind: input, shape index: {}]
  %s2 = inlined_call_operand.vmem [shape: bf16[48,48], index: 2, kind: input, shape index: {}]
  %s3 = inlined_call_operand.vmem [shape: f32[1,48], index: 3, kind: input, shape index: {}]
  %s4 = inlined_call_operand.vmem [shape: bf16[48,3], index: 4, kind: input, shape index: {}]
  %s5 = inlined_call_operand.vmem [shape: f32[1,3], index: 5, kind: input, shape index: {}]
  %s6 = inlined_call_operand.vmem [shape: bf16[48,48], index: 6, kind: input, shape index: {}]
  %s7 = inlined_call_operand.vmem [shape: f32[1,48], index: 7, kind: input, shape index: {}]
  %s8 = inlined_call_operand.vmem [shape: bf16[48,6], index: 8, kind: input, shape index: {}]
  %s9 = inlined_call_operand.vmem [shape: f32[1,6], index: 9, kind: input, shape index: {}]
  %s10 = inlined_call_operand.vmem [shape: f32[16,9], index: 10, kind: output, shape index: {}]
  %s11 = sld [smem:[#allocation0]]
  $region50: #{planner_forward.35} parent=0
    _
  %s13 = ssub.s32 1, %s11
  %s14 = scalar_select 0, %s13, %s11
  // Predicated region
  $region2: #{planner_forward.35} parent=0 // pred_check
    _
  $region3: #{planner_forward.35} parent=0 // pred_check_branch
    %16 = sbr.rel (0) target = $region5
  $region4: #{planner_forward.35} parent=0 // pred_region
    _
  $region5: #{planner_forward.35} parent=0 // pred_fallthru
    _
  // Predicated region
  $region6: #{planner_forward.35} parent=0 // pred_check
    _
  $region7: #{planner_forward.35} parent=0 // pred_check_branch
    %18 = sbr.rel (0) target = $region9
  $region8: #{planner_forward.35} parent=0 // pred_region
    _
  $region9: #{planner_forward.35} parent=0 // pred_fallthru
    _
  // Predicated region
  $region10: #{planner_forward.35} parent=0 // pred_check
    _
  $region11: #{planner_forward.35} parent=0 // pred_check_branch
    %20 = sbr.rel (0) target = $region13
  $region12: #{planner_forward.35} parent=0 // pred_region
    _
  $region13: #{planner_forward.35} parent=0 // pred_fallthru
    _
  // Predicated region
  $region14: #{planner_forward.35} parent=0 // pred_check
    _
  $region15: #{planner_forward.35} parent=0 // pred_check_branch
    %22 = sbr.rel (0) target = $region17
  $region16: #{planner_forward.35} parent=0 // pred_region
    _
  $region17: #{planner_forward.35} parent=0 // pred_fallthru
    _
  // Predicated region
  $region18: #{planner_forward.35} parent=0 // pred_check
    _
  $region19: #{planner_forward.35} parent=0 // pred_check_branch
    %24 = sbr.rel (0) target = $region21
  $region20: #{planner_forward.35} parent=0 // pred_region
    _
  $region21: #{planner_forward.35} parent=0 // pred_fallthru
    _
  // Predicated region
  $region22: #{planner_forward.35} parent=0 // pred_check
    _
  $region23: #{planner_forward.35} parent=0 // pred_check_branch
    %26 = sbr.rel (0) target = $region25
  $region24: #{planner_forward.35} parent=0 // pred_region
    _
  $region25: #{planner_forward.35} parent=0 // pred_fallthru
    _
  // Predicated region
  $region26: #{planner_forward.35} parent=0 // pred_check
    _
  $region27: #{planner_forward.35} parent=0 // pred_check_branch
    %28 = sbr.rel (0) target = $region29
  $region28: #{planner_forward.35} parent=0 // pred_region
    _
  $region29: #{planner_forward.35} parent=0 // pred_fallthru
    _
  // Predicated region
  $region30: #{planner_forward.35} parent=0 // pred_check
    _
  $region31: #{planner_forward.35} parent=0 // pred_check_branch
    %30 = sbr.rel (0) target = $region33
  $region32: #{planner_forward.35} parent=0 // pred_region
    _
  $region33: #{planner_forward.35} parent=0 // pred_fallthru
    _
  // Predicated region
  $region34: #{planner_forward.35} parent=0 // pred_check
    _
  $region35: #{planner_forward.35} parent=0 // pred_check_branch
    %32 = sbr.rel (0) target = $region37
  $region36: #{planner_forward.35} parent=0 // pred_region
    _
  $region37: #{planner_forward.35} parent=0 // pred_fallthru
    _
  // Predicated region
  $region38: #{planner_forward.35} parent=0 // pred_check
    _
  $region39: #{planner_forward.35} parent=0 // pred_check_branch
    %34 = sbr.rel (0) target = $region41
  $region40: #{planner_forward.35} parent=0 // pred_region
    _
  $region41: #{planner_forward.35} parent=0 // pred_fallthru
    _
  %v36 = vld [vmem:[%s0] sm:$0xff]
  %v37 = vld [vmem:[%s0 + $0x8] sm:$0xff]
  %v38 = vld [vmem:[%s2] sm:$0xf]
  %v39 = vld [vmem:[%s2 + $0x4] sm:$0xf]
  %v40 = vld [vmem:[%s2 + $0x8] sm:$0xf]
  %v41 = vld [vmem:[%s2 + $0xc] sm:$0xf]
  %v42 = vld [vmem:[%s2 + $0x10] sm:$0xf]
  %v43 = vld [vmem:[%s2 + $0x14] sm:$0xf]
  %v44 = vpack.c.bf16 %v37, %v36
  %v45 = vld [vmem:[%s3] sm:$0x1]
  %v47 = vlaneseq
  %v48 = vshrl.u32 %v47, 7
  %v49 = vsub.s32 0, %v48
  %v50 = vrot.slane %v45, %v49
  %v58 = vunpack.c.l.b16 %v38
  %v59 = vunpack.c.l.b16 %v39
  %v60 = vunpack.c.l.b16 %v40
  %v61 = vunpack.c.l.b16 %v41
  %v62 = vunpack.c.l.b16 %v42
  %v63 = vunpack.c.l.b16 %v43
  %v64 = vpack.c.b16 %v59, %v58
  %v65 = vpack.c.b16 %v61, %v60
  %v66 = vpack.c.b16 %v63, %v62
  %vm70 = vcmask 392192
  %v72 = vsel %vm70, %v44, 0
  %74 = vmatprep.subr.bf16.mxu0 0
  %75 = vmatpush1.bf16.msra.mxu0 %v64
  %76 = vmatprep.subr.bf16.mxu0 0
  %77 = vmatpush1.bf16.msra.mxu0 %v65
  %78 = vmatprep.subr.bf16.mxu0 0
  %79 = vmatpush1.bf16.msra.mxu0 %v66
  %80 = vmatprep.subr.bf16.mxu0 0
  %81 = vmatpush1.bf16.msra.mxu0 0
  %82 = vmatprep.subr.bf16.mxu0 0
  %83 = vmatpush1.bf16.msra.mxu0 0
  %84 = vmatprep.subr.bf16.mxu0 0
  %85 = vmatpush1.bf16.msra.mxu0 0
  %86 = vmatprep.subr.bf16.mxu0 0
  %87 = vmatpush1.bf16.msra.mxu0 0
  %88 = vmatprep.subr.bf16.mxu0 0
  %89 = vmatpush1.bf16.msra.mxu0 0
  %90 = vmatprep.subr.bf16.mxu0 0
  %91 = vmatpush1.bf16.msra.mxu0 0
  %92 = vmatprep.subr.bf16.mxu0 0
  %93 = vmatpush1.bf16.msra.mxu0 0
  %94 = vmatprep.subr.bf16.mxu0 0
  %95 = vmatpush1.bf16.msra.mxu0 0
  %96 = vmatprep.subr.bf16.mxu0 0
  %97 = vmatpush1.bf16.msra.mxu0 0
  %98 = vmatprep.subr.bf16.mxu0 0
  %99 = vmatpush1.bf16.msra.mxu0 0
  %100 = vmatprep.subr.bf16.mxu0 0
  %101 = vmatpush1.bf16.msra.mxu0 0
  %102 = vmatprep.subr.bf16.mxu0 0
  %103 = vmatpush1.bf16.msra.mxu0 0
  %104 = vmatprep.subr.bf16.mxu0 0
  %105 = vmatpush1.bf16.msra.mxu0 0
  %106 = vmatprep.mubr.bf16.mxu0 0
  %107 = vmatmul.mubr.bf16.gmra.mrb[0].mxu0 %v72
  %v108 = vpop.f32.mrb[0].mxu0
  %v109 = vadd.f32 %v50, %v108
  %v110 = vpop.f32.mrb[0].mxu0
  %v111 = vpop.f32.mrb[0].mxu0
  %v112 = vadd.f32 %v50, %v111
  %v113 = vpop.f32.mrb[0].mxu0
  %114 = vdwg.mxu0
  %v115 = vmax.f32 %v109, 0.0
  %v116 = vmax.f32 %v112, 0.0
  %v117 = vld [vmem:[%s4] sm:$0xf]
  %v118 = vld [vmem:[%s4 + $0x4] sm:$0xf]
  %v119 = vld [vmem:[%s4 + $0x8] sm:$0xf]
  %v120 = vld [vmem:[%s4 + $0xc] sm:$0xf]
  %v121 = vld [vmem:[%s4 + $0x10] sm:$0xf]
  %v122 = vld [vmem:[%s4 + $0x14] sm:$0xf]
  %v123 = vpack.c.bf16 %v116, %v115
  %v124 = vld [vmem:[%s5] sm:$0x1]
  %v126 = vlaneseq
  %v127 = vshrl.u32 %v126, 7
  %v128 = vsub.s32 0, %v127
  %v129 = vrot.slane %v124, %v128
  %v137 = vunpack.c.l.b16 %v117
  %v138 = vunpack.c.l.b16 %v118
  %v139 = vunpack.c.l.b16 %v119
  %v140 = vunpack.c.l.b16 %v120
  %v141 = vunpack.c.l.b16 %v121
  %v142 = vunpack.c.l.b16 %v122
  %v143 = vpack.c.b16 %v138, %v137
  %v144 = vpack.c.b16 %v140, %v139
  %v145 = vpack.c.b16 %v142, %v141
  %v150 = vsel %vm70, %v123, 0
  %152 = vmatprep.subr.bf16.mxu0 0
  %153 = vmatpush1.bf16.msra.mxu0 %v143
  %154 = vmatprep.subr.bf16.mxu0 0
  %155 = vmatpush1.bf16.msra.mxu0 %v144
  %156 = vmatprep.subr.bf16.mxu0 0
  %157 = vmatpush1.bf16.msra.mxu0 %v145
  %158 = vmatprep.subr.bf16.mxu0 0
  %159 = vmatpush1.bf16.msra.mxu0 0
  %160 = vmatprep.subr.bf16.mxu0 0
  %161 = vmatpush1.bf16.msra.mxu0 0
  %162 = vmatprep.subr.bf16.mxu0 0
  %163 = vmatpush1.bf16.msra.mxu0 0
  %164 = vmatprep.subr.bf16.mxu0 0
  %165 = vmatpush1.bf16.msra.mxu0 0
  %166 = vmatprep.subr.bf16.mxu0 0
  %167 = vmatpush1.bf16.msra.mxu0 0
  %168 = vmatprep.subr.bf16.mxu0 0
  %169 = vmatpush1.bf16.msra.mxu0 0
  %170 = vmatprep.subr.bf16.mxu0 0
  %171 = vmatpush1.bf16.msra.mxu0 0
  %172 = vmatprep.subr.bf16.mxu0 0
  %173 = vmatpush1.bf16.msra.mxu0 0
  %174 = vmatprep.subr.bf16.mxu0 0
  %175 = vmatpush1.bf16.msra.mxu0 0
  %176 = vmatprep.subr.bf16.mxu0 0
  %177 = vmatpush1.bf16.msra.mxu0 0
  %178 = vmatprep.subr.bf16.mxu0 0
  %179 = vmatpush1.bf16.msra.mxu0 0
  %180 = vmatprep.subr.bf16.mxu0 0
  %181 = vmatpush1.bf16.msra.mxu0 0
  %182 = vmatprep.subr.bf16.mxu0 0
  %183 = vmatpush1.bf16.msra.mxu0 0
  %184 = vmatprep.mubr.bf16.mxu0 0
  %185 = vmatmul.mubr.bf16.gmra.mrb[0].mxu0 %v150
  %v186 = vpop.f32.mrb[0].mxu0
  %v187 = vadd.f32 %v129, %v186
  %v188 = vpop.f32.mrb[0].mxu0
  %v189 = vpop.f32.mrb[0].mxu0
  %v190 = vadd.f32 %v129, %v189
  %v191 = vpop.f32.mrb[0].mxu0
  %192 = vdwg.mxu0
  %v193 = vld [vmem:[%s1] sm:$0xff]
  %v194 = vld [vmem:[%s1 + $0x8] sm:$0xff]
  %v195 = vld [vmem:[%s6] sm:$0xf]
  %v196 = vld [vmem:[%s6 + $0x4] sm:$0xf]
  %v197 = vld [vmem:[%s6 + $0x8] sm:$0xf]
  %v198 = vld [vmem:[%s6 + $0xc] sm:$0xf]
  %v199 = vld [vmem:[%s6 + $0x10] sm:$0xf]
  %v200 = vld [vmem:[%s6 + $0x14] sm:$0xf]
  %v201 = vpack.c.bf16 %v194, %v193
  %v202 = vld [vmem:[%s7] sm:$0x1]
  %v204 = vlaneseq
  %v205 = vshrl.u32 %v204, 7
  %v206 = vsub.s32 0, %v205
  %v207 = vrot.slane %v202, %v206
  %v215 = vunpack.c.l.b16 %v195
  %v216 = vunpack.c.l.b16 %v196
  %v217 = vunpack.c.l.b16 %v197
  %v218 = vunpack.c.l.b16 %v198
  %v219 = vunpack.c.l.b16 %v199
  %v220 = vunpack.c.l.b16 %v200
  %v221 = vpack.c.b16 %v216, %v215
  %v222 = vpack.c.b16 %v218, %v217
  %v223 = vpack.c.b16 %v220, %v219
  %v228 = vsel %vm70, %v201, 0
  %230 = vmatprep.subr.bf16.mxu0 0
  %231 = vmatpush1.bf16.msra.mxu0 %v221
  %232 = vmatprep.subr.bf16.mxu0 0
  %233 = vmatpush1.bf16.msra.mxu0 %v222
  %234 = vmatprep.subr.bf16.mxu0 0
  %235 = vmatpush1.bf16.msra.mxu0 %v223
  %236 = vmatprep.subr.bf16.mxu0 0
  %237 = vmatpush1.bf16.msra.mxu0 0
  %238 = vmatprep.subr.bf16.mxu0 0
  %239 = vmatpush1.bf16.msra.mxu0 0
  %240 = vmatprep.subr.bf16.mxu0 0
  %241 = vmatpush1.bf16.msra.mxu0 0
  %242 = vmatprep.subr.bf16.mxu0 0
  %243 = vmatpush1.bf16.msra.mxu0 0
  %244 = vmatprep.subr.bf16.mxu0 0
  %245 = vmatpush1.bf16.msra.mxu0 0
  %246 = vmatprep.subr.bf16.mxu0 0
  %247 = vmatpush1.bf16.msra.mxu0 0
  %248 = vmatprep.subr.bf16.mxu0 0
  %249 = vmatpush1.bf16.msra.mxu0 0
  %250 = vmatprep.subr.bf16.mxu0 0
  %251 = vmatpush1.bf16.msra.mxu0 0
  %252 = vmatprep.subr.bf16.mxu0 0
  %253 = vmatpush1.bf16.msra.mxu0 0
  %254 = vmatprep.subr.bf16.mxu0 0
  %255 = vmatpush1.bf16.msra.mxu0 0
  %256 = vmatprep.subr.bf16.mxu0 0
  %257 = vmatpush1.bf16.msra.mxu0 0
  %258 = vmatprep.subr.bf16.mxu0 0
  %259 = vmatpush1.bf16.msra.mxu0 0
  %260 = vmatprep.subr.bf16.mxu0 0
  %261 = vmatpush1.bf16.msra.mxu0 0
  %262 = vmatprep.mubr.bf16.mxu0 0
  %263 = vmatmul.mubr.bf16.gmra.mrb[0].mxu0 %v228
  %v264 = vpop.f32.mrb[0].mxu0
  %v265 = vadd.f32 %v207, %v264
  %v266 = vpop.f32.mrb[0].mxu0
  %v267 = vpop.f32.mrb[0].mxu0
  %v268 = vadd.f32 %v207, %v267
  %v269 = vpop.f32.mrb[0].mxu0
  %270 = vdwg.mxu0
  %v271 = vmax.f32 %v265, 0.0
  %v272 = vmax.f32 %v268, 0.0
  %v273 = vld [vmem:[%s8] sm:$0xf]
  %v274 = vld [vmem:[%s8 + $0x4] sm:$0xf]
  %v275 = vld [vmem:[%s8 + $0x8] sm:$0xf]
  %v276 = vld [vmem:[%s8 + $0xc] sm:$0xf]
  %v277 = vld [vmem:[%s8 + $0x10] sm:$0xf]
  %v278 = vld [vmem:[%s8 + $0x14] sm:$0xf]
  %v279 = vpack.c.bf16 %v272, %v271
  %v280 = vld [vmem:[%s9] sm:$0x1]
  %v282 = vlaneseq
  %v283 = vshrl.u32 %v282, 7
  %v284 = vsub.s32 0, %v283
  %v285 = vrot.slane %v280, %v284
  %v293 = vunpack.c.l.b16 %v273
  %v294 = vunpack.c.l.b16 %v274
  %v295 = vunpack.c.l.b16 %v275
  %v296 = vunpack.c.l.b16 %v276
  %v297 = vunpack.c.l.b16 %v277
  %v298 = vunpack.c.l.b16 %v278
  %v299 = vpack.c.b16 %v294, %v293
  %v300 = vpack.c.b16 %v296, %v295
  %v301 = vpack.c.b16 %v298, %v297
  %v306 = vsel %vm70, %v279, 0
  %308 = vmatprep.subr.bf16.mxu0 0
  %309 = vmatpush1.bf16.msra.mxu0 %v299
  %310 = vmatprep.subr.bf16.mxu0 0
  %311 = vmatpush1.bf16.msra.mxu0 %v300
  %312 = vmatprep.subr.bf16.mxu0 0
  %313 = vmatpush1.bf16.msra.mxu0 %v301
  %314 = vmatprep.subr.bf16.mxu0 0
  %315 = vmatpush1.bf16.msra.mxu0 0
  %316 = vmatprep.subr.bf16.mxu0 0
  %317 = vmatpush1.bf16.msra.mxu0 0
  %318 = vmatprep.subr.bf16.mxu0 0
  %319 = vmatpush1.bf16.msra.mxu0 0
  %320 = vmatprep.subr.bf16.mxu0 0
  %321 = vmatpush1.bf16.msra.mxu0 0
  %322 = vmatprep.subr.bf16.mxu0 0
  %323 = vmatpush1.bf16.msra.mxu0 0
  %324 = vmatprep.subr.bf16.mxu0 0
  %325 = vmatpush1.bf16.msra.mxu0 0
  %326 = vmatprep.subr.bf16.mxu0 0
  %327 = vmatpush1.bf16.msra.mxu0 0
  %328 = vmatprep.subr.bf16.mxu0 0
  %329 = vmatpush1.bf16.msra.mxu0 0
  %330 = vmatprep.subr.bf16.mxu0 0
  %331 = vmatpush1.bf16.msra.mxu0 0
  %332 = vmatprep.subr.bf16.mxu0 0
  %333 = vmatpush1.bf16.msra.mxu0 0
  %334 = vmatprep.subr.bf16.mxu0 0
  %335 = vmatpush1.bf16.msra.mxu0 0
  %336 = vmatprep.subr.bf16.mxu0 0
  %337 = vmatpush1.bf16.msra.mxu0 0
  %338 = vmatprep.subr.bf16.mxu0 0
  %339 = vmatpush1.bf16.msra.mxu0 0
  %340 = vmatprep.mubr.bf16.mxu0 0
  %341 = vmatmul.mubr.bf16.gmra.mrb[0].mxu0 %v306
  %v342 = vpop.f32.mrb[0].mxu0
  %v343 = vadd.f32 %v285, %v342
  %v344 = vpop.f32.mrb[0].mxu0
  %v345 = vpop.f32.mrb[0].mxu0
  %v346 = vadd.f32 %v285, %v345
  %v347 = vpop.f32.mrb[0].mxu0
  %348 = vdwg.mxu0
  %351 = vrot.lane.b32.xlu0 %v343, 3
  %v352 = vpop.permute.xlu0 %351
  %353 = vrot.lane.b32.xlu0 %v346, 3
  %v354 = vpop.permute.xlu0 %353
  %vm357 = vcmask 23552
  %v358 = vsel %vm357, %v187, %v352
  %v359 = vsel %vm357, %v190, %v354
  %vm360 = vcmask 72704
  %361 = vst.msk [vmem:[%s10] sm:$0xff] %vm360, %v358
  %362 = vst.msk [vmem:[%s10 + $0x8] sm:$0xff] %vm360, %v359
  // Predicated region
  $region42: #{planner_forward.35} parent=0 // pred_check
    _
  $region43: #{planner_forward.35} parent=0 // pred_check_branch
    %364 = sbr.rel (0) target = $region45
  $region44: #{planner_forward.35} parent=0 // pred_region
    _
  $region45: #{planner_forward.35} parent=0 // pred_fallthru
    _
  // Predicated region
  $region46: #{planner_forward.35} parent=0 // pred_check
    _
  $region47: #{planner_forward.35} parent=0 // pred_check_branch
    %366 = sbr.rel (0) target = $region49
  $region48: #{planner_forward.35} parent=0 // pred_region
    _
  $region49: #{planner_forward.35} parent=0 // pred_fallthru
    _

// kernel: planner_forward.32
$region0: #{planner_forward.32}
  #allocation0 [shape = 'u32[]', space=smem, size = 0x4, offset = 0x4, fixed_abs, tag = 'smem constant byte address 0x4 - core index']
  #allocation1 [shape = 'u32[144,128]{1,0:T(1,128)}', space=vmem, size = 0x12000, scoped, tag = 'internal scratch']
  %s0 = inlined_call_operand.vmem [shape: f32[2,8,48], index: 0, kind: input, shape index: {}]
  %s1 = inlined_call_operand.vmem [shape: f32[2,8,48], index: 1, kind: input, shape index: {}]
  %s2 = inlined_call_operand.vmem [shape: bf16[2,129,48], index: 2, kind: input, shape index: {}]
  %s3 = inlined_call_operand.vmem [shape: bf16[2,129,48], index: 3, kind: input, shape index: {}]
  %s4 = inlined_call_operand.vmem [shape: f32[2,8], index: 4, kind: input, shape index: {}]
  %s5 = inlined_call_operand.vmem [shape: f32[2,48], index: 5, kind: input, shape index: {}]
  %s6 = inlined_call_operand.vmem [shape: bf16[2,6,48,48], index: 6, kind: input, shape index: {}]
  %s7 = inlined_call_operand.vmem [shape: bf16[2,3,48,96], index: 7, kind: input, shape index: {}]
  %s8 = inlined_call_operand.vmem [shape: bf16[2,96,48], index: 8, kind: input, shape index: {}]
  %s9 = inlined_call_operand.vmem [shape: f32[2,16,48], index: 9, kind: input, shape index: {}]
  %s10 = inlined_call_operand.vmem [shape: f32[2,8,96], index: 10, kind: input, shape index: {}]
  %s11 = inlined_call_operand.vmem [shape: f32[2,8,48], index: 11, kind: output, shape index: {}]
  %s12 = sld [smem:[#allocation0]]
  $region81: #{planner_forward.32} parent=0
    _
  %s14 = ssub.s32 1, %s12
  %s15 = scalar_select 0, %s14, %s12
  loop: start=0, step=1, limit=4
  $region2: #{planner_forward.32} parent=0 // loop_pre_header
    _
  $region3: #{planner_forward.32} parent=0 // loop_header
    %s17 = sphi 0, %s21
    %p18 = scmp.ge.s32.totalorder %s17, 4
    %s25 = sphi 0, %s25
    %s27 = sphi 0, %s25
    %s28 = sphi 0, %s27
    %s42 = sphi 0, %s28
    %s46 = sphi 0, %s46
    %s48 = sphi 0, %s46
    %s49 = sphi 0, %s48
    %s63 = sphi 0, %s49
    %s67 = sphi 0, %s67
    %s69 = sphi 0, %s67
    %s70 = sphi 0, %s69
    %s84 = sphi 0, %s70
    %s88 = sphi 0, %s88
    %s90 = sphi 0, %s88
    %s91 = sphi 0, %s90
    %s105 = sphi 0, %s91
    %s109 = sphi 0, %s109
    %s111 = sphi 0, %s109
    %s112 = sphi 0, %s111
    %s126 = sphi 0, %s112
    %s130 = sphi 0, %s130
    %s132 = sphi 0, %s130
    %s133 = sphi 0, %s132
    %s147 = sphi 0, %s133
    %s153 = sphi 0, %s155
    %s156 = sphi 0, %s153
    %s157 = sphi 0, %s156
    %s173 = sphi 0, %s157
    %s179 = sphi 0, %s181
    %s182 = sphi 0, %s179
    %s183 = sphi 0, %s182
    %s199 = sphi 0, %s183
    %s205 = sphi 0, %s207
    %s208 = sphi 0, %s205
    %s209 = sphi 0, %s208
    %s225 = sphi 0, %s209
    %s231 = sphi 0, %s233
    %s234 = sphi 0, %s231
    %s235 = sphi 0, %s234
    %s251 = sphi 0, %s235
    %s257 = sphi 0, %s259
    %s260 = sphi 0, %s257
    %s261 = sphi 0, %s260
    %s277 = sphi 0, %s261
    %s281 = sphi 0, %s281
    %s283 = sphi 0, %s281
    %s284 = sphi 0, %s283
    %s298 = sphi 0, %s284
  $region4: #{planner_forward.32} parent=0 // loop_header_branch
    %20 = sbr.rel (%p18) target = $region8
  $region5: #{planner_forward.32} parent=0 // loop_body
    %s22 = ssub.s32 %s17, 1
    %s23 = ssub.s32 %s17, 2
    %s24 = sadd.s32 %s17, 1
    %s26 = sadd.s32 %s25, 1
    %p29 = scmp.eq.s32.totalorder %s17, 1
    %p30 = scmp.ne.s32.totalorder %s25, %s27
    %p31 = scmp.eq.s32.totalorder %s17, 0
    %p32 = por %p30, %p31
    %p33 = scmp.ne.s32.totalorder %s25, %s27
    %p34 = scmp.eq.s32.totalorder %s22, 1
    %p35 = por %p33, %p34
    %p36 = scmp.ne.s32.totalorder %s27, %s28
    %p37 = scmp.eq.s32.totalorder %s22, 0
    %p38 = por %p36, %p37
    %p39 = scmp.ne.s32.totalorder %s27, %s28
    %p40 = scmp.eq.s32.totalorder %s23, 1
    %p41 = por %p39, %p40
    %p43 = scmp.ne.s32.totalorder %s28, %s42
    %p44 = scmp.eq.s32.totalorder %s23, 0
    %p45 = por %p43, %p44
    %s47 = sadd.s32 %s46, 1
    %p50 = scmp.eq.s32.totalorder %s17, 1
    %p51 = scmp.ne.s32.totalorder %s46, %s48
    %p52 = scmp.eq.s32.totalorder %s17, 0
    %p53 = por %p51, %p52
    %p54 = scmp.ne.s32.totalorder %s46, %s48
    %p55 = scmp.eq.s32.totalorder %s22, 1
    %p56 = por %p54, %p55
    %p57 = scmp.ne.s32.totalorder %s48, %s49
    %p58 = scmp.eq.s32.totalorder %s22, 0
    %p59 = por %p57, %p58
    %p60 = scmp.ne.s32.totalorder %s48, %s49
    %p61 = scmp.eq.s32.totalorder %s23, 1
    %p62 = por %p60, %p61
    %p64 = scmp.ne.s32.totalorder %s49, %s63
    %p65 = scmp.eq.s32.totalorder %s23, 0
    %p66 = por %p64, %p65
    %s68 = sadd.s32 %s67, 1
    %p71 = scmp.eq.s32.totalorder %s17, 1
    %p72 = scmp.ne.s32.totalorder %s67, %s69
    %p73 = scmp.eq.s32.totalorder %s17, 0
    %p74 = por %p72, %p73
    %p75 = scmp.ne.s32.totalorder %s67, %s69
    %p76 = scmp.eq.s32.totalorder %s22, 1
    %p77 = por %p75, %p76
    %p78 = scmp.ne.s32.totalorder %s69, %s70
    %p79 = scmp.eq.s32.totalorder %s22, 0
    %p80 = por %p78, %p79
    %p81 = scmp.ne.s32.totalorder %s69, %s70
    %p82 = scmp.eq.s32.totalorder %s23, 1
    %p83 = por %p81, %p82
    %p85 = scmp.ne.s32.totalorder %s70, %s84
    %p86 = scmp.eq.s32.totalorder %s23, 0
    %p87 = por %p85, %p86
    %s89 = sadd.s32 %s88, 1
    %p92 = scmp.eq.s32.totalorder %s17, 1
    %p93 = scmp.ne.s32.totalorder %s88, %s90
    %p94 = scmp.eq.s32.totalorder %s17, 0
    %p95 = por %p93, %p94
    %p96 = scmp.ne.s32.totalorder %s88, %s90
    %p97 = scmp.eq.s32.totalorder %s22, 1
    %p98 = por %p96, %p97
    %p99 = scmp.ne.s32.totalorder %s90, %s91
    %p100 = scmp.eq.s32.totalorder %s22, 0
    %p101 = por %p99, %p100
    %p102 = scmp.ne.s32.totalorder %s90, %s91
    %p103 = scmp.eq.s32.totalorder %s23, 1
    %p104 = por %p102, %p103
    %p106 = scmp.ne.s32.totalorder %s91, %s105
    %p107 = scmp.eq.s32.totalorder %s23, 0
    %p108 = por %p106, %p107
    %s110 = sadd.s32 %s109, 1
    %p113 = scmp.eq.s32.totalorder %s17, 1
    %p114 = scmp.ne.s32.totalorder %s109, %s111
    %p115 = scmp.eq.s32.totalorder %s17, 0
    %p116 = por %p114, %p115
    %p117 = scmp.ne.s32.totalorder %s109, %s111
    %p118 = scmp.eq.s32.totalorder %s22, 1
    %p119 = por %p117, %p118
    %p120 = scmp.ne.s32.totalorder %s111, %s112
    %p121 = scmp.eq.s32.totalorder %s22, 0
    %p122 = por %p120, %p121
    %p123 = scmp.ne.s32.totalorder %s111, %s112
    %p124 = scmp.eq.s32.totalorder %s23, 1
    %p125 = por %p123, %p124
    %p127 = scmp.ne.s32.totalorder %s112, %s126
    %p128 = scmp.eq.s32.totalorder %s23, 0
    %p129 = por %p127, %p128
    %s131 = sadd.s32 %s130, 1
    %p134 = scmp.eq.s32.totalorder %s17, 1
    %p135 = scmp.ne.s32.totalorder %s130, %s132
    %p136 = scmp.eq.s32.totalorder %s17, 0
    %p137 = por %p135, %p136
    %p138 = scmp.ne.s32.totalorder %s130, %s132
    %p139 = scmp.eq.s32.totalorder %s22, 1
    %p140 = por %p138, %p139
    %p141 = scmp.ne.s32.totalorder %s132, %s133
    %p142 = scmp.eq.s32.totalorder %s22, 0
    %p143 = por %p141, %p142
    %p144 = scmp.ne.s32.totalorder %s132, %s133
    %p145 = scmp.eq.s32.totalorder %s23, 1
    %p146 = por %p144, %p145
    %p148 = scmp.ne.s32.totalorder %s133, %s147
    %p149 = scmp.eq.s32.totalorder %s23, 0
    %p150 = por %p148, %p149
    %s151 = ssub.s32 %s17, %s24
    %p152 = scmp.eq.s32.totalorder %s151, 0
    %s154 = sadd.s32 %s153, 1
    %s155 = scalar_select %p152, %s153, %s154
    %p158 = pneg %p152
    %p159 = scmp.eq.s32.totalorder %s17, 1
    %p160 = por %p158, %p159
    %p161 = scmp.ne.s32.totalorder %s153, %s156
    %p162 = scmp.eq.s32.totalorder %s17, 0
    %p163 = por %p161, %p162
    %p164 = scmp.ne.s32.totalorder %s153, %s156
    %p165 = scmp.eq.s32.totalorder %s22, 1
    %p166 = por %p164, %p165
    %p167 = scmp.ne.s32.totalorder %s156, %s157
    %p168 = scmp.eq.s32.totalorder %s22, 0
    %p169 = por %p167, %p168
    %p170 = scmp.ne.s32.totalorder %s156, %s157
    %p171 = scmp.eq.s32.totalorder %s23, 1
    %p172 = por %p170, %p171
    %p174 = scmp.ne.s32.totalorder %s157, %s173
    %p175 = scmp.eq.s32.totalorder %s23, 0
    %p176 = por %p174, %p175
    %s177 = ssub.s32 %s17, %s24
    %p178 = scmp.eq.s32.totalorder %s177, 0
    %s180 = sadd.s32 %s179, 1
    %s181 = scalar_select %p178, %s179, %s180
    %p184 = pneg %p178
    %p185 = scmp.eq.s32.totalorder %s17, 1
    %p186 = por %p184, %p185
    %p187 = scmp.ne.s32.totalorder %s179, %s182
    %p188 = scmp.eq.s32.totalorder %s17, 0
    %p189 = por %p187, %p188
    %p190 = scmp.ne.s32.totalorder %s179, %s182
    %p191 = scmp.eq.s32.totalorder %s22, 1
    %p192 = por %p190, %p191
    %p193 = scmp.ne.s32.totalorder %s182, %s183
    %p194 = scmp.eq.s32.totalorder %s22, 0
    %p195 = por %p193, %p194
    %p196 = scmp.ne.s32.totalorder %s182, %s183
    %p197 = scmp.eq.s32.totalorder %s23, 1
    %p198 = por %p196, %p197
    %p200 = scmp.ne.s32.totalorder %s183, %s199
    %p201 = scmp.eq.s32.totalorder %s23, 0
    %p202 = por %p200, %p201
    %s203 = ssub.s32 %s17, %s24
    %p204 = scmp.eq.s32.totalorder %s203, 0
    %s206 = sadd.s32 %s205, 1
    %s207 = scalar_select %p204, %s205, %s206
    %p210 = pneg %p204
    %p211 = scmp.eq.s32.totalorder %s17, 1
    %p212 = por %p210, %p211
    %p213 = scmp.ne.s32.totalorder %s205, %s208
    %p214 = scmp.eq.s32.totalorder %s17, 0
    %p215 = por %p213, %p214
    %p216 = scmp.ne.s32.totalorder %s205, %s208
    %p217 = scmp.eq.s32.totalorder %s22, 1
    %p218 = por %p216, %p217
    %p219 = scmp.ne.s32.totalorder %s208, %s209
    %p220 = scmp.eq.s32.totalorder %s22, 0
    %p221 = por %p219, %p220
    %p222 = scmp.ne.s32.totalorder %s208, %s209
    %p223 = scmp.eq.s32.totalorder %s23, 1
    %p224 = por %p222, %p223
    %p226 = scmp.ne.s32.totalorder %s209, %s225
    %p227 = scmp.eq.s32.totalorder %s23, 0
    %p228 = por %p226, %p227
    %s229 = ssub.s32 %s17, %s24
    %p230 = scmp.eq.s32.totalorder %s229, 0
    %s232 = sadd.s32 %s231, 1
    %s233 = scalar_select %p230, %s231, %s232
    %p236 = pneg %p230
    %p237 = scmp.eq.s32.totalorder %s17, 1
    %p238 = por %p236, %p237
    %p239 = scmp.ne.s32.totalorder %s231, %s234
    %p240 = scmp.eq.s32.totalorder %s17, 0
    %p241 = por %p239, %p240
    %p242 = scmp.ne.s32.totalorder %s231, %s234
    %p243 = scmp.eq.s32.totalorder %s22, 1
    %p244 = por %p242, %p243
    %p245 = scmp.ne.s32.totalorder %s234, %s235
    %p246 = scmp.eq.s32.totalorder %s22, 0
    %p247 = por %p245, %p246
    %p248 = scmp.ne.s32.totalorder %s234, %s235
    %p249 = scmp.eq.s32.totalorder %s23, 1
    %p250 = por %p248, %p249
    %p252 = scmp.ne.s32.totalorder %s235, %s251
    %p253 = scmp.eq.s32.totalorder %s23, 0
    %p254 = por %p252, %p253
    %s255 = ssub.s32 %s17, %s24
    %p256 = scmp.eq.s32.totalorder %s255, 0
    %s258 = sadd.s32 %s257, 1
    %s259 = scalar_select %p256, %s257, %s258
    %p262 = pneg %p256
    %p263 = scmp.eq.s32.totalorder %s17, 1
    %p264 = por %p262, %p263
    %p265 = scmp.ne.s32.totalorder %s257, %s260
    %p266 = scmp.eq.s32.totalorder %s17, 0
    %p267 = por %p265, %p266
    %p268 = scmp.ne.s32.totalorder %s257, %s260
    %p269 = scmp.eq.s32.totalorder %s22, 1
    %p270 = por %p268, %p269
    %p271 = scmp.ne.s32.totalorder %s260, %s261
    %p272 = scmp.eq.s32.totalorder %s22, 0
    %p273 = por %p271, %p272
    %p274 = scmp.ne.s32.totalorder %s260, %s261
    %p275 = scmp.eq.s32.totalorder %s23, 1
    %p276 = por %p274, %p275
    %p278 = scmp.ne.s32.totalorder %s261, %s277
    %p279 = scmp.eq.s32.totalorder %s23, 0
    %p280 = por %p278, %p279
    %s282 = sadd.s32 %s281, 1
    %p285 = scmp.eq.s32.totalorder %s17, 1
    %p286 = scmp.ne.s32.totalorder %s281, %s283
    %p287 = scmp.eq.s32.totalorder %s17, 0
    %p288 = por %p286, %p287
    %p289 = scmp.ne.s32.totalorder %s281, %s283
    %p290 = scmp.eq.s32.totalorder %s22, 1
    %p291 = por %p289, %p290
    %p292 = scmp.ne.s32.totalorder %s283, %s284
    %p293 = scmp.eq.s32.totalorder %s22, 0
    %p294 = por %p292, %p293
    %p295 = scmp.ne.s32.totalorder %s283, %s284
    %p296 = scmp.eq.s32.totalorder %s23, 1
    %p297 = por %p295, %p296
    %p299 = scmp.ne.s32.totalorder %s284, %s298
    %p300 = scmp.eq.s32.totalorder %s23, 0
    %p301 = por %p299, %p300
    %p302 = scmp.le.s32.totalorder 1, %s17
    %p303 = scmp.lt.s32.totalorder %s17, 3
    %p304 = pnand %p302, %p303
    %p305 = pneg %p304
    // Predicated region
    $region9: #{planner_forward.32} parent=5 // pred_check
      _
    $region10: #{planner_forward.32} parent=5 // pred_check_branch
      %307 = sbr.rel (%p304) target = $region12
    $region11: #{planner_forward.32} parent=5 // pred_region
      %s308 = ssub.s32 %s17, 1
      // Predicated region
      $region13: #{planner_forward.32} parent=11 // pred_check
        %p309 = pneg %p38
      $region14: #{planner_forward.32} parent=11 // pred_check_branch
        %311 = sbr.rel (%p309) target = $region16
      $region15: #{planner_forward.32} parent=11 // pred_region
        _
      $region16: #{planner_forward.32} parent=11 // pred_fallthru
        _
      // Predicated region
      $region17: #{planner_forward.32} parent=11 // pred_check
        %p312 = pneg %p59
      $region18: #{planner_forward.32} parent=11 // pred_check_branch
        %314 = sbr.rel (%p312) target = $region20
      $region19: #{planner_forward.32} parent=11 // pred_region
        _
      $region20: #{planner_forward.32} parent=11 // pred_fallthru
        _
      // Predicated region
      $region21: #{planner_forward.32} parent=11 // pred_check
        %p315 = pneg %p80
      $region22: #{planner_forward.32} parent=11 // pred_check_branch
        %317 = sbr.rel (%p315) target = $region24
      $region23: #{planner_forward.32} parent=11 // pred_region
        _
      $region24: #{planner_forward.32} parent=11 // pred_fallthru
        _
      // Predicated region
      $region25: #{planner_forward.32} parent=11 // pred_check
        %p318 = pneg %p101
      $region26: #{planner_forward.32} parent=11 // pred_check_branch
        %320 = sbr.rel (%p318) target = $region28
      $region27: #{planner_forward.32} parent=11 // pred_region
        _
      $region28: #{planner_forward.32} parent=11 // pred_fallthru
        _
      // Predicated region
      $region29: #{planner_forward.32} parent=11 // pred_check
        %p321 = pneg %p122
      $region30: #{planner_forward.32} parent=11 // pred_check_branch
        %323 = sbr.rel (%p321) target = $region32
      $region31: #{planner_forward.32} parent=11 // pred_region
        _
      $region32: #{planner_forward.32} parent=11 // pred_fallthru
        _
      // Predicated region
      $region33: #{planner_forward.32} parent=11 // pred_check
        %p324 = pneg %p143
      $region34: #{planner_forward.32} parent=11 // pred_check_branch
        %326 = sbr.rel (%p324) target = $region36
      $region35: #{planner_forward.32} parent=11 // pred_region
        _
      $region36: #{planner_forward.32} parent=11 // pred_fallthru
        _
    $region12: #{planner_forward.32} parent=5 // pred_fallthru
      _
    %p327 = scmp.lt.s32.totalorder %s17, 2
    // Predicated region
    $region37: #{planner_forward.32} parent=5 // pred_check
      %p328 = pneg %p327
    $region38: #{planner_forward.32} parent=5 // pred_check_branch
      %330 = sbr.rel (%p328) target = $region40
    $region39: #{planner_forward.32} parent=5 // pred_region
      // Predicated region
      $region41: #{planner_forward.32} parent=39 // pred_check
        %p331 = pneg %p163
      $region42: #{planner_forward.32} parent=39 // pred_check_branch
        %333 = sbr.rel (%p331) target = $region44
      $region43: #{planner_forward.32} parent=39 // pred_region
        %p334 = scmp.lt.s32.totalorder %s17, 1
        %s335 = scalar_select %p334, %s17, 1
        %s336 = smul.addr %s335, 36
        %s337 = smul.addr %s336, 4
        %s338 = scalar_lea.vmem %s6, %s337
      $region44: #{planner_forward.32} parent=39 // pred_fallthru
        _
      // Predicated region
      $region45: #{planner_forward.32} parent=39 // pred_check
        %p339 = pneg %p189
      $region46: #{planner_forward.32} parent=39 // pred_check_branch
        %341 = sbr.rel (%p339) target = $region48
      $region47: #{planner_forward.32} parent=39 // pred_region
        %p342 = scmp.lt.s32.totalorder %s17, 1
        %s343 = scalar_select %p342, %s17, 1
        %s344 = smul.addr %s343, 18
        %s345 = smul.addr %s344, 4
        %s346 = scalar_lea.vmem %s7, %s345
      $region48: #{planner_forward.32} parent=39 // pred_fallthru
        _
      // Predicated region
      $region49: #{planner_forward.32} parent=39 // pred_check
        %p347 = pneg %p215
      $region50: #{planner_forward.32} parent=39 // pred_check_branch
        %349 = sbr.rel (%p347) target = $region52
      $region51: #{planner_forward.32} parent=39 // pred_region
        %p350 = scmp.lt.s32.totalorder %s17, 1
        %s351 = scalar_select %p350, %s17, 1
        %s352 = smul.addr %s351, 12
        %s353 = smul.addr %s352, 4
        %s354 = scalar_lea.vmem %s8, %s353
      $region52: #{planner_forward.32} parent=39 // pred_fallthru
        _
      // Predicated region
      $region53: #{planner_forward.32} parent=39 // pred_check
        %p355 = pneg %p241
      $region54: #{planner_forward.32} parent=39 // pred_check_branch
        %357 = sbr.rel (%p355) target = $region56
      $region55: #{planner_forward.32} parent=39 // pred_region
        %p358 = scmp.lt.s32.totalorder %s17, 1
        %s359 = scalar_select %p358, %s17, 1
        %s360 = smul.addr %s359, 2
        %s361 = smul.addr %s360, 8
        %s362 = scalar_lea.vmem %s9, %s361
      $region56: #{planner_forward.32} parent=39 // pred_fallthru
        _
      // Predicated region
      $region57: #{planner_forward.32} parent=39 // pred_check
        %p363 = pneg %p267
      $region58: #{planner_forward.32} parent=39 // pred_check_branch
        %365 = sbr.rel (%p363) target = $region60
      $region59: #{planner_forward.32} parent=39 // pred_region
        %p366 = scmp.lt.s32.totalorder %s17, 1
        %s367 = scalar_select %p366, %s17, 1
        %s368 = smul.addr %s367, 8
        %s369 = scalar_lea.vmem %s10, %s368
      $region60: #{planner_forward.32} parent=39 // pred_fallthru
        _
    $region40: #{planner_forward.32} parent=5 // pred_fallthru
      _
    %p370 = scmp.le.s32.totalorder 1, %s17
    %p371 = scmp.lt.s32.totalorder %s17, 3
    %p372 = pnand %p370, %p371
    %p373 = pneg %p372
    // Predicated region
    $region61: #{planner_forward.32} parent=5 // pred_check
      _
    $region62: #{planner_forward.32} parent=5 // pred_check_branch
      %375 = sbr.rel (%p372) target = $region64
    $region63: #{planner_forward.32} parent=5 // pred_region
      %s376 = ssub.s32 %s17, 1
      %p377 = pneg %p38
      %p378 = pneg %p35
      %p379 = pneg %p59
      %p380 = pneg %p56
      %p381 = pneg %p80
      %p382 = pneg %p77
      %p383 = pneg %p101
      %p384 = pneg %p98
      %p385 = pneg %p122
      %p386 = pneg %p119
      %p387 = pneg %p143
      %p388 = pneg %p140
      %p389 = scmp.lt.s32.totalorder %s22, 1
      %s390 = scalar_select %p389, %s22, 1
      %s391 = smul.addr %s390, 36
      %s392 = smul.addr %s391, 4
      %s393 = scalar_lea.vmem %s6, %s392
      %p394 = pneg %p169
      %p395 = pneg %p166
      %p396 = scmp.lt.s32.totalorder %s22, 1
      %s397 = scalar_select %p396, %s22, 1
      %s398 = smul.addr %s397, 18
      %s399 = smul.addr %s398, 4
      %s400 = scalar_lea.vmem %s7, %s399
      %p401 = pneg %p195
      %p402 = pneg %p192
      %p403 = scmp.lt.s32.totalorder %s22, 1
      %s404 = scalar_select %p403, %s22, 1
      %s405 = smul.addr %s404, 12
      %s406 = smul.addr %s405, 4
      %s407 = scalar_lea.vmem %s8, %s406
      %p408 = pneg %p221
      %p409 = pneg %p218
      %p410 = scmp.lt.s32.totalorder %s22, 1
      %s411 = scalar_select %p410, %s22, 1
      %s412 = smul.addr %s411, 2
      %s413 = smul.addr %s412, 8
      %s414 = scalar_lea.vmem %s9, %s413
      %p415 = pneg %p247
      %p416 = pneg %p244
      %p417 = scmp.lt.s32.totalorder %s22, 1
      %s418 = scalar_select %p417, %s22, 1
      %s419 = smul.addr %s418, 8
      %s420 = scalar_lea.vmem %s10, %s419
      %p421 = pneg %p273
      %p422 = pneg %p270
      %p423 = pneg %p294
      %p424 = pneg %p291
      %p425 = scmp.lt.s32.totalorder %s22, 1
      %s426 = scalar_select %p425, %s22, 1
      %s427 = smul.addr %s426, 36
      %s428 = smul.addr %s427, 4
      %s429 = scalar_lea.vmem %s6, %s428
      %p430 = scmp.lt.s32.totalorder %s22, 1
      %s431 = scalar_select %p430, %s22, 1
      %s432 = smul.addr %s431, 18
      %s433 = smul.addr %s432, 4
      %s434 = scalar_lea.vmem %s7, %s433
      %p435 = scmp.lt.s32.totalorder %s22, 1
      %s436 = scalar_select %p435, %s22, 1
      %s437 = smul.addr %s436, 12
      %s438 = smul.addr %s437, 4
      %s439 = scalar_lea.vmem %s8, %s438
      %p440 = scmp.lt.s32.totalorder %s22, 1
      %s441 = scalar_select %p440, %s22, 1
      %s442 = smul.addr %s441, 2
      %s443 = smul.addr %s442, 8
      %s444 = scalar_lea.vmem %s9, %s443
      %p445 = scmp.lt.s32.totalorder %s22, 1
      %s446 = scalar_select %p445, %s22, 1
      %s447 = smul.addr %s446, 8
      %s448 = scalar_lea.vmem %s10, %s447
      %p450 = scmp.eq.s32.totalorder %s22, 0
      // Predicated region
      $region65: #{planner_forward.32} parent=63 // pred_check
        %p451 = pneg %p450
      $region66: #{planner_forward.32} parent=63 // pred_check_branch
        %453 = sbr.rel (%p451) target = $region68
      $region67: #{planner_forward.32} parent=63 // pred_region
        %v454 = vld [vmem:[%s0] sm:$0xff]
        %v455 = vld [vmem:[%s0 + $0x8] sm:$0xff]
        %vm456 = vcmask 392192
        %457 = vst.msk [vmem:[%s11] sm:$0xff] %vm456, %v454
        %458 = vst.msk [vmem:[%s11 + $0x8] sm:$0xff] %vm456, %v455
      $region68: #{planner_forward.32} parent=63 // pred_fallthru
        _
      %v459 = vld [vmem:[%s11] sm:$0xff]
      %v460 = vld [vmem:[%s11 + $0x8] sm:$0xff]
      %v461 = vld [vmem:[%s1] sm:$0xff]
      %v462 = vld [vmem:[%s1 + $0x8] sm:$0xff]
      %v463 = vld [vmem:[%s4] sm:$0x3]
      %v464 = vld [vmem:[%s5] sm:$0x3]
      %v465 = vld [vmem:[%s429] sm:$0xf]
      %v466 = vld [vmem:[%s429 + $0x4] sm:$0xf]
      %v467 = vld [vmem:[%s429 + $0x8] sm:$0xf]
      %v468 = vld [vmem:[%s429 + $0xc] sm:$0xf]
      %v469 = vld [vmem:[%s429 + $0x10] sm:$0xf]
      %v470 = vld [vmem:[%s429 + $0x14] sm:$0xf]
      %s471 = scalar_lea.vmem %s429, 24
      %v472 = vld [vmem:[%s471] sm:$0xf]
      %v473 = vld [vmem:[%s471 + $0x4] sm:$0xf]
      %v474 = vld [vmem:[%s471 + $0x8] sm:$0xf]
      %v475 = vld [vmem:[%s471 + $0xc] sm:$0xf]
      %v476 = vld [vmem:[%s471 + $0x10] sm:$0xf]
      %v477 = vld [vmem:[%s471 + $0x14] sm:$0xf]
      %s478 = scalar_lea.vmem %s429, 48
      %v479 = vld [vmem:[%s478] sm:$0xf]
      %v480 = vld [vmem:[%s478 + $0x4] sm:$0xf]
      %v481 = vld [vmem:[%s478 + $0x8] sm:$0xf]
      %v482 = vld [vmem:[%s478 + $0xc] sm:$0xf]
      %v483 = vld [vmem:[%s478 + $0x10] sm:$0xf]
      %v484 = vld [vmem:[%s478 + $0x14] sm:$0xf]
      %s485 = scalar_lea.vmem %s429, 72
      %v486 = vld [vmem:[%s485] sm:$0xf]
      %v487 = vld [vmem:[%s485 + $0x4] sm:$0xf]
      %v488 = vld [vmem:[%s485 + $0x8] sm:$0xf]
      %v489 = vld [vmem:[%s485 + $0xc] sm:$0xf]
      %v490 = vld [vmem:[%s485 + $0x10] sm:$0xf]
      %v491 = vld [vmem:[%s485 + $0x14] sm:$0xf]
      %s492 = scalar_lea.vmem %s429, 96
      %v493 = vld [vmem:[%s492] sm:$0xf]
      %v494 = vld [vmem:[%s492 + $0x4] sm:$0xf]
      %v495 = vld [vmem:[%s492 + $0x8] sm:$0xf]
      %v496 = vld [vmem:[%s492 + $0xc] sm:$0xf]
      %v497 = vld [vmem:[%s492 + $0x10] sm:$0xf]
      %v498 = vld [vmem:[%s492 + $0x14] sm:$0xf]
      %s499 = scalar_lea.vmem %s429, 120
      %v500 = vld [vmem:[%s499] sm:$0xf]
      %v501 = vld [vmem:[%s499 + $0x4] sm:$0xf]
      %v502 = vld [vmem:[%s499 + $0x8] sm:$0xf]
      %v503 = vld [vmem:[%s499 + $0xc] sm:$0xf]
      %v504 = vld [vmem:[%s499 + $0x10] sm:$0xf]
      %v505 = vld [vmem:[%s499 + $0x14] sm:$0xf]
      %v506 = vld [vmem:[%s434] sm:$0xf]
      %v507 = vld [vmem:[%s434 + $0x4] sm:$0xf]
      %v508 = vld [vmem:[%s434 + $0x8] sm:$0xf]
      %v509 = vld [vmem:[%s434 + $0xc] sm:$0xf]
      %v510 = vld [vmem:[%s434 + $0x10] sm:$0xf]
      %v511 = vld [vmem:[%s434 + $0x14] sm:$0xf]
      %s512 = scalar_lea.vmem %s434, 24
      %v513 = vld [vmem:[%s512] sm:$0xf]
      %v514 = vld [vmem:[%s512 + $0x4] sm:$0xf]
      %v515 = vld [vmem:[%s512 + $0x8] sm:$0xf]
      %v516 = vld [vmem:[%s512 + $0xc] sm:$0xf]
      %v517 = vld [vmem:[%s512 + $0x10] sm:$0xf]
      %v518 = vld [vmem:[%s512 + $0x14] sm:$0xf]
      %s519 = scalar_lea.vmem %s434, 48
      %v520 = vld [vmem:[%s519] sm:$0xf]
      %v521 = vld [vmem:[%s519 + $0x4] sm:$0xf]
      %v522 = vld [vmem:[%s519 + $0x8] sm:$0xf]
      %v523 = vld [vmem:[%s519 + $0xc] sm:$0xf]
      %v524 = vld [vmem:[%s519 + $0x10] sm:$0xf]
      %v525 = vld [vmem:[%s519 + $0x14] sm:$0xf]
      %v526 = vld [vmem:[%s439] sm:$0xf]
      %v527 = vld [vmem:[%s439 + $0x4] sm:$0xf]
      %v528 = vld [vmem:[%s439 + $0x8] sm:$0xf]
      %v529 = vld [vmem:[%s439 + $0xc] sm:$0xf]
      %v530 = vld [vmem:[%s439 + $0x10] sm:$0xf]
      %v531 = vld [vmem:[%s439 + $0x14] sm:$0xf]
      %v532 = vld [vmem:[%s439 + $0x18] sm:$0xf]
      %v533 = vld [vmem:[%s439 + $0x1c] sm:$0xf]
      %v534 = vld [vmem:[%s439 + $0x20] sm:$0xf]
      %v535 = vld [vmem:[%s439 + $0x24] sm:$0xf]
      %v536 = vld [vmem:[%s439 + $0x28] sm:$0xf]
      %v537 = vld [vmem:[%s439 + $0x2c] sm:$0xf]
      %v538 = vld [vmem:[%s444] sm:$0xff]
      %v539 = vld [vmem:[%s444 + $0x8] sm:$0xff]
      %v540 = vld [vmem:[%s448] sm:$0xff]
      %v541 = vpack.c.bf16 %v464, %v464
      %v542 = vlaneseq
      %v543 = vshrl.u32 %v542, 7
      %v544 = vsub.s32 0, %v543
      %v545 = vrot.slane %v540, %v544
      %v552 = vunpack.c.l.b16 %v506
      %v553 = vunpack.c.l.b16 %v507
      %v554 = vunpack.c.l.b16 %v508
      %v555 = vunpack.c.l.b16 %v509
      %v556 = vunpack.c.l.b16 %v510
      %v557 = vunpack.c.l.b16 %v511
      %v558 = vpack.c.b16 %v553, %v552
      %v559 = vpack.c.b16 %v555, %v554
      %v560 = vpack.c.b16 %v557, %v556
      %vm564 = vcmask 392192
      %v566 = vsel %vm564, %v541, 0
      %568 = vmatprep.subr.bf16.mxu0 0
      %569 = vmatpush1.bf16.msra.mxu0 %v558
      %570 = vmatprep.subr.bf16.mxu0 0
      %571 = vmatpush1.bf16.msra.mxu0 %v559
      %572 = vmatprep.subr.bf16.mxu0 0
      %573 = vmatpush1.bf16.msra.mxu0 %v560
      %574 = vmatprep.subr.bf16.mxu0 0
      %575 = vmatpush1.bf16.msra.mxu0 0
      %576 = vmatprep.subr.bf16.mxu0 0
      %577 = vmatpush1.bf16.msra.mxu0 0
      %578 = vmatprep.subr.bf16.mxu0 0
      %579 = vmatpush1.bf16.msra.mxu0 0
      %580 = vmatprep.subr.bf16.mxu0 0
      %581 = vmatpush1.bf16.msra.mxu0 0
      %582 = vmatprep.subr.bf16.mxu0 0
      %583 = vmatpush1.bf16.msra.mxu0 0
      %584 = vmatprep.subr.bf16.mxu0 0
      %585 = vmatpush1.bf16.msra.mxu0 0
      %586 = vmatprep.subr.bf16.mxu0 0
      %587 = vmatpush1.bf16.msra.mxu0 0
      %588 = vmatprep.subr.bf16.mxu0 0
      %589 = vmatpush1.bf16.msra.mxu0 0
      %590 = vmatprep.subr.bf16.mxu0 0
      %591 = vmatpush1.bf16.msra.mxu0 0
      %592 = vmatprep.subr.bf16.mxu0 0
      %593 = vmatpush1.bf16.msra.mxu0 0
      %594 = vmatprep.subr.bf16.mxu0 0
      %595 = vmatpush1.bf16.msra.mxu0 0
      %596 = vmatprep.subr.bf16.mxu0 0
      %597 = vmatpush1.bf16.msra.mxu0 0
      %598 = vmatprep.subr.bf16.mxu0 0
      %599 = vmatpush1.bf16.msra.mxu0 0
      %600 = vmatprep.mubr.bf16.mxu0 0
      %601 = vmatmul.mubr.bf16.gmra.mrb[0].mxu0 %v566
      %v602 = vpop.f32.mrb[0].mxu0
      %v603 = vadd.f32 %v545, %v602
      %v604 = vpop.f32.mrb[0].mxu0
      %v605 = vpop.f32.mrb[0].mxu0
      %v606 = vpop.f32.mrb[0].mxu0
      %607 = vdwg.mxu0
      %v608 = vadd.f32 %v603, 1.0
      %v611 = vunpack.c.l.s4 1966171168
      %v612 = vunpack.c.0.s8 %v611
      %v613 = vlaneseq
      %v614 = vshrl.u32 %v613, 7
      %v615 = vsub.s32 %v612, %v614
      %v616 = vrot.slane %v608, %v615
      %v617 = vcombine.high %v616, %v616
      %v619 = vunpack.c.l.s4 1966171168
      %v620 = vunpack.c.0.s8 %v619
      %v621 = vlaneseq
      %v622 = vshrl.u32 %v621, 7
      %v623 = vsub.s32 %v620, %v622
      %v624 = vrot.slane %v616, %v623
      %v626 = vunpack.c.l.s4 1966171168
      %v627 = vunpack.c.0.s8 %v626
      %v628 = vlaneseq
      %v629 = vshrl.u32 %v628, 7
      %v630 = vsub.s32 %v627, %v629
      %v631 = vrot.slane %v617, %v630
      %v634 = vunpack.c.l.s4 1966171168
      %v635 = vunpack.c.0.s8 %v634
      %v636 = vlaneseq
      %v637 = vshrl.u32 %v636, 7
      %v638 = vsub.s32 %v635, %v637
      %v639 = vrot.slane %v603, %v638
      %v640 = vcombine.high %v639, %v639
      %v642 = vunpack.c.l.s4 1966171168
      %v643 = vunpack.c.0.s8 %v642
      %v644 = vlaneseq
      %v645 = vshrl.u32 %v644, 7
      %v646 = vsub.s32 %v643, %v645
      %v647 = vrot.slane %v639, %v646
      %v649 = vunpack.c.l.s4 1966171168
      %v650 = vunpack.c.0.s8 %v649
      %v651 = vlaneseq
      %v652 = vshrl.u32 %v651, 7
      %v653 = vsub.s32 %v650, %v652
      %v654 = vrot.slane %v640, %v653
      %v655 = vsel %vm564, %v459, 0.0
      %656 = vadd.xlane.f32.xlu0 %v655
      %v657 = vpop.xlane.xlu0 %656
      %v658 = vsel %vm564, %v460, 0.0
      %659 = vadd.xlane.f32.xlu0 %v658
      %v660 = vpop.xlane.xlu0 %659
      %v661 = vrcp.pop 48.0
      %v662 = vmul.f32 %v657, %v661
      %v663 = vmul.f32 %v660, %v661
      %v664 = vsub.f32 %v459, %v662
      %v665 = vsub.f32 %v460, %v663
      %v666 = vmul.f32 %v664, %v664
      %v667 = vmul.f32 %v665, %v665
      %v668 = vsel %vm564, %v666, 0.0
      %669 = vadd.xlane.f32.xlu0 %v668
      %v670 = vpop.xlane.xlu0 %669
      %v671 = vsel %vm564, %v667, 0.0
      %672 = vadd.xlane.f32.xlu0 %v671
      %v673 = vpop.xlane.xlu0 %672
      %v674 = vmul.f32 %v670, %v661
      %v675 = vmul.f32 %v673, %v661
      %v676 = vadd.f32 %v674, 1e-05
      %v677 = vadd.f32 %v675, 1e-05
      %v678 = vrsqrt.pop %v676
      %v679 = vrsqrt.pop %v677
      %v680 = vmul.f32 %v664, %v678
      %v681 = vmul.f32 %v665, %v679
      %v682 = vlaneseq
      %v683 = vshrl.u32 %v682, 7
      %v684 = vsub.s32 0, %v683
      %v685 = vrot.slane %v538, %v684
      %v686 = vmul.f32 %v680, %v685
      %v687 = vmul.f32 %v681, %v685
      %v688 = vlaneseq
      %v689 = vshrl.u32 %v688, 7
      %v690 = vsub.s32 1, %v689
      %v691 = vrot.slane %v538, %v690
      %v692 = vadd.f32 %v686, %v691
      %v693 = vadd.f32 %v687, %v691
      %v694 = vlaneseq
      %v695 = vshrl.u32 %v694, 7
      %v696 = vsub.s32 0, %v695
      %v697 = vrot.slane %v624, %v696
      %v698 = vlaneseq
      %v699 = vshrl.u32 %v698, 7
      %v700 = vsub.s32 0, %v699
      %v701 = vrot.slane %v631, %v700
      %v704 = vmul.f32 %v692, %v697
      %v705 = vmul.f32 %v693, %v701
      %v706 = vlaneseq
      %v707 = vshrl.u32 %v706, 7
      %v708 = vsub.s32 0, %v707
      %v709 = vrot.slane %v647, %v708
      %v710 = vlaneseq
      %v711 = vshrl.u32 %v710, 7
      %v712 = vsub.s32 0, %v711
      %v713 = vrot.slane %v654, %v712
      %714 = vrot.lane.b32.xlu0 %v709, 80
      %v715 = vpop.permute.xlu0 %714
      %716 = vrot.lane.b32.xlu0 %v713, 80
      %v717 = vpop.permute.xlu0 %716
      %v720 = vadd.f32 %v704, %v715
      %v721 = vadd.f32 %v705, %v717
      %v722 = vadd.f32 %v720, %v461
      %v723 = vadd.f32 %v721, %v462
      %v724 = vpack.c.bf16 %v723, %v722
      %v725 = vlaneseq
      %v726 = vshrl.u32 %v725, 7
      %v727 = vsub.s32 1, %v726
      %v728 = vrot.slane %v540, %v727
      %v735 = vunpack.c.l.b16 %v513
      %v736 = vunpack.c.l.b16 %v514
      %v737 = vunpack.c.l.b16 %v515
      %v738 = vunpack.c.l.b16 %v516
      %v739 = vunpack.c.l.b16 %v517
      %v740 = vunpack.c.l.b16 %v518
      %v741 = vpack.c.b16 %v736, %v735
      %v742 = vpack.c.b16 %v738, %v737
      %v743 = vpack.c.b16 %v740, %v739
      %v748 = vsel %vm564, %v724, 0
      %750 = vmatprep.subr.bf16.mxu0 0
      %751 = vmatpush1.bf16.msra.mxu0 %v741
      %752 = vmatprep.subr.bf16.mxu0 0
      %753 = vmatpush1.bf16.msra.mxu0 %v742
      %754 = vmatprep.subr.bf16.mxu0 0
      %755 = vmatpush1.bf16.msra.mxu0 %v743
      %756 = vmatprep.subr.bf16.mxu0 0
      %757 = vmatpush1.bf16.msra.mxu0 0
      %758 = vmatprep.subr.bf16.mxu0 0
      %759 = vmatpush1.bf16.msra.mxu0 0
      %760 = vmatprep.subr.bf16.mxu0 0
      %761 = vmatpush1.bf16.msra.mxu0 0
      %762 = vmatprep.subr.bf16.mxu0 0
      %763 = vmatpush1.bf16.msra.mxu0 0
      %764 = vmatprep.subr.bf16.mxu0 0
      %765 = vmatpush1.bf16.msra.mxu0 0
      %766 = vmatprep.subr.bf16.mxu0 0
      %767 = vmatpush1.bf16.msra.mxu0 0
      %768 = vmatprep.subr.bf16.mxu0 0
      %769 = vmatpush1.bf16.msra.mxu0 0
      %770 = vmatprep.subr.bf16.mxu0 0
      %771 = vmatpush1.bf16.msra.mxu0 0
      %772 = vmatprep.subr.bf16.mxu0 0
      %773 = vmatpush1.bf16.msra.mxu0 0
      %774 = vmatprep.subr.bf16.mxu0 0
      %775 = vmatpush1.bf16.msra.mxu0 0
      %776 = vmatprep.subr.bf16.mxu0 0
      %777 = vmatpush1.bf16.msra.mxu0 0
      %778 = vmatprep.subr.bf16.mxu0 0
      %779 = vmatpush1.bf16.msra.mxu0 0
      %780 = vmatprep.subr.bf16.mxu0 0
      %781 = vmatpush1.bf16.msra.mxu0 0
      %782 = vmatprep.mubr.bf16.mxu0 0
      %783 = vmatmul.mubr.bf16.gmra.mrb[0].mxu0 %v748
      %v784 = vpop.f32.mrb[0].mxu0
      %v785 = vadd.f32 %v728, %v784
      %v786 = vpop.f32.mrb[0].mxu0
      %v787 = vpop.f32.mrb[0].mxu0
      %v788 = vadd.f32 %v728, %v787
      %v789 = vpop.f32.mrb[0].mxu0
      %790 = vdwg.mxu0
      %v791 = vpack.c.bf16 %v721, %v720
      %v792 = vlaneseq
      %v793 = vshrl.u32 %v792, 7
      %v794 = vsub.s32 6, %v793
      %v795 = vrot.slane %v538, %v794
      %v802 = vunpack.c.l.b16 %v465
      %v803 = vunpack.c.l.b16 %v466
      %v804 = vunpack.c.l.b16 %v467
      %v805 = vunpack.c.l.b16 %v468
      %v806 = vunpack.c.l.b16 %v469
      %v807 = vunpack.c.l.b16 %v470
      %v808 = vpack.c.b16 %v803, %v802
      %v809 = vpack.c.b16 %v805, %v804
      %v810 = vpack.c.b16 %v807, %v806
      %v815 = vsel %vm564, %v791, 0
      %817 = vmatprep.subr.bf16.mxu0 0
      %818 = vmatpush1.bf16.msra.mxu0 %v808
      %819 = vmatprep.subr.bf16.mxu0 0
      %820 = vmatpush1.bf16.msra.mxu0 %v809
      %821 = vmatprep.subr.bf16.mxu0 0
      %822 = vmatpush1.bf16.msra.mxu0 %v810
      %823 = vmatprep.subr.bf16.mxu0 0
      %824 = vmatpush1.bf16.msra.mxu0 0
      %825 = vmatprep.subr.bf16.mxu0 0
      %826 = vmatpush1.bf16.msra.mxu0 0
      %827 = vmatprep.subr.bf16.mxu0 0
      %828 = vmatpush1.bf16.msra.mxu0 0
      %829 = vmatprep.subr.bf16.mxu0 0
      %830 = vmatpush1.bf16.msra.mxu0 0
      %831 = vmatprep.subr.bf16.mxu0 0
      %832 = vmatpush1.bf16.msra.mxu0 0
      %833 = vmatprep.subr.bf16.mxu0 0
      %834 = vmatpush1.bf16.msra.mxu0 0
      %835 = vmatprep.subr.bf16.mxu0 0
      %836 = vmatpush1.bf16.msra.mxu0 0
      %837 = vmatprep.subr.bf16.mxu0 0
      %838 = vmatpush1.bf16.msra.mxu0 0
      %839 = vmatprep.subr.bf16.mxu0 0
      %840 = vmatpush1.bf16.msra.mxu0 0
      %841 = vmatprep.subr.bf16.mxu0 0
      %842 = vmatpush1.bf16.msra.mxu0 0
      %843 = vmatprep.subr.bf16.mxu0 0
      %844 = vmatpush1.bf16.msra.mxu0 0
      %845 = vmatprep.subr.bf16.mxu0 0
      %846 = vmatpush1.bf16.msra.mxu0 0
      %847 = vmatprep.subr.bf16.mxu0 0
      %848 = vmatpush1.bf16.msra.mxu0 0
      %849 = vmatprep.mubr.bf16.mxu0 0
      %850 = vmatmul.mubr.bf16.gmra.mrb[0].mxu0 %v815
      %v851 = vpop.f32.mrb[0].mxu0
      %v852 = vadd.f32 %v795, %v851
      %v853 = vpop.f32.mrb[0].mxu0
      %v854 = vpop.f32.mrb[0].mxu0
      %v855 = vadd.f32 %v795, %v854
      %v856 = vpop.f32.mrb[0].mxu0
      %857 = vdwg.mxu0
      %v858 = vpack.c.bf16 %v785, %v785
      %v859 = vpack.c.bf16 %v852, %v852
      %861 = vrot.lane.b32.xlu0 %v858, 80
      %v862 = vpop.permute.xlu0 %861
      %vm863 = vcmask 97280
      %v865 = vsel %vm863, %v858, 0
      %v868 = vsel %vm863, %v862, 0
      %870 = vmatprep.subr.bf16.mxu0 0
      %871 = vmatpush1.bf16.xpose.msra.mxu0 %v868
      %872 = vmatprep.subr.bf16.mxu0 0
      %873 = vmatpush1.bf16.xpose.msra.mxu0 0
      %874 = vmatprep.subr.bf16.mxu0 0
      %875 = vmatpush1.bf16.xpose.msra.mxu0 0
      %876 = vmatprep.subr.bf16.mxu0 0
      %877 = vmatpush1.bf16.xpose.msra.mxu0 0
      %878 = vmatprep.subr.bf16.mxu0 0
      %879 = vmatpush1.bf16.xpose.msra.mxu0 0
      %880 = vmatprep.subr.bf16.mxu0 0
      %881 = vmatpush1.bf16.xpose.msra.mxu0 0
      %882 = vmatprep.subr.bf16.mxu0 0
      %883 = vmatpush1.bf16.xpose.msra.mxu0 0
      %884 = vmatprep.subr.bf16.mxu0 0
      %885 = vmatpush1.bf16.xpose.msra.mxu0 0
      %886 = vmatprep.subr.bf16.mxu0 0
      %887 = vmatpush1.bf16.xpose.msra.mxu0 0
      %888 = vmatprep.subr.bf16.mxu0 0
      %889 = vmatpush1.bf16.xpose.msra.mxu0 0
      %890 = vmatprep.subr.bf16.mxu0 0
      %891 = vmatpush1.bf16.xpose.msra.mxu0 0
      %892 = vmatprep.subr.bf16.mxu0 0
      %893 = vmatpush1.bf16.xpose.msra.mxu0 0
      %894 = vmatprep.subr.bf16.mxu0 0
      %895 = vmatpush1.bf16.xpose.msra.mxu0 0
      %896 = vmatprep.subr.bf16.mxu0 0
      %897 = vmatpush1.bf16.xpose.msra.mxu0 0
      %898 = vmatprep.subr.bf16.mxu0 0
      %899 = vmatpush1.bf16.xpose.msra.mxu0 0
      %900 = vmatprep.subr.bf16.mxu0 0
      %901 = vmatpush1.bf16.xpose.msra.mxu0 0
      %902 = vmatprep.mubr.bf16.mxu0 0
      %903 = vmatmul.mubr.bf16.gmra.mrb[0].mxu0 %v865
      %v904 = vpop.f32.mrb[0].mxu0
      %v905 = vadd.f32 0.0, %v904
      %v906 = vpop.f32.mrb[0].mxu0
      %v907 = vpop.f32.mrb[0].mxu0
      %v908 = vpop.f32.mrb[0].mxu0
      %909 = vdwg.mxu0
      %v910 = vmul.f32 %v905, 0.28867513
      %v911 = vlaneseq
      %v912 = vshrl.u32 %v911, 7
      %v913 = vsub.s32 0, %v912
      %v914 = vrot.slane %v463, %v913
      %v915 = vadd.f32 %v910, %v914
      %vm916 = vcmask 64512
      %v917 = vsel %vm916, %v915, -inf
      %918 = vmax.xlane.f32.xlu0 %v917
      %v919 = vpop.xlane.xlu0 %918
      %v920 = vsub.f32 %v915, %v919
      %v921 = vmul.f32 %v920, 1.442695
      %v922 = vpow.pop %v921
      %v923 = vsel %vm916, %v922, 0.0
      %924 = vadd.xlane.f32.xlu0 %v923
      %v925 = vpop.xlane.xlu0 %924
      %v926 = vrcp.pop %v925
      %v927 = vmul.f32 %v922, %v926
      %v928 = vpack.c.bf16 %v927, %v927
      %v930 = vsel %vm916, %v928, 0
      %vm932 = vcmask 1043456
      %v934 = vsel %vm932, %v859, 0
      %936 = vmatprep.subr.bf16.mxu0 0
      %937 = vmatpush1.bf16.msra.mxu0 %v934
      %938 = vmatprep.subr.bf16.mxu0 0
      %939 = vmatpush1.bf16.msra.mxu0 0
      %940 = vmatprep.subr.bf16.mxu0 0
      %941 = vmatpush1.bf16.msra.mxu0 0
      %942 = vmatprep.subr.bf16.mxu0 0
      %943 = vmatpush1.bf16.msra.mxu0 0
      %944 = vmatprep.subr.bf16.mxu0 0
      %945 = vmatpush1.bf16.msra.mxu0 0
      %946 = vmatprep.subr.bf16.mxu0 0
      %947 = vmatpush1.bf16.msra.mxu0 0
      %948 = vmatprep.subr.bf16.mxu0 0
      %949 = vmatpush1.bf16.msra.mxu0 0
      %950 = vmatprep.subr.bf16.mxu0 0
      %951 = vmatpush1.bf16.msra.mxu0 0
      %952 = vmatprep.subr.bf16.mxu0 0
      %953 = vmatpush1.bf16.msra.mxu0 0
      %954 = vmatprep.subr.bf16.mxu0 0
      %955 = vmatpush1.bf16.msra.mxu0 0
      %956 = vmatprep.subr.bf16.mxu0 0
      %957 = vmatpush1.bf16.msra.mxu0 0
      %958 = vmatprep.subr.bf16.mxu0 0
      %959 = vmatpush1.bf16.msra.mxu0 0
      %960 = vmatprep.subr.bf16.mxu0 0
      %961 = vmatpush1.bf16.msra.mxu0 0
      %962 = vmatprep.subr.bf16.mxu0 0
      %963 = vmatpush1.bf16.msra.mxu0 0
      %964 = vmatprep.subr.bf16.mxu0 0
      %965 = vmatpush1.bf16.msra.mxu0 0
      %966 = vmatprep.subr.bf16.mxu0 0
      %967 = vmatpush1.bf16.msra.mxu0 0
      %968 = vmatprep.mubr.bf16.mxu0 0
      %969 = vmatmul.mubr.bf16.gmra.mrb[0].mxu0 %v930
      %v970 = vpop.f32.mrb[0].mxu0
      %v971 = vadd.f32 0.0, %v970
      %v972 = vpop.f32.mrb[0].mxu0
      %v973 = vpop.f32.mrb[0].mxu0
      %v974 = vpop.f32.mrb[0].mxu0
      %975 = vdwg.mxu0
      %976 = vrot.lane.b32.xlu0 %v858, 116
      %v977 = vpop.permute.xlu0 %976
      %978 = vrot.lane.b32.xlu0 %v858, 68
      %v979 = vpop.permute.xlu0 %978
      %v981 = vsel %vm863, %v977, 0
      %v984 = vsel %vm863, %v979, 0
      %986 = vmatprep.subr.bf16.mxu0 0
      %987 = vmatpush1.bf16.xpose.msra.mxu0 %v984
      %988 = vmatprep.subr.bf16.mxu0 0
      %989 = vmatpush1.bf16.xpose.msra.mxu0 0
      %990 = vmatprep.subr.bf16.mxu0 0
      %991 = vmatpush1.bf16.xpose.msra.mxu0 0
      %992 = vmatprep.subr.bf16.mxu0 0
      %993 = vmatpush1.bf16.xpose.msra.mxu0 0
      %994 = vmatprep.subr.bf16.mxu0 0
      %995 = vmatpush1.bf16.xpose.msra.mxu0 0
      %996 = vmatprep.subr.bf16.mxu0 0
      %997 = vmatpush1.bf16.xpose.msra.mxu0 0
      %998 = vmatprep.subr.bf16.mxu0 0
      %999 = vmatpush1.bf16.xpose.msra.mxu0 0
      %1000 = vmatprep.subr.bf16.mxu0 0
      %1001 = vmatpush1.bf16.xpose.msra.mxu0 0
      %1002 = vmatprep.subr.bf16.mxu0 0
      %1003 = vmatpush1.bf16.xpose.msra.mxu0 0
      %1004 = vmatprep.subr.bf16.mxu0 0
      %1005 = vmatpush1.bf16.xpose.msra.mxu0 0
      %1006 = vmatprep.subr.bf16.mxu0 0
      %1007 = vmatpush1.bf16.xpose.msra.mxu0 0
      %1008 = vmatprep.subr.bf16.mxu0 0
      %1009 = vmatpush1.bf16.xpose.msra.mxu0 0
      %1010 = vmatprep.subr.bf16.mxu0 0
      %1011 = vmatpush1.bf16.xpose.msra.mxu0 0
      %1012 = vmatprep.subr.bf16.mxu0 0
      %1013 = vmatpush1.bf16.xpose.msra.mxu0 0
      %1014 = vmatprep.subr.bf16.mxu0 0
      %1015 = vmatpush1.bf16.xpose.msra.mxu0 0
      %1016 = vmatprep.subr.bf16.mxu0 0
      %1017 = vmatpush1.bf16.xpose.msra.mxu0 0
      %1018 = vmatprep.mubr.bf16.mxu0 0
      %1019 = vmatmul.mubr.bf16.gmra.mrb[0].mxu0 %v981
      %v1020 = vpop.f32.mrb[0].mxu0
      %v1021 = vadd.f32 0.0, %v1020
      %v1022 = vpop.f32.mrb[0].mxu0
      %v1023 = vpop.f32.mrb[0].mxu0
      %v1024 = vpop.f32.mrb[0].mxu0
      %1025 = vdwg.mxu0
      %v1026 = vmul.f32 %v1021, 0.28867513
      %v1027 = vadd.f32 %v1026, %v914
      %v1028 = vsel %vm916, %v1027, -inf
      %1029 = vmax.xlane.f32.xlu0 %v1028
      %v1030 = vpop.xlane.xlu0 %1029
      %v1031 = vsub.f32 %v1027, %v1030
      %v1032 = vmul.f32 %v1031, 1.442695
      %v1033 = vpow.pop %v1032
      %v1034 = vsel %vm916, %v1033, 0.0
      %1035 = vadd.xlane.f32.xlu0 %v1034
      %v1036 = vpop.xlane.xlu0 %1035
      %v1037 = vrcp.pop %v1036
      %v1038 = vmul.f32 %v1033, %v1037
      %v1039 = vpack.c.bf16 %v1038, %v1038
      %1041 = vrot.lane.b32.xlu0 %v859, 116
      %v1042 = vpop.permute.xlu0 %1041
      %v1044 = vsel %vm916, %v1039, 0
      %v1047 = vsel %vm932, %v1042, 0
      %1049 = vmatprep.subr.bf16.mxu0 0
      %1050 = vmatpush1.bf16.msra.mxu0 %v1047
      %1051 = vmatprep.subr.bf16.mxu0 0
      %1052 = vmatpush1.bf16.msra.mxu0 0
      %1053 = vmatprep.subr.bf16.mxu0 0
      %1054 = vmatpush1.bf16.msra.mxu0 0
      %1055 = vmatprep.subr.bf16.mxu0 0
      %1056 = vmatpush1.bf16.msra.mxu0 0
      %1057 = vmatprep.subr.bf16.mxu0 0
      %1058 = vmatpush1.bf16.msra.mxu0 0
      %1059 = vmatprep.subr.bf16.mxu0 0
      %1060 = vmatpush1.bf16.msra.mxu0 0
      %1061 = vmatprep.subr.bf16.mxu0 0
      %1062 = vmatpush1.bf16.msra.mxu0 0
      %1063 = vmatprep.subr.bf16.mxu0 0
      %1064 = vmatpush1.bf16.msra.mxu0 0
      %1065 = vmatprep.subr.bf16.mxu0 0
      %1066 = vmatpush1.bf16.msra.mxu0 0
      %1067 = vmatprep.subr.bf16.mxu0 0
      %1068 = vmatpush1.bf16.msra.mxu0 0
      %1069 = vmatprep.subr.bf16.mxu0 0
      %1070 = vmatpush1.bf16.msra.mxu0 0
      %1071 = vmatprep.subr.bf16.mxu0 0
      %1072 = vmatpush1.bf16.msra.mxu0 0
      %1073 = vmatprep.subr.bf16.mxu0 0
      %1074 = vmatpush1.bf16.msra.mxu0 0
      %1075 = vmatprep.subr.bf16.mxu0 0
      %1076 = vmatpush1.bf16.msra.mxu0 0
      %1077 = vmatprep.subr.bf16.mxu0 0
      %1078 = vmatpush1.bf16.msra.mxu0 0
      %1079 = vmatprep.subr.bf16.mxu0 0
      %1080 = vmatpush1.bf16.msra.mxu0 0
      %1081 = vmatprep.mubr.bf16.mxu0 0
      %1082 = vmatmul.mubr.bf16.gmra.mrb[0].mxu0 %v1044
      %v1083 = vpop.f32.mrb[0].mxu0
      %v1084 = vadd.f32 0.0, %v1083
      %v1085 = vpop.f32.mrb[0].mxu0
      %v1086 = vpop.f32.mrb[0].mxu0
      %v1087 = vpop.f32.mrb[0].mxu0
      %1088 = vdwg.mxu0
      %1089 = vrot.lane.b32.xlu0 %v858, 104
      %v1090 = vpop.permute.xlu0 %1089
      %1091 = vrot.lane.b32.xlu0 %v858, 56
      %v1092 = vpop.permute.xlu0 %1091
      %v1094 = vsel %vm863, %v1090, 0
      %v1097 = vsel %vm863, %v1092, 0
      %1099 = vmatprep.subr.bf16.mxu0 0
      %1100 = vmatpush1.bf16.xpose.msra.mxu0 %v1097
      %1101 = vmatprep.subr.bf16.mxu0 0
      %1102 = vmatpush1.bf16.xpose.msra.mxu0 0
      %1103 = vmatprep.subr.bf16.mxu0 0
      %1104 = vmatpush1.bf16.xpose.msra.mxu0 0
      %1105 = vmatprep.subr.bf16.mxu0 0
      %1106 = vmatpush1.bf16.xpose.msra.mxu0 0
      %1107 = vmatprep.subr.bf16.mxu0 0
      %1108 = vmatpush1.bf16.xpose.msra.mxu0 0
      %1109 = vmatprep.subr.bf16.mxu0 0
      %1110 = vmatpush1.bf16.xpose.msra.mxu0 0
      %1111 = vmatprep.subr.bf16.mxu0 0
      %1112 = vmatpush1.bf16.xpose.msra.mxu0 0
      %1113 = vmatprep.subr.bf16.mxu0 0
      %1114 = vmatpush1.bf16.xpose.msra.mxu0 0
      %1115 = vmatprep.subr.bf16.mxu0 0
      %1116 = vmatpush1.bf16.xpose.msra.mxu0 0
      %1117 = vmatprep.subr.bf16.mxu0 0
      %1118 = vmatpush1.bf16.xpose.msra.mxu0 0
      %1119 = vmatprep.subr.bf16.mxu0 0
      %1120 = vmatpush1.bf16.xpose.msra.mxu0 0
      %1121 = vmatprep.subr.bf16.mxu0 0
      %1122 = vmatpush1.bf16.xpose.msra.mxu0 0
      %1123 = vmatprep.subr.bf16.mxu0 0
      %1124 = vmatpush1.bf16.xpose.msra.mxu0 0
      %1125 = vmatprep.subr.bf16.mxu0 0
      %1126 = vmatpush1.bf16.xpose.msra.mxu0 0
      %1127 = vmatprep.subr.bf16.mxu0 0
      %1128 = vmatpush1.bf16.xpose.msra.mxu0 0
      %1129 = vmatprep.subr.bf16.mxu0 0
      %1130 = vmatpush1.bf16.xpose.msra.mxu0 0
      %1131 = vmatprep.mubr.bf16.mxu0 0
      %1132 = vmatmul.mubr.bf16.gmra.mrb[0].mxu0 %v1094
      %v1133 = vpop.f32.mrb[0].mxu0
      %v1134 = vadd.f32 0.0, %v1133
      %v1135 = vpop.f32.mrb[0].mxu0
      %v1136 = vpop.f32.mrb[0].mxu0
      %v1137 = vpop.f32.mrb[0].mxu0
      %1138 = vdwg.mxu0
      %v1139 = vmul.f32 %v1134, 0.28867513
      %v1140 = vadd.f32 %v1139, %v914
      %v1141 = vsel %vm916, %v1140, -inf
      %1142 = vmax.xlane.f32.xlu0 %v1141
      %v1143 = vpop.xlane.xlu0 %1142
      %v1144 = vsub.f32 %v1140, %v1143
      %v1145 = vmul.f32 %v1144, 1.442695
      %v1146 = vpow.pop %v1145
      %v1147 = vsel %vm916, %v1146, 0.0
      %1148 = vadd.xlane.f32.xlu0 %v1147
      %v1149 = vpop.xlane.xlu0 %1148
      %v1150 = vrcp.pop %v1149
      %v1151 = vmul.f32 %v1146, %v1150
      %v1152 = vpack.c.bf16 %v1151, %v1151
      %1153 = vrot.lane.b32.xlu0 %v859, 104
      %v1154 = vpop.permute.xlu0 %1153
      %v1156 = vsel %vm916, %v1152, 0
      %v1159 = vsel %vm932, %v1154, 0
      %1161 = vmatprep.subr.bf16.mxu0 0
      %1162 = vmatpush1.bf16.msra.mxu0 %v1159
      %1163 = vmatprep.subr.bf16.mxu0 0
      %1164 = vmatpush1.bf16.msra.mxu0 0
      %1165 = vmatprep.subr.bf16.mxu0 0
      %1166 = vmatpush1.bf16.msra.mxu0 0
      %1167 = vmatprep.subr.bf16.mxu0 0
      %1168 = vmatpush1.bf16.msra.mxu0 0
      %1169 = vmatprep.subr.bf16.mxu0 0
      %1170 = vmatpush1.bf16.msra.mxu0 0
      %1171 = vmatprep.subr.bf16.mxu0 0
      %1172 = vmatpush1.bf16.msra.mxu0 0
      %1173 = vmatprep.subr.bf16.mxu0 0
      %1174 = vmatpush1.bf16.msra.mxu0 0
      %1175 = vmatprep.subr.bf16.mxu0 0
      %1176 = vmatpush1.bf16.msra.mxu0 0
      %1177 = vmatprep.subr.bf16.mxu0 0
      %1178 = vmatpush1.bf16.msra.mxu0 0
      %1179 = vmatprep.subr.bf16.mxu0 0
      %1180 = vmatpush1.bf16.msra.mxu0 0
      %1181 = vmatprep.subr.bf16.mxu0 0
      %1182 = vmatpush1.bf16.msra.mxu0 0
      %1183 = vmatprep.subr.bf16.mxu0 0
      %1184 = vmatpush1.bf16.msra.mxu0 0
      %1185 = vmatprep.subr.bf16.mxu0 0
      %1186 = vmatpush1.bf16.msra.mxu0 0
      %1187 = vmatprep.subr.bf16.mxu0 0
      %1188 = vmatpush1.bf16.msra.mxu0 0
      %1189 = vmatprep.subr.bf16.mxu0 0
      %1190 = vmatpush1.bf16.msra.mxu0 0
      %1191 = vmatprep.subr.bf16.mxu0 0
      %1192 = vmatpush1.bf16.msra.mxu0 0
      %1193 = vmatprep.mubr.bf16.mxu0 0
      %1194 = vmatmul.mubr.bf16.gmra.mrb[0].mxu0 %v1156
      %v1195 = vpop.f32.mrb[0].mxu0
      %v1196 = vadd.f32 0.0, %v1195
      %v1197 = vpop.f32.mrb[0].mxu0
      %v1198 = vpop.f32.mrb[0].mxu0
      %v1199 = vpop.f32.mrb[0].mxu0
      %1200 = vdwg.mxu0
      %1201 = vrot.lane.b32.xlu0 %v858, 92
      %v1202 = vpop.permute.xlu0 %1201
      %1203 = vrot.lane.b32.xlu0 %v858, 44
      %v1204 = vpop.permute.xlu0 %1203
      %v1206 = vsel %vm863, %v1202, 0
      %v1209 = vsel %vm863, %v1204, 0
      %1211 = vmatprep.subr.bf16.mxu0 0
      %1212 = vmatpush1.bf16.xpose.msra.mxu0 %v1209
      %1213 = vmatprep.subr.bf16.mxu0 0
      %1214 = vmatpush1.bf16.xpose.msra.mxu0 0
      %1215 = vmatprep.subr.bf16.mxu0 0
      %1216 = vmatpush1.bf16.xpose.msra.mxu0 0
      %1217 = vmatprep.subr.bf16.mxu0 0
      %1218 = vmatpush1.bf16.xpose.msra.mxu0 0
      %1219 = vmatprep.subr.bf16.mxu0 0
      %1220 = vmatpush1.bf16.xpose.msra.mxu0 0
      %1221 = vmatprep.subr.bf16.mxu0 0
      %1222 = vmatpush1.bf16.xpose.msra.mxu0 0
      %1223 = vmatprep.subr.bf16.mxu0 0
      %1224 = vmatpush1.bf16.xpose.msra.mxu0 0
      %1225 = vmatprep.subr.bf16.mxu0 0
      %1226 = vmatpush1.bf16.xpose.msra.mxu0 0
      %1227 = vmatprep.subr.bf16.mxu0 0
      %1228 = vmatpush1.bf16.xpose.msra.mxu0 0
      %1229 = vmatprep.subr.bf16.mxu0 0
      %1230 = vmatpush1.bf16.xpose.msra.mxu0 0
      %1231 = vmatprep.subr.bf16.mxu0 0
      %1232 = vmatpush1.bf16.xpose.msra.mxu0 0
      %1233 = vmatprep.subr.bf16.mxu0 0
      %1234 = vmatpush1.bf16.xpose.msra.mxu0 0
      %1235 = vmatprep.subr.bf16.mxu0 0
      %1236 = vmatpush1.bf16.xpose.msra.mxu0 0
      %1237 = vmatprep.subr.bf16.mxu0 0
      %1238 = vmatpush1.bf16.xpose.msra.mxu0 0
      %1239 = vmatprep.subr.bf16.mxu0 0
      %1240 = vmatpush1.bf16.xpose.msra.mxu0 0
      %1241 = vmatprep.subr.bf16.mxu0 0
      %1242 = vmatpush1.bf16.xpose.msra.mxu0 0
      %1243 = vmatprep.mubr.bf16.mxu0 0
      %1244 = vmatmul.mubr.bf16.gmra.mrb[0].mxu0 %v1206
      %v1245 = vpop.f32.mrb[0].mxu0
      %v1246 = vadd.f32 0.0, %v1245
      %v1247 = vpop.f32.mrb[0].mxu0
      %v1248 = vpop.f32.mrb[0].mxu0
      %v1249 = vpop.f32.mrb[0].mxu0
      %1250 = vdwg.mxu0
      %v1251 = vmul.f32 %v1246, 0.28867513
      %v1252 = vadd.f32 %v1251, %v914
      %v1253 = vsel %vm916, %v1252, -inf
      %1254 = vmax.xlane.f32.xlu0 %v1253
      %v1255 = vpop.xlane.xlu0 %1254
      %v1256 = vsub.f32 %v1252, %v1255
      %v1257 = vmul.f32 %v1256, 1.442695
      %v1258 = vpow.pop %v1257
      %v1259 = vsel %vm916, %v1258, 0.0
      %1260 = vadd.xlane.f32.xlu0 %v1259
      %v1261 = vpop.xlane.xlu0 %1260
      %v1262 = vrcp.pop %v1261
      %v1263 = vmul.f32 %v1258, %v1262
      %v1264 = vpack.c.bf16 %v1263, %v1263
      %1265 = vrot.lane.b32.xlu0 %v859, 92
      %v1266 = vpop.permute.xlu0 %1265
      %v1268 = vsel %vm916, %v1264, 0
      %v1271 = vsel %vm932, %v1266, 0
      %1273 = vmatprep.subr.bf16.mxu0 0
      %1274 = vmatpush1.bf16.msra.mxu0 %v1271
      %1275 = vmatprep.subr.bf16.mxu0 0
      %1276 = vmatpush1.bf16.msra.mxu0 0
      %1277 = vmatprep.subr.bf16.mxu0 0
      %1278 = vmatpush1.bf16.msra.mxu0 0
      %1279 = vmatprep.subr.bf16.mxu0 0
      %1280 = vmatpush1.bf16.msra.mxu0 0
      %1281 = vmatprep.subr.bf16.mxu0 0
      %1282 = vmatpush1.bf16.msra.mxu0 0
      %1283 = vmatprep.subr.bf16.mxu0 0
      %1284 = vmatpush1.bf16.msra.mxu0 0
      %1285 = vmatprep.subr.bf16.mxu0 0
      %1286 = vmatpush1.bf16.msra.mxu0 0
      %1287 = vmatprep.subr.bf16.mxu0 0
      %1288 = vmatpush1.bf16.msra.mxu0 0
      %1289 = vmatprep.subr.bf16.mxu0 0
      %1290 = vmatpush1.bf16.msra.mxu0 0
      %1291 = vmatprep.subr.bf16.mxu0 0
      %1292 = vmatpush1.bf16.msra.mxu0 0
      %1293 = vmatprep.subr.bf16.mxu0 0
      %1294 = vmatpush1.bf16.msra.mxu0 0
      %1295 = vmatprep.subr.bf16.mxu0 0
      %1296 = vmatpush1.bf16.msra.mxu0 0
      %1297 = vmatprep.subr.bf16.mxu0 0
      %1298 = vmatpush1.bf16.msra.mxu0 0
      %1299 = vmatprep.subr.bf16.mxu0 0
      %1300 = vmatpush1.bf16.msra.mxu0 0
      %1301 = vmatprep.subr.bf16.mxu0 0
      %1302 = vmatpush1.bf16.msra.mxu0 0
      %1303 = vmatprep.subr.bf16.mxu0 0
      %1304 = vmatpush1.bf16.msra.mxu0 0
      %1305 = vmatprep.mubr.bf16.mxu0 0
      %1306 = vmatmul.mubr.bf16.gmra.mrb[0].mxu0 %v1268
      %v1307 = vpop.f32.mrb[0].mxu0
      %v1308 = vadd.f32 0.0, %v1307
      %v1309 = vpop.f32.mrb[0].mxu0
      %v1310 = vpop.f32.mrb[0].mxu0
      %v1311 = vpop.f32.mrb[0].mxu0
      %1312 = vdwg.mxu0
      %1314 = vrot.lane.b32.xlu0 %v1084, 12
      %v1315 = vpop.permute.xlu0 %1314
      %1318 = vrot.lane.b32.xlu0 %v1196, 24
      %v1319 = vpop.permute.xlu0 %1318
      %1322 = vrot.lane.b32.xlu0 %v1308, 36
      %v1323 = vpop.permute.xlu0 %1322
      %v1325 = vsel %vm863, %v971, %v1315
      %vm1326 = vcmask 195584
      %v1327 = vsel %vm1326, %v1325, %v1319
      %vm1328 = vcmask 293888
      %v1329 = vsel %vm1328, %v1327, %v1323
      %v1330 = vpack.c.bf16 %v788, %v788
      %v1331 = vpack.c.bf16 %v855, %v855
      %1333 = vrot.lane.b32.xlu0 %v1330, 80
      %v1334 = vpop.permute.xlu0 %1333
      %v1336 = vsel %vm863, %v1330, 0
      %v1339 = vsel %vm863, %v1334, 0
      %1341 = vmatprep.subr.bf16.mxu0 0
      %1342 = vmatpush1.bf16.xpose.msra.mxu0 %v1339
      %1343 = vmatprep.subr.bf16.mxu0 0
      %1344 = vmatpush1.bf16.xpose.msra.mxu0 0
      %1345 = vmatprep.subr.bf16.mxu0 0
      %1346 = vmatpush1.bf16.xpose.msra.mxu0 0
      %1347 = vmatprep.subr.bf16.mxu0 0
      %1348 = vmatpush1.bf16.xpose.msra.mxu0 0
      %1349 = vmatprep.subr.bf16.mxu0 0
      %1350 = vmatpush1.bf16.xpose.msra.mxu0 0
      %1351 = vmatprep.subr.bf16.mxu0 0
      %1352 = vmatpush1.bf16.xpose.msra.mxu0 0
      %1353 = vmatprep.subr.bf16.mxu0 0
      %1354 = vmatpush1.bf16.xpose.msra.mxu0 0
      %1355 = vmatprep.subr.bf16.mxu0 0
      %1356 = vmatpush1.bf16.xpose.msra.mxu0 0
      %1357 = vmatprep.subr.bf16.mxu0 0
      %1358 = vmatpush1.bf16.xpose.msra.mxu0 0
      %1359 = vmatprep.subr.bf16.mxu0 0
      %1360 = vmatpush1.bf16.xpose.msra.mxu0 0
      %1361 = vmatprep.subr.bf16.mxu0 0
      %1362 = vmatpush1.bf16.xpose.msra.mxu0 0
      %1363 = vmatprep.subr.bf16.mxu0 0
      %1364 = vmatpush1.bf16.xpose.msra.mxu0 0
      %1365 = vmatprep.subr.bf16.mxu0 0
      %1366 = vmatpush1.bf16.xpose.msra.mxu0 0
      %1367 = vmatprep.subr.bf16.mxu0 0
      %1368 = vmatpush1.bf16.xpose.msra.mxu0 0
      %1369 = vmatprep.subr.bf16.mxu0 0
      %1370 = vmatpush1.bf16.xpose.msra.mxu0 0
      %1371 = vmatprep.subr.bf16.mxu0 0
      %1372 = vmatpush1.bf16.xpose.msra.mxu0 0
      %1373 = vmatprep.mubr.bf16.mxu0 0
      %1374 = vmatmul.mubr.bf16.gmra.mrb[0].mxu0 %v1336
      %v1375 = vpop.f32.mrb[0].mxu0
      %v1376 = vadd.f32 0.0, %v1375
      %v1377 = vpop.f32.mrb[0].mxu0
      %v1378 = vpop.f32.mrb[0].mxu0
      %v1379 = vpop.f32.mrb[0].mxu0
      %1380 = vdwg.mxu0
      %v1381 = vmul.f32 %v1376, 0.28867513
      %v1382 = vlaneseq
      %v1383 = vshrl.u32 %v1382, 7
      %v1384 = vsub.s32 1, %v1383
      %v1385 = vrot.slane %v463, %v1384
      %v1386 = vadd.f32 %v1381, %v1385
      %v1387 = vsel %vm916, %v1386, -inf
      %1388 = vmax.xlane.f32.xlu0 %v1387
      %v1389 = vpop.xlane.xlu0 %1388
      %v1390 = vsub.f32 %v1386, %v1389
      %v1391 = vmul.f32 %v1390, 1.442695
      %v1392 = vpow.pop %v1391
      %v1393 = vsel %vm916, %v1392, 0.0
      %1394 = vadd.xlane.f32.xlu0 %v1393
      %v1395 = vpop.xlane.xlu0 %1394
      %v1396 = vrcp.pop %v1395
      %v1397 = vmul.f32 %v1392, %v1396
      %v1398 = vpack.c.bf16 %v1397, %v1397
      %v1400 = vsel %vm916, %v1398, 0
      %v1403 = vsel %vm932, %v1331, 0
      %1405 = vmatprep.subr.bf16.mxu0 0
      %1406 = vmatpush1.bf16.msra.mxu0 %v1403
      %1407 = vmatprep.subr.bf16.mxu0 0
      %1408 = vmatpush1.bf16.msra.mxu0 0
      %1409 = vmatprep.subr.bf16.mxu0 0
      %1410 = vmatpush1.bf16.msra.mxu0 0
      %1411 = vmatprep.subr.bf16.mxu0 0
      %1412 = vmatpush1.bf16.msra.mxu0 0
      %1413 = vmatprep.subr.bf16.mxu0 0
      %1414 = vmatpush1.bf16.msra.mxu0 0
      %1415 = vmatprep.subr.bf16.mxu0 0
      %1416 = vmatpush1.bf16.msra.mxu0 0
      %1417 = vmatprep.subr.bf16.mxu0 0
      %1418 = vmatpush1.bf16.msra.mxu0 0
      %1419 = vmatprep.subr.bf16.mxu0 0
      %1420 = vmatpush1.bf16.msra.mxu0 0
      %1421 = vmatprep.subr.bf16.mxu0 0
      %1422 = vmatpush1.bf16.msra.mxu0 0
      %1423 = vmatprep.subr.bf16.mxu0 0
      %1424 = vmatpush1.bf16.msra.mxu0 0
      %1425 = vmatprep.subr.bf16.mxu0 0
      %1426 = vmatpush1.bf16.msra.mxu0 0
      %1427 = vmatprep.subr.bf16.mxu0 0
      %1428 = vmatpush1.bf16.msra.mxu0 0
      %1429 = vmatprep.subr.bf16.mxu0 0
      %1430 = vmatpush1.bf16.msra.mxu0 0
      %1431 = vmatprep.subr.bf16.mxu0 0
      %1432 = vmatpush1.bf16.msra.mxu0 0
      %1433 = vmatprep.subr.bf16.mxu0 0
      %1434 = vmatpush1.bf16.msra.mxu0 0
      %1435 = vmatprep.subr.bf16.mxu0 0
      %1436 = vmatpush1.bf16.msra.mxu0 0
      %1437 = vmatprep.mubr.bf16.mxu0 0
      %1438 = vmatmul.mubr.bf16.gmra.mrb[0].mxu0 %v1400
      %v1439 = vpop.f32.mrb[0].mxu0
      %v1440 = vadd.f32 0.0, %v1439
      %v1441 = vpop.f32.mrb[0].mxu0
      %v1442 = vpop.f32.mrb[0].mxu0
      %v1443 = vpop.f32.mrb[0].mxu0
      %1444 = vdwg.mxu0
      %1445 = vrot.lane.b32.xlu0 %v1330, 116
      %v1446 = vpop.permute.xlu0 %1445
      %1447 = vrot.lane.b32.xlu0 %v1330, 68
      %v1448 = vpop.permute.xlu0 %1447
      %v1450 = vsel %vm863, %v1446, 0
      %v1453 = vsel %vm863, %v1448, 0
      %1455 = vmatprep.subr.bf16.mxu0 0
      %1456 = vmatpush1.bf16.xpose.msra.mxu0 %v1453
      %1457 = vmatprep.subr.bf16.mxu0 0
      %1458 = vmatpush1.bf16.xpose.msra.mxu0 0
      %1459 = vmatprep.subr.bf16.mxu0 0
      %1460 = vmatpush1.bf16.xpose.msra.mxu0 0
      %1461 = vmatprep.subr.bf16.mxu0 0
      %1462 = vmatpush1.bf16.xpose.msra.mxu0 0
      %1463 = vmatprep.subr.bf16.mxu0 0
      %1464 = vmatpush1.bf16.xpose.msra.mxu0 0
      %1465 = vmatprep.subr.bf16.mxu0 0
      %1466 = vmatpush1.bf16.xpose.msra.mxu0 0
      %1467 = vmatprep.subr.bf16.mxu0 0
      %1468 = vmatpush1.bf16.xpose.msra.mxu0 0
      %1469 = vmatprep.subr.bf16.mxu0 0
      %1470 = vmatpush1.bf16.xpose.msra.mxu0 0
      %1471 = vmatprep.subr.bf16.mxu0 0
      %1472 = vmatpush1.bf16.xpose.msra.mxu0 0
      %1473 = vmatprep.subr.bf16.mxu0 0
      %1474 = vmatpush1.bf16.xpose.msra.mxu0 0
      %1475 = vmatprep.subr.bf16.mxu0 0
      %1476 = vmatpush1.bf16.xpose.msra.mxu0 0
      %1477 = vmatprep.subr.bf16.mxu0 0
      %1478 = vmatpush1.bf16.xpose.msra.mxu0 0
      %1479 = vmatprep.subr.bf16.mxu0 0
      %1480 = vmatpush1.bf16.xpose.msra.mxu0 0
      %1481 = vmatprep.subr.bf16.mxu0 0
      %1482 = vmatpush1.bf16.xpose.msra.mxu0 0
      %1483 = vmatprep.subr.bf16.mxu0 0
      %1484 = vmatpush1.bf16.xpose.msra.mxu0 0
      %1485 = vmatprep.subr.bf16.mxu0 0
      %1486 = vmatpush1.bf16.xpose.msra.mxu0 0
      %1487 = vmatprep.mubr.bf16.mxu0 0
      %1488 = vmatmul.mubr.bf16.gmra.mrb[0].mxu0 %v1450
      %v1489 = vpop.f32.mrb[0].mxu0
      %v1490 = vadd.f32 0.0, %v1489
      %v1491 = vpop.f32.mrb[0].mxu0
      %v1492 = vpop.f32.mrb[0].mxu0
      %v1493 = vpop.f32.mrb[0].mxu0
      %1494 = vdwg.mxu0
      %v1495 = vmul.f32 %v1490, 0.28867513
      %v1496 = vadd.f32 %v1495, %v1385
      %v1497 = vsel %vm916, %v1496, -inf
      %1498 = vmax.xlane.f32.xlu0 %v1497
      %v1499 = vpop.xlane.xlu0 %1498
      %v1500 = vsub.f32 %v1496, %v1499
      %v1501 = vmul.f32 %v1500, 1.442695
      %v1502 = vpow.pop %v1501
      %v1503 = vsel %vm916, %v1502, 0.0
      %1504 = vadd.xlane.f32.xlu0 %v1503
      %v1505 = vpop.xlane.xlu0 %1504
      %v1506 = vrcp.pop %v1505
      %v1507 = vmul.f32 %v1502, %v1506
      %v1508 = vpack.c.bf16 %v1507, %v1507
      %1510 = vrot.lane.b32.xlu0 %v1331, 116
      %v1511 = vpop.permute.xlu0 %1510
      %v1513 = vsel %vm916, %v1508, 0
      %v1516 = vsel %vm932, %v1511, 0
      %1518 = vmatprep.subr.bf16.mxu0 0
      %1519 = vmatpush1.bf16.msra.mxu0 %v1516
      %1520 = vmatprep.subr.bf16.mxu0 0
      %1521 = vmatpush1.bf16.msra.mxu0 0
      %1522 = vmatprep.subr.bf16.mxu0 0
      %1523 = vmatpush1.bf16.msra.mxu0 0
      %1524 = vmatprep.subr.bf16.mxu0 0
      %1525 = vmatpush1.bf16.msra.mxu0 0
      %1526 = vmatprep.subr.bf16.mxu0 0
      %1527 = vmatpush1.bf16.msra.mxu0 0
      %1528 = vmatprep.subr.bf16.mxu0 0
      %1529 = vmatpush1.bf16.msra.mxu0 0
      %1530 = vmatprep.subr.bf16.mxu0 0
      %1531 = vmatpush1.bf16.msra.mxu0 0
      %1532 = vmatprep.subr.bf16.mxu0 0
      %1533 = vmatpush1.bf16.msra.mxu0 0
      %1534 = vmatprep.subr.bf16.mxu0 0
      %1535 = vmatpush1.bf16.msra.mxu0 0
      %1536 = vmatprep.subr.bf16.mxu0 0
      %1537 = vmatpush1.bf16.msra.mxu0 0
      %1538 = vmatprep.subr.bf16.mxu0 0
      %1539 = vmatpush1.bf16.msra.mxu0 0
      %1540 = vmatprep.subr.bf16.mxu0 0
      %1541 = vmatpush1.bf16.msra.mxu0 0
      %1542 = vmatprep.subr.bf16.mxu0 0
      %1543 = vmatpush1.bf16.msra.mxu0 0
      %1544 = vmatprep.subr.bf16.mxu0 0
      %1545 = vmatpush1.bf16.msra.mxu0 0
      %1546 = vmatprep.subr.bf16.mxu0 0
      %1547 = vmatpush1.bf16.msra.mxu0 0
      %1548 = vmatprep.subr.bf16.mxu0 0
      %1549 = vmatpush1.bf16.msra.mxu0 0
      %1550 = vmatprep.mubr.bf16.mxu0 0
      %1551 = vmatmul.mubr.bf16.gmra.mrb[0].mxu0 %v1513
      %v1552 = vpop.f32.mrb[0].mxu0
      %v1553 = vadd.f32 0.0, %v1552
      %v1554 = vpop.f32.mrb[0].mxu0
      %v1555 = vpop.f32.mrb[0].mxu0
      %v1556 = vpop.f32.mrb[0].mxu0
      %1557 = vdwg.mxu0
      %1558 = vrot.lane.b32.xlu0 %v1330, 104
      %v1559 = vpop.permute.xlu0 %1558
      %1560 = vrot.lane.b32.xlu0 %v1330, 56
      %v1561 = vpop.permute.xlu0 %1560
      %v1563 = vsel %vm863, %v1559, 0
      %v1566 = vsel %vm863, %v1561, 0
      %1568 = vmatprep.subr.bf16.mxu0 0
      %1569 = vmatpush1.bf16.xpose.msra.mxu0 %v1566
      %1570 = vmatprep.subr.bf16.mxu0 0
      %1571 = vmatpush1.bf16.xpose.msra.mxu0 0
      %1572 = vmatprep.subr.bf16.mxu0 0
      %1573 = vmatpush1.bf16.xpose.msra.mxu0 0
      %1574 = vmatprep.subr.bf16.mxu0 0
      %1575 = vmatpush1.bf16.xpose.msra.mxu0 0
      %1576 = vmatprep.subr.bf16.mxu0 0
      %1577 = vmatpush1.bf16.xpose.msra.mxu0 0
      %1578 = vmatprep.subr.bf16.mxu0 0
      %1579 = vmatpush1.bf16.xpose.msra.mxu0 0
      %1580 = vmatprep.subr.bf16.mxu0 0
      %1581 = vmatpush1.bf16.xpose.msra.mxu0 0
      %1582 = vmatprep.subr.bf16.mxu0 0
      %1583 = vmatpush1.bf16.xpose.msra.mxu0 0
      %1584 = vmatprep.subr.bf16.mxu0 0
      %1585 = vmatpush1.bf16.xpose.msra.mxu0 0
      %1586 = vmatprep.subr.bf16.mxu0 0
      %1587 = vmatpush1.bf16.xpose.msra.mxu0 0
      %1588 = vmatprep.subr.bf16.mxu0 0
      %1589 = vmatpush1.bf16.xpose.msra.mxu0 0
      %1590 = vmatprep.subr.bf16.mxu0 0
      %1591 = vmatpush1.bf16.xpose.msra.mxu0 0
      %1592 = vmatprep.subr.bf16.mxu0 0
      %1593 = vmatpush1.bf16.xpose.msra.mxu0 0
      %1594 = vmatprep.subr.bf16.mxu0 0
      %1595 = vmatpush1.bf16.xpose.msra.mxu0 0
      %1596 = vmatprep.subr.bf16.mxu0 0
      %1597 = vmatpush1.bf16.xpose.msra.mxu0 0
      %1598 = vmatprep.subr.bf16.mxu0 0
      %1599 = vmatpush1.bf16.xpose.msra.mxu0 0
      %1600 = vmatprep.mubr.bf16.mxu0 0
      %1601 = vmatmul.mubr.bf16.gmra.mrb[0].mxu0 %v1563
      %v1602 = vpop.f32.mrb[0].mxu0
      %v1603 = vadd.f32 0.0, %v1602
      %v1604 = vpop.f32.mrb[0].mxu0
      %v1605 = vpop.f32.mrb[0].mxu0
      %v1606 = vpop.f32.mrb[0].mxu0
      %1607 = vdwg.mxu0
      %v1608 = vmul.f32 %v1603, 0.28867513
      %v1609 = vadd.f32 %v1608, %v1385
      %v1610 = vsel %vm916, %v1609, -inf
      %1611 = vmax.xlane.f32.xlu0 %v1610
      %v1612 = vpop.xlane.xlu0 %1611
      %v1613 = vsub.f32 %v1609, %v1612
      %v1614 = vmul.f32 %v1613, 1.442695
      %v1615 = vpow.pop %v1614
      %v1616 = vsel %vm916, %v1615, 0.0
      %1617 = vadd.xlane.f32.xlu0 %v1616
      %v1618 = vpop.xlane.xlu0 %1617
      %v1619 = vrcp.pop %v1618
      %v1620 = vmul.f32 %v1615, %v1619
      %v1621 = vpack.c.bf16 %v1620, %v1620
      %1622 = vrot.lane.b32.xlu0 %v1331, 104
      %v1623 = vpop.permute.xlu0 %1622
      %v1625 = vsel %vm916, %v1621, 0
      %v1628 = vsel %vm932, %v1623, 0
      %1630 = vmatprep.subr.bf16.mxu0 0
      %1631 = vmatpush1.bf16.msra.mxu0 %v1628
      %1632 = vmatprep.subr.bf16.mxu0 0
      %1633 = vmatpush1.bf16.msra.mxu0 0
      %1634 = vmatprep.subr.bf16.mxu0 0
      %1635 = vmatpush1.bf16.msra.mxu0 0
      %1636 = vmatprep.subr.bf16.mxu0 0
      %1637 = vmatpush1.bf16.msra.mxu0 0
      %1638 = vmatprep.subr.bf16.mxu0 0
      %1639 = vmatpush1.bf16.msra.mxu0 0
      %1640 = vmatprep.subr.bf16.mxu0 0
      %1641 = vmatpush1.bf16.msra.mxu0 0
      %1642 = vmatprep.subr.bf16.mxu0 0
      %1643 = vmatpush1.bf16.msra.mxu0 0
      %1644 = vmatprep.subr.bf16.mxu0 0
      %1645 = vmatpush1.bf16.msra.mxu0 0
      %1646 = vmatprep.subr.bf16.mxu0 0
      %1647 = vmatpush1.bf16.msra.mxu0 0
      %1648 = vmatprep.subr.bf16.mxu0 0
      %1649 = vmatpush1.bf16.msra.mxu0 0
      %1650 = vmatprep.subr.bf16.mxu0 0
      %1651 = vmatpush1.bf16.msra.mxu0 0
      %1652 = vmatprep.subr.bf16.mxu0 0
      %1653 = vmatpush1.bf16.msra.mxu0 0
      %1654 = vmatprep.subr.bf16.mxu0 0
      %1655 = vmatpush1.bf16.msra.mxu0 0
      %1656 = vmatprep.subr.bf16.mxu0 0
      %1657 = vmatpush1.bf16.msra.mxu0 0
      %1658 = vmatprep.subr.bf16.mxu0 0
      %1659 = vmatpush1.bf16.msra.mxu0 0
      %1660 = vmatprep.subr.bf16.mxu0 0
      %1661 = vmatpush1.bf16.msra.mxu0 0
      %1662 = vmatprep.mubr.bf16.mxu0 0
      %1663 = vmatmul.mubr.bf16.gmra.mrb[0].mxu0 %v1625
      %v1664 = vpop.f32.mrb[0].mxu0
      %v1665 = vadd.f32 0.0, %v1664
      %v1666 = vpop.f32.mrb[0].mxu0
      %v1667 = vpop.f32.mrb[0].mxu0
      %v1668 = vpop.f32.mrb[0].mxu0
      %1669 = vdwg.mxu0
      %1670 = vrot.lane.b32.xlu0 %v1330, 92
      %v1671 = vpop.permute.xlu0 %1670
      %1672 = vrot.lane.b32.xlu0 %v1330, 44
      %v1673 = vpop.permute.xlu0 %1672
      %v1675 = vsel %vm863, %v1671, 0
      %v1678 = vsel %vm863, %v1673, 0
      %1680 = vmatprep.subr.bf16.mxu0 0
      %1681 = vmatpush1.bf16.xpose.msra.mxu0 %v1678
      %1682 = vmatprep.subr.bf16.mxu0 0
      %1683 = vmatpush1.bf16.xpose.msra.mxu0 0
      %1684 = vmatprep.subr.bf16.mxu0 0
      %1685 = vmatpush1.bf16.xpose.msra.mxu0 0
      %1686 = vmatprep.subr.bf16.mxu0 0
      %1687 = vmatpush1.bf16.xpose.msra.mxu0 0
      %1688 = vmatprep.subr.bf16.mxu0 0
      %1689 = vmatpush1.bf16.xpose.msra.mxu0 0
      %1690 = vmatprep.subr.bf16.mxu0 0
      %1691 = vmatpush1.bf16.xpose.msra.mxu0 0
      %1692 = vmatprep.subr.bf16.mxu0 0
      %1693 = vmatpush1.bf16.xpose.msra.mxu0 0
      %1694 = vmatprep.subr.bf16.mxu0 0
      %1695 = vmatpush1.bf16.xpose.msra.mxu0 0
      %1696 = vmatprep.subr.bf16.mxu0 0
      %1697 = vmatpush1.bf16.xpose.msra.mxu0 0
      %1698 = vmatprep.subr.bf16.mxu0 0
      %1699 = vmatpush1.bf16.xpose.msra.mxu0 0
      %1700 = vmatprep.subr.bf16.mxu0 0
      %1701 = vmatpush1.bf16.xpose.msra.mxu0 0
      %1702 = vmatprep.subr.bf16.mxu0 0
      %1703 = vmatpush1.bf16.xpose.msra.mxu0 0
      %1704 = vmatprep.subr.bf16.mxu0 0
      %1705 = vmatpush1.bf16.xpose.msra.mxu0 0
      %1706 = vmatprep.subr.bf16.mxu0 0
      %1707 = vmatpush1.bf16.xpose.msra.mxu0 0
      %1708 = vmatprep.subr.bf16.mxu0 0
      %1709 = vmatpush1.bf16.xpose.msra.mxu0 0
      %1710 = vmatprep.subr.bf16.mxu0 0
      %1711 = vmatpush1.bf16.xpose.msra.mxu0 0
      %1712 = vmatprep.mubr.bf16.mxu0 0
      %1713 = vmatmul.mubr.bf16.gmra.mrb[0].mxu0 %v1675
      %v1714 = vpop.f32.mrb[0].mxu0
      %v1715 = vadd.f32 0.0, %v1714
      %v1716 = vpop.f32.mrb[0].mxu0
      %v1717 = vpop.f32.mrb[0].mxu0
      %v1718 = vpop.f32.mrb[0].mxu0
      %1719 = vdwg.mxu0
      %v1720 = vmul.f32 %v1715, 0.28867513
      %v1721 = vadd.f32 %v1720, %v1385
      %v1722 = vsel %vm916, %v1721, -inf
      %1723 = vmax.xlane.f32.xlu0 %v1722
      %v1724 = vpop.xlane.xlu0 %1723
      %v1725 = vsub.f32 %v1721, %v1724
      %v1726 = vmul.f32 %v1725, 1.442695
      %v1727 = vpow.pop %v1726
      %v1728 = vsel %vm916, %v1727, 0.0
      %1729 = vadd.xlane.f32.xlu0 %v1728
      %v1730 = vpop.xlane.xlu0 %1729
      %v1731 = vrcp.pop %v1730
      %v1732 = vmul.f32 %v1727, %v1731
      %v1733 = vpack.c.bf16 %v1732, %v1732
      %1734 = vrot.lane.b32.xlu0 %v1331, 92
      %v1735 = vpop.permute.xlu0 %1734
      %v1737 = vsel %vm916, %v1733, 0
      %v1740 = vsel %vm932, %v1735, 0
      %1742 = vmatprep.subr.bf16.mxu0 0
      %1743 = vmatpush1.bf16.msra.mxu0 %v1740
      %1744 = vmatprep.subr.bf16.mxu0 0
      %1745 = vmatpush1.bf16.msra.mxu0 0
      %1746 = vmatprep.subr.bf16.mxu0 0
      %1747 = vmatpush1.bf16.msra.mxu0 0
      %1748 = vmatprep.subr.bf16.mxu0 0
      %1749 = vmatpush1.bf16.msra.mxu0 0
      %1750 = vmatprep.subr.bf16.mxu0 0
      %1751 = vmatpush1.bf16.msra.mxu0 0
      %1752 = vmatprep.subr.bf16.mxu0 0
      %1753 = vmatpush1.bf16.msra.mxu0 0
      %1754 = vmatprep.subr.bf16.mxu0 0
      %1755 = vmatpush1.bf16.msra.mxu0 0
      %1756 = vmatprep.subr.bf16.mxu0 0
      %1757 = vmatpush1.bf16.msra.mxu0 0
      %1758 = vmatprep.subr.bf16.mxu0 0
      %1759 = vmatpush1.bf16.msra.mxu0 0
      %1760 = vmatprep.subr.bf16.mxu0 0
      %1761 = vmatpush1.bf16.msra.mxu0 0
      %1762 = vmatprep.subr.bf16.mxu0 0
      %1763 = vmatpush1.bf16.msra.mxu0 0
      %1764 = vmatprep.subr.bf16.mxu0 0
      %1765 = vmatpush1.bf16.msra.mxu0 0
      %1766 = vmatprep.subr.bf16.mxu0 0
      %1767 = vmatpush1.bf16.msra.mxu0 0
      %1768 = vmatprep.subr.bf16.mxu0 0
      %1769 = vmatpush1.bf16.msra.mxu0 0
      %1770 = vmatprep.subr.bf16.mxu0 0
      %1771 = vmatpush1.bf16.msra.mxu0 0
      %1772 = vmatprep.subr.bf16.mxu0 0
      %1773 = vmatpush1.bf16.msra.mxu0 0
      %1774 = vmatprep.mubr.bf16.mxu0 0
      %1775 = vmatmul.mubr.bf16.gmra.mrb[0].mxu0 %v1737
      %v1776 = vpop.f32.mrb[0].mxu0
      %v1777 = vadd.f32 0.0, %v1776
      %v1778 = vpop.f32.mrb[0].mxu0
      %v1779 = vpop.f32.mrb[0].mxu0
      %v1780 = vpop.f32.mrb[0].mxu0
      %1781 = vdwg.mxu0
      %1783 = vrot.lane.b32.xlu0 %v1553, 12
      %v1784 = vpop.permute.xlu0 %1783
      %1787 = vrot.lane.b32.xlu0 %v1665, 24
      %v1788 = vpop.permute.xlu0 %1787
      %1791 = vrot.lane.b32.xlu0 %v1777, 36
      %v1792 = vpop.permute.xlu0 %1791
      %v1794 = vsel %vm863, %v1440, %v1784
      %v1795 = vsel %vm1326, %v1794, %v1788
      %v1796 = vsel %vm1328, %v1795, %v1792
      %v1797 = vpack.c.bf16 %v1796, %v1329
      %v1798 = vlaneseq
      %v1799 = vshrl.u32 %v1798, 7
      %v1800 = vsub.s32 7, %v1799
      %v1801 = vrot.slane %v538, %v1800
      %v1808 = vunpack.c.l.b16 %v472
      %v1809 = vunpack.c.l.b16 %v473
      %v1810 = vunpack.c.l.b16 %v474
      %v1811 = vunpack.c.l.b16 %v475
      %v1812 = vunpack.c.l.b16 %v476
      %v1813 = vunpack.c.l.b16 %v477
      %v1814 = vpack.c.b16 %v1809, %v1808
      %v1815 = vpack.c.b16 %v1811, %v1810
      %v1816 = vpack.c.b16 %v1813, %v1812
      %v1821 = vsel %vm564, %v1797, 0
      %1823 = vmatprep.subr.bf16.mxu0 0
      %1824 = vmatpush1.bf16.msra.mxu0 %v1814
      %1825 = vmatprep.subr.bf16.mxu0 0
      %1826 = vmatpush1.bf16.msra.mxu0 %v1815
      %1827 = vmatprep.subr.bf16.mxu0 0
      %1828 = vmatpush1.bf16.msra.mxu0 %v1816
      %1829 = vmatprep.subr.bf16.mxu0 0
      %1830 = vmatpush1.bf16.msra.mxu0 0
      %1831 = vmatprep.subr.bf16.mxu0 0
      %1832 = vmatpush1.bf16.msra.mxu0 0
      %1833 = vmatprep.subr.bf16.mxu0 0
      %1834 = vmatpush1.bf16.msra.mxu0 0
      %1835 = vmatprep.subr.bf16.mxu0 0
      %1836 = vmatpush1.bf16.msra.mxu0 0
      %1837 = vmatprep.subr.bf16.mxu0 0
      %1838 = vmatpush1.bf16.msra.mxu0 0
      %1839 = vmatprep.subr.bf16.mxu0 0
      %1840 = vmatpush1.bf16.msra.mxu0 0
      %1841 = vmatprep.subr.bf16.mxu0 0
      %1842 = vmatpush1.bf16.msra.mxu0 0
      %1843 = vmatprep.subr.bf16.mxu0 0
      %1844 = vmatpush1.bf16.msra.mxu0 0
      %1845 = vmatprep.subr.bf16.mxu0 0
      %1846 = vmatpush1.bf16.msra.mxu0 0
      %1847 = vmatprep.subr.bf16.mxu0 0
      %1848 = vmatpush1.bf16.msra.mxu0 0
      %1849 = vmatprep.subr.bf16.mxu0 0
      %1850 = vmatpush1.bf16.msra.mxu0 0
      %1851 = vmatprep.subr.bf16.mxu0 0
      %1852 = vmatpush1.bf16.msra.mxu0 0
      %1853 = vmatprep.subr.bf16.mxu0 0
      %1854 = vmatpush1.bf16.msra.mxu0 0
      %1855 = vmatprep.mubr.bf16.mxu0 0
      %1856 = vmatmul.mubr.bf16.gmra.mrb[0].mxu0 %v1821
      %v1857 = vpop.f32.mrb[0].mxu0
      %v1858 = vadd.f32 %v1801, %v1857
      %v1859 = vpop.f32.mrb[0].mxu0
      %v1860 = vpop.f32.mrb[0].mxu0
      %v1861 = vadd.f32 %v1801, %v1860
      %v1862 = vpop.f32.mrb[0].mxu0
      %1863 = vdwg.mxu0
      %v1864 = vadd.f32 %v459, %v1858
      %v1865 = vadd.f32 %v460, %v1861
      %v1866 = vsel %vm564, %v1864, 0.0
      %1867 = vadd.xlane.f32.xlu0 %v1866
      %v1868 = vpop.xlane.xlu0 %1867
      %v1869 = vsel %vm564, %v1865, 0.0
      %1870 = vadd.xlane.f32.xlu0 %v1869
      %v1871 = vpop.xlane.xlu0 %1870
      %v1872 = vmul.f32 %v1868, %v661
      %v1873 = vmul.f32 %v1871, %v661
      %v1874 = vsub.f32 %v1864, %v1872
      %v1875 = vsub.f32 %v1865, %v1873
      %v1876 = vmul.f32 %v1874, %v1874
      %v1877 = vmul.f32 %v1875, %v1875
      %v1878 = vsel %vm564, %v1876, 0.0
      %1879 = vadd.xlane.f32.xlu0 %v1878
      %v1880 = vpop.xlane.xlu0 %1879
      %v1881 = vsel %vm564, %v1877, 0.0
      %1882 = vadd.xlane.f32.xlu0 %v1881
      %v1883 = vpop.xlane.xlu0 %1882
      %v1884 = vmul.f32 %v1880, %v661
      %v1885 = vmul.f32 %v1883, %v661
      %v1886 = vadd.f32 %v1884, 1e-05
      %v1887 = vadd.f32 %v1885, 1e-05
      %v1888 = vrsqrt.pop %v1886
      %v1889 = vrsqrt.pop %v1887
      %v1890 = vmul.f32 %v1874, %v1888
      %v1891 = vmul.f32 %v1875, %v1889
      %v1892 = vlaneseq
      %v1893 = vshrl.u32 %v1892, 7
      %v1894 = vsub.s32 2, %v1893
      %v1895 = vrot.slane %v538, %v1894
      %v1896 = vmul.f32 %v1890, %v1895
      %v1897 = vmul.f32 %v1891, %v1895
      %v1898 = vlaneseq
      %v1899 = vshrl.u32 %v1898, 7
      %v1900 = vsub.s32 3, %v1899
      %v1901 = vrot.slane %v538, %v1900
      %v1902 = vadd.f32 %v1896, %v1901
      %v1903 = vadd.f32 %v1897, %v1901
      %v1904 = vmul.f32 %v1902, %v697
      %v1905 = vmul.f32 %v1903, %v701
      %v1906 = vadd.f32 %v1904, %v715
      %v1907 = vadd.f32 %v1905, %v717
      %v1908 = vadd.f32 %v1906, %v461
      %v1909 = vadd.f32 %v1907, %v462
      %v1910 = vpack.c.bf16 %v1909, %v1908
      %v1911 = vlaneseq
      %v1912 = vshrl.u32 %v1911, 7
      %v1913 = vsub.s32 0, %v1912
      %v1914 = vrot.slane %v539, %v1913
      %v1921 = vunpack.c.l.b16 %v479
      %v1922 = vunpack.c.l.b16 %v480
      %v1923 = vunpack.c.l.b16 %v481
      %v1924 = vunpack.c.l.b16 %v482
      %v1925 = vunpack.c.l.b16 %v483
      %v1926 = vunpack.c.l.b16 %v484
      %v1927 = vpack.c.b16 %v1922, %v1921
      %v1928 = vpack.c.b16 %v1924, %v1923
      %v1929 = vpack.c.b16 %v1926, %v1925
      %v1934 = vsel %vm564, %v1910, 0
      %1936 = vmatprep.subr.bf16.mxu0 0
      %1937 = vmatpush1.bf16.msra.mxu0 %v1927
      %1938 = vmatprep.subr.bf16.mxu0 0
      %1939 = vmatpush1.bf16.msra.mxu0 %v1928
      %1940 = vmatprep.subr.bf16.mxu0 0
      %1941 = vmatpush1.bf16.msra.mxu0 %v1929
      %1942 = vmatprep.subr.bf16.mxu0 0
      %1943 = vmatpush1.bf16.msra.mxu0 0
      %1944 = vmatprep.subr.bf16.mxu0 0
      %1945 = vmatpush1.bf16.msra.mxu0 0
      %1946 = vmatprep.subr.bf16.mxu0 0
      %1947 = vmatpush1.bf16.msra.mxu0 0
      %1948 = vmatprep.subr.bf16.mxu0 0
      %1949 = vmatpush1.bf16.msra.mxu0 0
      %1950 = vmatprep.subr.bf16.mxu0 0
      %1951 = vmatpush1.bf16.msra.mxu0 0
      %1952 = vmatprep.subr.bf16.mxu0 0
      %1953 = vmatpush1.bf16.msra.mxu0 0
      %1954 = vmatprep.subr.bf16.mxu0 0
      %1955 = vmatpush1.bf16.msra.mxu0 0
      %1956 = vmatprep.subr.bf16.mxu0 0
      %1957 = vmatpush1.bf16.msra.mxu0 0
      %1958 = vmatprep.subr.bf16.mxu0 0
      %1959 = vmatpush1.bf16.msra.mxu0 0
      %1960 = vmatprep.subr.bf16.mxu0 0
      %1961 = vmatpush1.bf16.msra.mxu0 0
      %1962 = vmatprep.subr.bf16.mxu0 0
      %1963 = vmatpush1.bf16.msra.mxu0 0
      %1964 = vmatprep.subr.bf16.mxu0 0
      %1965 = vmatpush1.bf16.msra.mxu0 0
      %1966 = vmatprep.subr.bf16.mxu0 0
      %1967 = vmatpush1.bf16.msra.mxu0 0
      %1968 = vmatprep.mubr.bf16.mxu0 0
      %1969 = vmatmul.mubr.bf16.gmra.mrb[0].mxu0 %v1934
      %v1970 = vpop.f32.mrb[0].mxu0
      %v1971 = vadd.f32 %v1914, %v1970
      %v1972 = vpop.f32.mrb[0].mxu0
      %v1973 = vpop.f32.mrb[0].mxu0
      %v1974 = vadd.f32 %v1914, %v1973
      %v1975 = vpop.f32.mrb[0].mxu0
      %1976 = vdwg.mxu0
      %v1977 = vld [vmem:[%s2] sm:$0xf]
      %v1978 = vld [vmem:[%s2 + $0x4] sm:$0xf]
      %v1979 = vld [vmem:[%s2 + $0x8] sm:$0xf]
      %v1980 = vld [vmem:[%s2 + $0xc] sm:$0xf]
      %v1981 = vld [vmem:[%s2 + $0x10] sm:$0xf]
      %v1982 = vld [vmem:[%s2 + $0x14] sm:$0xf]
      %v1983 = vld [vmem:[%s2 + $0x18] sm:$0xf]
      %v1984 = vld [vmem:[%s2 + $0x1c] sm:$0xf]
      %v1985 = vld [vmem:[%s2 + $0x20] sm:$0xf]
      %v1986 = vld [vmem:[%s2 + $0x24] sm:$0xf]
      %v1987 = vld [vmem:[%s2 + $0x28] sm:$0xf]
      %v1988 = vld [vmem:[%s2 + $0x2c] sm:$0xf]
      %v1989 = vld [vmem:[%s2 + $0x30] sm:$0xf]
      %v1990 = vld [vmem:[%s2 + $0x34] sm:$0xf]
      %v1991 = vld [vmem:[%s2 + $0x38] sm:$0xf]
      %v1992 = vld [vmem:[%s2 + $0x3c] sm:$0xf]
      %v1993 = vld [vmem:[%s2 + $0x40] sm:$0x1]
      %v1994 = vlaneseq
      %v1995 = vshrl.u32 %v1994, 7
      %v1996 = vsub.s32 1, %v1995
      %v1997 = vrot.slane %v539, %v1996
      %v2015 = vunpack.c.l.b16 %v1977
      %v2016 = vunpack.c.l.b16 %v1978
      %v2017 = vunpack.c.l.b16 %v1979
      %v2018 = vunpack.c.l.b16 %v1980
      %v2019 = vunpack.c.l.b16 %v1981
      %v2020 = vunpack.c.l.b16 %v1982
      %v2021 = vunpack.c.l.b16 %v1983
      %v2022 = vunpack.c.l.b16 %v1984
      %v2023 = vunpack.c.l.b16 %v1985
      %v2024 = vunpack.c.l.b16 %v1986
      %v2025 = vunpack.c.l.b16 %v1987
      %v2026 = vunpack.c.l.b16 %v1988
      %v2027 = vunpack.c.l.b16 %v1989
      %v2028 = vunpack.c.l.b16 %v1990
      %v2029 = vunpack.c.l.b16 %v1991
      %v2030 = vunpack.c.l.b16 %v1992
      %v2031 = vunpack.c.l.b16 %v1993
      %v2032 = vpack.c.b16 %v2016, %v2015
      %v2033 = vpack.c.b16 %v2018, %v2017
      %v2034 = vpack.c.b16 %v2020, %v2019
      %v2035 = vpack.c.b16 %v2022, %v2021
      %v2036 = vpack.c.b16 %v2024, %v2023
      %v2037 = vpack.c.b16 %v2026, %v2025
      %v2038 = vpack.c.b16 %v2028, %v2027
      %v2039 = vpack.c.b16 %v2030, %v2029
      %v2040 = vpack.c.b16 %v2031, %v2031
      %v2047 = vunpack.c.l.b16 %v486
      %v2048 = vunpack.c.l.b16 %v487
      %v2049 = vunpack.c.l.b16 %v488
      %v2050 = vunpack.c.l.b16 %v489
      %v2051 = vunpack.c.l.b16 %v490
      %v2052 = vunpack.c.l.b16 %v491
      %v2053 = vpack.c.b16 %v2048, %v2047
      %v2054 = vpack.c.b16 %v2050, %v2049
      %v2055 = vpack.c.b16 %v2052, %v2051
      %v2060 = vsel %vm564, %v2032, 0
      %v2063 = vsel %vm564, %v2033, 0
      %v2066 = vsel %vm564, %v2034, 0
      %v2069 = vsel %vm564, %v2035, 0
      %v2072 = vsel %vm564, %v2036, 0
      %v2075 = vsel %vm564, %v2037, 0
      %v2078 = vsel %vm564, %v2038, 0
      %v2081 = vsel %vm564, %v2039, 0
      %v2084 = vsel %vm564, %v2040, 0
      %2086 = vmatprep.subr.bf16.mxu0 0
      %2087 = vmatpush1.bf16.msra.mxu0 %v2053
      %2088 = vmatprep.subr.bf16.mxu0 0
      %2089 = vmatpush1.bf16.msra.mxu0 %v2054
      %2090 = vmatprep.subr.bf16.mxu0 0
      %2091 = vmatpush1.bf16.msra.mxu0 %v2055
      %2092 = vmatprep.subr.bf16.mxu0 0
      %2093 = vmatpush1.bf16.msra.mxu0 0
      %2094 = vmatprep.subr.bf16.mxu0 0
      %2095 = vmatpush1.bf16.msra.mxu0 0
      %2096 = vmatprep.subr.bf16.mxu0 0
      %2097 = vmatpush1.bf16.msra.mxu0 0
      %2098 = vmatprep.subr.bf16.mxu0 0
      %2099 = vmatpush1.bf16.msra.mxu0 0
      %2100 = vmatprep.subr.bf16.mxu0 0
      %2101 = vmatpush1.bf16.msra.mxu0 0
      %2102 = vmatprep.subr.bf16.mxu0 0
      %2103 = vmatpush1.bf16.msra.mxu0 0
      %2104 = vmatprep.subr.bf16.mxu0 0
      %2105 = vmatpush1.bf16.msra.mxu0 0
      %2106 = vmatprep.subr.bf16.mxu0 0
      %2107 = vmatpush1.bf16.msra.mxu0 0
      %2108 = vmatprep.subr.bf16.mxu0 0
      %2109 = vmatpush1.bf16.msra.mxu0 0
      %2110 = vmatprep.subr.bf16.mxu0 0
      %2111 = vmatpush1.bf16.msra.mxu0 0
      %2112 = vmatprep.subr.bf16.mxu0 0
      %2113 = vmatpush1.bf16.msra.mxu0 0
      %2114 = vmatprep.subr.bf16.mxu0 0
      %2115 = vmatpush1.bf16.msra.mxu0 0
      %2116 = vmatprep.subr.bf16.mxu0 0
      %2117 = vmatpush1.bf16.msra.mxu0 0
      %2118 = vmatprep.mubr.bf16.mxu0 0
      %2119 = vmatmul.mubr.bf16.gmra.mrb[0].mxu0 %v2060
      %v2120 = vpop.f32.mrb[0].mxu0
      %v2121 = vadd.f32 %v1997, %v2120
      %v2122 = vpop.f32.mrb[0].mxu0
      %v2123 = vpop.f32.mrb[0].mxu0
      %v2124 = vadd.f32 %v1997, %v2123
      %v2125 = vpop.f32.mrb[0].mxu0
      %2126 = vmatprep.mubr.bf16.mxu0 0
      %2127 = vmatmul.mubr.bf16.gmra.mrb[0].mxu0 %v2063
      %v2128 = vpop.f32.mrb[0].mxu0
      %v2129 = vadd.f32 %v1997, %v2128
      %v2130 = vpop.f32.mrb[0].mxu0
      %v2131 = vpop.f32.mrb[0].mxu0
      %v2132 = vadd.f32 %v1997, %v2131
      %v2133 = vpop.f32.mrb[0].mxu0
      %2134 = vmatprep.mubr.bf16.mxu0 0
      %2135 = vmatmul.mubr.bf16.gmra.mrb[0].mxu0 %v2066
      %v2136 = vpop.f32.mrb[0].mxu0
      %v2137 = vadd.f32 %v1997, %v2136
      %v2138 = vpop.f32.mrb[0].mxu0
      %v2139 = vpop.f32.mrb[0].mxu0
      %v2140 = vadd.f32 %v1997, %v2139
      %v2141 = vpop.f32.mrb[0].mxu0
      %2142 = vmatprep.mubr.bf16.mxu0 0
      %2143 = vmatmul.mubr.bf16.gmra.mrb[0].mxu0 %v2069
      %v2144 = vpop.f32.mrb[0].mxu0
      %v2145 = vadd.f32 %v1997, %v2144
      %v2146 = vpop.f32.mrb[0].mxu0
      %v2147 = vpop.f32.mrb[0].mxu0
      %v2148 = vadd.f32 %v1997, %v2147
      %v2149 = vpop.f32.mrb[0].mxu0
      %2150 = vmatprep.mubr.bf16.mxu0 0
      %2151 = vmatmul.mubr.bf16.gmra.mrb[0].mxu0 %v2072
      %v2152 = vpop.f32.mrb[0].mxu0
      %v2153 = vadd.f32 %v1997, %v2152
      %v2154 = vpop.f32.mrb[0].mxu0
      %v2155 = vpop.f32.mrb[0].mxu0
      %v2156 = vadd.f32 %v1997, %v2155
      %v2157 = vpop.f32.mrb[0].mxu0
      %2158 = vmatprep.mubr.bf16.mxu0 0
      %2159 = vmatmul.mubr.bf16.gmra.mrb[0].mxu0 %v2075
      %v2160 = vpop.f32.mrb[0].mxu0
      %v2161 = vadd.f32 %v1997, %v2160
      %v2162 = vpop.f32.mrb[0].mxu0
      %v2163 = vpop.f32.mrb[0].mxu0
      %v2164 = vadd.f32 %v1997, %v2163
      %v2165 = vpop.f32.mrb[0].mxu0
      %2166 = vmatprep.mubr.bf16.mxu0 0
      %2167 = vmatmul.mubr.bf16.gmra.mrb[0].mxu0 %v2078
      %v2168 = vpop.f32.mrb[0].mxu0
      %v2169 = vadd.f32 %v1997, %v2168
      %v2170 = vpop.f32.mrb[0].mxu0
      %v2171 = vpop.f32.mrb[0].mxu0
      %v2172 = vadd.f32 %v1997, %v2171
      %v2173 = vpop.f32.mrb[0].mxu0
      %2174 = vmatprep.mubr.bf16.mxu0 0
      %2175 = vmatmul.mubr.bf16.gmra.mrb[0].mxu0 %v2081
      %v2176 = vpop.f32.mrb[0].mxu0
      %v2177 = vadd.f32 %v1997, %v2176
      %v2178 = vpop.f32.mrb[0].mxu0
      %v2179 = vpop.f32.mrb[0].mxu0
      %v2180 = vadd.f32 %v1997, %v2179
      %v2181 = vpop.f32.mrb[0].mxu0
      %2182 = vmatprep.mubr.bf16.mxu0 0
      %2183 = vmatmul.mubr.bf16.gmra.mrb[0].mxu0 %v2084
      %v2184 = vpop.f32.mrb[0].mxu0
      %v2185 = vadd.f32 %v1997, %v2184
      %v2186 = vpop.f32.mrb[0].mxu0
      %v2187 = vpop.f32.mrb[0].mxu0
      %v2188 = vpop.f32.mrb[0].mxu0
      %2189 = vdwg.mxu0
      %s2190 = scalar_lea.vmem %s2, 68
      %v2191 = vld [vmem:[%s2190] sm:$0xf]
      %v2192 = vld [vmem:[%s2190 + $0x4] sm:$0xf]
      %v2193 = vld [vmem:[%s2190 + $0x8] sm:$0xf]
      %v2194 = vld [vmem:[%s2190 + $0xc] sm:$0xf]
      %v2195 = vld [vmem:[%s2190 + $0x10] sm:$0xf]
      %v2196 = vld [vmem:[%s2190 + $0x14] sm:$0xf]
      %v2197 = vld [vmem:[%s2190 + $0x18] sm:$0xf]
      %v2198 = vld [vmem:[%s2190 + $0x1c] sm:$0xf]
      %v2199 = vld [vmem:[%s2190 + $0x20] sm:$0xf]
      %v2200 = vld [vmem:[%s2190 + $0x24] sm:$0xf]
      %v2201 = vld [vmem:[%s2190 + $0x28] sm:$0xf]
      %v2202 = vld [vmem:[%s2190 + $0x2c] sm:$0xf]
      %v2203 = vld [vmem:[%s2190 + $0x30] sm:$0xf]
      %v2204 = vld [vmem:[%s2190 + $0x34] sm:$0xf]
      %v2205 = vld [vmem:[%s2190 + $0x38] sm:$0xf]
      %v2206 = vld [vmem:[%s2190 + $0x3c] sm:$0xf]
      %v2207 = vld [vmem:[%s2190 + $0x40] sm:$0x1]
      %v2225 = vunpack.c.l.b16 %v2191
      %v2226 = vunpack.c.l.b16 %v2192
      %v2227 = vunpack.c.l.b16 %v2193
      %v2228 = vunpack.c.l.b16 %v2194
      %v2229 = vunpack.c.l.b16 %v2195
      %v2230 = vunpack.c.l.b16 %v2196
      %v2231 = vunpack.c.l.b16 %v2197
      %v2232 = vunpack.c.l.b16 %v2198
      %v2233 = vunpack.c.l.b16 %v2199
      %v2234 = vunpack.c.l.b16 %v2200
      %v2235 = vunpack.c.l.b16 %v2201
      %v2236 = vunpack.c.l.b16 %v2202
      %v2237 = vunpack.c.l.b16 %v2203
      %v2238 = vunpack.c.l.b16 %v2204
      %v2239 = vunpack.c.l.b16 %v2205
      %v2240 = vunpack.c.l.b16 %v2206
      %v2241 = vunpack.c.l.b16 %v2207
      %v2242 = vpack.c.b16 %v2226, %v2225
      %v2243 = vpack.c.b16 %v2228, %v2227
      %v2244 = vpack.c.b16 %v2230, %v2229
      %v2245 = vpack.c.b16 %v2232, %v2231
      %v2246 = vpack.c.b16 %v2234, %v2233
      %v2247 = vpack.c.b16 %v2236, %v2235
      %v2248 = vpack.c.b16 %v2238, %v2237
      %v2249 = vpack.c.b16 %v2240, %v2239
      %v2250 = vpack.c.b16 %v2241, %v2241
      %v2252 = vsel %vm564, %v2242, 0
      %v2255 = vsel %vm564, %v2243, 0
      %v2258 = vsel %vm564, %v2244, 0
      %v2261 = vsel %vm564, %v2245, 0
      %v2264 = vsel %vm564, %v2246, 0
      %v2267 = vsel %vm564, %v2247, 0
      %v2270 = vsel %vm564, %v2248, 0
      %v2273 = vsel %vm564, %v2249, 0
      %v2276 = vsel %vm564, %v2250, 0
      %2278 = vmatprep.subr.bf16.mxu0 0
      %2279 = vmatpush1.bf16.msra.mxu0 %v2053
      %2280 = vmatprep.subr.bf16.mxu0 0
      %2281 = vmatpush1.bf16.msra.mxu0 %v2054
      %2282 = vmatprep.subr.bf16.mxu0 0
      %2283 = vmatpush1.bf16.msra.mxu0 %v2055
      %2284 = vmatprep.subr.bf16.mxu0 0
      %2285 = vmatpush1.bf16.msra.mxu0 0
      %2286 = vmatprep.subr.bf16.mxu0 0
      %2287 = vmatpush1.bf16.msra.mxu0 0
      %2288 = vmatprep.subr.bf16.mxu0 0
      %2289 = vmatpush1.bf16.msra.mxu0 0
      %2290 = vmatprep.subr.bf16.mxu0 0
      %2291 = vmatpush1.bf16.msra.mxu0 0
      %2292 = vmatprep.subr.bf16.mxu0 0
      %2293 = vmatpush1.bf16.msra.mxu0 0
      %2294 = vmatprep.subr.bf16.mxu0 0
      %2295 = vmatpush1.bf16.msra.mxu0 0
      %2296 = vmatprep.subr.bf16.mxu0 0
      %2297 = vmatpush1.bf16.msra.mxu0 0
      %2298 = vmatprep.subr.bf16.mxu0 0
      %2299 = vmatpush1.bf16.msra.mxu0 0
      %2300 = vmatprep.subr.bf16.mxu0 0
      %2301 = vmatpush1.bf16.msra.mxu0 0
      %2302 = vmatprep.subr.bf16.mxu0 0
      %2303 = vmatpush1.bf16.msra.mxu0 0
      %2304 = vmatprep.subr.bf16.mxu0 0
      %2305 = vmatpush1.bf16.msra.mxu0 0
      %2306 = vmatprep.subr.bf16.mxu0 0
      %2307 = vmatpush1.bf16.msra.mxu0 0
      %2308 = vmatprep.subr.bf16.mxu0 0
      %2309 = vmatpush1.bf16.msra.mxu0 0
      %2310 = vmatprep.mubr.bf16.mxu0 0
      %2311 = vmatmul.mubr.bf16.gmra.mrb[0].mxu0 %v2252
      %v2312 = vpop.f32.mrb[0].mxu0
      %v2313 = vadd.f32 %v1997, %v2312
      %v2314 = vpop.f32.mrb[0].mxu0
      %v2315 = vpop.f32.mrb[0].mxu0
      %v2316 = vadd.f32 %v1997, %v2315
      %v2317 = vpop.f32.mrb[0].mxu0
      %2318 = vmatprep.mubr.bf16.mxu0 0
      %2319 = vmatmul.mubr.bf16.gmra.mrb[0].mxu0 %v2255
      %v2320 = vpop.f32.mrb[0].mxu0
      %v2321 = vadd.f32 %v1997, %v2320
      %v2322 = vpop.f32.mrb[0].mxu0
      %v2323 = vpop.f32.mrb[0].mxu0
      %v2324 = vadd.f32 %v1997, %v2323
      %v2325 = vpop.f32.mrb[0].mxu0
      %2326 = vmatprep.mubr.bf16.mxu0 0
      %2327 = vmatmul.mubr.bf16.gmra.mrb[0].mxu0 %v2258
      %v2328 = vpop.f32.mrb[0].mxu0
      %v2329 = vadd.f32 %v1997, %v2328
      %v2330 = vpop.f32.mrb[0].mxu0
      %v2331 = vpop.f32.mrb[0].mxu0
      %v2332 = vadd.f32 %v1997, %v2331
      %v2333 = vpop.f32.mrb[0].mxu0
      %2334 = vmatprep.mubr.bf16.mxu0 0
      %2335 = vmatmul.mubr.bf16.gmra.mrb[0].mxu0 %v2261
      %v2336 = vpop.f32.mrb[0].mxu0
      %v2337 = vadd.f32 %v1997, %v2336
      %v2338 = vpop.f32.mrb[0].mxu0
      %v2339 = vpop.f32.mrb[0].mxu0
      %v2340 = vadd.f32 %v1997, %v2339
      %v2341 = vpop.f32.mrb[0].mxu0
      %2342 = vmatprep.mubr.bf16.mxu0 0
      %2343 = vmatmul.mubr.bf16.gmra.mrb[0].mxu0 %v2264
      %v2344 = vpop.f32.mrb[0].mxu0
      %v2345 = vadd.f32 %v1997, %v2344
      %v2346 = vpop.f32.mrb[0].mxu0
      %v2347 = vpop.f32.mrb[0].mxu0
      %v2348 = vadd.f32 %v1997, %v2347
      %v2349 = vpop.f32.mrb[0].mxu0
      %2350 = vmatprep.mubr.bf16.mxu0 0
      %2351 = vmatmul.mubr.bf16.gmra.mrb[0].mxu0 %v2267
      %v2352 = vpop.f32.mrb[0].mxu0
      %v2353 = vadd.f32 %v1997, %v2352
      %v2354 = vpop.f32.mrb[0].mxu0
      %v2355 = vpop.f32.mrb[0].mxu0
      %v2356 = vadd.f32 %v1997, %v2355
      %v2357 = vpop.f32.mrb[0].mxu0
      %2358 = vmatprep.mubr.bf16.mxu0 0
      %2359 = vmatmul.mubr.bf16.gmra.mrb[0].mxu0 %v2270
      %v2360 = vpop.f32.mrb[0].mxu0
      %v2361 = vadd.f32 %v1997, %v2360
      %v2362 = vpop.f32.mrb[0].mxu0
      %v2363 = vpop.f32.mrb[0].mxu0
      %v2364 = vadd.f32 %v1997, %v2363
      %v2365 = vpop.f32.mrb[0].mxu0
      %2366 = vmatprep.mubr.bf16.mxu0 0
      %2367 = vmatmul.mubr.bf16.gmra.mrb[0].mxu0 %v2273
      %v2368 = vpop.f32.mrb[0].mxu0
      %v2369 = vadd.f32 %v1997, %v2368
      %v2370 = vpop.f32.mrb[0].mxu0
      %v2371 = vpop.f32.mrb[0].mxu0
      %v2372 = vadd.f32 %v1997, %v2371
      %v2373 = vpop.f32.mrb[0].mxu0
      %2374 = vmatprep.mubr.bf16.mxu0 0
      %2375 = vmatmul.mubr.bf16.gmra.mrb[0].mxu0 %v2276
      %v2376 = vpop.f32.mrb[0].mxu0
      %v2377 = vadd.f32 %v1997, %v2376
      %v2378 = vpop.f32.mrb[0].mxu0
      %v2379 = vpop.f32.mrb[0].mxu0
      %v2380 = vpop.f32.mrb[0].mxu0
      %2381 = vdwg.mxu0
      %v2382 = vld [vmem:[%s3] sm:$0xf]
      %v2383 = vld [vmem:[%s3 + $0x4] sm:$0xf]
      %v2384 = vld [vmem:[%s3 + $0x8] sm:$0xf]
      %v2385 = vld [vmem:[%s3 + $0xc] sm:$0xf]
      %v2386 = vld [vmem:[%s3 + $0x10] sm:$0xf]
      %v2387 = vld [vmem:[%s3 + $0x14] sm:$0xf]
      %v2388 = vld [vmem:[%s3 + $0x18] sm:$0xf]
      %v2389 = vld [vmem:[%s3 + $0x1c] sm:$0xf]
      %v2390 = vld [vmem:[%s3 + $0x20] sm:$0xf]
      %v2391 = vld [vmem:[%s3 + $0x24] sm:$0xf]
      %v2392 = vld [vmem:[%s3 + $0x28] sm:$0xf]
      %v2393 = vld [vmem:[%s3 + $0x2c] sm:$0xf]
      %v2394 = vld [vmem:[%s3 + $0x30] sm:$0xf]
      %v2395 = vld [vmem:[%s3 + $0x34] sm:$0xf]
      %v2396 = vld [vmem:[%s3 + $0x38] sm:$0xf]
      %v2397 = vld [vmem:[%s3 + $0x3c] sm:$0xf]
      %v2398 = vld [vmem:[%s3 + $0x40] sm:$0x1]
      %v2399 = vlaneseq
      %v2400 = vshrl.u32 %v2399, 7
      %v2401 = vsub.s32 2, %v2400
      %v2402 = vrot.slane %v539, %v2401
      %v2420 = vunpack.c.l.b16 %v2382
      %v2421 = vunpack.c.l.b16 %v2383
      %v2422 = vunpack.c.l.b16 %v2384
      %v2423 = vunpack.c.l.b16 %v2385
      %v2424 = vunpack.c.l.b16 %v2386
      %v2425 = vunpack.c.l.b16 %v2387
      %v2426 = vunpack.c.l.b16 %v2388
      %v2427 = vunpack.c.l.b16 %v2389
      %v2428 = vunpack.c.l.b16 %v2390
      %v2429 = vunpack.c.l.b16 %v2391
      %v2430 = vunpack.c.l.b16 %v2392
      %v2431 = vunpack.c.l.b16 %v2393
      %v2432 = vunpack.c.l.b16 %v2394
      %v2433 = vunpack.c.l.b16 %v2395
      %v2434 = vunpack.c.l.b16 %v2396
      %v2435 = vunpack.c.l.b16 %v2397
      %v2436 = vunpack.c.l.b16 %v2398
      %v2437 = vpack.c.b16 %v2421, %v2420
      %v2438 = vpack.c.b16 %v2423, %v2422
      %v2439 = vpack.c.b16 %v2425, %v2424
      %v2440 = vpack.c.b16 %v2427, %v2426
      %v2441 = vpack.c.b16 %v2429, %v2428
      %v2442 = vpack.c.b16 %v2431, %v2430
      %v2443 = vpack.c.b16 %v2433, %v2432
      %v2444 = vpack.c.b16 %v2435, %v2434
      %v2445 = vpack.c.b16 %v2436, %v2436
      %v2452 = vunpack.c.l.b16 %v493
      %v2453 = vunpack.c.l.b16 %v494
      %v2454 = vunpack.c.l.b16 %v495
      %v2455 = vunpack.c.l.b16 %v496
      %v2456 = vunpack.c.l.b16 %v497
      %v2457 = vunpack.c.l.b16 %v498
      %v2458 = vpack.c.b16 %v2453, %v2452
      %v2459 = vpack.c.b16 %v2455, %v2454
      %v2460 = vpack.c.b16 %v2457, %v2456
      %v2465 = vsel %vm564, %v2437, 0
      %v2468 = vsel %vm564, %v2438, 0
      %v2471 = vsel %vm564, %v2439, 0
      %v2474 = vsel %vm564, %v2440, 0
      %v2477 = vsel %vm564, %v2441, 0
      %v2480 = vsel %vm564, %v2442, 0
      %v2483 = vsel %vm564, %v2443, 0
      %v2486 = vsel %vm564, %v2444, 0
      %v2489 = vsel %vm564, %v2445, 0
      %2491 = vmatprep.subr.bf16.mxu0 0
      %2492 = vmatpush1.bf16.msra.mxu0 %v2458
      %2493 = vmatprep.subr.bf16.mxu0 0
      %2494 = vmatpush1.bf16.msra.mxu0 %v2459
      %2495 = vmatprep.subr.bf16.mxu0 0
      %2496 = vmatpush1.bf16.msra.mxu0 %v2460
      %2497 = vmatprep.subr.bf16.mxu0 0
      %2498 = vmatpush1.bf16.msra.mxu0 0
      %2499 = vmatprep.subr.bf16.mxu0 0
      %2500 = vmatpush1.bf16.msra.mxu0 0
      %2501 = vmatprep.subr.bf16.mxu0 0
      %2502 = vmatpush1.bf16.msra.mxu0 0
      %2503 = vmatprep.subr.bf16.mxu0 0
      %2504 = vmatpush1.bf16.msra.mxu0 0
      %2505 = vmatprep.subr.bf16.mxu0 0
      %2506 = vmatpush1.bf16.msra.mxu0 0
      %2507 = vmatprep.subr.bf16.mxu0 0
      %2508 = vmatpush1.bf16.msra.mxu0 0
      %2509 = vmatprep.subr.bf16.mxu0 0
      %2510 = vmatpush1.bf16.msra.mxu0 0
      %2511 = vmatprep.subr.bf16.mxu0 0
      %2512 = vmatpush1.bf16.msra.mxu0 0
      %2513 = vmatprep.subr.bf16.mxu0 0
      %2514 = vmatpush1.bf16.msra.mxu0 0
      %2515 = vmatprep.subr.bf16.mxu0 0
      %2516 = vmatpush1.bf16.msra.mxu0 0
      %2517 = vmatprep.subr.bf16.mxu0 0
      %2518 = vmatpush1.bf16.msra.mxu0 0
      %2519 = vmatprep.subr.bf16.mxu0 0
      %2520 = vmatpush1.bf16.msra.mxu0 0
      %2521 = vmatprep.subr.bf16.mxu0 0
      %2522 = vmatpush1.bf16.msra.mxu0 0
      %2523 = vmatprep.mubr.bf16.mxu0 0
      %2524 = vmatmul.mubr.bf16.gmra.mrb[0].mxu0 %v2465
      %v2525 = vpop.f32.mrb[0].mxu0
      %v2526 = vadd.f32 %v2402, %v2525
      %v2527 = vpop.f32.mrb[0].mxu0
      %v2528 = vpop.f32.mrb[0].mxu0
      %v2529 = vadd.f32 %v2402, %v2528
      %v2530 = vpop.f32.mrb[0].mxu0
      %2531 = vmatprep.mubr.bf16.mxu0 0
      %2532 = vmatmul.mubr.bf16.gmra.mrb[0].mxu0 %v2468
      %v2533 = vpop.f32.mrb[0].mxu0
      %v2534 = vadd.f32 %v2402, %v2533
      %v2535 = vpop.f32.mrb[0].mxu0
      %v2536 = vpop.f32.mrb[0].mxu0
      %v2537 = vadd.f32 %v2402, %v2536
      %v2538 = vpop.f32.mrb[0].mxu0
      %2539 = vmatprep.mubr.bf16.mxu0 0
      %2540 = vmatmul.mubr.bf16.gmra.mrb[0].mxu0 %v2471
      %v2541 = vpop.f32.mrb[0].mxu0
      %v2542 = vadd.f32 %v2402, %v2541
      %v2543 = vpop.f32.mrb[0].mxu0
      %v2544 = vpop.f32.mrb[0].mxu0
      %v2545 = vadd.f32 %v2402, %v2544
      %v2546 = vpop.f32.mrb[0].mxu0
      %2547 = vmatprep.mubr.bf16.mxu0 0
      %2548 = vmatmul.mubr.bf16.gmra.mrb[0].mxu0 %v2474
      %v2549 = vpop.f32.mrb[0].mxu0
      %v2550 = vadd.f32 %v2402, %v2549
      %v2551 = vpop.f32.mrb[0].mxu0
      %v2552 = vpop.f32.mrb[0].mxu0
      %v2553 = vadd.f32 %v2402, %v2552
      %v2554 = vpop.f32.mrb[0].mxu0
      %2555 = vmatprep.mubr.bf16.mxu0 0
      %2556 = vmatmul.mubr.bf16.gmra.mrb[0].mxu0 %v2477
      %v2557 = vpop.f32.mrb[0].mxu0
      %v2558 = vadd.f32 %v2402, %v2557
      %v2559 = vpop.f32.mrb[0].mxu0
      %v2560 = vpop.f32.mrb[0].mxu0
      %v2561 = vadd.f32 %v2402, %v2560
      %v2562 = vpop.f32.mrb[0].mxu0
      %2563 = vmatprep.mubr.bf16.mxu0 0
      %2564 = vmatmul.mubr.bf16.gmra.mrb[0].mxu0 %v2480
      %v2565 = vpop.f32.mrb[0].mxu0
      %v2566 = vadd.f32 %v2402, %v2565
      %v2567 = vpop.f32.mrb[0].mxu0
      %v2568 = vpop.f32.mrb[0].mxu0
      %v2569 = vadd.f32 %v2402, %v2568
      %v2570 = vpop.f32.mrb[0].mxu0
      %2571 = vmatprep.mubr.bf16.mxu0 0
      %2572 = vmatmul.mubr.bf16.gmra.mrb[0].mxu0 %v2483
      %v2573 = vpop.f32.mrb[0].mxu0
      %v2574 = vadd.f32 %v2402, %v2573
      %v2575 = vpop.f32.mrb[0].mxu0
      %v2576 = vpop.f32.mrb[0].mxu0
      %v2577 = vadd.f32 %v2402, %v2576
      %v2578 = vpop.f32.mrb[0].mxu0
      %2579 = vmatprep.mubr.bf16.mxu0 0
      %2580 = vmatmul.mubr.bf16.gmra.mrb[0].mxu0 %v2486
      %v2581 = vpop.f32.mrb[0].mxu0
      %v2582 = vadd.f32 %v2402, %v2581
      %v2583 = vpop.f32.mrb[0].mxu0
      %v2584 = vpop.f32.mrb[0].mxu0
      %v2585 = vadd.f32 %v2402, %v2584
      %v2586 = vpop.f32.mrb[0].mxu0
      %2587 = vmatprep.mubr.bf16.mxu0 0
      %2588 = vmatmul.mubr.bf16.gmra.mrb[0].mxu0 %v2489
      %v2589 = vpop.f32.mrb[0].mxu0
      %v2590 = vadd.f32 %v2402, %v2589
      %v2591 = vpop.f32.mrb[0].mxu0
      %v2592 = vpop.f32.mrb[0].mxu0
      %v2593 = vpop.f32.mrb[0].mxu0
      %2594 = vdwg.mxu0
      %s2595 = scalar_lea.vmem %s3, 68
      %v2596 = vld [vmem:[%s2595] sm:$0xf]
      %v2597 = vld [vmem:[%s2595 + $0x4] sm:$0xf]
      %v2598 = vld [vmem:[%s2595 + $0x8] sm:$0xf]
      %v2599 = vld [vmem:[%s2595 + $0xc] sm:$0xf]
      %v2600 = vld [vmem:[%s2595 + $0x10] sm:$0xf]
      %v2601 = vld [vmem:[%s2595 + $0x14] sm:$0xf]
      %v2602 = vld [vmem:[%s2595 + $0x18] sm:$0xf]
      %v2603 = vld [vmem:[%s2595 + $0x1c] sm:$0xf]
      %v2604 = vld [vmem:[%s2595 + $0x20] sm:$0xf]
      %v2605 = vld [vmem:[%s2595 + $0x24] sm:$0xf]
      %v2606 = vld [vmem:[%s2595 + $0x28] sm:$0xf]
      %v2607 = vld [vmem:[%s2595 + $0x2c] sm:$0xf]
      %v2608 = vld [vmem:[%s2595 + $0x30] sm:$0xf]
      %v2609 = vld [vmem:[%s2595 + $0x34] sm:$0xf]
      %v2610 = vld [vmem:[%s2595 + $0x38] sm:$0xf]
      %v2611 = vld [vmem:[%s2595 + $0x3c] sm:$0xf]
      %v2612 = vld [vmem:[%s2595 + $0x40] sm:$0x1]
      %v2630 = vunpack.c.l.b16 %v2596
      %v2631 = vunpack.c.l.b16 %v2597
      %v2632 = vunpack.c.l.b16 %v2598
      %v2633 = vunpack.c.l.b16 %v2599
      %v2634 = vunpack.c.l.b16 %v2600
      %v2635 = vunpack.c.l.b16 %v2601
      %v2636 = vunpack.c.l.b16 %v2602
      %v2637 = vunpack.c.l.b16 %v2603
      %v2638 = vunpack.c.l.b16 %v2604
      %v2639 = vunpack.c.l.b16 %v2605
      %v2640 = vunpack.c.l.b16 %v2606
      %v2641 = vunpack.c.l.b16 %v2607
      %v2642 = vunpack.c.l.b16 %v2608
      %v2643 = vunpack.c.l.b16 %v2609
      %v2644 = vunpack.c.l.b16 %v2610
      %v2645 = vunpack.c.l.b16 %v2611
      %v2646 = vunpack.c.l.b16 %v2612
      %v2647 = vpack.c.b16 %v2631, %v2630
      %v2648 = vpack.c.b16 %v2633, %v2632
      %v2649 = vpack.c.b16 %v2635, %v2634
      %v2650 = vpack.c.b16 %v2637, %v2636
      %v2651 = vpack.c.b16 %v2639, %v2638
      %v2652 = vpack.c.b16 %v2641, %v2640
      %v2653 = vpack.c.b16 %v2643, %v2642
      %v2654 = vpack.c.b16 %v2645, %v2644
      %v2655 = vpack.c.b16 %v2646, %v2646
      %v2657 = vsel %vm564, %v2647, 0
      %v2660 = vsel %vm564, %v2648, 0
      %v2663 = vsel %vm564, %v2649, 0
      %v2666 = vsel %vm564, %v2650, 0
      %v2669 = vsel %vm564, %v2651, 0
      %v2672 = vsel %vm564, %v2652, 0
      %v2675 = vsel %vm564, %v2653, 0
      %v2678 = vsel %vm564, %v2654, 0
      %v2681 = vsel %vm564, %v2655, 0
      %2683 = vmatprep.subr.bf16.mxu0 0
      %2684 = vmatpush1.bf16.msra.mxu0 %v2458
      %2685 = vmatprep.subr.bf16.mxu0 0
      %2686 = vmatpush1.bf16.msra.mxu0 %v2459
      %2687 = vmatprep.subr.bf16.mxu0 0
      %2688 = vmatpush1.bf16.msra.mxu0 %v2460
      %2689 = vmatprep.subr.bf16.mxu0 0
      %2690 = vmatpush1.bf16.msra.mxu0 0
      %2691 = vmatprep.subr.bf16.mxu0 0
      %2692 = vmatpush1.bf16.msra.mxu0 0
      %2693 = vmatprep.subr.bf16.mxu0 0
      %2694 = vmatpush1.bf16.msra.mxu0 0
      %2695 = vmatprep.subr.bf16.mxu0 0
      %2696 = vmatpush1.bf16.msra.mxu0 0
      %2697 = vmatprep.subr.bf16.mxu0 0
      %2698 = vmatpush1.bf16.msra.mxu0 0
      %2699 = vmatprep.subr.bf16.mxu0 0
      %2700 = vmatpush1.bf16.msra.mxu0 0
      %2701 = vmatprep.subr.bf16.mxu0 0
      %2702 = vmatpush1.bf16.msra.mxu0 0
      %2703 = vmatprep.subr.bf16.mxu0 0
      %2704 = vmatpush1.bf16.msra.mxu0 0
      %2705 = vmatprep.subr.bf16.mxu0 0
      %2706 = vmatpush1.bf16.msra.mxu0 0
      %2707 = vmatprep.subr.bf16.mxu0 0
      %2708 = vmatpush1.bf16.msra.mxu0 0
      %2709 = vmatprep.subr.bf16.mxu0 0
      %2710 = vmatpush1.bf16.msra.mxu0 0
      %2711 = vmatprep.subr.bf16.mxu0 0
      %2712 = vmatpush1.bf16.msra.mxu0 0
      %2713 = vmatprep.subr.bf16.mxu0 0
      %2714 = vmatpush1.bf16.msra.mxu0 0
      %2715 = vmatprep.mubr.bf16.mxu0 0
      %2716 = vmatmul.mubr.bf16.gmra.mrb[0].mxu0 %v2657
      %v2717 = vpop.f32.mrb[0].mxu0
      %v2718 = vadd.f32 %v2402, %v2717
      %v2719 = vpop.f32.mrb[0].mxu0
      %v2720 = vpop.f32.mrb[0].mxu0
      %v2721 = vadd.f32 %v2402, %v2720
      %v2722 = vpop.f32.mrb[0].mxu0
      %2723 = vmatprep.mubr.bf16.mxu0 0
      %2724 = vmatmul.mubr.bf16.gmra.mrb[0].mxu0 %v2660
      %v2725 = vpop.f32.mrb[0].mxu0
      %v2726 = vadd.f32 %v2402, %v2725
      %v2727 = vpop.f32.mrb[0].mxu0
      %v2728 = vpop.f32.mrb[0].mxu0
      %v2729 = vadd.f32 %v2402, %v2728
      %v2730 = vpop.f32.mrb[0].mxu0
      %2731 = vmatprep.mubr.bf16.mxu0 0
      %2732 = vmatmul.mubr.bf16.gmra.mrb[0].mxu0 %v2663
      %v2733 = vpop.f32.mrb[0].mxu0
      %v2734 = vadd.f32 %v2402, %v2733
      %v2735 = vpop.f32.mrb[0].mxu0
      %v2736 = vpop.f32.mrb[0].mxu0
      %v2737 = vadd.f32 %v2402, %v2736
      %v2738 = vpop.f32.mrb[0].mxu0
      %2739 = vmatprep.mubr.bf16.mxu0 0
      %2740 = vmatmul.mubr.bf16.gmra.mrb[0].mxu0 %v2666
      %v2741 = vpop.f32.mrb[0].mxu0
      %v2742 = vadd.f32 %v2402, %v2741
      %v2743 = vpop.f32.mrb[0].mxu0
      %v2744 = vpop.f32.mrb[0].mxu0
      %v2745 = vadd.f32 %v2402, %v2744
      %v2746 = vpop.f32.mrb[0].mxu0
      %2747 = vmatprep.mubr.bf16.mxu0 0
      %2748 = vmatmul.mubr.bf16.gmra.mrb[0].mxu0 %v2669
      %v2749 = vpop.f32.mrb[0].mxu0
      %v2750 = vadd.f32 %v2402, %v2749
      %v2751 = vpop.f32.mrb[0].mxu0
      %v2752 = vpop.f32.mrb[0].mxu0
      %v2753 = vadd.f32 %v2402, %v2752
      %v2754 = vpop.f32.mrb[0].mxu0
      %2755 = vmatprep.mubr.bf16.mxu0 0
      %2756 = vmatmul.mubr.bf16.gmra.mrb[0].mxu0 %v2672
      %v2757 = vpop.f32.mrb[0].mxu0
      %v2758 = vadd.f32 %v2402, %v2757
      %v2759 = vpop.f32.mrb[0].mxu0
      %v2760 = vpop.f32.mrb[0].mxu0
      %v2761 = vadd.f32 %v2402, %v2760
      %v2762 = vpop.f32.mrb[0].mxu0
      %2763 = vmatprep.mubr.bf16.mxu0 0
      %2764 = vmatmul.mubr.bf16.gmra.mrb[0].mxu0 %v2675
      %v2765 = vpop.f32.mrb[0].mxu0
      %v2766 = vadd.f32 %v2402, %v2765
      %v2767 = vpop.f32.mrb[0].mxu0
      %v2768 = vpop.f32.mrb[0].mxu0
      %v2769 = vadd.f32 %v2402, %v2768
      %v2770 = vpop.f32.mrb[0].mxu0
      %2771 = vmatprep.mubr.bf16.mxu0 0
      %2772 = vmatmul.mubr.bf16.gmra.mrb[0].mxu0 %v2678
      %v2773 = vpop.f32.mrb[0].mxu0
      %v2774 = vadd.f32 %v2402, %v2773
      %v2775 = vpop.f32.mrb[0].mxu0
      %v2776 = vpop.f32.mrb[0].mxu0
      %v2777 = vadd.f32 %v2402, %v2776
      %v2778 = vpop.f32.mrb[0].mxu0
      %2779 = vmatprep.mubr.bf16.mxu0 0
      %2780 = vmatmul.mubr.bf16.gmra.mrb[0].mxu0 %v2681
      %v2781 = vpop.f32.mrb[0].mxu0
      %v2782 = vadd.f32 %v2402, %v2781
      %v2783 = vpop.f32.mrb[0].mxu0
      %v2784 = vpop.f32.mrb[0].mxu0
      %v2785 = vpop.f32.mrb[0].mxu0
      %2786 = vdwg.mxu0
      %v2787 = vpack.c.bf16 %v1971, %v1971
      %v2788 = vpack.c.bf16 %v2124, %v2121
      %v2789 = vpack.c.bf16 %v2132, %v2129
      %v2790 = vpack.c.bf16 %v2140, %v2137
      %v2791 = vpack.c.bf16 %v2148, %v2145
      %v2792 = vpack.c.bf16 %v2156, %v2153
      %v2793 = vpack.c.bf16 %v2164, %v2161
      %v2794 = vpack.c.bf16 %v2172, %v2169
      %v2795 = vpack.c.bf16 %v2180, %v2177
      %v2796 = vpack.c.bf16 %v2185, %v2185
      %v2797 = vpack.c.bf16 %v2529, %v2526
      %v2798 = vpack.c.bf16 %v2537, %v2534
      %v2799 = vpack.c.bf16 %v2545, %v2542
      %v2800 = vpack.c.bf16 %v2553, %v2550
      %v2801 = vpack.c.bf16 %v2561, %v2558
      %v2802 = vpack.c.bf16 %v2569, %v2566
      %v2803 = vpack.c.bf16 %v2577, %v2574
      %v2804 = vpack.c.bf16 %v2585, %v2582
      %v2805 = vpack.c.bf16 %v2590, %v2590
      %v2807 = vsel %vm863, %v2787, 0
      %v2810 = vsel %vm863, %v2788, 0
      %v2813 = vsel %vm863, %v2789, 0
      %v2816 = vsel %vm863, %v2790, 0
      %v2819 = vsel %vm863, %v2791, 0
      %v2822 = vsel %vm863, %v2792, 0
      %v2825 = vsel %vm863, %v2793, 0
      %v2828 = vsel %vm863, %v2794, 0
      %v2831 = vsel %vm863, %v2795, 0
      %v2834 = vsel %vm863, %v2796, 0
      %2836 = vmatprep.subr.bf16.mxu0 0
      %2837 = vmatpush1.bf16.xpose.msra.mxu0 %v2810
      %2838 = vmatprep.subr.bf16.mxu0 0
      %2839 = vmatpush1.bf16.xpose.msra.mxu0 %v2813
      %2840 = vmatprep.subr.bf16.mxu0 0
      %2841 = vmatpush1.bf16.xpose.msra.mxu0 %v2816
      %2842 = vmatprep.subr.bf16.mxu0 0
      %2843 = vmatpush1.bf16.xpose.msra.mxu0 %v2819
      %2844 = vmatprep.subr.bf16.mxu0 0
      %2845 = vmatpush1.bf16.xpose.msra.mxu0 %v2822
      %2846 = vmatprep.subr.bf16.mxu0 0
      %2847 = vmatpush1.bf16.xpose.msra.mxu0 %v2825
      %2848 = vmatprep.subr.bf16.mxu0 0
      %2849 = vmatpush1.bf16.xpose.msra.mxu0 %v2828
      %2850 = vmatprep.subr.bf16.mxu0 0
      %2851 = vmatpush1.bf16.xpose.msra.mxu0 %v2831
      %2852 = vmatprep.subr.bf16.mxu0 0
      %2853 = vmatpush1.bf16.xpose.msra.mxu0 %v2834
      %2854 = vmatprep.subr.bf16.mxu0 0
      %2855 = vmatpush1.bf16.xpose.msra.mxu0 0
      %2856 = vmatprep.subr.bf16.mxu0 0
      %2857 = vmatpush1.bf16.xpose.msra.mxu0 0
      %2858 = vmatprep.subr.bf16.mxu0 0
      %2859 = vmatpush1.bf16.xpose.msra.mxu0 0
      %2860 = vmatprep.subr.bf16.mxu0 0
      %2861 = vmatpush1.bf16.xpose.msra.mxu0 0
      %2862 = vmatprep.subr.bf16.mxu0 0
      %2863 = vmatpush1.bf16.xpose.msra.mxu0 0
      %2864 = vmatprep.subr.bf16.mxu0 0
      %2865 = vmatpush1.bf16.xpose.msra.mxu0 0
      %2866 = vmatprep.subr.bf16.mxu0 0
      %2867 = vmatpush1.bf16.xpose.msra.mxu0 0
      %2868 = vmatprep.mubr.bf16.mxu0 0
      %2869 = vmatmul.mubr.bf16.gmra.mrb[0].mxu0 %v2807
      %v2870 = vpop.f32.mrb[0].mxu0
      %v2871 = vadd.f32 0.0, %v2870
      %v2872 = vpop.f32.mrb[0].mxu0
      %v2873 = vadd.f32 0.0, %v2872
      %v2874 = vpop.f32.mrb[0].mxu0
      %v2875 = vpop.f32.mrb[0].mxu0
      %2876 = vdwg.mxu0
      %v2877 = vmul.f32 %v2871, 0.28867513
      %v2878 = vmul.f32 %v2873, 0.28867513
      %vm2879 = vcmask 7168
      %v2880 = vsel %vm2879, %v2878, -inf
      %v2881 = vmax.f32 %v2877, %v2880
      %2882 = vmax.xlane.f32.xlu0 %v2881
      %v2883 = vpop.xlane.xlu0 %2882
      %v2884 = vsub.f32 %v2877, %v2883
      %v2885 = vsub.f32 %v2878, %v2883
      %v2886 = vmul.f32 %v2884, 1.442695
      %v2887 = vpow.pop %v2886
      %v2888 = vmul.f32 %v2885, 1.442695
      %v2889 = vpow.pop %v2888
      %v2890 = vsel %vm2879, %v2889, 0.0
      %v2891 = vadd.f32 %v2887, %v2890
      %2892 = vadd.xlane.f32.xlu0 %v2891
      %v2893 = vpop.xlane.xlu0 %2892
      %v2894 = vrcp.pop %v2893
      %v2895 = vmul.f32 %v2887, %v2894
      %v2896 = vmul.f32 %v2889, %v2894
      %v2897 = vpack.c.bf16 %v2895, %v2895
      %v2898 = vpack.c.bf16 %v2896, %v2896
      %v2900 = vsel %vm2879, %v2898, 0
      %vm2902 = vcmask 1040384
      %v2903 = vsel 0, 4294967295, 65535
      %v2904 = vsel %vm2902, %v2903, 0
      %v2906 = vand.u32 %v2805, %v2904
      %2908 = vmatprep.subr.bf16.mxu0 0
      %2909 = vmatpush1.bf16.msra.mxu0 %v2797
      %2910 = vmatprep.subr.bf16.mxu0 0
      %2911 = vmatpush1.bf16.msra.mxu0 %v2798
      %2912 = vmatprep.subr.bf16.mxu0 0
      %2913 = vmatpush1.bf16.msra.mxu0 %v2799
      %2914 = vmatprep.subr.bf16.mxu0 0
      %2915 = vmatpush1.bf16.msra.mxu0 %v2800
      %2916 = vmatprep.subr.bf16.mxu0 0
      %2917 = vmatpush1.bf16.msra.mxu0 %v2801
      %2918 = vmatprep.subr.bf16.mxu0 0
      %2919 = vmatpush1.bf16.msra.mxu0 %v2802
      %2920 = vmatprep.subr.bf16.mxu0 0
      %2921 = vmatpush1.bf16.msra.mxu0 %v2803
      %2922 = vmatprep.subr.bf16.mxu0 0
      %2923 = vmatpush1.bf16.msra.mxu0 %v2804
      %2924 = vmatprep.subr.bf16.mxu0 0
      %2925 = vmatpush1.bf16.msra.mxu0 %v2906
      %2926 = vmatprep.subr.bf16.mxu0 0
      %2927 = vmatpush1.bf16.msra.mxu0 0
      %2928 = vmatprep.subr.bf16.mxu0 0
      %2929 = vmatpush1.bf16.msra.mxu0 0
      %2930 = vmatprep.subr.bf16.mxu0 0
      %2931 = vmatpush1.bf16.msra.mxu0 0
      %2932 = vmatprep.subr.bf16.mxu0 0
      %2933 = vmatpush1.bf16.msra.mxu0 0
      %2934 = vmatprep.subr.bf16.mxu0 0
      %2935 = vmatpush1.bf16.msra.mxu0 0
      %2936 = vmatprep.subr.bf16.mxu0 0
      %2937 = vmatpush1.bf16.msra.mxu0 0
      %2938 = vmatprep.subr.bf16.mxu0 0
      %2939 = vmatpush1.bf16.msra.mxu0 0
      %2940 = vmatprep.mubr.bf16.mxu0 %v2900
      %2941 = vmatmul.mubr.bf16.gmra.mrb[0].mxu0 %v2897
      %v2942 = vpop.f32.mrb[0].mxu0
      %v2943 = vadd.f32 0.0, %v2942
      %v2944 = vpop.f32.mrb[0].mxu0
      %v2945 = vpop.f32.mrb[0].mxu0
      %v2946 = vpop.f32.mrb[0].mxu0
      %2947 = vdwg.mxu0
      %2949 = vrot.lane.b32.xlu0 %v2787, 116
      %v2950 = vpop.permute.xlu0 %2949
      %2960 = vrot.lane.b32.xlu0 %v2788, 116
      %v2961 = vpop.permute.xlu0 %2960
      %2962 = vrot.lane.b32.xlu0 %v2789, 116
      %v2963 = vpop.permute.xlu0 %2962
      %2964 = vrot.lane.b32.xlu0 %v2790, 116
      %v2965 = vpop.permute.xlu0 %2964
      %2966 = vrot.lane.b32.xlu0 %v2791, 116
      %v2967 = vpop.permute.xlu0 %2966
      %2968 = vrot.lane.b32.xlu0 %v2792, 116
      %v2969 = vpop.permute.xlu0 %2968
      %2970 = vrot.lane.b32.xlu0 %v2793, 116
      %v2971 = vpop.permute.xlu0 %2970
      %2972 = vrot.lane.b32.xlu0 %v2794, 116
      %v2973 = vpop.permute.xlu0 %2972
      %2974 = vrot.lane.b32.xlu0 %v2795, 116
      %v2975 = vpop.permute.xlu0 %2974
      %2976 = vrot.lane.b32.xlu0 %v2796, 116
      %v2977 = vpop.permute.xlu0 %2976
      %v2979 = vsel %vm863, %v2950, 0
      %v2982 = vsel %vm863, %v2961, 0
      %v2985 = vsel %vm863, %v2963, 0
      %v2988 = vsel %vm863, %v2965, 0
      %v2991 = vsel %vm863, %v2967, 0
      %v2994 = vsel %vm863, %v2969, 0
      %v2997 = vsel %vm863, %v2971, 0
      %v3000 = vsel %vm863, %v2973, 0
      %v3003 = vsel %vm863, %v2975, 0
      %v3006 = vsel %vm863, %v2977, 0
      %3008 = vmatprep.subr.bf16.mxu0 0
      %3009 = vmatpush1.bf16.xpose.msra.mxu0 %v2982
      %3010 = vmatprep.subr.bf16.mxu0 0
      %3011 = vmatpush1.bf16.xpose.msra.mxu0 %v2985
      %3012 = vmatprep.subr.bf16.mxu0 0
      %3013 = vmatpush1.bf16.xpose.msra.mxu0 %v2988
      %3014 = vmatprep.subr.bf16.mxu0 0
      %3015 = vmatpush1.bf16.xpose.msra.mxu0 %v2991
      %3016 = vmatprep.subr.bf16.mxu0 0
      %3017 = vmatpush1.bf16.xpose.msra.mxu0 %v2994
      %3018 = vmatprep.subr.bf16.mxu0 0
      %3019 = vmatpush1.bf16.xpose.msra.mxu0 %v2997
      %3020 = vmatprep.subr.bf16.mxu0 0
      %3021 = vmatpush1.bf16.xpose.msra.mxu0 %v3000
      %3022 = vmatprep.subr.bf16.mxu0 0
      %3023 = vmatpush1.bf16.xpose.msra.mxu0 %v3003
      %3024 = vmatprep.subr.bf16.mxu0 0
      %3025 = vmatpush1.bf16.xpose.msra.mxu0 %v3006
      %3026 = vmatprep.subr.bf16.mxu0 0
      %3027 = vmatpush1.bf16.xpose.msra.mxu0 0
      %3028 = vmatprep.subr.bf16.mxu0 0
      %3029 = vmatpush1.bf16.xpose.msra.mxu0 0
      %3030 = vmatprep.subr.bf16.mxu0 0
      %3031 = vmatpush1.bf16.xpose.msra.mxu0 0
      %3032 = vmatprep.subr.bf16.mxu0 0
      %3033 = vmatpush1.bf16.xpose.msra.mxu0 0
      %3034 = vmatprep.subr.bf16.mxu0 0
      %3035 = vmatpush1.bf16.xpose.msra.mxu0 0
      %3036 = vmatprep.subr.bf16.mxu0 0
      %3037 = vmatpush1.bf16.xpose.msra.mxu0 0
      %3038 = vmatprep.subr.bf16.mxu0 0
      %3039 = vmatpush1.bf16.xpose.msra.mxu0 0
      %3040 = vmatprep.mubr.bf16.mxu0 0
      %3041 = vmatmul.mubr.bf16.gmra.mrb[0].mxu0 %v2979
      %v3042 = vpop.f32.mrb[0].mxu0
      %v3043 = vadd.f32 0.0, %v3042
      %v3044 = vpop.f32.mrb[0].mxu0
      %v3045 = vadd.f32 0.0, %v3044
      %v3046 = vpop.f32.mrb[0].mxu0
      %v3047 = vpop.f32.mrb[0].mxu0
      %3048 = vdwg.mxu0
      %v3049 = vmul.f32 %v3043, 0.28867513
      %v3050 = vmul.f32 %v3045, 0.28867513
      %v3051 = vsel %vm2879, %v3050, -inf
      %v3052 = vmax.f32 %v3049, %v3051
      %3053 = vmax.xlane.f32.xlu0 %v3052
      %v3054 = vpop.xlane.xlu0 %3053
      %v3055 = vsub.f32 %v3049, %v3054
      %v3056 = vsub.f32 %v3050, %v3054
      %v3057 = vmul.f32 %v3055, 1.442695
      %v3058 = vpow.pop %v3057
      %v3059 = vmul.f32 %v3056, 1.442695
      %v3060 = vpow.pop %v3059
      %v3061 = vsel %vm2879, %v3060, 0.0
      %v3062 = vadd.f32 %v3058, %v3061
      %3063 = vadd.xlane.f32.xlu0 %v3062
      %v3064 = vpop.xlane.xlu0 %3063
      %v3065 = vrcp.pop %v3064
      %v3066 = vmul.f32 %v3058, %v3065
      %v3067 = vmul.f32 %v3060, %v3065
      %v3068 = vpack.c.bf16 %v3066, %v3066
      %v3069 = vpack.c.bf16 %v3067, %v3067
      %3079 = vrot.lane.b32.xlu0 %v2797, 116
      %v3080 = vpop.permute.xlu0 %3079
      %3081 = vrot.lane.b32.xlu0 %v2798, 116
      %v3082 = vpop.permute.xlu0 %3081
      %3083 = vrot.lane.b32.xlu0 %v2799, 116
      %v3084 = vpop.permute.xlu0 %3083
      %3085 = vrot.lane.b32.xlu0 %v2800, 116
      %v3086 = vpop.permute.xlu0 %3085
      %3087 = vrot.lane.b32.xlu0 %v2801, 116
      %v3088 = vpop.permute.xlu0 %3087
      %3089 = vrot.lane.b32.xlu0 %v2802, 116
      %v3090 = vpop.permute.xlu0 %3089
      %3091 = vrot.lane.b32.xlu0 %v2803, 116
      %v3092 = vpop.permute.xlu0 %3091
      %3093 = vrot.lane.b32.xlu0 %v2804, 116
      %v3094 = vpop.permute.xlu0 %3093
      %3095 = vrot.lane.b32.xlu0 %v2805, 116
      %v3096 = vpop.permute.xlu0 %3095
      %v3106 = vsel %vm2879, %v3069, 0
      %v3109 = vand.u32 %v3096, %v2904
      %3111 = vmatprep.subr.bf16.mxu0 0
      %3112 = vmatpush1.bf16.msra.mxu0 %v3080
      %3113 = vmatprep.subr.bf16.mxu0 0
      %3114 = vmatpush1.bf16.msra.mxu0 %v3082
      %3115 = vmatprep.subr.bf16.mxu0 0
      %3116 = vmatpush1.bf16.msra.mxu0 %v3084
      %3117 = vmatprep.subr.bf16.mxu0 0
      %3118 = vmatpush1.bf16.msra.mxu0 %v3086
      %3119 = vmatprep.subr.bf16.mxu0 0
      %3120 = vmatpush1.bf16.msra.mxu0 %v3088
      %3121 = vmatprep.subr.bf16.mxu0 0
      %3122 = vmatpush1.bf16.msra.mxu0 %v3090
      %3123 = vmatprep.subr.bf16.mxu0 0
      %3124 = vmatpush1.bf16.msra.mxu0 %v3092
      %3125 = vmatprep.subr.bf16.mxu0 0
      %3126 = vmatpush1.bf16.msra.mxu0 %v3094
      %3127 = vmatprep.subr.bf16.mxu0 0
      %3128 = vmatpush1.bf16.msra.mxu0 %v3109
      %3129 = vmatprep.subr.bf16.mxu0 0
      %3130 = vmatpush1.bf16.msra.mxu0 0
      %3131 = vmatprep.subr.bf16.mxu0 0
      %3132 = vmatpush1.bf16.msra.mxu0 0
      %3133 = vmatprep.subr.bf16.mxu0 0
      %3134 = vmatpush1.bf16.msra.mxu0 0
      %3135 = vmatprep.subr.bf16.mxu0 0
      %3136 = vmatpush1.bf16.msra.mxu0 0
      %3137 = vmatprep.subr.bf16.mxu0 0
      %3138 = vmatpush1.bf16.msra.mxu0 0
      %3139 = vmatprep.subr.bf16.mxu0 0
      %3140 = vmatpush1.bf16.msra.mxu0 0
      %3141 = vmatprep.subr.bf16.mxu0 0
      %3142 = vmatpush1.bf16.msra.mxu0 0
      %3143 = vmatprep.mubr.bf16.mxu0 %v3106
      %3144 = vmatmul.mubr.bf16.gmra.mrb[0].mxu0 %v3068
      %v3145 = vpop.f32.mrb[0].mxu0
      %v3146 = vadd.f32 0.0, %v3145
      %v3147 = vpop.f32.mrb[0].mxu0
      %v3148 = vpop.f32.mrb[0].mxu0
      %v3149 = vpop.f32.mrb[0].mxu0
      %3150 = vdwg.mxu0
      %3151 = vrot.lane.b32.xlu0 %v2787, 104
      %v3152 = vpop.permute.xlu0 %3151
      %3153 = vrot.lane.b32.xlu0 %v2788, 104
      %v3154 = vpop.permute.xlu0 %3153
      %3155 = vrot.lane.b32.xlu0 %v2789, 104
      %v3156 = vpop.permute.xlu0 %3155
      %3157 = vrot.lane.b32.xlu0 %v2790, 104
      %v3158 = vpop.permute.xlu0 %3157
      %3159 = vrot.lane.b32.xlu0 %v2791, 104
      %v3160 = vpop.permute.xlu0 %3159
      %3161 = vrot.lane.b32.xlu0 %v2792, 104
      %v3162 = vpop.permute.xlu0 %3161
      %3163 = vrot.lane.b32.xlu0 %v2793, 104
      %v3164 = vpop.permute.xlu0 %3163
      %3165 = vrot.lane.b32.xlu0 %v2794, 104
      %v3166 = vpop.permute.xlu0 %3165
      %3167 = vrot.lane.b32.xlu0 %v2795, 104
      %v3168 = vpop.permute.xlu0 %3167
      %3169 = vrot.lane.b32.xlu0 %v2796, 104
      %v3170 = vpop.permute.xlu0 %3169
      %v3172 = vsel %vm863, %v3152, 0
      %v3175 = vsel %vm863, %v3154, 0
      %v3178 = vsel %vm863, %v3156, 0
      %v3181 = vsel %vm863, %v3158, 0
      %v3184 = vsel %vm863, %v3160, 0
      %v3187 = vsel %vm863, %v3162, 0
      %v3190 = vsel %vm863, %v3164, 0
      %v3193 = vsel %vm863, %v3166, 0
      %v3196 = vsel %vm863, %v3168, 0
      %v3199 = vsel %vm863, %v3170, 0
      %3201 = vmatprep.subr.bf16.mxu0 0
      %3202 = vmatpush1.bf16.xpose.msra.mxu0 %v3175
      %3203 = vmatprep.subr.bf16.mxu0 0
      %3204 = vmatpush1.bf16.xpose.msra.mxu0 %v3178
      %3205 = vmatprep.subr.bf16.mxu0 0
      %3206 = vmatpush1.bf16.xpose.msra.mxu0 %v3181
      %3207 = vmatprep.subr.bf16.mxu0 0
      %3208 = vmatpush1.bf16.xpose.msra.mxu0 %v3184
      %3209 = vmatprep.subr.bf16.mxu0 0
      %3210 = vmatpush1.bf16.xpose.msra.mxu0 %v3187
      %3211 = vmatprep.subr.bf16.mxu0 0
      %3212 = vmatpush1.bf16.xpose.msra.mxu0 %v3190
      %3213 = vmatprep.subr.bf16.mxu0 0
      %3214 = vmatpush1.bf16.xpose.msra.mxu0 %v3193
      %3215 = vmatprep.subr.bf16.mxu0 0
      %3216 = vmatpush1.bf16.xpose.msra.mxu0 %v3196
      %3217 = vmatprep.subr.bf16.mxu0 0
      %3218 = vmatpush1.bf16.xpose.msra.mxu0 %v3199
      %3219 = vmatprep.subr.bf16.mxu0 0
      %3220 = vmatpush1.bf16.xpose.msra.mxu0 0
      %3221 = vmatprep.subr.bf16.mxu0 0
      %3222 = vmatpush1.bf16.xpose.msra.mxu0 0
      %3223 = vmatprep.subr.bf16.mxu0 0
      %3224 = vmatpush1.bf16.xpose.msra.mxu0 0
      %3225 = vmatprep.subr.bf16.mxu0 0
      %3226 = vmatpush1.bf16.xpose.msra.mxu0 0
      %3227 = vmatprep.subr.bf16.mxu0 0
      %3228 = vmatpush1.bf16.xpose.msra.mxu0 0
      %3229 = vmatprep.subr.bf16.mxu0 0
      %3230 = vmatpush1.bf16.xpose.msra.mxu0 0
      %3231 = vmatprep.subr.bf16.mxu0 0
      %3232 = vmatpush1.bf16.xpose.msra.mxu0 0
      %3233 = vmatprep.mubr.bf16.mxu0 0
      %3234 = vmatmul.mubr.bf16.gmra.mrb[0].mxu0 %v3172
      %v3235 = vpop.f32.mrb[0].mxu0
      %v3236 = vadd.f32 0.0, %v3235
      %v3237 = vpop.f32.mrb[0].mxu0
      %v3238 = vadd.f32 0.0, %v3237
      %v3239 = vpop.f32.mrb[0].mxu0
      %v3240 = vpop.f32.mrb[0].mxu0
      %3241 = vdwg.mxu0
      %v3242 = vmul.f32 %v3236, 0.28867513
      %v3243 = vmul.f32 %v3238, 0.28867513
      %v3244 = vsel %vm2879, %v3243, -inf
      %v3245 = vmax.f32 %v3242, %v3244
      %3246 = vmax.xlane.f32.xlu0 %v3245
      %v3247 = vpop.xlane.xlu0 %3246
      %v3248 = vsub.f32 %v3242, %v3247
      %v3249 = vsub.f32 %v3243, %v3247
      %v3250 = vmul.f32 %v3248, 1.442695
      %v3251 = vpow.pop %v3250
      %v3252 = vmul.f32 %v3249, 1.442695
      %v3253 = vpow.pop %v3252
      %v3254 = vsel %vm2879, %v3253, 0.0
      %v3255 = vadd.f32 %v3251, %v3254
      %3256 = vadd.xlane.f32.xlu0 %v3255
      %v3257 = vpop.xlane.xlu0 %3256
      %v3258 = vrcp.pop %v3257
      %v3259 = vmul.f32 %v3251, %v3258
      %v3260 = vmul.f32 %v3253, %v3258
      %v3261 = vpack.c.bf16 %v3259, %v3259
      %v3262 = vpack.c.bf16 %v3260, %v3260
      %3263 = vrot.lane.b32.xlu0 %v2797, 104
      %v3264 = vpop.permute.xlu0 %3263
      %3265 = vrot.lane.b32.xlu0 %v2798, 104
      %v3266 = vpop.permute.xlu0 %3265
      %3267 = vrot.lane.b32.xlu0 %v2799, 104
      %v3268 = vpop.permute.xlu0 %3267
      %3269 = vrot.lane.b32.xlu0 %v2800, 104
      %v3270 = vpop.permute.xlu0 %3269
      %3271 = vrot.lane.b32.xlu0 %v2801, 104
      %v3272 = vpop.permute.xlu0 %3271
      %3273 = vrot.lane.b32.xlu0 %v2802, 104
      %v3274 = vpop.permute.xlu0 %3273
      %3275 = vrot.lane.b32.xlu0 %v2803, 104
      %v3276 = vpop.permute.xlu0 %3275
      %3277 = vrot.lane.b32.xlu0 %v2804, 104
      %v3278 = vpop.permute.xlu0 %3277
      %3279 = vrot.lane.b32.xlu0 %v2805, 104
      %v3280 = vpop.permute.xlu0 %3279
      %v3290 = vsel %vm2879, %v3262, 0
      %v3293 = vand.u32 %v3280, %v2904
      %3295 = vmatprep.subr.bf16.mxu0 0
      %3296 = vmatpush1.bf16.msra.mxu0 %v3264
      %3297 = vmatprep.subr.bf16.mxu0 0
      %3298 = vmatpush1.bf16.msra.mxu0 %v3266
      %3299 = vmatprep.subr.bf16.mxu0 0
      %3300 = vmatpush1.bf16.msra.mxu0 %v3268
      %3301 = vmatprep.subr.bf16.mxu0 0
      %3302 = vmatpush1.bf16.msra.mxu0 %v3270
      %3303 = vmatprep.subr.bf16.mxu0 0
      %3304 = vmatpush1.bf16.msra.mxu0 %v3272
      %3305 = vmatprep.subr.bf16.mxu0 0
      %3306 = vmatpush1.bf16.msra.mxu0 %v3274
      %3307 = vmatprep.subr.bf16.mxu0 0
      %3308 = vmatpush1.bf16.msra.mxu0 %v3276
      %3309 = vmatprep.subr.bf16.mxu0 0
      %3310 = vmatpush1.bf16.msra.mxu0 %v3278
      %3311 = vmatprep.subr.bf16.mxu0 0
      %3312 = vmatpush1.bf16.msra.mxu0 %v3293
      %3313 = vmatprep.subr.bf16.mxu0 0
      %3314 = vmatpush1.bf16.msra.mxu0 0
      %3315 = vmatprep.subr.bf16.mxu0 0
      %3316 = vmatpush1.bf16.msra.mxu0 0
      %3317 = vmatprep.subr.bf16.mxu0 0
      %3318 = vmatpush1.bf16.msra.mxu0 0
      %3319 = vmatprep.subr.bf16.mxu0 0
      %3320 = vmatpush1.bf16.msra.mxu0 0
      %3321 = vmatprep.subr.bf16.mxu0 0
      %3322 = vmatpush1.bf16.msra.mxu0 0
      %3323 = vmatprep.subr.bf16.mxu0 0
      %3324 = vmatpush1.bf16.msra.mxu0 0
      %3325 = vmatprep.subr.bf16.mxu0 0
      %3326 = vmatpush1.bf16.msra.mxu0 0
      %3327 = vmatprep.mubr.bf16.mxu0 %v3290
      %3328 = vmatmul.mubr.bf16.gmra.mrb[0].mxu0 %v3261
      %v3329 = vpop.f32.mrb[0].mxu0
      %v3330 = vadd.f32 0.0, %v3329
      %v3331 = vpop.f32.mrb[0].mxu0
      %v3332 = vpop.f32.mrb[0].mxu0
      %v3333 = vpop.f32.mrb[0].mxu0
      %3334 = vdwg.mxu0
      %3335 = vrot.lane.b32.xlu0 %v2787, 92
      %v3336 = vpop.permute.xlu0 %3335
      %3337 = vrot.lane.b32.xlu0 %v2788, 92
      %v3338 = vpop.permute.xlu0 %3337
      %3339 = vrot.lane.b32.xlu0 %v2789, 92
      %v3340 = vpop.permute.xlu0 %3339
      %3341 = vrot.lane.b32.xlu0 %v2790, 92
      %v3342 = vpop.permute.xlu0 %3341
      %3343 = vrot.lane.b32.xlu0 %v2791, 92
      %v3344 = vpop.permute.xlu0 %3343
      %3345 = vrot.lane.b32.xlu0 %v2792, 92
      %v3346 = vpop.permute.xlu0 %3345
      %3347 = vrot.lane.b32.xlu0 %v2793, 92
      %v3348 = vpop.permute.xlu0 %3347
      %3349 = vrot.lane.b32.xlu0 %v2794, 92
      %v3350 = vpop.permute.xlu0 %3349
      %3351 = vrot.lane.b32.xlu0 %v2795, 92
      %v3352 = vpop.permute.xlu0 %3351
      %3353 = vrot.lane.b32.xlu0 %v2796, 92
      %v3354 = vpop.permute.xlu0 %3353
      %v3356 = vsel %vm863, %v3336, 0
      %v3359 = vsel %vm863, %v3338, 0
      %v3362 = vsel %vm863, %v3340, 0
      %v3365 = vsel %vm863, %v3342, 0
      %v3368 = vsel %vm863, %v3344, 0
      %v3371 = vsel %vm863, %v3346, 0
      %v3374 = vsel %vm863, %v3348, 0
      %v3377 = vsel %vm863, %v3350, 0
      %v3380 = vsel %vm863, %v3352, 0
      %v3383 = vsel %vm863, %v3354, 0
      %3385 = vmatprep.subr.bf16.mxu0 0
      %3386 = vmatpush1.bf16.xpose.msra.mxu0 %v3359
      %3387 = vmatprep.subr.bf16.mxu0 0
      %3388 = vmatpush1.bf16.xpose.msra.mxu0 %v3362
      %3389 = vmatprep.subr.bf16.mxu0 0
      %3390 = vmatpush1.bf16.xpose.msra.mxu0 %v3365
      %3391 = vmatprep.subr.bf16.mxu0 0
      %3392 = vmatpush1.bf16.xpose.msra.mxu0 %v3368
      %3393 = vmatprep.subr.bf16.mxu0 0
      %3394 = vmatpush1.bf16.xpose.msra.mxu0 %v3371
      %3395 = vmatprep.subr.bf16.mxu0 0
      %3396 = vmatpush1.bf16.xpose.msra.mxu0 %v3374
      %3397 = vmatprep.subr.bf16.mxu0 0
      %3398 = vmatpush1.bf16.xpose.msra.mxu0 %v3377
      %3399 = vmatprep.subr.bf16.mxu0 0
      %3400 = vmatpush1.bf16.xpose.msra.mxu0 %v3380
      %3401 = vmatprep.subr.bf16.mxu0 0
      %3402 = vmatpush1.bf16.xpose.msra.mxu0 %v3383
      %3403 = vmatprep.subr.bf16.mxu0 0
      %3404 = vmatpush1.bf16.xpose.msra.mxu0 0
      %3405 = vmatprep.subr.bf16.mxu0 0
      %3406 = vmatpush1.bf16.xpose.msra.mxu0 0
      %3407 = vmatprep.subr.bf16.mxu0 0
      %3408 = vmatpush1.bf16.xpose.msra.mxu0 0
      %3409 = vmatprep.subr.bf16.mxu0 0
      %3410 = vmatpush1.bf16.xpose.msra.mxu0 0
      %3411 = vmatprep.subr.bf16.mxu0 0
      %3412 = vmatpush1.bf16.xpose.msra.mxu0 0
      %3413 = vmatprep.subr.bf16.mxu0 0
      %3414 = vmatpush1.bf16.xpose.msra.mxu0 0
      %3415 = vmatprep.subr.bf16.mxu0 0
      %3416 = vmatpush1.bf16.xpose.msra.mxu0 0
      %3417 = vmatprep.mubr.bf16.mxu0 0
      %3418 = vmatmul.mubr.bf16.gmra.mrb[0].mxu0 %v3356
      %v3419 = vpop.f32.mrb[0].mxu0
      %v3420 = vadd.f32 0.0, %v3419
      %v3421 = vpop.f32.mrb[0].mxu0
      %v3422 = vadd.f32 0.0, %v3421
      %v3423 = vpop.f32.mrb[0].mxu0
      %v3424 = vpop.f32.mrb[0].mxu0
      %3425 = vdwg.mxu0
      %v3426 = vmul.f32 %v3420, 0.28867513
      %v3427 = vmul.f32 %v3422, 0.28867513
      %v3428 = vsel %vm2879, %v3427, -inf
      %v3429 = vmax.f32 %v3426, %v3428
      %3430 = vmax.xlane.f32.xlu0 %v3429
      %v3431 = vpop.xlane.xlu0 %3430
      %v3432 = vsub.f32 %v3426, %v3431
      %v3433 = vsub.f32 %v3427, %v3431
      %v3434 = vmul.f32 %v3432, 1.442695
      %v3435 = vpow.pop %v3434
      %v3436 = vmul.f32 %v3433, 1.442695
      %v3437 = vpow.pop %v3436
      %v3438 = vsel %vm2879, %v3437, 0.0
      %v3439 = vadd.f32 %v3435, %v3438
      %3440 = vadd.xlane.f32.xlu0 %v3439
      %v3441 = vpop.xlane.xlu0 %3440
      %v3442 = vrcp.pop %v3441
      %v3443 = vmul.f32 %v3435, %v3442
      %v3444 = vmul.f32 %v3437, %v3442
      %v3445 = vpack.c.bf16 %v3443, %v3443
      %v3446 = vpack.c.bf16 %v3444, %v3444
      %3447 = vrot.lane.b32.xlu0 %v2797, 92
      %v3448 = vpop.permute.xlu0 %3447
      %3449 = vrot.lane.b32.xlu0 %v2798, 92
      %v3450 = vpop.permute.xlu0 %3449
      %3451 = vrot.lane.b32.xlu0 %v2799, 92
      %v3452 = vpop.permute.xlu0 %3451
      %3453 = vrot.lane.b32.xlu0 %v2800, 92
      %v3454 = vpop.permute.xlu0 %3453
      %3455 = vrot.lane.b32.xlu0 %v2801, 92
      %v3456 = vpop.permute.xlu0 %3455
      %3457 = vrot.lane.b32.xlu0 %v2802, 92
      %v3458 = vpop.permute.xlu0 %3457
      %3459 = vrot.lane.b32.xlu0 %v2803, 92
      %v3460 = vpop.permute.xlu0 %3459
      %3461 = vrot.lane.b32.xlu0 %v2804, 92
      %v3462 = vpop.permute.xlu0 %3461
      %3463 = vrot.lane.b32.xlu0 %v2805, 92
      %v3464 = vpop.permute.xlu0 %3463
      %v3474 = vsel %vm2879, %v3446, 0
      %v3477 = vand.u32 %v3464, %v2904
      %3479 = vmatprep.subr.bf16.mxu0 0
      %3480 = vmatpush1.bf16.msra.mxu0 %v3448
      %3481 = vmatprep.subr.bf16.mxu0 0
      %3482 = vmatpush1.bf16.msra.mxu0 %v3450
      %3483 = vmatprep.subr.bf16.mxu0 0
      %3484 = vmatpush1.bf16.msra.mxu0 %v3452
      %3485 = vmatprep.subr.bf16.mxu0 0
      %3486 = vmatpush1.bf16.msra.mxu0 %v3454
      %3487 = vmatprep.subr.bf16.mxu0 0
      %3488 = vmatpush1.bf16.msra.mxu0 %v3456
      %3489 = vmatprep.subr.bf16.mxu0 0
      %3490 = vmatpush1.bf16.msra.mxu0 %v3458
      %3491 = vmatprep.subr.bf16.mxu0 0
      %3492 = vmatpush1.bf16.msra.mxu0 %v3460
      %3493 = vmatprep.subr.bf16.mxu0 0
      %3494 = vmatpush1.bf16.msra.mxu0 %v3462
      %3495 = vmatprep.subr.bf16.mxu0 0
      %3496 = vmatpush1.bf16.msra.mxu0 %v3477
      %3497 = vmatprep.subr.bf16.mxu0 0
      %3498 = vmatpush1.bf16.msra.mxu0 0
      %3499 = vmatprep.subr.bf16.mxu0 0
      %3500 = vmatpush1.bf16.msra.mxu0 0
      %3501 = vmatprep.subr.bf16.mxu0 0
      %3502 = vmatpush1.bf16.msra.mxu0 0
      %3503 = vmatprep.subr.bf16.mxu0 0
      %3504 = vmatpush1.bf16.msra.mxu0 0
      %3505 = vmatprep.subr.bf16.mxu0 0
      %3506 = vmatpush1.bf16.msra.mxu0 0
      %3507 = vmatprep.subr.bf16.mxu0 0
      %3508 = vmatpush1.bf16.msra.mxu0 0
      %3509 = vmatprep.subr.bf16.mxu0 0
      %3510 = vmatpush1.bf16.msra.mxu0 0
      %3511 = vmatprep.mubr.bf16.mxu0 %v3474
      %3512 = vmatmul.mubr.bf16.gmra.mrb[0].mxu0 %v3445
      %v3513 = vpop.f32.mrb[0].mxu0
      %v3514 = vadd.f32 0.0, %v3513
      %v3515 = vpop.f32.mrb[0].mxu0
      %v3516 = vpop.f32.mrb[0].mxu0
      %v3517 = vpop.f32.mrb[0].mxu0
      %3518 = vdwg.mxu0
      %3520 = vrot.lane.b32.xlu0 %v3146, 12
      %v3521 = vpop.permute.xlu0 %3520
      %3524 = vrot.lane.b32.xlu0 %v3330, 24
      %v3525 = vpop.permute.xlu0 %3524
      %3528 = vrot.lane.b32.xlu0 %v3514, 36
      %v3529 = vpop.permute.xlu0 %3528
      %v3531 = vsel %vm863, %v2943, %v3521
      %v3532 = vsel %vm1326, %v3531, %v3525
      %v3533 = vsel %vm1328, %v3532, %v3529
      %v3534 = vpack.c.bf16 %v1974, %v1974
      %v3535 = vpack.c.bf16 %v2316, %v2313
      %v3536 = vpack.c.bf16 %v2324, %v2321
      %v3537 = vpack.c.bf16 %v2332, %v2329
      %v3538 = vpack.c.bf16 %v2340, %v2337
      %v3539 = vpack.c.bf16 %v2348, %v2345
      %v3540 = vpack.c.bf16 %v2356, %v2353
      %v3541 = vpack.c.bf16 %v2364, %v2361
      %v3542 = vpack.c.bf16 %v2372, %v2369
      %v3543 = vpack.c.bf16 %v2377, %v2377
      %v3544 = vpack.c.bf16 %v2721, %v2718
      %v3545 = vpack.c.bf16 %v2729, %v2726
      %v3546 = vpack.c.bf16 %v2737, %v2734
      %v3547 = vpack.c.bf16 %v2745, %v2742
      %v3548 = vpack.c.bf16 %v2753, %v2750
      %v3549 = vpack.c.bf16 %v2761, %v2758
      %v3550 = vpack.c.bf16 %v2769, %v2766
      %v3551 = vpack.c.bf16 %v2777, %v2774
      %v3552 = vpack.c.bf16 %v2782, %v2782
      %v3554 = vsel %vm863, %v3534, 0
      %v3557 = vsel %vm863, %v3535, 0
      %v3560 = vsel %vm863, %v3536, 0
      %v3563 = vsel %vm863, %v3537, 0
      %v3566 = vsel %vm863, %v3538, 0
      %v3569 = vsel %vm863, %v3539, 0
      %v3572 = vsel %vm863, %v3540, 0
      %v3575 = vsel %vm863, %v3541, 0
      %v3578 = vsel %vm863, %v3542, 0
      %v3581 = vsel %vm863, %v3543, 0
      %3583 = vmatprep.subr.bf16.mxu0 0
      %3584 = vmatpush1.bf16.xpose.msra.mxu0 %v3557
      %3585 = vmatprep.subr.bf16.mxu0 0
      %3586 = vmatpush1.bf16.xpose.msra.mxu0 %v3560
      %3587 = vmatprep.subr.bf16.mxu0 0
      %3588 = vmatpush1.bf16.xpose.msra.mxu0 %v3563
      %3589 = vmatprep.subr.bf16.mxu0 0
      %3590 = vmatpush1.bf16.xpose.msra.mxu0 %v3566
      %3591 = vmatprep.subr.bf16.mxu0 0
      %3592 = vmatpush1.bf16.xpose.msra.mxu0 %v3569
      %3593 = vmatprep.subr.bf16.mxu0 0
      %3594 = vmatpush1.bf16.xpose.msra.mxu0 %v3572
      %3595 = vmatprep.subr.bf16.mxu0 0
      %3596 = vmatpush1.bf16.xpose.msra.mxu0 %v3575
      %3597 = vmatprep.subr.bf16.mxu0 0
      %3598 = vmatpush1.bf16.xpose.msra.mxu0 %v3578
      %3599 = vmatprep.subr.bf16.mxu0 0
      %3600 = vmatpush1.bf16.xpose.msra.mxu0 %v3581
      %3601 = vmatprep.subr.bf16.mxu0 0
      %3602 = vmatpush1.bf16.xpose.msra.mxu0 0
      %3603 = vmatprep.subr.bf16.mxu0 0
      %3604 = vmatpush1.bf16.xpose.msra.mxu0 0
      %3605 = vmatprep.subr.bf16.mxu0 0
      %3606 = vmatpush1.bf16.xpose.msra.mxu0 0
      %3607 = vmatprep.subr.bf16.mxu0 0
      %3608 = vmatpush1.bf16.xpose.msra.mxu0 0
      %3609 = vmatprep.subr.bf16.mxu0 0
      %3610 = vmatpush1.bf16.xpose.msra.mxu0 0
      %3611 = vmatprep.subr.bf16.mxu0 0
      %3612 = vmatpush1.bf16.xpose.msra.mxu0 0
      %3613 = vmatprep.subr.bf16.mxu0 0
      %3614 = vmatpush1.bf16.xpose.msra.mxu0 0
      %3615 = vmatprep.mubr.bf16.mxu0 0
      %3616 = vmatmul.mubr.bf16.gmra.mrb[0].mxu0 %v3554
      %v3617 = vpop.f32.mrb[0].mxu0
      %v3618 = vadd.f32 0.0, %v3617
      %v3619 = vpop.f32.mrb[0].mxu0
      %v3620 = vadd.f32 0.0, %v3619
      %v3621 = vpop.f32.mrb[0].mxu0
      %v3622 = vpop.f32.mrb[0].mxu0
      %3623 = vdwg.mxu0
      %v3624 = vmul.f32 %v3618, 0.28867513
      %v3625 = vmul.f32 %v3620, 0.28867513
      %v3626 = vsel %vm2879, %v3625, -inf
      %v3627 = vmax.f32 %v3624, %v3626
      %3628 = vmax.xlane.f32.xlu0 %v3627
      %v3629 = vpop.xlane.xlu0 %3628
      %v3630 = vsub.f32 %v3624, %v3629
      %v3631 = vsub.f32 %v3625, %v3629
      %v3632 = vmul.f32 %v3630, 1.442695
      %v3633 = vpow.pop %v3632
      %v3634 = vmul.f32 %v3631, 1.442695
      %v3635 = vpow.pop %v3634
      %v3636 = vsel %vm2879, %v3635, 0.0
      %v3637 = vadd.f32 %v3633, %v3636
      %3638 = vadd.xlane.f32.xlu0 %v3637
      %v3639 = vpop.xlane.xlu0 %3638
      %v3640 = vrcp.pop %v3639
      %v3641 = vmul.f32 %v3633, %v3640
      %v3642 = vmul.f32 %v3635, %v3640
      %v3643 = vpack.c.bf16 %v3641, %v3641
      %v3644 = vpack.c.bf16 %v3642, %v3642
      %v3646 = vsel %vm2879, %v3644, 0
      %v3649 = vand.u32 %v3552, %v2904
      %3651 = vmatprep.subr.bf16.mxu0 0
      %3652 = vmatpush1.bf16.msra.mxu0 %v3544
      %3653 = vmatprep.subr.bf16.mxu0 0
      %3654 = vmatpush1.bf16.msra.mxu0 %v3545
      %3655 = vmatprep.subr.bf16.mxu0 0
      %3656 = vmatpush1.bf16.msra.mxu0 %v3546
      %3657 = vmatprep.subr.bf16.mxu0 0
      %3658 = vmatpush1.bf16.msra.mxu0 %v3547
      %3659 = vmatprep.subr.bf16.mxu0 0
      %3660 = vmatpush1.bf16.msra.mxu0 %v3548
      %3661 = vmatprep.subr.bf16.mxu0 0
      %3662 = vmatpush1.bf16.msra.mxu0 %v3549
      %3663 = vmatprep.subr.bf16.mxu0 0
      %3664 = vmatpush1.bf16.msra.mxu0 %v3550
      %3665 = vmatprep.subr.bf16.mxu0 0
      %3666 = vmatpush1.bf16.msra.mxu0 %v3551
      %3667 = vmatprep.subr.bf16.mxu0 0
      %3668 = vmatpush1.bf16.msra.mxu0 %v3649
      %3669 = vmatprep.subr.bf16.mxu0 0
      %3670 = vmatpush1.bf16.msra.mxu0 0
      %3671 = vmatprep.subr.bf16.mxu0 0
      %3672 = vmatpush1.bf16.msra.mxu0 0
      %3673 = vmatprep.subr.bf16.mxu0 0
      %3674 = vmatpush1.bf16.msra.mxu0 0
      %3675 = vmatprep.subr.bf16.mxu0 0
      %3676 = vmatpush1.bf16.msra.mxu0 0
      %3677 = vmatprep.subr.bf16.mxu0 0
      %3678 = vmatpush1.bf16.msra.mxu0 0
      %3679 = vmatprep.subr.bf16.mxu0 0
      %3680 = vmatpush1.bf16.msra.mxu0 0
      %3681 = vmatprep.subr.bf16.mxu0 0
      %3682 = vmatpush1.bf16.msra.mxu0 0
      %3683 = vmatprep.mubr.bf16.mxu0 %v3646
      %3684 = vmatmul.mubr.bf16.gmra.mrb[0].mxu0 %v3643
      %v3685 = vpop.f32.mrb[0].mxu0
      %v3686 = vadd.f32 0.0, %v3685
      %v3687 = vpop.f32.mrb[0].mxu0
      %v3688 = vpop.f32.mrb[0].mxu0
      %v3689 = vpop.f32.mrb[0].mxu0
      %3690 = vdwg.mxu0
      %3692 = vrot.lane.b32.xlu0 %v3534, 116
      %v3693 = vpop.permute.xlu0 %3692
      %3703 = vrot.lane.b32.xlu0 %v3535, 116
      %v3704 = vpop.permute.xlu0 %3703
      %3705 = vrot.lane.b32.xlu0 %v3536, 116
      %v3706 = vpop.permute.xlu0 %3705
      %3707 = vrot.lane.b32.xlu0 %v3537, 116
      %v3708 = vpop.permute.xlu0 %3707
      %3709 = vrot.lane.b32.xlu0 %v3538, 116
      %v3710 = vpop.permute.xlu0 %3709
      %3711 = vrot.lane.b32.xlu0 %v3539, 116
      %v3712 = vpop.permute.xlu0 %3711
      %3713 = vrot.lane.b32.xlu0 %v3540, 116
      %v3714 = vpop.permute.xlu0 %3713
      %3715 = vrot.lane.b32.xlu0 %v3541, 116
      %v3716 = vpop.permute.xlu0 %3715
      %3717 = vrot.lane.b32.xlu0 %v3542, 116
      %v3718 = vpop.permute.xlu0 %3717
      %3719 = vrot.lane.b32.xlu0 %v3543, 116
      %v3720 = vpop.permute.xlu0 %3719
      %v3722 = vsel %vm863, %v3693, 0
      %v3725 = vsel %vm863, %v3704, 0
      %v3728 = vsel %vm863, %v3706, 0
      %v3731 = vsel %vm863, %v3708, 0
      %v3734 = vsel %vm863, %v3710, 0
      %v3737 = vsel %vm863, %v3712, 0
      %v3740 = vsel %vm863, %v3714, 0
      %v3743 = vsel %vm863, %v3716, 0
      %v3746 = vsel %vm863, %v3718, 0
      %v3749 = vsel %vm863, %v3720, 0
      %3751 = vmatprep.subr.bf16.mxu0 0
      %3752 = vmatpush1.bf16.xpose.msra.mxu0 %v3725
      %3753 = vmatprep.subr.bf16.mxu0 0
      %3754 = vmatpush1.bf16.xpose.msra.mxu0 %v3728
      %3755 = vmatprep.subr.bf16.mxu0 0
      %3756 = vmatpush1.bf16.xpose.msra.mxu0 %v3731
      %3757 = vmatprep.subr.bf16.mxu0 0
      %3758 = vmatpush1.bf16.xpose.msra.mxu0 %v3734
      %3759 = vmatprep.subr.bf16.mxu0 0
      %3760 = vmatpush1.bf16.xpose.msra.mxu0 %v3737
      %3761 = vmatprep.subr.bf16.mxu0 0
      %3762 = vmatpush1.bf16.xpose.msra.mxu0 %v3740
      %3763 = vmatprep.subr.bf16.mxu0 0
      %3764 = vmatpush1.bf16.xpose.msra.mxu0 %v3743
      %3765 = vmatprep.subr.bf16.mxu0 0
      %3766 = vmatpush1.bf16.xpose.msra.mxu0 %v3746
      %3767 = vmatprep.subr.bf16.mxu0 0
      %3768 = vmatpush1.bf16.xpose.msra.mxu0 %v3749
      %3769 = vmatprep.subr.bf16.mxu0 0
      %3770 = vmatpush1.bf16.xpose.msra.mxu0 0
      %3771 = vmatprep.subr.bf16.mxu0 0
      %3772 = vmatpush1.bf16.xpose.msra.mxu0 0
      %3773 = vmatprep.subr.bf16.mxu0 0
      %3774 = vmatpush1.bf16.xpose.msra.mxu0 0
      %3775 = vmatprep.subr.bf16.mxu0 0
      %3776 = vmatpush1.bf16.xpose.msra.mxu0 0
      %3777 = vmatprep.subr.bf16.mxu0 0
      %3778 = vmatpush1.bf16.xpose.msra.mxu0 0
      %3779 = vmatprep.subr.bf16.mxu0 0
      %3780 = vmatpush1.bf16.xpose.msra.mxu0 0
      %3781 = vmatprep.subr.bf16.mxu0 0
      %3782 = vmatpush1.bf16.xpose.msra.mxu0 0
      %3783 = vmatprep.mubr.bf16.mxu0 0
      %3784 = vmatmul.mubr.bf16.gmra.mrb[0].mxu0 %v3722
      %v3785 = vpop.f32.mrb[0].mxu0
      %v3786 = vadd.f32 0.0, %v3785
      %v3787 = vpop.f32.mrb[0].mxu0
      %v3788 = vadd.f32 0.0, %v3787
      %v3789 = vpop.f32.mrb[0].mxu0
      %v3790 = vpop.f32.mrb[0].mxu0
      %3791 = vdwg.mxu0
      %v3792 = vmul.f32 %v3786, 0.28867513
      %v3793 = vmul.f32 %v3788, 0.28867513
      %v3794 = vsel %vm2879, %v3793, -inf
      %v3795 = vmax.f32 %v3792, %v3794
      %3796 = vmax.xlane.f32.xlu0 %v3795
      %v3797 = vpop.xlane.xlu0 %3796
      %v3798 = vsub.f32 %v3792, %v3797
      %v3799 = vsub.f32 %v3793, %v3797
      %v3800 = vmul.f32 %v3798, 1.442695
      %v3801 = vpow.pop %v3800
      %v3802 = vmul.f32 %v3799, 1.442695
      %v3803 = vpow.pop %v3802
      %v3804 = vsel %vm2879, %v3803, 0.0
      %v3805 = vadd.f32 %v3801, %v3804
      %3806 = vadd.xlane.f32.xlu0 %v3805
      %v3807 = vpop.xlane.xlu0 %3806
      %v3808 = vrcp.pop %v3807
      %v3809 = vmul.f32 %v3801, %v3808
      %v3810 = vmul.f32 %v3803, %v3808
      %v3811 = vpack.c.bf16 %v3809, %v3809
      %v3812 = vpack.c.bf16 %v3810, %v3810
      %3822 = vrot.lane.b32.xlu0 %v3544, 116
      %v3823 = vpop.permute.xlu0 %3822
      %3824 = vrot.lane.b32.xlu0 %v3545, 116
      %v3825 = vpop.permute.xlu0 %3824
      %3826 = vrot.lane.b32.xlu0 %v3546, 116
      %v3827 = vpop.permute.xlu0 %3826
      %3828 = vrot.lane.b32.xlu0 %v3547, 116
      %v3829 = vpop.permute.xlu0 %3828
      %3830 = vrot.lane.b32.xlu0 %v3548, 116
      %v3831 = vpop.permute.xlu0 %3830
      %3832 = vrot.lane.b32.xlu0 %v3549, 116
      %v3833 = vpop.permute.xlu0 %3832
      %3834 = vrot.lane.b32.xlu0 %v3550, 116
      %v3835 = vpop.permute.xlu0 %3834
      %3836 = vrot.lane.b32.xlu0 %v3551, 116
      %v3837 = vpop.permute.xlu0 %3836
      %3838 = vrot.lane.b32.xlu0 %v3552, 116
      %v3839 = vpop.permute.xlu0 %3838
      %v3849 = vsel %vm2879, %v3812, 0
      %v3852 = vand.u32 %v3839, %v2904
      %3854 = vmatprep.subr.bf16.mxu0 0
      %3855 = vmatpush1.bf16.msra.mxu0 %v3823
      %3856 = vmatprep.subr.bf16.mxu0 0
      %3857 = vmatpush1.bf16.msra.mxu0 %v3825
      %3858 = vmatprep.subr.bf16.mxu0 0
      %3859 = vmatpush1.bf16.msra.mxu0 %v3827
      %3860 = vmatprep.subr.bf16.mxu0 0
      %3861 = vmatpush1.bf16.msra.mxu0 %v3829
      %3862 = vmatprep.subr.bf16.mxu0 0
      %3863 = vmatpush1.bf16.msra.mxu0 %v3831
      %3864 = vmatprep.subr.bf16.mxu0 0
      %3865 = vmatpush1.bf16.msra.mxu0 %v3833
      %3866 = vmatprep.subr.bf16.mxu0 0
      %3867 = vmatpush1.bf16.msra.mxu0 %v3835
      %3868 = vmatprep.subr.bf16.mxu0 0
      %3869 = vmatpush1.bf16.msra.mxu0 %v3837
      %3870 = vmatprep.subr.bf16.mxu0 0
      %3871 = vmatpush1.bf16.msra.mxu0 %v3852
      %3872 = vmatprep.subr.bf16.mxu0 0
      %3873 = vmatpush1.bf16.msra.mxu0 0
      %3874 = vmatprep.subr.bf16.mxu0 0
      %3875 = vmatpush1.bf16.msra.mxu0 0
      %3876 = vmatprep.subr.bf16.mxu0 0
      %3877 = vmatpush1.bf16.msra.mxu0 0
      %3878 = vmatprep.subr.bf16.mxu0 0
      %3879 = vmatpush1.bf16.msra.mxu0 0
      %3880 = vmatprep.subr.bf16.mxu0 0
      %3881 = vmatpush1.bf16.msra.mxu0 0
      %3882 = vmatprep.subr.bf16.mxu0 0
      %3883 = vmatpush1.bf16.msra.mxu0 0
      %3884 = vmatprep.subr.bf16.mxu0 0
      %3885 = vmatpush1.bf16.msra.mxu0 0
      %3886 = vmatprep.mubr.bf16.mxu0 %v3849
      %3887 = vmatmul.mubr.bf16.gmra.mrb[0].mxu0 %v3811
      %v3888 = vpop.f32.mrb[0].mxu0
      %v3889 = vadd.f32 0.0, %v3888
      %v3890 = vpop.f32.mrb[0].mxu0
      %v3891 = vpop.f32.mrb[0].mxu0
      %v3892 = vpop.f32.mrb[0].mxu0
      %3893 = vdwg.mxu0
      %3894 = vrot.lane.b32.xlu0 %v3534, 104
      %v3895 = vpop.permute.xlu0 %3894
      %3896 = vrot.lane.b32.xlu0 %v3535, 104
      %v3897 = vpop.permute.xlu0 %3896
      %3898 = vrot.lane.b32.xlu0 %v3536, 104
      %v3899 = vpop.permute.xlu0 %3898
      %3900 = vrot.lane.b32.xlu0 %v3537, 104
      %v3901 = vpop.permute.xlu0 %3900
      %3902 = vrot.lane.b32.xlu0 %v3538, 104
      %v3903 = vpop.permute.xlu0 %3902
      %3904 = vrot.lane.b32.xlu0 %v3539, 104
      %v3905 = vpop.permute.xlu0 %3904
      %3906 = vrot.lane.b32.xlu0 %v3540, 104
      %v3907 = vpop.permute.xlu0 %3906
      %3908 = vrot.lane.b32.xlu0 %v3541, 104
      %v3909 = vpop.permute.xlu0 %3908
      %3910 = vrot.lane.b32.xlu0 %v3542, 104
      %v3911 = vpop.permute.xlu0 %3910
      %3912 = vrot.lane.b32.xlu0 %v3543, 104
      %v3913 = vpop.permute.xlu0 %3912
      %v3915 = vsel %vm863, %v3895, 0
      %v3918 = vsel %vm863, %v3897, 0
      %v3921 = vsel %vm863, %v3899, 0
      %v3924 = vsel %vm863, %v3901, 0
      %v3927 = vsel %vm863, %v3903, 0
      %v3930 = vsel %vm863, %v3905, 0
      %v3933 = vsel %vm863, %v3907, 0
      %v3936 = vsel %vm863, %v3909, 0
      %v3939 = vsel %vm863, %v3911, 0
      %v3942 = vsel %vm863, %v3913, 0
      %3944 = vmatprep.subr.bf16.mxu0 0
      %3945 = vmatpush1.bf16.xpose.msra.mxu0 %v3918
      %3946 = vmatprep.subr.bf16.mxu0 0
      %3947 = vmatpush1.bf16.xpose.msra.mxu0 %v3921
      %3948 = vmatprep.subr.bf16.mxu0 0
      %3949 = vmatpush1.bf16.xpose.msra.mxu0 %v3924
      %3950 = vmatprep.subr.bf16.mxu0 0
      %3951 = vmatpush1.bf16.xpose.msra.mxu0 %v3927
      %3952 = vmatprep.subr.bf16.mxu0 0
      %3953 = vmatpush1.bf16.xpose.msra.mxu0 %v3930
      %3954 = vmatprep.subr.bf16.mxu0 0
      %3955 = vmatpush1.bf16.xpose.msra.mxu0 %v3933
      %3956 = vmatprep.subr.bf16.mxu0 0
      %3957 = vmatpush1.bf16.xpose.msra.mxu0 %v3936
      %3958 = vmatprep.subr.bf16.mxu0 0
      %3959 = vmatpush1.bf16.xpose.msra.mxu0 %v3939
      %3960 = vmatprep.subr.bf16.mxu0 0
      %3961 = vmatpush1.bf16.xpose.msra.mxu0 %v3942
      %3962 = vmatprep.subr.bf16.mxu0 0
      %3963 = vmatpush1.bf16.xpose.msra.mxu0 0
      %3964 = vmatprep.subr.bf16.mxu0 0
      %3965 = vmatpush1.bf16.xpose.msra.mxu0 0
      %3966 = vmatprep.subr.bf16.mxu0 0
      %3967 = vmatpush1.bf16.xpose.msra.mxu0 0
      %3968 = vmatprep.subr.bf16.mxu0 0
      %3969 = vmatpush1.bf16.xpose.msra.mxu0 0
      %3970 = vmatprep.subr.bf16.mxu0 0
      %3971 = vmatpush1.bf16.xpose.msra.mxu0 0
      %3972 = vmatprep.subr.bf16.mxu0 0
      %3973 = vmatpush1.bf16.xpose.msra.mxu0 0
      %3974 = vmatprep.subr.bf16.mxu0 0
      %3975 = vmatpush1.bf16.xpose.msra.mxu0 0
      %3976 = vmatprep.mubr.bf16.mxu0 0
      %3977 = vmatmul.mubr.bf16.gmra.mrb[0].mxu0 %v3915
      %v3978 = vpop.f32.mrb[0].mxu0
      %v3979 = vadd.f32 0.0, %v3978
      %v3980 = vpop.f32.mrb[0].mxu0
      %v3981 = vadd.f32 0.0, %v3980
      %v3982 = vpop.f32.mrb[0].mxu0
      %v3983 = vpop.f32.mrb[0].mxu0
      %3984 = vdwg.mxu0
      %v3985 = vmul.f32 %v3979, 0.28867513
      %v3986 = vmul.f32 %v3981, 0.28867513
      %v3987 = vsel %vm2879, %v3986, -inf
      %v3988 = vmax.f32 %v3985, %v3987
      %3989 = vmax.xlane.f32.xlu0 %v3988
      %v3990 = vpop.xlane.xlu0 %3989
      %v3991 = vsub.f32 %v3985, %v3990
      %v3992 = vsub.f32 %v3986, %v3990
      %v3993 = vmul.f32 %v3991, 1.442695
      %v3994 = vpow.pop %v3993
      %v3995 = vmul.f32 %v3992, 1.442695
      %v3996 = vpow.pop %v3995
      %v3997 = vsel %vm2879, %v3996, 0.0
      %v3998 = vadd.f32 %v3994, %v3997
      %3999 = vadd.xlane.f32.xlu0 %v3998
      %v4000 = vpop.xlane.xlu0 %3999
      %v4001 = vrcp.pop %v4000
      %v4002 = vmul.f32 %v3994, %v4001
      %v4003 = vmul.f32 %v3996, %v4001
      %v4004 = vpack.c.bf16 %v4002, %v4002
      %v4005 = vpack.c.bf16 %v4003, %v4003
      %4006 = vrot.lane.b32.xlu0 %v3544, 104
      %v4007 = vpop.permute.xlu0 %4006
      %4008 = vrot.lane.b32.xlu0 %v3545, 104
      %v4009 = vpop.permute.xlu0 %4008
      %4010 = vrot.lane.b32.xlu0 %v3546, 104
      %v4011 = vpop.permute.xlu0 %4010
      %4012 = vrot.lane.b32.xlu0 %v3547, 104
      %v4013 = vpop.permute.xlu0 %4012
      %4014 = vrot.lane.b32.xlu0 %v3548, 104
      %v4015 = vpop.permute.xlu0 %4014
      %4016 = vrot.lane.b32.xlu0 %v3549, 104
      %v4017 = vpop.permute.xlu0 %4016
      %4018 = vrot.lane.b32.xlu0 %v3550, 104
      %v4019 = vpop.permute.xlu0 %4018
      %4020 = vrot.lane.b32.xlu0 %v3551, 104
      %v4021 = vpop.permute.xlu0 %4020
      %4022 = vrot.lane.b32.xlu0 %v3552, 104
      %v4023 = vpop.permute.xlu0 %4022
      %v4033 = vsel %vm2879, %v4005, 0
      %v4036 = vand.u32 %v4023, %v2904
      %4038 = vmatprep.subr.bf16.mxu0 0
      %4039 = vmatpush1.bf16.msra.mxu0 %v4007
      %4040 = vmatprep.subr.bf16.mxu0 0
      %4041 = vmatpush1.bf16.msra.mxu0 %v4009
      %4042 = vmatprep.subr.bf16.mxu0 0
      %4043 = vmatpush1.bf16.msra.mxu0 %v4011
      %4044 = vmatprep.subr.bf16.mxu0 0
      %4045 = vmatpush1.bf16.msra.mxu0 %v4013
      %4046 = vmatprep.subr.bf16.mxu0 0
      %4047 = vmatpush1.bf16.msra.mxu0 %v4015
      %4048 = vmatprep.subr.bf16.mxu0 0
      %4049 = vmatpush1.bf16.msra.mxu0 %v4017
      %4050 = vmatprep.subr.bf16.mxu0 0
      %4051 = vmatpush1.bf16.msra.mxu0 %v4019
      %4052 = vmatprep.subr.bf16.mxu0 0
      %4053 = vmatpush1.bf16.msra.mxu0 %v4021
      %4054 = vmatprep.subr.bf16.mxu0 0
      %4055 = vmatpush1.bf16.msra.mxu0 %v4036
      %4056 = vmatprep.subr.bf16.mxu0 0
      %4057 = vmatpush1.bf16.msra.mxu0 0
      %4058 = vmatprep.subr.bf16.mxu0 0
      %4059 = vmatpush1.bf16.msra.mxu0 0
      %4060 = vmatprep.subr.bf16.mxu0 0
      %4061 = vmatpush1.bf16.msra.mxu0 0
      %4062 = vmatprep.subr.bf16.mxu0 0
      %4063 = vmatpush1.bf16.msra.mxu0 0
      %4064 = vmatprep.subr.bf16.mxu0 0
      %4065 = vmatpush1.bf16.msra.mxu0 0
      %4066 = vmatprep.subr.bf16.mxu0 0
      %4067 = vmatpush1.bf16.msra.mxu0 0
      %4068 = vmatprep.subr.bf16.mxu0 0
      %4069 = vmatpush1.bf16.msra.mxu0 0
      %4070 = vmatprep.mubr.bf16.mxu0 %v4033
      %4071 = vmatmul.mubr.bf16.gmra.mrb[0].mxu0 %v4004
      %v4072 = vpop.f32.mrb[0].mxu0
      %v4073 = vadd.f32 0.0, %v4072
      %v4074 = vpop.f32.mrb[0].mxu0
      %v4075 = vpop.f32.mrb[0].mxu0
      %v4076 = vpop.f32.mrb[0].mxu0
      %4077 = vdwg.mxu0
      %4078 = vrot.lane.b32.xlu0 %v3534, 92
      %v4079 = vpop.permute.xlu0 %4078
      %4080 = vrot.lane.b32.xlu0 %v3535, 92
      %v4081 = vpop.permute.xlu0 %4080
      %4082 = vrot.lane.b32.xlu0 %v3536, 92
      %v4083 = vpop.permute.xlu0 %4082
      %4084 = vrot.lane.b32.xlu0 %v3537, 92
      %v4085 = vpop.permute.xlu0 %4084
      %4086 = vrot.lane.b32.xlu0 %v3538, 92
      %v4087 = vpop.permute.xlu0 %4086
      %4088 = vrot.lane.b32.xlu0 %v3539, 92
      %v4089 = vpop.permute.xlu0 %4088
      %4090 = vrot.lane.b32.xlu0 %v3540, 92
      %v4091 = vpop.permute.xlu0 %4090
      %4092 = vrot.lane.b32.xlu0 %v3541, 92
      %v4093 = vpop.permute.xlu0 %4092
      %4094 = vrot.lane.b32.xlu0 %v3542, 92
      %v4095 = vpop.permute.xlu0 %4094
      %4096 = vrot.lane.b32.xlu0 %v3543, 92
      %v4097 = vpop.permute.xlu0 %4096
      %v4099 = vsel %vm863, %v4079, 0
      %v4102 = vsel %vm863, %v4081, 0
      %v4105 = vsel %vm863, %v4083, 0
      %v4108 = vsel %vm863, %v4085, 0
      %v4111 = vsel %vm863, %v4087, 0
      %v4114 = vsel %vm863, %v4089, 0
      %v4117 = vsel %vm863, %v4091, 0
      %v4120 = vsel %vm863, %v4093, 0
      %v4123 = vsel %vm863, %v4095, 0
      %v4126 = vsel %vm863, %v4097, 0
      %4128 = vmatprep.subr.bf16.mxu0 0
      %4129 = vmatpush1.bf16.xpose.msra.mxu0 %v4102
      %4130 = vmatprep.subr.bf16.mxu0 0
      %4131 = vmatpush1.bf16.xpose.msra.mxu0 %v4105
      %4132 = vmatprep.subr.bf16.mxu0 0
      %4133 = vmatpush1.bf16.xpose.msra.mxu0 %v4108
      %4134 = vmatprep.subr.bf16.mxu0 0
      %4135 = vmatpush1.bf16.xpose.msra.mxu0 %v4111
      %4136 = vmatprep.subr.bf16.mxu0 0
      %4137 = vmatpush1.bf16.xpose.msra.mxu0 %v4114
      %4138 = vmatprep.subr.bf16.mxu0 0
      %4139 = vmatpush1.bf16.xpose.msra.mxu0 %v4117
      %4140 = vmatprep.subr.bf16.mxu0 0
      %4141 = vmatpush1.bf16.xpose.msra.mxu0 %v4120
      %4142 = vmatprep.subr.bf16.mxu0 0
      %4143 = vmatpush1.bf16.xpose.msra.mxu0 %v4123
      %4144 = vmatprep.subr.bf16.mxu0 0
      %4145 = vmatpush1.bf16.xpose.msra.mxu0 %v4126
      %4146 = vmatprep.subr.bf16.mxu0 0
      %4147 = vmatpush1.bf16.xpose.msra.mxu0 0
      %4148 = vmatprep.subr.bf16.mxu0 0
      %4149 = vmatpush1.bf16.xpose.msra.mxu0 0
      %4150 = vmatprep.subr.bf16.mxu0 0
      %4151 = vmatpush1.bf16.xpose.msra.mxu0 0
      %4152 = vmatprep.subr.bf16.mxu0 0
      %4153 = vmatpush1.bf16.xpose.msra.mxu0 0
      %4154 = vmatprep.subr.bf16.mxu0 0
      %4155 = vmatpush1.bf16.xpose.msra.mxu0 0
      %4156 = vmatprep.subr.bf16.mxu0 0
      %4157 = vmatpush1.bf16.xpose.msra.mxu0 0
      %4158 = vmatprep.subr.bf16.mxu0 0
      %4159 = vmatpush1.bf16.xpose.msra.mxu0 0
      %4160 = vmatprep.mubr.bf16.mxu0 0
      %4161 = vmatmul.mubr.bf16.gmra.mrb[0].mxu0 %v4099
      %v4162 = vpop.f32.mrb[0].mxu0
      %v4163 = vadd.f32 0.0, %v4162
      %v4164 = vpop.f32.mrb[0].mxu0
      %v4165 = vadd.f32 0.0, %v4164
      %v4166 = vpop.f32.mrb[0].mxu0
      %v4167 = vpop.f32.mrb[0].mxu0
      %4168 = vdwg.mxu0
      %v4169 = vmul.f32 %v4163, 0.28867513
      %v4170 = vmul.f32 %v4165, 0.28867513
      %v4171 = vsel %vm2879, %v4170, -inf
      %v4172 = vmax.f32 %v4169, %v4171
      %4173 = vmax.xlane.f32.xlu0 %v4172
      %v4174 = vpop.xlane.xlu0 %4173
      %v4175 = vsub.f32 %v4169, %v4174
      %v4176 = vsub.f32 %v4170, %v4174
      %v4177 = vmul.f32 %v4175, 1.442695
      %v4178 = vpow.pop %v4177
      %v4179 = vmul.f32 %v4176, 1.442695
      %v4180 = vpow.pop %v4179
      %v4181 = vsel %vm2879, %v4180, 0.0
      %v4182 = vadd.f32 %v4178, %v4181
      %4183 = vadd.xlane.f32.xlu0 %v4182
      %v4184 = vpop.xlane.xlu0 %4183
      %v4185 = vrcp.pop %v4184
      %v4186 = vmul.f32 %v4178, %v4185
      %v4187 = vmul.f32 %v4180, %v4185
      %v4188 = vpack.c.bf16 %v4186, %v4186
      %v4189 = vpack.c.bf16 %v4187, %v4187
      %4190 = vrot.lane.b32.xlu0 %v3544, 92
      %v4191 = vpop.permute.xlu0 %4190
      %4192 = vrot.lane.b32.xlu0 %v3545, 92
      %v4193 = vpop.permute.xlu0 %4192
      %4194 = vrot.lane.b32.xlu0 %v3546, 92
      %v4195 = vpop.permute.xlu0 %4194
      %4196 = vrot.lane.b32.xlu0 %v3547, 92
      %v4197 = vpop.permute.xlu0 %4196
      %4198 = vrot.lane.b32.xlu0 %v3548, 92
      %v4199 = vpop.permute.xlu0 %4198
      %4200 = vrot.lane.b32.xlu0 %v3549, 92
      %v4201 = vpop.permute.xlu0 %4200
      %4202 = vrot.lane.b32.xlu0 %v3550, 92
      %v4203 = vpop.permute.xlu0 %4202
      %4204 = vrot.lane.b32.xlu0 %v3551, 92
      %v4205 = vpop.permute.xlu0 %4204
      %4206 = vrot.lane.b32.xlu0 %v3552, 92
      %v4207 = vpop.permute.xlu0 %4206
      %v4217 = vsel %vm2879, %v4189, 0
      %v4220 = vand.u32 %v4207, %v2904
      %4222 = vmatprep.subr.bf16.mxu0 0
      %4223 = vmatpush1.bf16.msra.mxu0 %v4191
      %4224 = vmatprep.subr.bf16.mxu0 0
      %4225 = vmatpush1.bf16.msra.mxu0 %v4193
      %4226 = vmatprep.subr.bf16.mxu0 0
      %4227 = vmatpush1.bf16.msra.mxu0 %v4195
      %4228 = vmatprep.subr.bf16.mxu0 0
      %4229 = vmatpush1.bf16.msra.mxu0 %v4197
      %4230 = vmatprep.subr.bf16.mxu0 0
      %4231 = vmatpush1.bf16.msra.mxu0 %v4199
      %4232 = vmatprep.subr.bf16.mxu0 0
      %4233 = vmatpush1.bf16.msra.mxu0 %v4201
      %4234 = vmatprep.subr.bf16.mxu0 0
      %4235 = vmatpush1.bf16.msra.mxu0 %v4203
      %4236 = vmatprep.subr.bf16.mxu0 0
      %4237 = vmatpush1.bf16.msra.mxu0 %v4205
      %4238 = vmatprep.subr.bf16.mxu0 0
      %4239 = vmatpush1.bf16.msra.mxu0 %v4220
      %4240 = vmatprep.subr.bf16.mxu0 0
      %4241 = vmatpush1.bf16.msra.mxu0 0
      %4242 = vmatprep.subr.bf16.mxu0 0
      %4243 = vmatpush1.bf16.msra.mxu0 0
      %4244 = vmatprep.subr.bf16.mxu0 0
      %4245 = vmatpush1.bf16.msra.mxu0 0
      %4246 = vmatprep.subr.bf16.mxu0 0
      %4247 = vmatpush1.bf16.msra.mxu0 0
      %4248 = vmatprep.subr.bf16.mxu0 0
      %4249 = vmatpush1.bf16.msra.mxu0 0
      %4250 = vmatprep.subr.bf16.mxu0 0
      %4251 = vmatpush1.bf16.msra.mxu0 0
      %4252 = vmatprep.subr.bf16.mxu0 0
      %4253 = vmatpush1.bf16.msra.mxu0 0
      %4254 = vmatprep.mubr.bf16.mxu0 %v4217
      %4255 = vmatmul.mubr.bf16.gmra.mrb[0].mxu0 %v4188
      %v4256 = vpop.f32.mrb[0].mxu0
      %v4257 = vadd.f32 0.0, %v4256
      %v4258 = vpop.f32.mrb[0].mxu0
      %v4259 = vpop.f32.mrb[0].mxu0
      %v4260 = vpop.f32.mrb[0].mxu0
      %4261 = vdwg.mxu0
      %4263 = vrot.lane.b32.xlu0 %v3889, 12
      %v4264 = vpop.permute.xlu0 %4263
      %4267 = vrot.lane.b32.xlu0 %v4073, 24
      %v4268 = vpop.permute.xlu0 %4267
      %4271 = vrot.lane.b32.xlu0 %v4257, 36
      %v4272 = vpop.permute.xlu0 %4271
      %v4274 = vsel %vm863, %v3686, %v4264
      %v4275 = vsel %vm1326, %v4274, %v4268
      %v4276 = vsel %vm1328, %v4275, %v4272
      %v4277 = vpack.c.bf16 %v4276, %v3533
      %v4278 = vlaneseq
      %v4279 = vshrl.u32 %v4278, 7
      %v4280 = vsub.s32 3, %v4279
      %v4281 = vrot.slane %v539, %v4280
      %v4288 = vunpack.c.l.b16 %v500
      %v4289 = vunpack.c.l.b16 %v501
      %v4290 = vunpack.c.l.b16 %v502
      %v4291 = vunpack.c.l.b16 %v503
      %v4292 = vunpack.c.l.b16 %v504
      %v4293 = vunpack.c.l.b16 %v505
      %v4294 = vpack.c.b16 %v4289, %v4288
      %v4295 = vpack.c.b16 %v4291, %v4290
      %v4296 = vpack.c.b16 %v4293, %v4292
      %v4301 = vsel %vm564, %v4277, 0
      %4303 = vmatprep.subr.bf16.mxu0 0
      %4304 = vmatpush1.bf16.msra.mxu0 %v4294
      %4305 = vmatprep.subr.bf16.mxu0 0
      %4306 = vmatpush1.bf16.msra.mxu0 %v4295
      %4307 = vmatprep.subr.bf16.mxu0 0
      %4308 = vmatpush1.bf16.msra.mxu0 %v4296
      %4309 = vmatprep.subr.bf16.mxu0 0
      %4310 = vmatpush1.bf16.msra.mxu0 0
      %4311 = vmatprep.subr.bf16.mxu0 0
      %4312 = vmatpush1.bf16.msra.mxu0 0
      %4313 = vmatprep.subr.bf16.mxu0 0
      %4314 = vmatpush1.bf16.msra.mxu0 0
      %4315 = vmatprep.subr.bf16.mxu0 0
      %4316 = vmatpush1.bf16.msra.mxu0 0
      %4317 = vmatprep.subr.bf16.mxu0 0
      %4318 = vmatpush1.bf16.msra.mxu0 0
      %4319 = vmatprep.subr.bf16.mxu0 0
      %4320 = vmatpush1.bf16.msra.mxu0 0
      %4321 = vmatprep.subr.bf16.mxu0 0
      %4322 = vmatpush1.bf16.msra.mxu0 0
      %4323 = vmatprep.subr.bf16.mxu0 0
      %4324 = vmatpush1.bf16.msra.mxu0 0
      %4325 = vmatprep.subr.bf16.mxu0 0
      %4326 = vmatpush1.bf16.msra.mxu0 0
      %4327 = vmatprep.subr.bf16.mxu0 0
      %4328 = vmatpush1.bf16.msra.mxu0 0
      %4329 = vmatprep.subr.bf16.mxu0 0
      %4330 = vmatpush1.bf16.msra.mxu0 0
      %4331 = vmatprep.subr.bf16.mxu0 0
      %4332 = vmatpush1.bf16.msra.mxu0 0
      %4333 = vmatprep.subr.bf16.mxu0 0
      %4334 = vmatpush1.bf16.msra.mxu0 0
      %4335 = vmatprep.mubr.bf16.mxu0 0
      %4336 = vmatmul.mubr.bf16.gmra.mrb[0].mxu0 %v4301
      %v4337 = vpop.f32.mrb[0].mxu0
      %v4338 = vadd.f32 %v4281, %v4337
      %v4339 = vpop.f32.mrb[0].mxu0
      %v4340 = vpop.f32.mrb[0].mxu0
      %v4341 = vadd.f32 %v4281, %v4340
      %v4342 = vpop.f32.mrb[0].mxu0
      %4343 = vdwg.mxu0
      %v4344 = vadd.f32 %v1864, %v4338
      %v4345 = vadd.f32 %v1865, %v4341
      %v4346 = vsel %vm564, %v4344, 0.0
      %4347 = vadd.xlane.f32.xlu0 %v4346
      %v4348 = vpop.xlane.xlu0 %4347
      %v4349 = vsel %vm564, %v4345, 0.0
      %4350 = vadd.xlane.f32.xlu0 %v4349
      %v4351 = vpop.xlane.xlu0 %4350
      %v4352 = vmul.f32 %v4348, %v661
      %v4353 = vmul.f32 %v4351, %v661
      %v4354 = vsub.f32 %v4344, %v4352
      %v4355 = vsub.f32 %v4345, %v4353
      %v4356 = vmul.f32 %v4354, %v4354
      %v4357 = vmul.f32 %v4355, %v4355
      %v4358 = vsel %vm564, %v4356, 0.0
      %4359 = vadd.xlane.f32.xlu0 %v4358
      %v4360 = vpop.xlane.xlu0 %4359
      %v4361 = vsel %vm564, %v4357, 0.0
      %4362 = vadd.xlane.f32.xlu0 %v4361
      %v4363 = vpop.xlane.xlu0 %4362
      %v4364 = vmul.f32 %v4360, %v661
      %v4365 = vmul.f32 %v4363, %v661
      %v4366 = vadd.f32 %v4364, 1e-05
      %v4367 = vadd.f32 %v4365, 1e-05
      %v4368 = vrsqrt.pop %v4366
      %v4369 = vrsqrt.pop %v4367
      %v4370 = vmul.f32 %v4354, %v4368
      %v4371 = vmul.f32 %v4355, %v4369
      %v4372 = vlaneseq
      %v4373 = vshrl.u32 %v4372, 7
      %v4374 = vsub.s32 4, %v4373
      %v4375 = vrot.slane %v538, %v4374
      %v4376 = vmul.f32 %v4370, %v4375
      %v4377 = vmul.f32 %v4371, %v4375
      %v4378 = vlaneseq
      %v4379 = vshrl.u32 %v4378, 7
      %v4380 = vsub.s32 5, %v4379
      %v4381 = vrot.slane %v538, %v4380
      %v4382 = vadd.f32 %v4376, %v4381
      %v4383 = vadd.f32 %v4377, %v4381
      %v4384 = vmul.f32 %v4382, %v697
      %v4385 = vmul.f32 %v4383, %v701
      %v4386 = vadd.f32 %v4384, %v715
      %v4387 = vadd.f32 %v4385, %v717
      %v4388 = vpack.c.bf16 %v4387, %v4386
      %v4389 = vlaneseq
      %v4390 = vshrl.u32 %v4389, 7
      %v4391 = vsub.s32 2, %v4390
      %v4392 = vrot.slane %v540, %v4391
      %v4399 = vunpack.c.l.b16 %v520
      %v4400 = vunpack.c.l.b16 %v521
      %v4401 = vunpack.c.l.b16 %v522
      %v4402 = vunpack.c.l.b16 %v523
      %v4403 = vunpack.c.l.b16 %v524
      %v4404 = vunpack.c.l.b16 %v525
      %v4405 = vpack.c.b16 %v4400, %v4399
      %v4406 = vpack.c.b16 %v4402, %v4401
      %v4407 = vpack.c.b16 %v4404, %v4403
      %v4412 = vsel %vm564, %v4388, 0
      %4414 = vmatprep.subr.bf16.mxu0 0
      %4415 = vmatpush1.bf16.msra.mxu0 %v4405
      %4416 = vmatprep.subr.bf16.mxu0 0
      %4417 = vmatpush1.bf16.msra.mxu0 %v4406
      %4418 = vmatprep.subr.bf16.mxu0 0
      %4419 = vmatpush1.bf16.msra.mxu0 %v4407
      %4420 = vmatprep.subr.bf16.mxu0 0
      %4421 = vmatpush1.bf16.msra.mxu0 0
      %4422 = vmatprep.subr.bf16.mxu0 0
      %4423 = vmatpush1.bf16.msra.mxu0 0
      %4424 = vmatprep.subr.bf16.mxu0 0
      %4425 = vmatpush1.bf16.msra.mxu0 0
      %4426 = vmatprep.subr.bf16.mxu0 0
      %4427 = vmatpush1.bf16.msra.mxu0 0
      %4428 = vmatprep.subr.bf16.mxu0 0
      %4429 = vmatpush1.bf16.msra.mxu0 0
      %4430 = vmatprep.subr.bf16.mxu0 0
      %4431 = vmatpush1.bf16.msra.mxu0 0
      %4432 = vmatprep.subr.bf16.mxu0 0
      %4433 = vmatpush1.bf16.msra.mxu0 0
      %4434 = vmatprep.subr.bf16.mxu0 0
      %4435 = vmatpush1.bf16.msra.mxu0 0
      %4436 = vmatprep.subr.bf16.mxu0 0
      %4437 = vmatpush1.bf16.msra.mxu0 0
      %4438 = vmatprep.subr.bf16.mxu0 0
      %4439 = vmatpush1.bf16.msra.mxu0 0
      %4440 = vmatprep.subr.bf16.mxu0 0
      %4441 = vmatpush1.bf16.msra.mxu0 0
      %4442 = vmatprep.subr.bf16.mxu0 0
      %4443 = vmatpush1.bf16.msra.mxu0 0
      %4444 = vmatprep.subr.bf16.mxu0 0
      %4445 = vmatpush1.bf16.msra.mxu0 0
      %4446 = vmatprep.mubr.bf16.mxu0 0
      %4447 = vmatmul.mubr.bf16.gmra.mrb[0].mxu0 %v4412
      %v4448 = vpop.f32.mrb[0].mxu0
      %v4449 = vadd.f32 %v4392, %v4448
      %v4450 = vpop.f32.mrb[0].mxu0
      %v4451 = vpop.f32.mrb[0].mxu0
      %v4452 = vadd.f32 %v4392, %v4451
      %v4453 = vpop.f32.mrb[0].mxu0
      %4454 = vdwg.mxu0
      %v4455 = vmax.f32 %v4449, 0.0
      %v4456 = vmax.f32 %v4452, 0.0
      %v4457 = vpack.c.bf16 %v4456, %v4455
      %v4458 = vlaneseq
      %v4459 = vshrl.u32 %v4458, 7
      %v4460 = vsub.s32 4, %v4459
      %v4461 = vrot.slane %v539, %v4460
      %v4474 = vunpack.c.l.b16 %v526
      %v4475 = vunpack.c.l.b16 %v527
      %v4476 = vunpack.c.l.b16 %v528
      %v4477 = vunpack.c.l.b16 %v529
      %v4478 = vunpack.c.l.b16 %v530
      %v4479 = vunpack.c.l.b16 %v531
      %v4480 = vunpack.c.l.b16 %v532
      %v4481 = vunpack.c.l.b16 %v533
      %v4482 = vunpack.c.l.b16 %v534
      %v4483 = vunpack.c.l.b16 %v535
      %v4484 = vunpack.c.l.b16 %v536
      %v4485 = vunpack.c.l.b16 %v537
      %v4486 = vpack.c.b16 %v4475, %v4474
      %v4487 = vpack.c.b16 %v4477, %v4476
      %v4488 = vpack.c.b16 %v4479, %v4478
      %v4489 = vpack.c.b16 %v4481, %v4480
      %v4490 = vpack.c.b16 %v4483, %v4482
      %v4491 = vpack.c.b16 %v4485, %v4484
      %vm4498 = vcmask 785408
      %v4500 = vsel %vm4498, %v4457, 0
      %4502 = vmatprep.subr.bf16.mxu0 0
      %4503 = vmatpush1.bf16.msra.mxu0 %v4486
      %4504 = vmatprep.subr.bf16.mxu0 0
      %4505 = vmatpush1.bf16.msra.mxu0 %v4487
      %4506 = vmatprep.subr.bf16.mxu0 0
      %4507 = vmatpush1.bf16.msra.mxu0 %v4488
      %4508 = vmatprep.subr.bf16.mxu0 0
      %4509 = vmatpush1.bf16.msra.mxu0 %v4489
      %4510 = vmatprep.subr.bf16.mxu0 0
      %4511 = vmatpush1.bf16.msra.mxu0 %v4490
      %4512 = vmatprep.subr.bf16.mxu0 0
      %4513 = vmatpush1.bf16.msra.mxu0 %v4491
      %4514 = vmatprep.subr.bf16.mxu0 0
      %4515 = vmatpush1.bf16.msra.mxu0 0
      %4516 = vmatprep.subr.bf16.mxu0 0
      %4517 = vmatpush1.bf16.msra.mxu0 0
      %4518 = vmatprep.subr.bf16.mxu0 0
      %4519 = vmatpush1.bf16.msra.mxu0 0
      %4520 = vmatprep.subr.bf16.mxu0 0
      %4521 = vmatpush1.bf16.msra.mxu0 0
      %4522 = vmatprep.subr.bf16.mxu0 0
      %4523 = vmatpush1.bf16.msra.mxu0 0
      %4524 = vmatprep.subr.bf16.mxu0 0
      %4525 = vmatpush1.bf16.msra.mxu0 0
      %4526 = vmatprep.subr.bf16.mxu0 0
      %4527 = vmatpush1.bf16.msra.mxu0 0
      %4528 = vmatprep.subr.bf16.mxu0 0
      %4529 = vmatpush1.bf16.msra.mxu0 0
      %4530 = vmatprep.subr.bf16.mxu0 0
      %4531 = vmatpush1.bf16.msra.mxu0 0
      %4532 = vmatprep.subr.bf16.mxu0 0
      %4533 = vmatpush1.bf16.msra.mxu0 0
      %4534 = vmatprep.mubr.bf16.mxu0 0
      %4535 = vmatmul.mubr.bf16.gmra.mrb[0].mxu0 %v4500
      %v4536 = vpop.f32.mrb[0].mxu0
      %v4537 = vadd.f32 %v4461, %v4536
      %v4538 = vpop.f32.mrb[0].mxu0
      %v4539 = vpop.f32.mrb[0].mxu0
      %v4540 = vadd.f32 %v4461, %v4539
      %v4541 = vpop.f32.mrb[0].mxu0
      %4542 = vdwg.mxu0
      %v4543 = vadd.f32 %v4344, %v4537
      %v4544 = vadd.f32 %v4345, %v4540
      %4545 = vst.msk [vmem:[%s11] sm:$0xff] %vm564, %v4543
      %4546 = vst.msk [vmem:[%s11 + $0x8] sm:$0xff] %vm564, %v4544
      // Predicated region
      $region69: #{planner_forward.32} parent=63 // pred_check
        %p4547 = pneg %p291
      $region70: #{planner_forward.32} parent=63 // pred_check_branch
        %4549 = sbr.rel (%p4547) target = $region72
      $region71: #{planner_forward.32} parent=63 // pred_region
        _
      $region72: #{planner_forward.32} parent=63 // pred_fallthru
        _
      // Predicated region
      $region73: #{planner_forward.32} parent=63 // pred_check
        %p4550 = pneg %p291
      $region74: #{planner_forward.32} parent=63 // pred_check_branch
        %4552 = sbr.rel (%p4550) target = $region76
      $region75: #{planner_forward.32} parent=63 // pred_region
        _
      $region76: #{planner_forward.32} parent=63 // pred_fallthru
        _
    $region64: #{planner_forward.32} parent=5 // pred_fallthru
      _
    %p4553 = scmp.le.s32.totalorder 2, %s17
    // Predicated region
    $region77: #{planner_forward.32} parent=5 // pred_check
      %p4554 = pneg %p4553
    $region78: #{planner_forward.32} parent=5 // pred_check_branch
      %4556 = sbr.rel (%p4554) target = $region80
    $region79: #{planner_forward.32} parent=5 // pred_region
      %s4557 = ssub.s32 %s17, 2
    $region80: #{planner_forward.32} parent=5 // pred_fallthru
      _
  $region6: #{planner_forward.32} parent=0 // loop_footer
    %s21 = sadd.s32 1, %s17
  $region7: #{planner_forward.32} parent=0 // loop_footer_branch
    %16 = sbr.rel target = $region3
  $region8: #{planner_forward.32} parent=0 // loop_exit
    _

</llo_original>
